<compile_context>
chip_gen: v7x
topology: tpu7x:2x2x1
jax: 0.10.0
libtpu: 0.0.40
codegen_flags: <defaults>
</compile_context>

<pallas_src>
import functools

import jax
import jax.numpy as jnp
from jax.experimental import pallas as pl
from jax.experimental.pallas import tpu as pltpu


# -----------------------------------------------------------------------------
# Small helpers
# -----------------------------------------------------------------------------

def _layernorm(v, gamma, beta, eps):
    mu = jnp.mean(v, axis=-1, keepdims=True)
    var = jnp.mean((v - mu) ** 2, axis=-1, keepdims=True)
    return (v - mu) * jax.lax.rsqrt(var + eps) * gamma + beta


def _layernorm_noaffine(v, eps):
    mu = jnp.mean(v, axis=-1, keepdims=True)
    var = jnp.mean((v - mu) ** 2, axis=-1, keepdims=True)
    return (v - mu) * jax.lax.rsqrt(var + eps)


def _choose_q_tile(S, max_tile=512):
    """Largest query tile <= max_tile that divides S; full S when it fits."""
    if S <= max_tile:
        return S
    for t in (512, 384, 256, 128, 64, 32, 16, 8):
        if S % t == 0:
            return t
    return S


def _choose_ff_chunk(H4):
    """Chunk width (multiple of 128) for the 4H feed-forward dimension."""
    if H4 <= 512:
        return H4
    for c in (512, 384, 256, 128):
        if H4 % c == 0:
            return c
    return H4


def _vmem_cap_bytes():
    """7/8 of per-core VMEM (leave Mosaic internal-scratch headroom)."""
    cap = 64 << 20                       # conservative fallback (v7x-sized)
    try:
        cap = int(pltpu.get_tpu_info().vmem_capacity_bytes)
    except Exception:
        pass
    return (cap * 7) // 8


def _vmem_estimate(S, tq, H, n_out, cd_bytes, weight_bufs):
    """VMEM estimate (bytes) for one layer call from the actual block sizes."""
    f32 = 4
    H4 = 4 * H
    # grid-streamed activation blocks (double buffered by the pipeline)
    act = ((S + tq) * H + 2 * tq * S + n_out * tq * H) * f32 * 2
    # weights / LN vectors resident in VMEM (x1 if single-buffered, x2 else)
    weights = ((2 * H * H + H * 2 * H + 2 * H * H4 + H4 * H) * cd_bytes
               + 14 * H * f32) * weight_bufs
    # persistent scratch (K/V cache + attn_pre slab) and in-kernel temporaries
    scratch = S * 2 * H * cd_bytes + tq * H * f32
    tmp = (6 * tq * H + 2 * tq * S + 3 * tq * min(H4, 512)) * f32
    return act + weights + scratch + tmp + (4 << 20)


# -----------------------------------------------------------------------------
# Fused transformer-layer kernel
# -----------------------------------------------------------------------------

def graph_layer_kernel(
        # ---- inputs ----
        x_full_ref,   # (1, S, H)   residual stream, full sequence (K/V source)
        x_q_ref,      # (1, tq, H)  residual stream, query rows of this tile
        gb_ref,       # (1, tq, S)  graph_bias rows
        mask_ref,     # (1, tq, S)  attn_mask rows
        fac_ref,      # (nH,)       signed per-head bias factors, SMEM
        wq_ref,       # (H, H)      W_Q with 1/sqrt(d) folded in
        wkv_ref,      # (H, 2H)     [W_K | W_V] packed
        wo_ref,       # (H, H)
        g_ain_ref, b_ain_ref, g_aout_ref, b_aout_ref,    # (1, H)
        w1_ref, w2_ref, w3_ref,                          # (H,4H) (H,4H) (4H,H)
        g_fin_ref, b_fin_ref, g_fout_ref, b_fout_ref,    # (1, H)
        g_out_ref, b_out_ref,                            # (1, H) output_norm
        # ---- outputs then scratch (composition via static flags) ----
        *refs,
        num_heads, eps, fuse_input_norm, fuse_output_norm,
        write_intermediates, compute_dtype, approx_recip, ff_chunk):
    n_out = 1 + (3 if write_intermediates else 0) + (1 if fuse_output_norm else 0)
    out_refs = refs[:n_out]
    kv_scratch, ctx_scratch = refs[n_out], refs[n_out + 1]

    idx = 0
    x_post_ff_ref = out_refs[idx]; idx += 1
    if write_intermediates:
        x_post_attn_ref = out_refs[idx]; idx += 1
        attn_pre_ref = out_refs[idx]; idx += 1
        ff_out_ref = out_refs[idx]; idx += 1
    if fuse_output_norm:
        final_ref = out_refs[idx]; idx += 1

    cd = compute_dtype
    g_ain = g_ain_ref[0]
    b_ain = b_ain_ref[0]

    # ---- K/V cache: compute once per batch element (first query tile only) ----
    @pl.when(pl.program_id(1) == 0)
    def _():
        x_full = x_full_ref[0]                        # (S, H)
        if fuse_input_norm:                           # layer 0: fused input_norm
            x_full = _layernorm_noaffine(x_full, eps)
        xn_kv = _layernorm(x_full, g_ain, b_ain, eps).astype(cd)
        # one packed full-width matmul: (S,H) @ (H,2H) -> [K | V]
        kv_scratch[...] = jnp.dot(xn_kv, wkv_ref[...],
                                  preferred_element_type=jnp.float32).astype(cd)

    # ---- query side ----
    x_q = x_q_ref[0]                                  # (tq, H)
    if fuse_input_norm:
        x_q = _layernorm_noaffine(x_q, eps)
    xn_q = _layernorm(x_q, g_ain, b_ain, eps).astype(cd)
    # full-width Q projection; 1/sqrt(d) scale already folded into W_Q
    q_all = jnp.dot(xn_q, wq_ref[...], preferred_element_type=jnp.float32)  # (tq,H)

    gb = gb_ref[0]                                    # (tq, S)
    msk = mask_ref[0]                                 # (tq, S)
    tq, H = x_q.shape
    d = H // num_heads

    # ---- per-head score/softmax/context; context assembled into VMEM scratch ----
    for h in range(num_heads):        # static unroll; offsets are compile-time
        lo = h * d
        q_h = q_all[:, lo:lo + d].astype(cd)          # (tq, d)
        k_h = kv_scratch[:, lo:lo + d]                # (S, d)   from cache
        v_h = kv_scratch[:, H + lo:H + lo + d]        # (S, d)
        s = jax.lax.dot_general(q_h, k_h, (((1,), (1,)), ((), ())),
                                preferred_element_type=jnp.float32)   # (tq, S)
        # bias on the fly: mask + signed_factor[h] * graph_bias
        s = s + (msk + fac_ref[h] * gb)
        s = s - jnp.max(s, axis=-1, keepdims=True)
        p = jnp.exp(s)
        inv = pl.reciprocal(jnp.sum(p, axis=-1, keepdims=True), approx=approx_recip)
        p = p * inv
        ctx_scratch[:, lo:lo + d] = jnp.dot(p.astype(cd), v_h,
                                            preferred_element_type=jnp.float32)

    ctx = ctx_scratch[...]                            # (tq, H) head-major slab
    if write_intermediates:
        attn_pre_ref[0] = ctx.astype(attn_pre_ref.dtype)   # one lane-dense store
    # single full-width O projection
    attn_out = jnp.dot(ctx.astype(cd), wo_ref[...],
                       preferred_element_type=jnp.float32)              # (tq, H)
    x_post_attn = x_q + _layernorm(attn_out, g_aout_ref[0], b_aout_ref[0], eps)

    # ---- bilinear feed-forward, 4H dimension chunked ----
    xn2 = _layernorm(x_post_attn, g_fin_ref[0], b_fin_ref[0], eps).astype(cd)
    H4 = w1_ref.shape[1]
    ff = jnp.zeros((tq, H), jnp.float32)
    for c0 in range(0, H4, ff_chunk):
        c1 = c0 + ff_chunk
        x1 = jnp.dot(xn2, w1_ref[:, c0:c1], preferred_element_type=jnp.float32)
        x2 = jnp.dot(xn2, w2_ref[:, c0:c1], preferred_element_type=jnp.float32)
        ff = ff + jnp.dot((x1 * x2).astype(cd), w3_ref[c0:c1, :],
                          preferred_element_type=jnp.float32)
    x_post_ff = x_post_attn + _layernorm(ff, g_fout_ref[0], b_fout_ref[0], eps)

    # ---- writes ----
    x_post_ff_ref[0] = x_post_ff.astype(x_post_ff_ref.dtype)
    if write_intermediates:
        x_post_attn_ref[0] = x_post_attn.astype(x_post_attn_ref.dtype)
        ff_out_ref[0] = ff.astype(ff_out_ref.dtype)
    if fuse_output_norm:      # last layer: fused output_norm (final_hidden_state)
        final_ref[0] = _layernorm(x_post_ff, g_out_ref[0], b_out_ref[0],
                                  eps).astype(final_ref.dtype)


# -----------------------------------------------------------------------------
# One-time weight prepack (fold scale, pack K|V, cast to compute dtype)
# -----------------------------------------------------------------------------

def prepack_graph_transformer_params(layers_params, out_gamma, out_beta,
                                     num_heads, compute_dtype=jnp.bfloat16):
    H = layers_params[0]["W_Q"].shape[0]
    scale = (H / num_heads) ** (-0.5)
    cd = compute_dtype
    vec = lambda v: jnp.asarray(v, jnp.float32).reshape(1, H)   # LN params stay f32
    layers = []
    for p in layers_params:
        layers.append(dict(
            W_Q=(jnp.asarray(p["W_Q"], jnp.float32) * scale).astype(cd),
            W_KV=jnp.concatenate([jnp.asarray(p["W_K"]), jnp.asarray(p["W_V"])],
                                 axis=1).astype(cd),
            W_O=jnp.asarray(p["W_O"]).astype(cd),
            W_1=jnp.asarray(p["W_1"]).astype(cd),
            W_2=jnp.asarray(p["W_2"]).astype(cd),
            W_3=jnp.asarray(p["W_3"]).astype(cd),
            attn_in_g=vec(p["attn_in_g"]), attn_in_b=vec(p["attn_in_b"]),
            attn_out_g=vec(p["attn_out_g"]), attn_out_b=vec(p["attn_out_b"]),
            ff_in_g=vec(p["ff_in_g"]), ff_in_b=vec(p["ff_in_b"]),
            ff_out_g=vec(p["ff_out_g"]), ff_out_b=vec(p["ff_out_b"]),
        ))
    return dict(layers=layers, out_g=vec(out_gamma), out_b=vec(out_beta),
                num_heads=num_heads, compute_dtype=cd)


# -----------------------------------------------------------------------------
# Wrapper: one pallas_call per transformer layer
# -----------------------------------------------------------------------------

def pallas_transformer_layer(x, graph_bias, attn_mask, signed_factors, lp,
                             out_g, out_b, *, num_heads, compute_dtype,
                             eps=1e-5, fuse_input_norm=False,
                             fuse_output_norm=False, write_intermediates=True,
                             q_tile=None, single_buffer_weights=True):
    B, S, H = x.shape
    nH = num_heads
    if H % nH != 0:
        raise ValueError(f"hidden_size {H} must be divisible by num_heads {nH}")
    cd = compute_dtype
    cd_bytes = jnp.dtype(cd).itemsize
    approx_recip = jnp.dtype(cd) != jnp.dtype(jnp.float32)
    ff_chunk = _choose_ff_chunk(4 * H)

    tq = _choose_q_tile(S) if q_tile is None else q_tile
    if S % tq != 0 or (tq != S and tq % 8 != 0):
        raise ValueError(f"query tile {tq} incompatible with seq_len {S}")

    n_out = 1 + (3 if write_intermediates else 0) + (1 if fuse_output_norm else 0)
    cap = _vmem_cap_bytes()
    wbufs = 1 if single_buffer_weights else 2
    est = _vmem_estimate(S, tq, H, n_out, cd_bytes, wbufs)
    # over budget -> shrink the query tile instead of silently clamping
    while est > cap and tq % 16 == 0 and S % (tq // 2) == 0:
        tq //= 2
        est = _vmem_estimate(S, tq, H, n_out, cd_bytes, wbufs)
    vmem_limit = int(min(max(est, 16 << 20), cap))
    n_q = S // tq

    kernel = functools.partial(
        graph_layer_kernel, num_heads=nH, eps=eps,
        fuse_input_norm=fuse_input_norm, fuse_output_norm=fuse_output_norm,
        write_intermediates=write_intermediates, compute_dtype=cd,
        approx_recip=approx_recip, ff_chunk=ff_chunk)

    def build_and_run(single_buffer):
        if single_buffer:
            wspec = lambda shape: pl.BlockSpec(shape, lambda b, q: tuple(0 for _ in shape),
                                               pipeline_mode=pl.Buffered(1))
        else:
            wspec = lambda shape: pl.BlockSpec(shape, lambda b, q: tuple(0 for _ in shape))

        tile_spec = pl.BlockSpec((1, tq, H), lambda b, q: (b, q, 0))
        full_seq_spec = pl.BlockSpec((1, S, H), lambda b, q: (b, 0, 0))
        rows_spec = pl.BlockSpec((1, tq, S), lambda b, q: (b, q, 0))

        in_specs = [
            full_seq_spec,                                      # x (full seq, K/V)
            tile_spec,                                          # x (query tile)
            rows_spec,                                          # graph_bias rows
            rows_spec,                                          # attn_mask rows
            pl.BlockSpec(memory_space=pltpu.MemorySpace.SMEM),  # per-head factors
            wspec((H, H)), wspec((H, 2 * H)), wspec((H, H)),    # W_Q, [W_K|W_V], W_O
            wspec((1, H)), wspec((1, H)), wspec((1, H)), wspec((1, H)),
            wspec((H, 4 * H)), wspec((H, 4 * H)), wspec((4 * H, H)),
            wspec((1, H)), wspec((1, H)), wspec((1, H)), wspec((1, H)),
            wspec((1, H)), wspec((1, H)),                       # output_norm g/b
        ]

        out_shapes = [jax.ShapeDtypeStruct((B, S, H), x.dtype)]          # x_post_ff
        out_specs = [tile_spec]
        if write_intermediates:
            out_shapes += [jax.ShapeDtypeStruct((B, S, H), x.dtype)] * 3
            out_specs += [tile_spec] * 3
        if fuse_output_norm:
            out_shapes.append(jax.ShapeDtypeStruct((B, S, H), x.dtype))
            out_specs.append(tile_spec)

        return pl.pallas_call(
            kernel,
            out_shape=tuple(out_shapes),
            grid_spec=pltpu.PrefetchScalarGridSpec(
                num_scalar_prefetch=0,
                grid=(B, n_q),
                in_specs=in_specs,
                out_specs=tuple(out_specs),
                scratch_shapes=[pltpu.VMEM((S, 2 * H), cd),        # K/V cache
                                pltpu.VMEM((tq, H), jnp.float32)], # attn_pre slab
            ),
            compiler_params=pltpu.CompilerParams(
                # q axis is "arbitrary": the K/V scratch is reused across q tiles
                dimension_semantics=("parallel", "arbitrary"),
                vmem_limit_bytes=vmem_limit,
            ),
        )(x, x, graph_bias, attn_mask, signed_factors,
          lp["W_Q"], lp["W_KV"], lp["W_O"],
          lp["attn_in_g"], lp["attn_in_b"], lp["attn_out_g"], lp["attn_out_b"],
          lp["W_1"], lp["W_2"], lp["W_3"],
          lp["ff_in_g"], lp["ff_in_b"], lp["ff_out_g"], lp["ff_out_b"],
          out_g, out_b)

    try:
        outs = build_and_run(single_buffer_weights)
    except Exception:
        if not single_buffer_weights:
            raise
        # fallback if pl.Buffered(1) single-buffering is unsupported on this build
        outs = build_and_run(False)

    idx = 0
    result = {"x_post_ff": outs[idx]}; idx += 1
    if write_intermediates:
        result["x_post_attn"] = outs[idx]; idx += 1
        result["attn_pre"] = outs[idx]; idx += 1
        result["ff_out"] = outs[idx]; idx += 1
    if fuse_output_norm:
        result["final_hidden_state"] = outs[idx]; idx += 1
    return result


# -----------------------------------------------------------------------------
# Full GraphTransformer forward
# -----------------------------------------------------------------------------

def graph_transformer_forward(x, graph_bias, attn_mask, packed_params, *,
                              eps=1e-5, return_intermediates=True,
                              q_tile=None, single_buffer_weights=True):
    """GraphTransformer.forward; dropout is identity (p=0 / eval mode)."""
    layers = packed_params["layers"]
    nH = packed_params["num_heads"]
    cd = packed_params["compute_dtype"]
    out_g, out_b = packed_params["out_g"], packed_params["out_b"]
    n_layers = len(layers)
    if n_layers == 0:
        raise ValueError("GraphTransformer needs at least one layer")

    # Per-head factors logspace(-8, 0, nH, base=2); the data-dependent sign flip
    # is folded into the factors so the (B, nH, S, S) bias never exists:
    # mean(graph_bias x factors) = mean(graph_bias) * mean(factors), factors > 0.
    factors = 2.0 ** jnp.linspace(-8.0, 0.0, nH).astype(jnp.float32)
    mean_adb = jnp.mean(graph_bias.astype(jnp.float32)) * jnp.mean(factors)
    signed_factors = jnp.where(mean_adb > 0, -factors, factors)

    residuals_post_attn, residuals_post_ff = [], []
    attn_outputs_prelinear, ff_outputs = [], []
    final_hidden_state = None

    h = x
    for li, lp in enumerate(layers):
        outs = pallas_transformer_layer(
            h, graph_bias, attn_mask, signed_factors, lp, out_g, out_b,
            num_heads=nH, compute_dtype=cd, eps=eps,
            fuse_input_norm=(li == 0),               # affine-free input_norm
            fuse_output_norm=(li == n_layers - 1),   # output_norm tail
            write_intermediates=return_intermediates,
            q_tile=q_tile, single_buffer_weights=single_buffer_weights)
        h = outs["x_post_ff"]
        residuals_post_ff.append(outs["x_post_ff"])
        if return_intermediates:
            residuals_post_attn.append(outs["x_post_attn"])
            attn_outputs_prelinear.append(outs["attn_pre"])
            ff_outputs.append(outs["ff_out"])
        if li == n_layers - 1:
            final_hidden_state = outs["final_hidden_state"]

    fingerprints = final_hidden_state[:, 0]
    return dict(
        residuals_post_attn=tuple(residuals_post_attn),
        residuals_post_ff=tuple(residuals_post_ff),
        attn_outputs_prelinear=tuple(attn_outputs_prelinear),
        ff_outputs=tuple(ff_outputs),
        final_hidden_state=final_hidden_state,
        fingerprints=fingerprints,
    )


# -----------------------------------------------------------------------------
# Pure-JAX reference (module semantics) for verification
# -----------------------------------------------------------------------------

def _ref_forward(x, graph_bias, attn_mask, layers_params, out_gamma, out_beta,
                 num_heads, eps=1e-5):
    H = x.shape[-1]
    d = H // num_heads
    scale = (H / num_heads) ** (-0.5)
    factors = 2.0 ** jnp.linspace(-8.0, 0.0, num_heads).astype(jnp.float32)
    adb = jnp.einsum('bqk,h->bhqk', graph_bias, factors)
    adb = jnp.where(jnp.mean(adb) > 0, -adb, adb)
    attn_bias = attn_mask[:, None, :, :] + adb

    def ln(v, g, b):
        mu = jnp.mean(v, -1, keepdims=True)
        var = jnp.mean((v - mu) ** 2, -1, keepdims=True)
        return (v - mu) / jnp.sqrt(var + eps) * g + b

    x = ln(x, 1.0, 0.0)
    res_pa, res_pf, pre_l, ff_l = [], [], [], []
    for p in layers_params:
        xn = ln(x, p["attn_in_g"], p["attn_in_b"])
        B, S, _ = xn.shape
        Q = (xn @ p["W_Q"]).reshape(B, S, num_heads, d)
        K = (xn @ p["W_K"]).reshape(B, S, num_heads, d)
        V = (xn @ p["W_V"]).reshape(B, S, num_heads, d)
        attn = jnp.einsum('bqhd,bkhd->bhqk', Q, K) * scale + attn_bias
        attn = jax.nn.softmax(attn, axis=-1)
        pre = jnp.einsum('bhqk,bkhd->bqhd', attn, V).reshape(B, S, H)
        attn_out = pre @ p["W_O"]
        x_post_attn = x + ln(attn_out, p["attn_out_g"], p["attn_out_b"])
        xn2 = ln(x_post_attn, p["ff_in_g"], p["ff_in_b"])
        ff = ((xn2 @ p["W_1"]) * (xn2 @ p["W_2"])) @ p["W_3"]
        x = x_post_attn + ln(ff, p["ff_out_g"], p["ff_out_b"])
        res_pa.append(x_post_attn)
        res_pf.append(x)
        pre_l.append(pre)
        ff_l.append(ff)
    final = ln(x, out_gamma, out_beta)
    return dict(final=final, res_post_attn=res_pa, res_post_ff=res_pf,
                attn_pre=pre_l, ff=ff_l)


# -----------------------------------------------------------------------------
# Main
# -----------------------------------------------------------------------------

if __name__ == "__main__":
    B, S, H, nH, n_layers = 2, 16, 32, 4, 2

    key = jax.random.PRNGKey(0)
    keys = iter(jax.random.split(key, 64))

    def make_layer_params():
        return dict(
            W_Q=0.05 * jax.random.normal(next(keys), (H, H), jnp.float32),
            W_K=0.05 * jax.random.normal(next(keys), (H, H), jnp.float32),
            W_V=0.05 * jax.random.normal(next(keys), (H, H), jnp.float32),
            W_O=0.05 * jax.random.normal(next(keys), (H, H), jnp.float32),
            W_1=0.05 * jax.random.normal(next(keys), (H, 4 * H), jnp.float32),
            W_2=0.05 * jax.random.normal(next(keys), (H, 4 * H), jnp.float32),
            W_3=0.05 * jax.random.normal(next(keys), (4 * H, H), jnp.float32),
            attn_in_g=jnp.ones((H,), jnp.float32), attn_in_b=jnp.zeros((H,), jnp.float32),
            attn_out_g=jnp.ones((H,), jnp.float32), attn_out_b=jnp.zeros((H,), jnp.float32),
            ff_in_g=jnp.ones((H,), jnp.float32), ff_in_b=jnp.zeros((H,), jnp.float32),
            ff_out_g=jnp.ones((H,), jnp.float32), ff_out_b=jnp.zeros((H,), jnp.float32),
        )

    layers_params = [make_layer_params() for _ in range(n_layers)]
    out_gamma = jnp.ones((H,), jnp.float32)
    out_beta = jnp.zeros((H,), jnp.float32)

    x = jax.random.normal(next(keys), (B, S, H), jnp.float32)
    graph_bias = jax.random.uniform(next(keys), (B, S, S), jnp.float32)  # positive -> sign-flip path
    attn_mask = jnp.zeros((B, S, S), jnp.float32)

    ref = _ref_forward(x, graph_bias, attn_mask, layers_params,
                       out_gamma, out_beta, nH)

    # ---- f32 exact-semantics check; q_tile=8 -> n_q=2 exercises the cached
    #      K/V path (K/V computed only on the first query tile of each b).
    packed_f32 = prepack_graph_transformer_params(
        layers_params, out_gamma, out_beta, nH, compute_dtype=jnp.float32)
    out = graph_transformer_forward(x, graph_bias, attn_mask, packed_f32,
                                    return_intermediates=True, q_tile=8)
    jax.block_until_ready(out["final_hidden_state"])

    assert jnp.allclose(out["final_hidden_state"], ref["final"], atol=1e-3, rtol=1e-3)
    assert jnp.allclose(out["attn_outputs_prelinear"][0], ref["attn_pre"][0],
                        atol=5e-3, rtol=5e-3)
    assert jnp.allclose(out["residuals_post_attn"][-1], ref["res_post_attn"][-1],
                        atol=5e-3, rtol=5e-3)
    assert jnp.allclose(out["ff_outputs"][-1], ref["ff"][-1], atol=5e-3, rtol=5e-3)
    assert jnp.allclose(out["residuals_post_ff"][-1], ref["res_post_ff"][-1],
                        atol=5e-3, rtol=5e-3)
    assert out["fingerprints"].shape == (B, H)
    assert len(out["residuals_post_ff"]) == n_layers

    # ---- bf16 production-path smoke test (wide matmuls in bf16, approx
    #      reciprocal, inference-only single output per layer).
    packed_bf16 = prepack_graph_transformer_params(
        layers_params, out_gamma, out_beta, nH, compute_dtype=jnp.bfloat16)
    out_bf16 = graph_transformer_forward(x, graph_bias, attn_mask, packed_bf16,
                                         return_intermediates=False, q_tile=8)
    fhs_bf16 = jax.block_until_ready(out_bf16["final_hidden_state"])
    assert bool(jnp.all(jnp.isfinite(fhs_bf16)))
    assert float(jnp.max(jnp.abs(fhs_bf16 - ref["final"]))) < 0.25
    assert out_bf16["fingerprints"].shape == (B, H)

    print("KERNEL_OK")
</pallas_src>

<mosaic_0001>
module attributes {stable_mosaic.version = 11 : i64} {
  func.func @graph_layer_kernel(%arg0: i32, %arg1: i32, %arg2: memref<1x16x32xf32, #tpu.memory_space<vmem>>, %arg3: memref<1x8x32xf32, #tpu.memory_space<vmem>>, %arg4: memref<1x8x16xf32, #tpu.memory_space<vmem>>, %arg5: memref<1x8x16xf32, #tpu.memory_space<vmem>>, %arg6: memref<4xf32, #tpu.memory_space<smem>>, %arg7: memref<32x32xf32, #tpu.memory_space<vmem>>, %arg8: memref<32x64xf32, #tpu.memory_space<vmem>>, %arg9: memref<32x32xf32, #tpu.memory_space<vmem>>, %arg10: memref<1x32xf32, #tpu.memory_space<vmem>>, %arg11: memref<1x32xf32, #tpu.memory_space<vmem>>, %arg12: memref<1x32xf32, #tpu.memory_space<vmem>>, %arg13: memref<1x32xf32, #tpu.memory_space<vmem>>, %arg14: memref<32x128xf32, #tpu.memory_space<vmem>>, %arg15: memref<32x128xf32, #tpu.memory_space<vmem>>, %arg16: memref<128x32xf32, #tpu.memory_space<vmem>>, %arg17: memref<1x32xf32, #tpu.memory_space<vmem>>, %arg18: memref<1x32xf32, #tpu.memory_space<vmem>>, %arg19: memref<1x32xf32, #tpu.memory_space<vmem>>, %arg20: memref<1x32xf32, #tpu.memory_space<vmem>>, %arg21: memref<1x32xf32, #tpu.memory_space<vmem>>, %arg22: memref<1x32xf32, #tpu.memory_space<vmem>>, %arg23: memref<1x8x32xf32, #tpu.memory_space<vmem>>, %arg24: memref<1x8x32xf32, #tpu.memory_space<vmem>>, %arg25: memref<1x8x32xf32, #tpu.memory_space<vmem>>, %arg26: memref<1x8x32xf32, #tpu.memory_space<vmem>>, %arg27: memref<16x64xf32, #tpu.memory_space<vmem>>, %arg28: memref<8x32xf32, #tpu.memory_space<vmem>>) attributes {dimension_semantics = [#tpu.dimension_semantics<parallel>, #tpu.dimension_semantics<arbitrary>], iteration_bounds = array<i64: 2, 2>, scalar_prefetch = 0 : i64, scratch_operands = 2 : i64, tpu.core_type = #tpu.core_type<tc>, window_params = [{transform_indices = @transform_0, window_bounds = array<i64: 1, 16, 32>}, {transform_indices = @transform_1, window_bounds = array<i64: 1, 8, 32>}, {transform_indices = @transform_2, window_bounds = array<i64: 1, 8, 16>}, {transform_indices = @transform_3, window_bounds = array<i64: 1, 8, 16>}, {transform_indices = @transform_4, window_bounds = array<i64: 4>}, {pipeline_mode = #tpu.pipeline_mode<synchronous>, transform_indices = @transform_5, window_bounds = array<i64: 32, 32>}, {pipeline_mode = #tpu.pipeline_mode<synchronous>, transform_indices = @transform_6, window_bounds = array<i64: 32, 64>}, {pipeline_mode = #tpu.pipeline_mode<synchronous>, transform_indices = @transform_7, window_bounds = array<i64: 32, 32>}, {pipeline_mode = #tpu.pipeline_mode<synchronous>, transform_indices = @transform_8, window_bounds = array<i64: 1, 32>}, {pipeline_mode = #tpu.pipeline_mode<synchronous>, transform_indices = @transform_9, window_bounds = array<i64: 1, 32>}, {pipeline_mode = #tpu.pipeline_mode<synchronous>, transform_indices = @transform_10, window_bounds = array<i64: 1, 32>}, {pipeline_mode = #tpu.pipeline_mode<synchronous>, transform_indices = @transform_11, window_bounds = array<i64: 1, 32>}, {pipeline_mode = #tpu.pipeline_mode<synchronous>, transform_indices = @transform_12, window_bounds = array<i64: 32, 128>}, {pipeline_mode = #tpu.pipeline_mode<synchronous>, transform_indices = @transform_13, window_bounds = array<i64: 32, 128>}, {pipeline_mode = #tpu.pipeline_mode<synchronous>, transform_indices = @transform_14, window_bounds = array<i64: 128, 32>}, {pipeline_mode = #tpu.pipeline_mode<synchronous>, transform_indices = @transform_15, window_bounds = array<i64: 1, 32>}, {pipeline_mode = #tpu.pipeline_mode<synchronous>, transform_indices = @transform_16, window_bounds = array<i64: 1, 32>}, {pipeline_mode = #tpu.pipeline_mode<synchronous>, transform_indices = @transform_17, window_bounds = array<i64: 1, 32>}, {pipeline_mode = #tpu.pipeline_mode<synchronous>, transform_indices = @transform_18, window_bounds = array<i64: 1, 32>}, {pipeline_mode = #tpu.pipeline_mode<synchronous>, transform_indices = @transform_19, window_bounds = array<i64: 1, 32>}, {pipeline_mode = #tpu.pipeline_mode<synchronous>, transform_indices = @transform_20, window_bounds = array<i64: 1, 32>}, {transform_indices = @transform_21, window_bounds = array<i64: 1, 8, 32>}, {transform_indices = @transform_22, window_bounds = array<i64: 1, 8, 32>}, {transform_indices = @transform_23, window_bounds = array<i64: 1, 8, 32>}, {transform_indices = @transform_24, window_bounds = array<i64: 1, 8, 32>}]} {
    %c0 = arith.constant 0 : index
    %c0_0 = arith.constant 0 : index
    %0 = vector.load %arg10[%c0, %c0_0] : memref<1x32xf32, #tpu.memory_space<vmem>>, vector<1x32xf32>
    %1 = vector.shape_cast %0 : vector<1x32xf32> to vector<32xf32>
    %c0_1 = arith.constant 0 : index
    %c0_2 = arith.constant 0 : index
    %2 = vector.load %arg11[%c0_1, %c0_2] : memref<1x32xf32, #tpu.memory_space<vmem>>, vector<1x32xf32>
    %3 = vector.shape_cast %2 : vector<1x32xf32> to vector<32xf32>
    %c0_i32 = arith.constant 0 : i32
    %4 = arith.cmpi eq, %arg1, %c0_i32 : i32
    %5 = arith.extui %4 : i1 to i32
    %c0_i32_3 = arith.constant 0 : i32
    %6 = arith.cmpi ne, %5, %c0_i32_3 : i32
    scf.if %6 {
      %c0_113 = arith.constant 0 : index
      %c0_114 = arith.constant 0 : index
      %c0_115 = arith.constant 0 : index
      %251 = vector.load %arg2[%c0_113, %c0_114, %c0_115] : memref<1x16x32xf32, #tpu.memory_space<vmem>>, vector<1x16x32xf32>
      %252 = vector.shape_cast %251 : vector<1x16x32xf32> to vector<16x32xf32>
      %cst_116 = arith.constant dense<0.000000e+00> : vector<16xf32>
      %253 = vector.multi_reduction <add>, %252, %cst_116 [1] : vector<16x32xf32> to vector<16xf32>
      %254 = vector.shape_cast %253 : vector<16xf32> to vector<16x1xf32>
      %cst_117 = arith.constant 3.200000e+01 : f32
      %255 = vector.broadcast %cst_117 : f32 to vector<16x1xf32>
      %256 = arith.divf %254, %255 : vector<16x1xf32>
      %257 = vector.broadcast %256 : vector<16x1xf32> to vector<16x32xf32>
      %258 = arith.subf %252, %257 : vector<16x32xf32>
      %259 = arith.mulf %258, %258 : vector<16x32xf32>
      %cst_118 = arith.constant dense<0.000000e+00> : vector<16xf32>
      %260 = vector.multi_reduction <add>, %259, %cst_118 [1] : vector<16x32xf32> to vector<16xf32>
      %261 = vector.shape_cast %260 : vector<16xf32> to vector<16x1xf32>
      %cst_119 = arith.constant 3.200000e+01 : f32
      %262 = vector.broadcast %cst_119 : f32 to vector<16x1xf32>
      %263 = arith.divf %261, %262 : vector<16x1xf32>
      %264 = vector.broadcast %256 : vector<16x1xf32> to vector<16x32xf32>
      %265 = arith.subf %252, %264 : vector<16x32xf32>
      %cst_120 = arith.constant 9.99999974E-6 : f32
      %266 = vector.broadcast %cst_120 : f32 to vector<16x1xf32>
      %267 = arith.addf %263, %266 : vector<16x1xf32>
      %268 = math.rsqrt %267 : vector<16x1xf32>
      %269 = vector.broadcast %268 : vector<16x1xf32> to vector<16x32xf32>
      %270 = arith.mulf %265, %269 : vector<16x32xf32>
      %cst_121 = arith.constant dense<0.000000e+00> : vector<16xf32>
      %271 = vector.multi_reduction <add>, %270, %cst_121 [1] : vector<16x32xf32> to vector<16xf32>
      %272 = vector.shape_cast %271 : vector<16xf32> to vector<16x1xf32>
      %cst_122 = arith.constant 3.200000e+01 : f32
      %273 = vector.broadcast %cst_122 : f32 to vector<16x1xf32>
      %274 = arith.divf %272, %273 : vector<16x1xf32>
      %275 = vector.broadcast %274 : vector<16x1xf32> to vector<16x32xf32>
      %276 = arith.subf %270, %275 : vector<16x32xf32>
      %277 = arith.mulf %276, %276 : vector<16x32xf32>
      %cst_123 = arith.constant dense<0.000000e+00> : vector<16xf32>
      %278 = vector.multi_reduction <add>, %277, %cst_123 [1] : vector<16x32xf32> to vector<16xf32>
      %279 = vector.shape_cast %278 : vector<16xf32> to vector<16x1xf32>
      %cst_124 = arith.constant 3.200000e+01 : f32
      %280 = vector.broadcast %cst_124 : f32 to vector<16x1xf32>
      %281 = arith.divf %279, %280 : vector<16x1xf32>
      %282 = vector.broadcast %274 : vector<16x1xf32> to vector<16x32xf32>
      %283 = arith.subf %270, %282 : vector<16x32xf32>
      %cst_125 = arith.constant 9.99999974E-6 : f32
      %284 = vector.broadcast %cst_125 : f32 to vector<16x1xf32>
      %285 = arith.addf %281, %284 : vector<16x1xf32>
      %286 = math.rsqrt %285 : vector<16x1xf32>
      %287 = vector.broadcast %286 : vector<16x1xf32> to vector<16x32xf32>
      %288 = arith.mulf %283, %287 : vector<16x32xf32>
      %289 = vector.shape_cast %1 : vector<32xf32> to vector<1x32xf32>
      %290 = vector.broadcast %289 : vector<1x32xf32> to vector<16x32xf32>
      %291 = arith.mulf %288, %290 : vector<16x32xf32>
      %292 = vector.shape_cast %3 : vector<32xf32> to vector<1x32xf32>
      %293 = vector.broadcast %292 : vector<1x32xf32> to vector<16x32xf32>
      %294 = arith.addf %291, %293 : vector<16x32xf32>
      %c0_126 = arith.constant 0 : index
      %c0_127 = arith.constant 0 : index
      %295 = vector.load %arg8[%c0_126, %c0_127] : memref<32x64xf32, #tpu.memory_space<vmem>>, vector<32x64xf32>
      %cst_128 = arith.constant dense<0.000000e+00> : vector<16x64xf32>
      %296 = tpu.matmul %294, %295, %cst_128 {dimension_numbers = #tpu.dot_dimension_numbers<[1], [0], [0], [1], [0, 0, 1, 1], [], []>} : vector<16x32xf32>, vector<32x64xf32>, vector<16x64xf32> -> vector<16x64xf32>
      %c0_129 = arith.constant 0 : index
      %c0_130 = arith.constant 0 : index
      %297 = vector.load %arg27[%c0_129, %c0_130] : memref<16x64xf32, #tpu.memory_space<vmem>>, vector<16x64xf32>
      tpu.vector_store %arg27[%c0_129, %c0_130], %296 {strides = array<i32>} : memref<16x64xf32, #tpu.memory_space<vmem>>, vector<16x64xf32>,
    } else {
    }
    %c0_4 = arith.constant 0 : index
    %c0_5 = arith.constant 0 : index
    %c0_6 = arith.constant 0 : index
    %7 = vector.load %arg3[%c0_4, %c0_5, %c0_6] : memref<1x8x32xf32, #tpu.memory_space<vmem>>, vector<1x8x32xf32>
    %8 = vector.shape_cast %7 : vector<1x8x32xf32> to vector<8x32xf32>
    %cst = arith.constant dense<0.000000e+00> : vector<8xf32>
    %9 = vector.multi_reduction <add>, %8, %cst [1] : vector<8x32xf32> to vector<8xf32>
    %10 = vector.shape_cast %9 : vector<8xf32> to vector<8x1xf32>
    %cst_7 = arith.constant 3.200000e+01 : f32
    %11 = vector.broadcast %cst_7 : f32 to vector<8x1xf32>
    %12 = arith.divf %10, %11 : vector<8x1xf32>
    %13 = vector.broadcast %12 : vector<8x1xf32> to vector<8x32xf32>
    %14 = arith.subf %8, %13 : vector<8x32xf32>
    %15 = arith.mulf %14, %14 : vector<8x32xf32>
    %cst_8 = arith.constant dense<0.000000e+00> : vector<8xf32>
    %16 = vector.multi_reduction <add>, %15, %cst_8 [1] : vector<8x32xf32> to vector<8xf32>
    %17 = vector.shape_cast %16 : vector<8xf32> to vector<8x1xf32>
    %cst_9 = arith.constant 3.200000e+01 : f32
    %18 = vector.broadcast %cst_9 : f32 to vector<8x1xf32>
    %19 = arith.divf %17, %18 : vector<8x1xf32>
    %20 = vector.broadcast %12 : vector<8x1xf32> to vector<8x32xf32>
    %21 = arith.subf %8, %20 : vector<8x32xf32>
    %cst_10 = arith.constant 9.99999974E-6 : f32
    %22 = vector.broadcast %cst_10 : f32 to vector<8x1xf32>
    %23 = arith.addf %19, %22 : vector<8x1xf32>
    %24 = math.rsqrt %23 : vector<8x1xf32>
    %25 = vector.broadcast %24 : vector<8x1xf32> to vector<8x32xf32>
    %26 = arith.mulf %21, %25 : vector<8x32xf32>
    %cst_11 = arith.constant dense<0.000000e+00> : vector<8xf32>
    %27 = vector.multi_reduction <add>, %26, %cst_11 [1] : vector<8x32xf32> to vector<8xf32>
    %28 = vector.shape_cast %27 : vector<8xf32> to vector<8x1xf32>
    %cst_12 = arith.constant 3.200000e+01 : f32
    %29 = vector.broadcast %cst_12 : f32 to vector<8x1xf32>
    %30 = arith.divf %28, %29 : vector<8x1xf32>
    %31 = vector.broadcast %30 : vector<8x1xf32> to vector<8x32xf32>
    %32 = arith.subf %26, %31 : vector<8x32xf32>
    %33 = arith.mulf %32, %32 : vector<8x32xf32>
    %cst_13 = arith.constant dense<0.000000e+00> : vector<8xf32>
    %34 = vector.multi_reduction <add>, %33, %cst_13 [1] : vector<8x32xf32> to vector<8xf32>
    %35 = vector.shape_cast %34 : vector<8xf32> to vector<8x1xf32>
    %cst_14 = arith.constant 3.200000e+01 : f32
    %36 = vector.broadcast %cst_14 : f32 to vector<8x1xf32>
    %37 = arith.divf %35, %36 : vector<8x1xf32>
    %38 = vector.broadcast %30 : vector<8x1xf32> to vector<8x32xf32>
    %39 = arith.subf %26, %38 : vector<8x32xf32>
    %cst_15 = arith.constant 9.99999974E-6 : f32
    %40 = vector.broadcast %cst_15 : f32 to vector<8x1xf32>
    %41 = arith.addf %37, %40 : vector<8x1xf32>
    %42 = math.rsqrt %41 : vector<8x1xf32>
    %43 = vector.broadcast %42 : vector<8x1xf32> to vector<8x32xf32>
    %44 = arith.mulf %39, %43 : vector<8x32xf32>
    %45 = vector.shape_cast %1 : vector<32xf32> to vector<1x32xf32>
    %46 = vector.broadcast %45 : vector<1x32xf32> to vector<8x32xf32>
    %47 = arith.mulf %44, %46 : vector<8x32xf32>
    %48 = vector.shape_cast %3 : vector<32xf32> to vector<1x32xf32>
    %49 = vector.broadcast %48 : vector<1x32xf32> to vector<8x32xf32>
    %50 = arith.addf %47, %49 : vector<8x32xf32>
    %c0_16 = arith.constant 0 : index
    %c0_17 = arith.constant 0 : index
    %51 = vector.load %arg7[%c0_16, %c0_17] : memref<32x32xf32, #tpu.memory_space<vmem>>, vector<32x32xf32>
    %cst_18 = arith.constant dense<0.000000e+00> : vector<8x32xf32>
    %52 = tpu.matmul %50, %51, %cst_18 {dimension_numbers = #tpu.dot_dimension_numbers<[1], [0], [0], [1], [0, 0, 1, 1], [], []>} : vector<8x32xf32>, vector<32x32xf32>, vector<8x32xf32> -> vector<8x32xf32>
    %c0_19 = arith.constant 0 : index
    %c0_20 = arith.constant 0 : index
    %c0_21 = arith.constant 0 : index
    %53 = vector.load %arg4[%c0_19, %c0_20, %c0_21] : memref<1x8x16xf32, #tpu.memory_space<vmem>>, vector<1x8x16xf32>
    %54 = vector.shape_cast %53 : vector<1x8x16xf32> to vector<8x16xf32>
    %c0_22 = arith.constant 0 : index
    %c0_23 = arith.constant 0 : index
    %c0_24 = arith.constant 0 : index
    %55 = vector.load %arg5[%c0_22, %c0_23, %c0_24] : memref<1x8x16xf32, #tpu.memory_space<vmem>>, vector<1x8x16xf32>
    %56 = vector.shape_cast %55 : vector<1x8x16xf32> to vector<8x16xf32>
    %57 = vector.extract_strided_slice %52 {offsets = [0, 0], sizes = [8, 8], strides = [1, 1]} : vector<8x32xf32> to vector<8x8xf32>
    %c0_25 = arith.constant 0 : index
    %c0_26 = arith.constant 0 : index
    %58 = vector.load %arg27[%c0_25, %c0_26] : memref<16x64xf32, #tpu.memory_space<vmem>>, vector<16x8xf32>
    %c0_27 = arith.constant 0 : index
    %c32 = arith.constant 32 : index
    %59 = vector.load %arg27[%c0_27, %c32] : memref<16x64xf32, #tpu.memory_space<vmem>>, vector<16x8xf32>
    %cst_28 = arith.constant dense<0.000000e+00> : vector<8x16xf32>
    %60 = tpu.matmul %57, %58, %cst_28 {dimension_numbers = #tpu.dot_dimension_numbers<[1], [1], [0], [0], [0, 0, 1, 0], [], []>} : vector<8x8xf32>, vector<16x8xf32>, vector<8x16xf32> -> vector<8x16xf32>
    %c0_29 = arith.constant 0 : index
    %61 = memref.load %arg6[%c0_29] : memref<4xf32, #tpu.memory_space<smem>>
    %62 = vector.broadcast %61 : f32 to vector<8x16xf32>
    %63 = arith.mulf %62, %54 : vector<8x16xf32>
    %64 = arith.addf %56, %63 : vector<8x16xf32>
    %65 = arith.addf %60, %64 : vector<8x16xf32>
    %cst_30 = arith.constant dense<0xFF800000> : vector<8xf32>
    %66 = vector.multi_reduction <maximumf>, %65, %cst_30 [1] : vector<8x16xf32> to vector<8xf32>
    %67 = vector.shape_cast %66 : vector<8xf32> to vector<8x1xf32>
    %68 = vector.broadcast %67 : vector<8x1xf32> to vector<8x16xf32>
    %69 = arith.subf %65, %68 : vector<8x16xf32>
    %70 = math.exp %69 : vector<8x16xf32>
    %cst_31 = arith.constant dense<0.000000e+00> : vector<8xf32>
    %71 = vector.multi_reduction <add>, %70, %cst_31 [1] : vector<8x16xf32> to vector<8xf32>
    %72 = vector.shape_cast %71 : vector<8xf32> to vector<8x1xf32>
    %73 = tpu.reciprocal %72 : vector<8x1xf32> -> vector<8x1xf32>
    %74 = vector.broadcast %73 : vector<8x1xf32> to vector<8x16xf32>
    %75 = arith.mulf %70, %74 : vector<8x16xf32>
    %cst_32 = arith.constant dense<0.000000e+00> : vector<8x8xf32>
    %76 = tpu.matmul %75, %59, %cst_32 {dimension_numbers = #tpu.dot_dimension_numbers<[1], [0], [0], [1], [0, 0, 1, 1], [], []>} : vector<8x16xf32>, vector<16x8xf32>, vector<8x8xf32> -> vector<8x8xf32>
    %c0_33 = arith.constant 0 : index
    %c0_34 = arith.constant 0 : index
    %77 = vector.load %arg28[%c0_33, %c0_34] : memref<8x32xf32, #tpu.memory_space<vmem>>, vector<8x8xf32>
    tpu.vector_store %arg28[%c0_33, %c0_34], %76 {strides = array<i32>} : memref<8x32xf32, #tpu.memory_space<vmem>>, vector<8x8xf32>,
    %78 = vector.extract_strided_slice %52 {offsets = [0, 8], sizes = [8, 8], strides = [1, 1]} : vector<8x32xf32> to vector<8x8xf32>
    %c0_35 = arith.constant 0 : index
    %c8 = arith.constant 8 : index
    %79 = vector.load %arg27[%c0_35, %c8] : memref<16x64xf32, #tpu.memory_space<vmem>>, vector<16x8xf32>
    %c0_36 = arith.constant 0 : index
    %c40 = arith.constant 40 : index
    %80 = vector.load %arg27[%c0_36, %c40] : memref<16x64xf32, #tpu.memory_space<vmem>>, vector<16x8xf32>
    %cst_37 = arith.constant dense<0.000000e+00> : vector<8x16xf32>
    %81 = tpu.matmul %78, %79, %cst_37 {dimension_numbers = #tpu.dot_dimension_numbers<[1], [1], [0], [0], [0, 0, 1, 0], [], []>} : vector<8x8xf32>, vector<16x8xf32>, vector<8x16xf32> -> vector<8x16xf32>
    %c1 = arith.constant 1 : index
    %82 = memref.load %arg6[%c1] : memref<4xf32, #tpu.memory_space<smem>>
    %83 = vector.broadcast %82 : f32 to vector<8x16xf32>
    %84 = arith.mulf %83, %54 : vector<8x16xf32>
    %85 = arith.addf %56, %84 : vector<8x16xf32>
    %86 = arith.addf %81, %85 : vector<8x16xf32>
    %cst_38 = arith.constant dense<0xFF800000> : vector<8xf32>
    %87 = vector.multi_reduction <maximumf>, %86, %cst_38 [1] : vector<8x16xf32> to vector<8xf32>
    %88 = vector.shape_cast %87 : vector<8xf32> to vector<8x1xf32>
    %89 = vector.broadcast %88 : vector<8x1xf32> to vector<8x16xf32>
    %90 = arith.subf %86, %89 : vector<8x16xf32>
    %91 = math.exp %90 : vector<8x16xf32>
    %cst_39 = arith.constant dense<0.000000e+00> : vector<8xf32>
    %92 = vector.multi_reduction <add>, %91, %cst_39 [1] : vector<8x16xf32> to vector<8xf32>
    %93 = vector.shape_cast %92 : vector<8xf32> to vector<8x1xf32>
    %94 = tpu.reciprocal %93 : vector<8x1xf32> -> vector<8x1xf32>
    %95 = vector.broadcast %94 : vector<8x1xf32> to vector<8x16xf32>
    %96 = arith.mulf %91, %95 : vector<8x16xf32>
    %cst_40 = arith.constant dense<0.000000e+00> : vector<8x8xf32>
    %97 = tpu.matmul %96, %80, %cst_40 {dimension_numbers = #tpu.dot_dimension_numbers<[1], [0], [0], [1], [0, 0, 1, 1], [], []>} : vector<8x16xf32>, vector<16x8xf32>, vector<8x8xf32> -> vector<8x8xf32>
    %c0_41 = arith.constant 0 : index
    %c8_42 = arith.constant 8 : index
    %98 = vector.load %arg28[%c0_41, %c8_42] : memref<8x32xf32, #tpu.memory_space<vmem>>, vector<8x8xf32>
    tpu.vector_store %arg28[%c0_41, %c8_42], %97 {strides = array<i32>} : memref<8x32xf32, #tpu.memory_space<vmem>>, vector<8x8xf32>,
    %99 = vector.extract_strided_slice %52 {offsets = [0, 16], sizes = [8, 8], strides = [1, 1]} : vector<8x32xf32> to vector<8x8xf32>
    %c0_43 = arith.constant 0 : index
    %c16 = arith.constant 16 : index
    %100 = vector.load %arg27[%c0_43, %c16] : memref<16x64xf32, #tpu.memory_space<vmem>>, vector<16x8xf32>
    %c0_44 = arith.constant 0 : index
    %c48 = arith.constant 48 : index
    %101 = vector.load %arg27[%c0_44, %c48] : memref<16x64xf32, #tpu.memory_space<vmem>>, vector<16x8xf32>
    %cst_45 = arith.constant dense<0.000000e+00> : vector<8x16xf32>
    %102 = tpu.matmul %99, %100, %cst_45 {dimension_numbers = #tpu.dot_dimension_numbers<[1], [1], [0], [0], [0, 0, 1, 0], [], []>} : vector<8x8xf32>, vector<16x8xf32>, vector<8x16xf32> -> vector<8x16xf32>
    %c2 = arith.constant 2 : index
    %103 = memref.load %arg6[%c2] : memref<4xf32, #tpu.memory_space<smem>>
    %104 = vector.broadcast %103 : f32 to vector<8x16xf32>
    %105 = arith.mulf %104, %54 : vector<8x16xf32>
    %106 = arith.addf %56, %105 : vector<8x16xf32>
    %107 = arith.addf %102, %106 : vector<8x16xf32>
    %cst_46 = arith.constant dense<0xFF800000> : vector<8xf32>
    %108 = vector.multi_reduction <maximumf>, %107, %cst_46 [1] : vector<8x16xf32> to vector<8xf32>
    %109 = vector.shape_cast %108 : vector<8xf32> to vector<8x1xf32>
    %110 = vector.broadcast %109 : vector<8x1xf32> to vector<8x16xf32>
    %111 = arith.subf %107, %110 : vector<8x16xf32>
    %112 = math.exp %111 : vector<8x16xf32>
    %cst_47 = arith.constant dense<0.000000e+00> : vector<8xf32>
    %113 = vector.multi_reduction <add>, %112, %cst_47 [1] : vector<8x16xf32> to vector<8xf32>
    %114 = vector.shape_cast %113 : vector<8xf32> to vector<8x1xf32>
    %115 = tpu.reciprocal %114 : vector<8x1xf32> -> vector<8x1xf32>
    %116 = vector.broadcast %115 : vector<8x1xf32> to vector<8x16xf32>
    %117 = arith.mulf %112, %116 : vector<8x16xf32>
    %cst_48 = arith.constant dense<0.000000e+00> : vector<8x8xf32>
    %118 = tpu.matmul %117, %101, %cst_48 {dimension_numbers = #tpu.dot_dimension_numbers<[1], [0], [0], [1], [0, 0, 1, 1], [], []>} : vector<8x16xf32>, vector<16x8xf32>, vector<8x8xf32> -> vector<8x8xf32>
    %c0_49 = arith.constant 0 : index
    %c16_50 = arith.constant 16 : index
    %119 = vector.load %arg28[%c0_49, %c16_50] : memref<8x32xf32, #tpu.memory_space<vmem>>, vector<8x8xf32>
    tpu.vector_store %arg28[%c0_49, %c16_50], %118 {strides = array<i32>} : memref<8x32xf32, #tpu.memory_space<vmem>>, vector<8x8xf32>,
    %120 = vector.extract_strided_slice %52 {offsets = [0, 24], sizes = [8, 8], strides = [1, 1]} : vector<8x32xf32> to vector<8x8xf32>
    %c0_51 = arith.constant 0 : index
    %c24 = arith.constant 24 : index
    %121 = vector.load %arg27[%c0_51, %c24] : memref<16x64xf32, #tpu.memory_space<vmem>>, vector<16x8xf32>
    %c0_52 = arith.constant 0 : index
    %c56 = arith.constant 56 : index
    %122 = vector.load %arg27[%c0_52, %c56] : memref<16x64xf32, #tpu.memory_space<vmem>>, vector<16x8xf32>
    %cst_53 = arith.constant dense<0.000000e+00> : vector<8x16xf32>
    %123 = tpu.matmul %120, %121, %cst_53 {dimension_numbers = #tpu.dot_dimension_numbers<[1], [1], [0], [0], [0, 0, 1, 0], [], []>} : vector<8x8xf32>, vector<16x8xf32>, vector<8x16xf32> -> vector<8x16xf32>
    %c3 = arith.constant 3 : index
    %124 = memref.load %arg6[%c3] : memref<4xf32, #tpu.memory_space<smem>>
    %125 = vector.broadcast %124 : f32 to vector<8x16xf32>
    %126 = arith.mulf %125, %54 : vector<8x16xf32>
    %127 = arith.addf %56, %126 : vector<8x16xf32>
    %128 = arith.addf %123, %127 : vector<8x16xf32>
    %cst_54 = arith.constant dense<0xFF800000> : vector<8xf32>
    %129 = vector.multi_reduction <maximumf>, %128, %cst_54 [1] : vector<8x16xf32> to vector<8xf32>
    %130 = vector.shape_cast %129 : vector<8xf32> to vector<8x1xf32>
    %131 = vector.broadcast %130 : vector<8x1xf32> to vector<8x16xf32>
    %132 = arith.subf %128, %131 : vector<8x16xf32>
    %133 = math.exp %132 : vector<8x16xf32>
    %cst_55 = arith.constant dense<0.000000e+00> : vector<8xf32>
    %134 = vector.multi_reduction <add>, %133, %cst_55 [1] : vector<8x16xf32> to vector<8xf32>
    %135 = vector.shape_cast %134 : vector<8xf32> to vector<8x1xf32>
    %136 = tpu.reciprocal %135 : vector<8x1xf32> -> vector<8x1xf32>
    %137 = vector.broadcast %136 : vector<8x1xf32> to vector<8x16xf32>
    %138 = arith.mulf %133, %137 : vector<8x16xf32>
    %cst_56 = arith.constant dense<0.000000e+00> : vector<8x8xf32>
    %139 = tpu.matmul %138, %122, %cst_56 {dimension_numbers = #tpu.dot_dimension_numbers<[1], [0], [0], [1], [0, 0, 1, 1], [], []>} : vector<8x16xf32>, vector<16x8xf32>, vector<8x8xf32> -> vector<8x8xf32>
    %c0_57 = arith.constant 0 : index
    %c24_58 = arith.constant 24 : index
    %140 = vector.load %arg28[%c0_57, %c24_58] : memref<8x32xf32, #tpu.memory_space<vmem>>, vector<8x8xf32>
    tpu.vector_store %arg28[%c0_57, %c24_58], %139 {strides = array<i32>} : memref<8x32xf32, #tpu.memory_space<vmem>>, vector<8x8xf32>,
    %c0_59 = arith.constant 0 : index
    %c0_60 = arith.constant 0 : index
    %141 = vector.load %arg28[%c0_59, %c0_60] : memref<8x32xf32, #tpu.memory_space<vmem>>, vector<8x32xf32>
    %c0_61 = arith.constant 0 : index
    %c0_62 = arith.constant 0 : index
    %c0_63 = arith.constant 0 : index
    %142 = vector.load %arg25[%c0_61, %c0_62, %c0_63] : memref<1x8x32xf32, #tpu.memory_space<vmem>>, vector<1x8x32xf32>
    %143 = vector.shape_cast %142 : vector<1x8x32xf32> to vector<8x32xf32>
    %144 = vector.shape_cast %141 : vector<8x32xf32> to vector<1x8x32xf32>
    tpu.vector_store %arg25[%c0_61, %c0_62, %c0_63], %144 {strides = array<i32>} : memref<1x8x32xf32, #tpu.memory_space<vmem>>, vector<1x8x32xf32>,
    %c0_64 = arith.constant 0 : index
    %c0_65 = arith.constant 0 : index
    %145 = vector.load %arg9[%c0_64, %c0_65] : memref<32x32xf32, #tpu.memory_space<vmem>>, vector<32x32xf32>
    %cst_66 = arith.constant dense<0.000000e+00> : vector<8x32xf32>
    %146 = tpu.matmul %141, %145, %cst_66 {dimension_numbers = #tpu.dot_dimension_numbers<[1], [0], [0], [1], [0, 0, 1, 1], [], []>} : vector<8x32xf32>, vector<32x32xf32>, vector<8x32xf32> -> vector<8x32xf32>
    %c0_67 = arith.constant 0 : index
    %c0_68 = arith.constant 0 : index
    %147 = vector.load %arg12[%c0_67, %c0_68] : memref<1x32xf32, #tpu.memory_space<vmem>>, vector<1x32xf32>
    %148 = vector.shape_cast %147 : vector<1x32xf32> to vector<32xf32>
    %c0_69 = arith.constant 0 : index
    %c0_70 = arith.constant 0 : index
    %149 = vector.load %arg13[%c0_69, %c0_70] : memref<1x32xf32, #tpu.memory_space<vmem>>, vector<1x32xf32>
    %150 = vector.shape_cast %149 : vector<1x32xf32> to vector<32xf32>
    %cst_71 = arith.constant dense<0.000000e+00> : vector<8xf32>
    %151 = vector.multi_reduction <add>, %146, %cst_71 [1] : vector<8x32xf32> to vector<8xf32>
    %152 = vector.shape_cast %151 : vector<8xf32> to vector<8x1xf32>
    %cst_72 = arith.constant 3.200000e+01 : f32
    %153 = vector.broadcast %cst_72 : f32 to vector<8x1xf32>
    %154 = arith.divf %152, %153 : vector<8x1xf32>
    %155 = vector.broadcast %154 : vector<8x1xf32> to vector<8x32xf32>
    %156 = arith.subf %146, %155 : vector<8x32xf32>
    %157 = arith.mulf %156, %156 : vector<8x32xf32>
    %cst_73 = arith.constant dense<0.000000e+00> : vector<8xf32>
    %158 = vector.multi_reduction <add>, %157, %cst_73 [1] : vector<8x32xf32> to vector<8xf32>
    %159 = vector.shape_cast %158 : vector<8xf32> to vector<8x1xf32>
    %cst_74 = arith.constant 3.200000e+01 : f32
    %160 = vector.broadcast %cst_74 : f32 to vector<8x1xf32>
    %161 = arith.divf %159, %160 : vector<8x1xf32>
    %162 = vector.broadcast %154 : vector<8x1xf32> to vector<8x32xf32>
    %163 = arith.subf %146, %162 : vector<8x32xf32>
    %cst_75 = arith.constant 9.99999974E-6 : f32
    %164 = vector.broadcast %cst_75 : f32 to vector<8x1xf32>
    %165 = arith.addf %161, %164 : vector<8x1xf32>
    %166 = math.rsqrt %165 : vector<8x1xf32>
    %167 = vector.broadcast %166 : vector<8x1xf32> to vector<8x32xf32>
    %168 = arith.mulf %163, %167 : vector<8x32xf32>
    %169 = vector.shape_cast %148 : vector<32xf32> to vector<1x32xf32>
    %170 = vector.broadcast %169 : vector<1x32xf32> to vector<8x32xf32>
    %171 = arith.mulf %168, %170 : vector<8x32xf32>
    %172 = vector.shape_cast %150 : vector<32xf32> to vector<1x32xf32>
    %173 = vector.broadcast %172 : vector<1x32xf32> to vector<8x32xf32>
    %174 = arith.addf %171, %173 : vector<8x32xf32>
    %175 = arith.addf %26, %174 : vector<8x32xf32>
    %c0_76 = arith.constant 0 : index
    %c0_77 = arith.constant 0 : index
    %176 = vector.load %arg17[%c0_76, %c0_77] : memref<1x32xf32, #tpu.memory_space<vmem>>, vector<1x32xf32>
    %177 = vector.shape_cast %176 : vector<1x32xf32> to vector<32xf32>
    %c0_78 = arith.constant 0 : index
    %c0_79 = arith.constant 0 : index
    %178 = vector.load %arg18[%c0_78, %c0_79] : memref<1x32xf32, #tpu.memory_space<vmem>>, vector<1x32xf32>
    %179 = vector.shape_cast %178 : vector<1x32xf32> to vector<32xf32>
    %cst_80 = arith.constant dense<0.000000e+00> : vector<8xf32>
    %180 = vector.multi_reduction <add>, %175, %cst_80 [1] : vector<8x32xf32> to vector<8xf32>
    %181 = vector.shape_cast %180 : vector<8xf32> to vector<8x1xf32>
    %cst_81 = arith.constant 3.200000e+01 : f32
    %182 = vector.broadcast %cst_81 : f32 to vector<8x1xf32>
    %183 = arith.divf %181, %182 : vector<8x1xf32>
    %184 = vector.broadcast %183 : vector<8x1xf32> to vector<8x32xf32>
    %185 = arith.subf %175, %184 : vector<8x32xf32>
    %186 = arith.mulf %185, %185 : vector<8x32xf32>
    %cst_82 = arith.constant dense<0.000000e+00> : vector<8xf32>
    %187 = vector.multi_reduction <add>, %186, %cst_82 [1] : vector<8x32xf32> to vector<8xf32>
    %188 = vector.shape_cast %187 : vector<8xf32> to vector<8x1xf32>
    %cst_83 = arith.constant 3.200000e+01 : f32
    %189 = vector.broadcast %cst_83 : f32 to vector<8x1xf32>
    %190 = arith.divf %188, %189 : vector<8x1xf32>
    %191 = vector.broadcast %183 : vector<8x1xf32> to vector<8x32xf32>
    %192 = arith.subf %175, %191 : vector<8x32xf32>
    %cst_84 = arith.constant 9.99999974E-6 : f32
    %193 = vector.broadcast %cst_84 : f32 to vector<8x1xf32>
    %194 = arith.addf %190, %193 : vector<8x1xf32>
    %195 = math.rsqrt %194 : vector<8x1xf32>
    %196 = vector.broadcast %195 : vector<8x1xf32> to vector<8x32xf32>
    %197 = arith.mulf %192, %196 : vector<8x32xf32>
    %198 = vector.shape_cast %177 : vector<32xf32> to vector<1x32xf32>
    %199 = vector.broadcast %198 : vector<1x32xf32> to vector<8x32xf32>
    %200 = arith.mulf %197, %199 : vector<8x32xf32>
    %201 = vector.shape_cast %179 : vector<32xf32> to vector<1x32xf32>
    %202 = vector.broadcast %201 : vector<1x32xf32> to vector<8x32xf32>
    %203 = arith.addf %200, %202 : vector<8x32xf32>
    %cst_85 = arith.constant 0.000000e+00 : f32
    %204 = vector.broadcast %cst_85 : f32 to vector<8x32xf32>
    %c0_86 = arith.constant 0 : index
    %c0_87 = arith.constant 0 : index
    %205 = vector.load %arg14[%c0_86, %c0_87] : memref<32x128xf32, #tpu.memory_space<vmem>>, vector<32x128xf32>
    %cst_88 = arith.constant dense<0.000000e+00> : vector<8x128xf32>
    %206 = tpu.matmul %203, %205, %cst_88 {dimension_numbers = #tpu.dot_dimension_numbers<[1], [0], [0], [1], [0, 0, 1, 1], [], []>} : vector<8x32xf32>, vector<32x128xf32>, vector<8x128xf32> -> vector<8x128xf32>
    %c0_89 = arith.constant 0 : index
    %c0_90 = arith.constant 0 : index
    %207 = vector.load %arg15[%c0_89, %c0_90] : memref<32x128xf32, #tpu.memory_space<vmem>>, vector<32x128xf32>
    %cst_91 = arith.constant dense<0.000000e+00> : vector<8x128xf32>
    %208 = tpu.matmul %203, %207, %cst_91 {dimension_numbers = #tpu.dot_dimension_numbers<[1], [0], [0], [1], [0, 0, 1, 1], [], []>} : vector<8x32xf32>, vector<32x128xf32>, vector<8x128xf32> -> vector<8x128xf32>
    %209 = arith.mulf %206, %208 : vector<8x128xf32>
    %c0_92 = arith.constant 0 : index
    %c0_93 = arith.constant 0 : index
    %210 = vector.load %arg16[%c0_92, %c0_93] : memref<128x32xf32, #tpu.memory_space<vmem>>, vector<128x32xf32>
    %cst_94 = arith.constant dense<0.000000e+00> : vector<8x32xf32>
    %211 = tpu.matmul %209, %210, %cst_94 {dimension_numbers = #tpu.dot_dimension_numbers<[1], [0], [0], [1], [0, 0, 1, 1], [], []>} : vector<8x128xf32>, vector<128x32xf32>, vector<8x32xf32> -> vector<8x32xf32>
    %212 = arith.addf %204, %211 : vector<8x32xf32>
    %c0_95 = arith.constant 0 : index
    %c0_96 = arith.constant 0 : index
    %213 = vector.load %arg19[%c0_95, %c0_96] : memref<1x32xf32, #tpu.memory_space<vmem>>, vector<1x32xf32>
    %214 = vector.shape_cast %213 : vector<1x32xf32> to vector<32xf32>
    %c0_97 = arith.constant 0 : index
    %c0_98 = arith.constant 0 : index
    %215 = vector.load %arg20[%c0_97, %c0_98] : memref<1x32xf32, #tpu.memory_space<vmem>>, vector<1x32xf32>
    %216 = vector.shape_cast %215 : vector<1x32xf32> to vector<32xf32>
    %cst_99 = arith.constant dense<0.000000e+00> : vector<8xf32>
    %217 = vector.multi_reduction <add>, %212, %cst_99 [1] : vector<8x32xf32> to vector<8xf32>
    %218 = vector.shape_cast %217 : vector<8xf32> to vector<8x1xf32>
    %cst_100 = arith.constant 3.200000e+01 : f32
    %219 = vector.broadcast %cst_100 : f32 to vector<8x1xf32>
    %220 = arith.divf %218, %219 : vector<8x1xf32>
    %221 = vector.broadcast %220 : vector<8x1xf32> to vector<8x32xf32>
    %222 = arith.subf %212, %221 : vector<8x32xf32>
    %223 = arith.mulf %222, %222 : vector<8x32xf32>
    %cst_101 = arith.constant dense<0.000000e+00> : vector<8xf32>
    %224 = vector.multi_reduction <add>, %223, %cst_101 [1] : vector<8x32xf32> to vector<8xf32>
    %225 = vector.shape_cast %224 : vector<8xf32> to vector<8x1xf32>
    %cst_102 = arith.constant 3.200000e+01 : f32
    %226 = vector.broadcast %cst_102 : f32 to vector<8x1xf32>
    %227 = arith.divf %225, %226 : vector<8x1xf32>
    %228 = vector.broadcast %220 : vector<8x1xf32> to vector<8x32xf32>
    %229 = arith.subf %212, %228 : vector<8x32xf32>
    %cst_103 = arith.constant 9.99999974E-6 : f32
    %230 = vector.broadcast %cst_103 : f32 to vector<8x1xf32>
    %231 = arith.addf %227, %230 : vector<8x1xf32>
    %232 = math.rsqrt %231 : vector<8x1xf32>
    %233 = vector.broadcast %232 : vector<8x1xf32> to vector<8x32xf32>
    %234 = arith.mulf %229, %233 : vector<8x32xf32>
    %235 = vector.shape_cast %214 : vector<32xf32> to vector<1x32xf32>
    %236 = vector.broadcast %235 : vector<1x32xf32> to vector<8x32xf32>
    %237 = arith.mulf %234, %236 : vector<8x32xf32>
    %238 = vector.shape_cast %216 : vector<32xf32> to vector<1x32xf32>
    %239 = vector.broadcast %238 : vector<1x32xf32> to vector<8x32xf32>
    %240 = arith.addf %237, %239 : vector<8x32xf32>
    %241 = arith.addf %175, %240 : vector<8x32xf32>
    %c0_104 = arith.constant 0 : index
    %c0_105 = arith.constant 0 : index
    %c0_106 = arith.constant 0 : index
    %242 = vector.load %arg23[%c0_104, %c0_105, %c0_106] : memref<1x8x32xf32, #tpu.memory_space<vmem>>, vector<1x8x32xf32>
    %243 = vector.shape_cast %242 : vector<1x8x32xf32> to vector<8x32xf32>
    %244 = vector.shape_cast %241 : vector<8x32xf32> to vector<1x8x32xf32>
    tpu.vector_store %arg23[%c0_104, %c0_105, %c0_106], %244 {strides = array<i32>} : memref<1x8x32xf32, #tpu.memory_space<vmem>>, vector<1x8x32xf32>,
    %c0_107 = arith.constant 0 : index
    %c0_108 = arith.constant 0 : index
    %c0_109 = arith.constant 0 : index
    %245 = vector.load %arg24[%c0_107, %c0_108, %c0_109] : memref<1x8x32xf32, #tpu.memory_space<vmem>>, vector<1x8x32xf32>
    %246 = vector.shape_cast %245 : vector<1x8x32xf32> to vector<8x32xf32>
    %247 = vector.shape_cast %175 : vector<8x32xf32> to vector<1x8x32xf32>
    tpu.vector_store %arg24[%c0_107, %c0_108, %c0_109], %247 {strides = array<i32>} : memref<1x8x32xf32, #tpu.memory_space<vmem>>, vector<1x8x32xf32>,
    %c0_110 = arith.constant 0 : index
    %c0_111 = arith.constant 0 : index
    %c0_112 = arith.constant 0 : index
    %248 = vector.load %arg26[%c0_110, %c0_111, %c0_112] : memref<1x8x32xf32, #tpu.memory_space<vmem>>, vector<1x8x32xf32>
    %249 = vector.shape_cast %248 : vector<1x8x32xf32> to vector<8x32xf32>
    %250 = vector.shape_cast %212 : vector<8x32xf32> to vector<1x8x32xf32>
    tpu.vector_store %arg26[%c0_110, %c0_111, %c0_112], %250 {strides = array<i32>} : memref<1x8x32xf32, #tpu.memory_space<vmem>>, vector<1x8x32xf32>,
    return
  }
  func.func @transform_0(%arg0: i32, %arg1: i32) -> (i32, i32, i32) {
    %c0_i32 = arith.constant 0 : i32
    %c0_i32_0 = arith.constant 0 : i32
    %c0_i32_1 = arith.constant 0 : i32
    return %arg0, %c0_i32, %c0_i32_0 : i32, i32, i32
  }
  func.func @transform_1(%arg0: i32, %arg1: i32) -> (i32, i32, i32) {
    %c0_i32 = arith.constant 0 : i32
    %c0_i32_0 = arith.constant 0 : i32
    return %arg0, %arg1, %c0_i32 : i32, i32, i32
  }
  func.func @transform_2(%arg0: i32, %arg1: i32) -> (i32, i32, i32) {
    %c0_i32 = arith.constant 0 : i32
    %c0_i32_0 = arith.constant 0 : i32
    return %arg0, %arg1, %c0_i32 : i32, i32, i32
  }
  func.func @transform_3(%arg0: i32, %arg1: i32) -> (i32, i32, i32) {
    %c0_i32 = arith.constant 0 : i32
    %c0_i32_0 = arith.constant 0 : i32
    return %arg0, %arg1, %c0_i32 : i32, i32, i32
  }
  func.func @transform_4(%arg0: i32, %arg1: i32) -> i32 {
    %c0_i32 = arith.constant 0 : i32
    %c0_i32_0 = arith.constant 0 : i32
    return %c0_i32 : i32
  }
  func.func @transform_5(%arg0: i32, %arg1: i32) -> (i32, i32) {
    %c0_i32 = arith.constant 0 : i32
    %c0_i32_0 = arith.constant 0 : i32
    %c0_i32_1 = arith.constant 0 : i32
    return %c0_i32, %c0_i32_0 : i32, i32
  }
  func.func @transform_6(%arg0: i32, %arg1: i32) -> (i32, i32) {
    %c0_i32 = arith.constant 0 : i32
    %c0_i32_0 = arith.constant 0 : i32
    %c0_i32_1 = arith.constant 0 : i32
    return %c0_i32, %c0_i32_0 : i32, i32
  }
  func.func @transform_7(%arg0: i32, %arg1: i32) -> (i32, i32) {
    %c0_i32 = arith.constant 0 : i32
    %c0_i32_0 = arith.constant 0 : i32
    %c0_i32_1 = arith.constant 0 : i32
    return %c0_i32, %c0_i32_0 : i32, i32
  }
  func.func @transform_8(%arg0: i32, %arg1: i32) -> (i32, i32) {
    %c0_i32 = arith.constant 0 : i32
    %c0_i32_0 = arith.constant 0 : i32
    %c0_i32_1 = arith.constant 0 : i32
    return %c0_i32, %c0_i32_0 : i32, i32
  }
  func.func @transform_9(%arg0: i32, %arg1: i32) -> (i32, i32) {
    %c0_i32 = arith.constant 0 : i32
    %c0_i32_0 = arith.constant 0 : i32
    %c0_i32_1 = arith.constant 0 : i32
    return %c0_i32, %c0_i32_0 : i32, i32
  }
  func.func @transform_10(%arg0: i32, %arg1: i32) -> (i32, i32) {
    %c0_i32 = arith.constant 0 : i32
    %c0_i32_0 = arith.constant 0 : i32
    %c0_i32_1 = arith.constant 0 : i32
    return %c0_i32, %c0_i32_0 : i32, i32
  }
  func.func @transform_11(%arg0: i32, %arg1: i32) -> (i32, i32) {
    %c0_i32 = arith.constant 0 : i32
    %c0_i32_0 = arith.constant 0 : i32
    %c0_i32_1 = arith.constant 0 : i32
    return %c0_i32, %c0_i32_0 : i32, i32
  }
  func.func @transform_12(%arg0: i32, %arg1: i32) -> (i32, i32) {
    %c0_i32 = arith.constant 0 : i32
    %c0_i32_0 = arith.constant 0 : i32
    %c0_i32_1 = arith.constant 0 : i32
    return %c0_i32, %c0_i32_0 : i32, i32
  }
  func.func @transform_13(%arg0: i32, %arg1: i32) -> (i32, i32) {
    %c0_i32 = arith.constant 0 : i32
    %c0_i32_0 = arith.constant 0 : i32
    %c0_i32_1 = arith.constant 0 : i32
    return %c0_i32, %c0_i32_0 : i32, i32
  }
  func.func @transform_14(%arg0: i32, %arg1: i32) -> (i32, i32) {
    %c0_i32 = arith.constant 0 : i32
    %c0_i32_0 = arith.constant 0 : i32
    %c0_i32_1 = arith.constant 0 : i32
    return %c0_i32, %c0_i32_0 : i32, i32
  }
  func.func @transform_15(%arg0: i32, %arg1: i32) -> (i32, i32) {
    %c0_i32 = arith.constant 0 : i32
    %c0_i32_0 = arith.constant 0 : i32
    %c0_i32_1 = arith.constant 0 : i32
    return %c0_i32, %c0_i32_0 : i32, i32
  }
  func.func @transform_16(%arg0: i32, %arg1: i32) -> (i32, i32) {
    %c0_i32 = arith.constant 0 : i32
    %c0_i32_0 = arith.constant 0 : i32
    %c0_i32_1 = arith.constant 0 : i32
    return %c0_i32, %c0_i32_0 : i32, i32
  }
  func.func @transform_17(%arg0: i32, %arg1: i32) -> (i32, i32) {
    %c0_i32 = arith.constant 0 : i32
    %c0_i32_0 = arith.constant 0 : i32
    %c0_i32_1 = arith.constant 0 : i32
    return %c0_i32, %c0_i32_0 : i32, i32
  }
  func.func @transform_18(%arg0: i32, %arg1: i32) -> (i32, i32) {
    %c0_i32 = arith.constant 0 : i32
    %c0_i32_0 = arith.constant 0 : i32
    %c0_i32_1 = arith.constant 0 : i32
    return %c0_i32, %c0_i32_0 : i32, i32
  }
  func.func @transform_19(%arg0: i32, %arg1: i32) -> (i32, i32) {
    %c0_i32 = arith.constant 0 : i32
    %c0_i32_0 = arith.constant 0 : i32
    %c0_i32_1 = arith.constant 0 : i32
    return %c0_i32, %c0_i32_0 : i32, i32
  }
  func.func @transform_20(%arg0: i32, %arg1: i32) -> (i32, i32) {
    %c0_i32 = arith.constant 0 : i32
    %c0_i32_0 = arith.constant 0 : i32
    %c0_i32_1 = arith.constant 0 : i32
    return %c0_i32, %c0_i32_0 : i32, i32
  }
  func.func @transform_21(%arg0: i32, %arg1: i32) -> (i32, i32, i32) {
    %c0_i32 = arith.constant 0 : i32
    %c0_i32_0 = arith.constant 0 : i32
    return %arg0, %arg1, %c0_i32 : i32, i32, i32
  }
  func.func @transform_22(%arg0: i32, %arg1: i32) -> (i32, i32, i32) {
    %c0_i32 = arith.constant 0 : i32
    %c0_i32_0 = arith.constant 0 : i32
    return %arg0, %arg1, %c0_i32 : i32, i32, i32
  }
  func.func @transform_23(%arg0: i32, %arg1: i32) -> (i32, i32, i32) {
    %c0_i32 = arith.constant 0 : i32
    %c0_i32_0 = arith.constant 0 : i32
    return %arg0, %arg1, %c0_i32 : i32, i32, i32
  }
  func.func @transform_24(%arg0: i32, %arg1: i32) -> (i32, i32, i32) {
    %c0_i32 = arith.constant 0 : i32
    %c0_i32_0 = arith.constant 0 : i32
    return %arg0, %arg1, %c0_i32 : i32, i32, i32
  }
}

module attributes {stable_mosaic.version = 11 : i64} {
  func.func @graph_layer_kernel(%arg0: i32, %arg1: i32, %arg2: memref<1x16x32xf32, #tpu.memory_space<vmem>>, %arg3: memref<1x8x32xf32, #tpu.memory_space<vmem>>, %arg4: memref<1x8x16xf32, #tpu.memory_space<vmem>>, %arg5: memref<1x8x16xf32, #tpu.memory_space<vmem>>, %arg6: memref<4xf32, #tpu.memory_space<smem>>, %arg7: memref<32x32xf32, #tpu.memory_space<vmem>>, %arg8: memref<32x64xf32, #tpu.memory_space<vmem>>, %arg9: memref<32x32xf32, #tpu.memory_space<vmem>>, %arg10: memref<1x32xf32, #tpu.memory_space<vmem>>, %arg11: memref<1x32xf32, #tpu.memory_space<vmem>>, %arg12: memref<1x32xf32, #tpu.memory_space<vmem>>, %arg13: memref<1x32xf32, #tpu.memory_space<vmem>>, %arg14: memref<32x128xf32, #tpu.memory_space<vmem>>, %arg15: memref<32x128xf32, #tpu.memory_space<vmem>>, %arg16: memref<128x32xf32, #tpu.memory_space<vmem>>, %arg17: memref<1x32xf32, #tpu.memory_space<vmem>>, %arg18: memref<1x32xf32, #tpu.memory_space<vmem>>, %arg19: memref<1x32xf32, #tpu.memory_space<vmem>>, %arg20: memref<1x32xf32, #tpu.memory_space<vmem>>, %arg21: memref<1x32xf32, #tpu.memory_space<vmem>>, %arg22: memref<1x32xf32, #tpu.memory_space<vmem>>, %arg23: memref<1x8x32xf32, #tpu.memory_space<vmem>>, %arg24: memref<1x8x32xf32, #tpu.memory_space<vmem>>, %arg25: memref<1x8x32xf32, #tpu.memory_space<vmem>>, %arg26: memref<1x8x32xf32, #tpu.memory_space<vmem>>, %arg27: memref<16x64xf32, #tpu.memory_space<vmem>>, %arg28: memref<8x32xf32, #tpu.memory_space<vmem>>) attributes {dimension_semantics = [#tpu.dimension_semantics<parallel>, #tpu.dimension_semantics<arbitrary>], iteration_bounds = array<i64: 2, 2>, scalar_prefetch = 0 : i64, scratch_operands = 2 : i64, tpu.core_type = #tpu.core_type<tc>, window_params = [{transform_indices = @transform_0, window_bounds = array<i64: 1, 16, 32>}, {transform_indices = @transform_1, window_bounds = array<i64: 1, 8, 32>}, {transform_indices = @transform_2, window_bounds = array<i64: 1, 8, 16>}, {transform_indices = @transform_3, window_bounds = array<i64: 1, 8, 16>}, {transform_indices = @transform_4, window_bounds = array<i64: 4>}, {pipeline_mode = #tpu.pipeline_mode<synchronous>, transform_indices = @transform_5, window_bounds = array<i64: 32, 32>}, {pipeline_mode = #tpu.pipeline_mode<synchronous>, transform_indices = @transform_6, window_bounds = array<i64: 32, 64>}, {pipeline_mode = #tpu.pipeline_mode<synchronous>, transform_indices = @transform_7, window_bounds = array<i64: 32, 32>}, {pipeline_mode = #tpu.pipeline_mode<synchronous>, transform_indices = @transform_8, window_bounds = array<i64: 1, 32>}, {pipeline_mode = #tpu.pipeline_mode<synchronous>, transform_indices = @transform_9, window_bounds = array<i64: 1, 32>}, {pipeline_mode = #tpu.pipeline_mode<synchronous>, transform_indices = @transform_10, window_bounds = array<i64: 1, 32>}, {pipeline_mode = #tpu.pipeline_mode<synchronous>, transform_indices = @transform_11, window_bounds = array<i64: 1, 32>}, {pipeline_mode = #tpu.pipeline_mode<synchronous>, transform_indices = @transform_12, window_bounds = array<i64: 32, 128>}, {pipeline_mode = #tpu.pipeline_mode<synchronous>, transform_indices = @transform_13, window_bounds = array<i64: 32, 128>}, {pipeline_mode = #tpu.pipeline_mode<synchronous>, transform_indices = @transform_14, window_bounds = array<i64: 128, 32>}, {pipeline_mode = #tpu.pipeline_mode<synchronous>, transform_indices = @transform_15, window_bounds = array<i64: 1, 32>}, {pipeline_mode = #tpu.pipeline_mode<synchronous>, transform_indices = @transform_16, window_bounds = array<i64: 1, 32>}, {pipeline_mode = #tpu.pipeline_mode<synchronous>, transform_indices = @transform_17, window_bounds = array<i64: 1, 32>}, {pipeline_mode = #tpu.pipeline_mode<synchronous>, transform_indices = @transform_18, window_bounds = array<i64: 1, 32>}, {pipeline_mode = #tpu.pipeline_mode<synchronous>, transform_indices = @transform_19, window_bounds = array<i64: 1, 32>}, {pipeline_mode = #tpu.pipeline_mode<synchronous>, transform_indices = @transform_20, window_bounds = array<i64: 1, 32>}, {transform_indices = @transform_21, window_bounds = array<i64: 1, 8, 32>}, {transform_indices = @transform_22, window_bounds = array<i64: 1, 8, 32>}, {transform_indices = @transform_23, window_bounds = array<i64: 1, 8, 32>}, {transform_indices = @transform_24, window_bounds = array<i64: 1, 8, 32>}]} {
    %c0 = arith.constant 0 : index
    %c0_0 = arith.constant 0 : index
    %0 = vector.load %arg10[%c0, %c0_0] : memref<1x32xf32, #tpu.memory_space<vmem>>, vector<1x32xf32>
    %1 = vector.shape_cast %0 : vector<1x32xf32> to vector<32xf32>
    %c0_1 = arith.constant 0 : index
    %c0_2 = arith.constant 0 : index
    %2 = vector.load %arg11[%c0_1, %c0_2] : memref<1x32xf32, #tpu.memory_space<vmem>>, vector<1x32xf32>
    %3 = vector.shape_cast %2 : vector<1x32xf32> to vector<32xf32>
    %c0_i32 = arith.constant 0 : i32
    %4 = arith.cmpi eq, %arg1, %c0_i32 : i32
    %5 = arith.extui %4 : i1 to i32
    %c0_i32_3 = arith.constant 0 : i32
    %6 = arith.cmpi ne, %5, %c0_i32_3 : i32
    scf.if %6 {
      %c0_113 = arith.constant 0 : index
      %c0_114 = arith.constant 0 : index
      %c0_115 = arith.constant 0 : index
      %251 = vector.load %arg2[%c0_113, %c0_114, %c0_115] : memref<1x16x32xf32, #tpu.memory_space<vmem>>, vector<1x16x32xf32>
      %252 = vector.shape_cast %251 : vector<1x16x32xf32> to vector<16x32xf32>
      %cst_116 = arith.constant dense<0.000000e+00> : vector<16xf32>
      %253 = vector.multi_reduction <add>, %252, %cst_116 [1] : vector<16x32xf32> to vector<16xf32>
      %254 = vector.shape_cast %253 : vector<16xf32> to vector<16x1xf32>
      %cst_117 = arith.constant 3.200000e+01 : f32
      %255 = vector.broadcast %cst_117 : f32 to vector<16x1xf32>
      %256 = arith.divf %254, %255 : vector<16x1xf32>
      %257 = vector.broadcast %256 : vector<16x1xf32> to vector<16x32xf32>
      %258 = arith.subf %252, %257 : vector<16x32xf32>
      %259 = arith.mulf %258, %258 : vector<16x32xf32>
      %cst_118 = arith.constant dense<0.000000e+00> : vector<16xf32>
      %260 = vector.multi_reduction <add>, %259, %cst_118 [1] : vector<16x32xf32> to vector<16xf32>
      %261 = vector.shape_cast %260 : vector<16xf32> to vector<16x1xf32>
      %cst_119 = arith.constant 3.200000e+01 : f32
      %262 = vector.broadcast %cst_119 : f32 to vector<16x1xf32>
      %263 = arith.divf %261, %262 : vector<16x1xf32>
      %264 = vector.broadcast %256 : vector<16x1xf32> to vector<16x32xf32>
      %265 = arith.subf %252, %264 : vector<16x32xf32>
      %cst_120 = arith.constant 9.99999974E-6 : f32
      %266 = vector.broadcast %cst_120 : f32 to vector<16x1xf32>
      %267 = arith.addf %263, %266 : vector<16x1xf32>
      %268 = math.rsqrt %267 : vector<16x1xf32>
      %269 = vector.broadcast %268 : vector<16x1xf32> to vector<16x32xf32>
      %270 = arith.mulf %265, %269 : vector<16x32xf32>
      %cst_121 = arith.constant dense<0.000000e+00> : vector<16xf32>
      %271 = vector.multi_reduction <add>, %270, %cst_121 [1] : vector<16x32xf32> to vector<16xf32>
      %272 = vector.shape_cast %271 : vector<16xf32> to vector<16x1xf32>
      %cst_122 = arith.constant 3.200000e+01 : f32
      %273 = vector.broadcast %cst_122 : f32 to vector<16x1xf32>
      %274 = arith.divf %272, %273 : vector<16x1xf32>
      %275 = vector.broadcast %274 : vector<16x1xf32> to vector<16x32xf32>
      %276 = arith.subf %270, %275 : vector<16x32xf32>
      %277 = arith.mulf %276, %276 : vector<16x32xf32>
      %cst_123 = arith.constant dense<0.000000e+00> : vector<16xf32>
      %278 = vector.multi_reduction <add>, %277, %cst_123 [1] : vector<16x32xf32> to vector<16xf32>
      %279 = vector.shape_cast %278 : vector<16xf32> to vector<16x1xf32>
      %cst_124 = arith.constant 3.200000e+01 : f32
      %280 = vector.broadcast %cst_124 : f32 to vector<16x1xf32>
      %281 = arith.divf %279, %280 : vector<16x1xf32>
      %282 = vector.broadcast %274 : vector<16x1xf32> to vector<16x32xf32>
      %283 = arith.subf %270, %282 : vector<16x32xf32>
      %cst_125 = arith.constant 9.99999974E-6 : f32
      %284 = vector.broadcast %cst_125 : f32 to vector<16x1xf32>
      %285 = arith.addf %281, %284 : vector<16x1xf32>
      %286 = math.rsqrt %285 : vector<16x1xf32>
      %287 = vector.broadcast %286 : vector<16x1xf32> to vector<16x32xf32>
      %288 = arith.mulf %283, %287 : vector<16x32xf32>
      %289 = vector.shape_cast %1 : vector<32xf32> to vector<1x32xf32>
      %290 = vector.broadcast %289 : vector<1x32xf32> to vector<16x32xf32>
      %291 = arith.mulf %288, %290 : vector<16x32xf32>
      %292 = vector.shape_cast %3 : vector<32xf32> to vector<1x32xf32>
      %293 = vector.broadcast %292 : vector<1x32xf32> to vector<16x32xf32>
      %294 = arith.addf %291, %293 : vector<16x32xf32>
      %c0_126 = arith.constant 0 : index
      %c0_127 = arith.constant 0 : index
      %295 = vector.load %arg8[%c0_126, %c0_127] : memref<32x64xf32, #tpu.memory_space<vmem>>, vector<32x64xf32>
      %cst_128 = arith.constant dense<0.000000e+00> : vector<16x64xf32>
      %296 = tpu.matmul %294, %295, %cst_128 {dimension_numbers = #tpu.dot_dimension_numbers<[1], [0], [0], [1], [0, 0, 1, 1], [], []>} : vector<16x32xf32>, vector<32x64xf32>, vector<16x64xf32> -> vector<16x64xf32>
      %c0_129 = arith.constant 0 : index
      %c0_130 = arith.constant 0 : index
      %297 = vector.load %arg27[%c0_129, %c0_130] : memref<16x64xf32, #tpu.memory_space<vmem>>, vector<16x64xf32>
      tpu.vector_store %arg27[%c0_129, %c0_130], %296 {strides = array<i32>} : memref<16x64xf32, #tpu.memory_space<vmem>>, vector<16x64xf32>,
    } else {
    }
    %c0_4 = arith.constant 0 : index
    %c0_5 = arith.constant 0 : index
    %c0_6 = arith.constant 0 : index
    %7 = vector.load %arg3[%c0_4, %c0_5, %c0_6] : memref<1x8x32xf32, #tpu.memory_space<vmem>>, vector<1x8x32xf32>
    %8 = vector.shape_cast %7 : vector<1x8x32xf32> to vector<8x32xf32>
    %cst = arith.constant dense<0.000000e+00> : vector<8xf32>
    %9 = vector.multi_reduction <add>, %8, %cst [1] : vector<8x32xf32> to vector<8xf32>
    %10 = vector.shape_cast %9 : vector<8xf32> to vector<8x1xf32>
    %cst_7 = arith.constant 3.200000e+01 : f32
    %11 = vector.broadcast %cst_7 : f32 to vector<8x1xf32>
    %12 = arith.divf %10, %11 : vector<8x1xf32>
    %13 = vector.broadcast %12 : vector<8x1xf32> to vector<8x32xf32>
    %14 = arith.subf %8, %13 : vector<8x32xf32>
    %15 = arith.mulf %14, %14 : vector<8x32xf32>
    %cst_8 = arith.constant dense<0.000000e+00> : vector<8xf32>
    %16 = vector.multi_reduction <add>, %15, %cst_8 [1] : vector<8x32xf32> to vector<8xf32>
    %17 = vector.shape_cast %16 : vector<8xf32> to vector<8x1xf32>
    %cst_9 = arith.constant 3.200000e+01 : f32
    %18 = vector.broadcast %cst_9 : f32 to vector<8x1xf32>
    %19 = arith.divf %17, %18 : vector<8x1xf32>
    %20 = vector.broadcast %12 : vector<8x1xf32> to vector<8x32xf32>
    %21 = arith.subf %8, %20 : vector<8x32xf32>
    %cst_10 = arith.constant 9.99999974E-6 : f32
    %22 = vector.broadcast %cst_10 : f32 to vector<8x1xf32>
    %23 = arith.addf %19, %22 : vector<8x1xf32>
    %24 = math.rsqrt %23 : vector<8x1xf32>
    %25 = vector.broadcast %24 : vector<8x1xf32> to vector<8x32xf32>
    %26 = arith.mulf %21, %25 : vector<8x32xf32>
    %cst_11 = arith.constant dense<0.000000e+00> : vector<8xf32>
    %27 = vector.multi_reduction <add>, %26, %cst_11 [1] : vector<8x32xf32> to vector<8xf32>
    %28 = vector.shape_cast %27 : vector<8xf32> to vector<8x1xf32>
    %cst_12 = arith.constant 3.200000e+01 : f32
    %29 = vector.broadcast %cst_12 : f32 to vector<8x1xf32>
    %30 = arith.divf %28, %29 : vector<8x1xf32>
    %31 = vector.broadcast %30 : vector<8x1xf32> to vector<8x32xf32>
    %32 = arith.subf %26, %31 : vector<8x32xf32>
    %33 = arith.mulf %32, %32 : vector<8x32xf32>
    %cst_13 = arith.constant dense<0.000000e+00> : vector<8xf32>
    %34 = vector.multi_reduction <add>, %33, %cst_13 [1] : vector<8x32xf32> to vector<8xf32>
    %35 = vector.shape_cast %34 : vector<8xf32> to vector<8x1xf32>
    %cst_14 = arith.constant 3.200000e+01 : f32
    %36 = vector.broadcast %cst_14 : f32 to vector<8x1xf32>
    %37 = arith.divf %35, %36 : vector<8x1xf32>
    %38 = vector.broadcast %30 : vector<8x1xf32> to vector<8x32xf32>
    %39 = arith.subf %26, %38 : vector<8x32xf32>
    %cst_15 = arith.constant 9.99999974E-6 : f32
    %40 = vector.broadcast %cst_15 : f32 to vector<8x1xf32>
    %41 = arith.addf %37, %40 : vector<8x1xf32>
    %42 = math.rsqrt %41 : vector<8x1xf32>
    %43 = vector.broadcast %42 : vector<8x1xf32> to vector<8x32xf32>
    %44 = arith.mulf %39, %43 : vector<8x32xf32>
    %45 = vector.shape_cast %1 : vector<32xf32> to vector<1x32xf32>
    %46 = vector.broadcast %45 : vector<1x32xf32> to vector<8x32xf32>
    %47 = arith.mulf %44, %46 : vector<8x32xf32>
    %48 = vector.shape_cast %3 : vector<32xf32> to vector<1x32xf32>
    %49 = vector.broadcast %48 : vector<1x32xf32> to vector<8x32xf32>
    %50 = arith.addf %47, %49 : vector<8x32xf32>
    %c0_16 = arith.constant 0 : index
    %c0_17 = arith.constant 0 : index
    %51 = vector.load %arg7[%c0_16, %c0_17] : memref<32x32xf32, #tpu.memory_space<vmem>>, vector<32x32xf32>
    %cst_18 = arith.constant dense<0.000000e+00> : vector<8x32xf32>
    %52 = tpu.matmul %50, %51, %cst_18 {dimension_numbers = #tpu.dot_dimension_numbers<[1], [0], [0], [1], [0, 0, 1, 1], [], []>} : vector<8x32xf32>, vector<32x32xf32>, vector<8x32xf32> -> vector<8x32xf32>
    %c0_19 = arith.constant 0 : index
    %c0_20 = arith.constant 0 : index
    %c0_21 = arith.constant 0 : index
    %53 = vector.load %arg4[%c0_19, %c0_20, %c0_21] : memref<1x8x16xf32, #tpu.memory_space<vmem>>, vector<1x8x16xf32>
    %54 = vector.shape_cast %53 : vector<1x8x16xf32> to vector<8x16xf32>
    %c0_22 = arith.constant 0 : index
    %c0_23 = arith.constant 0 : index
    %c0_24 = arith.constant 0 : index
    %55 = vector.load %arg5[%c0_22, %c0_23, %c0_24] : memref<1x8x16xf32, #tpu.memory_space<vmem>>, vector<1x8x16xf32>
    %56 = vector.shape_cast %55 : vector<1x8x16xf32> to vector<8x16xf32>
    %57 = vector.extract_strided_slice %52 {offsets = [0, 0], sizes = [8, 8], strides = [1, 1]} : vector<8x32xf32> to vector<8x8xf32>
    %c0_25 = arith.constant 0 : index
    %c0_26 = arith.constant 0 : index
    %58 = vector.load %arg27[%c0_25, %c0_26] : memref<16x64xf32, #tpu.memory_space<vmem>>, vector<16x8xf32>
    %c0_27 = arith.constant 0 : index
    %c32 = arith.constant 32 : index
    %59 = vector.load %arg27[%c0_27, %c32] : memref<16x64xf32, #tpu.memory_space<vmem>>, vector<16x8xf32>
    %cst_28 = arith.constant dense<0.000000e+00> : vector<8x16xf32>
    %60 = tpu.matmul %57, %58, %cst_28 {dimension_numbers = #tpu.dot_dimension_numbers<[1], [1], [0], [0], [0, 0, 1, 0], [], []>} : vector<8x8xf32>, vector<16x8xf32>, vector<8x16xf32> -> vector<8x16xf32>
    %c0_29 = arith.constant 0 : index
    %61 = memref.load %arg6[%c0_29] : memref<4xf32, #tpu.memory_space<smem>>
    %62 = vector.broadcast %61 : f32 to vector<8x16xf32>
    %63 = arith.mulf %62, %54 : vector<8x16xf32>
    %64 = arith.addf %56, %63 : vector<8x16xf32>
    %65 = arith.addf %60, %64 : vector<8x16xf32>
    %cst_30 = arith.constant dense<0xFF800000> : vector<8xf32>
    %66 = vector.multi_reduction <maximumf>, %65, %cst_30 [1] : vector<8x16xf32> to vector<8xf32>
    %67 = vector.shape_cast %66 : vector<8xf32> to vector<8x1xf32>
    %68 = vector.broadcast %67 : vector<8x1xf32> to vector<8x16xf32>
    %69 = arith.subf %65, %68 : vector<8x16xf32>
    %70 = math.exp %69 : vector<8x16xf32>
    %cst_31 = arith.constant dense<0.000000e+00> : vector<8xf32>
    %71 = vector.multi_reduction <add>, %70, %cst_31 [1] : vector<8x16xf32> to vector<8xf32>
    %72 = vector.shape_cast %71 : vector<8xf32> to vector<8x1xf32>
    %73 = tpu.reciprocal %72 : vector<8x1xf32> -> vector<8x1xf32>
    %74 = vector.broadcast %73 : vector<8x1xf32> to vector<8x16xf32>
    %75 = arith.mulf %70, %74 : vector<8x16xf32>
    %cst_32 = arith.constant dense<0.000000e+00> : vector<8x8xf32>
    %76 = tpu.matmul %75, %59, %cst_32 {dimension_numbers = #tpu.dot_dimension_numbers<[1], [0], [0], [1], [0, 0, 1, 1], [], []>} : vector<8x16xf32>, vector<16x8xf32>, vector<8x8xf32> -> vector<8x8xf32>
    %c0_33 = arith.constant 0 : index
    %c0_34 = arith.constant 0 : index
    %77 = vector.load %arg28[%c0_33, %c0_34] : memref<8x32xf32, #tpu.memory_space<vmem>>, vector<8x8xf32>
    tpu.vector_store %arg28[%c0_33, %c0_34], %76 {strides = array<i32>} : memref<8x32xf32, #tpu.memory_space<vmem>>, vector<8x8xf32>,
    %78 = vector.extract_strided_slice %52 {offsets = [0, 8], sizes = [8, 8], strides = [1, 1]} : vector<8x32xf32> to vector<8x8xf32>
    %c0_35 = arith.constant 0 : index
    %c8 = arith.constant 8 : index
    %79 = vector.load %arg27[%c0_35, %c8] : memref<16x64xf32, #tpu.memory_space<vmem>>, vector<16x8xf32>
    %c0_36 = arith.constant 0 : index
    %c40 = arith.constant 40 : index
    %80 = vector.load %arg27[%c0_36, %c40] : memref<16x64xf32, #tpu.memory_space<vmem>>, vector<16x8xf32>
    %cst_37 = arith.constant dense<0.000000e+00> : vector<8x16xf32>
    %81 = tpu.matmul %78, %79, %cst_37 {dimension_numbers = #tpu.dot_dimension_numbers<[1], [1], [0], [0], [0, 0, 1, 0], [], []>} : vector<8x8xf32>, vector<16x8xf32>, vector<8x16xf32> -> vector<8x16xf32>
    %c1 = arith.constant 1 : index
    %82 = memref.load %arg6[%c1] : memref<4xf32, #tpu.memory_space<smem>>
    %83 = vector.broadcast %82 : f32 to vector<8x16xf32>
    %84 = arith.mulf %83, %54 : vector<8x16xf32>
    %85 = arith.addf %56, %84 : vector<8x16xf32>
    %86 = arith.addf %81, %85 : vector<8x16xf32>
    %cst_38 = arith.constant dense<0xFF800000> : vector<8xf32>
    %87 = vector.multi_reduction <maximumf>, %86, %cst_38 [1] : vector<8x16xf32> to vector<8xf32>
    %88 = vector.shape_cast %87 : vector<8xf32> to vector<8x1xf32>
    %89 = vector.broadcast %88 : vector<8x1xf32> to vector<8x16xf32>
    %90 = arith.subf %86, %89 : vector<8x16xf32>
    %91 = math.exp %90 : vector<8x16xf32>
    %cst_39 = arith.constant dense<0.000000e+00> : vector<8xf32>
    %92 = vector.multi_reduction <add>, %91, %cst_39 [1] : vector<8x16xf32> to vector<8xf32>
    %93 = vector.shape_cast %92 : vector<8xf32> to vector<8x1xf32>
    %94 = tpu.reciprocal %93 : vector<8x1xf32> -> vector<8x1xf32>
    %95 = vector.broadcast %94 : vector<8x1xf32> to vector<8x16xf32>
    %96 = arith.mulf %91, %95 : vector<8x16xf32>
    %cst_40 = arith.constant dense<0.000000e+00> : vector<8x8xf32>
    %97 = tpu.matmul %96, %80, %cst_40 {dimension_numbers = #tpu.dot_dimension_numbers<[1], [0], [0], [1], [0, 0, 1, 1], [], []>} : vector<8x16xf32>, vector<16x8xf32>, vector<8x8xf32> -> vector<8x8xf32>
    %c0_41 = arith.constant 0 : index
    %c8_42 = arith.constant 8 : index
    %98 = vector.load %arg28[%c0_41, %c8_42] : memref<8x32xf32, #tpu.memory_space<vmem>>, vector<8x8xf32>
    tpu.vector_store %arg28[%c0_41, %c8_42], %97 {strides = array<i32>} : memref<8x32xf32, #tpu.memory_space<vmem>>, vector<8x8xf32>,
    %99 = vector.extract_strided_slice %52 {offsets = [0, 16], sizes = [8, 8], strides = [1, 1]} : vector<8x32xf32> to vector<8x8xf32>
    %c0_43 = arith.constant 0 : index
    %c16 = arith.constant 16 : index
    %100 = vector.load %arg27[%c0_43, %c16] : memref<16x64xf32, #tpu.memory_space<vmem>>, vector<16x8xf32>
    %c0_44 = arith.constant 0 : index
    %c48 = arith.constant 48 : index
    %101 = vector.load %arg27[%c0_44, %c48] : memref<16x64xf32, #tpu.memory_space<vmem>>, vector<16x8xf32>
    %cst_45 = arith.constant dense<0.000000e+00> : vector<8x16xf32>
    %102 = tpu.matmul %99, %100, %cst_45 {dimension_numbers = #tpu.dot_dimension_numbers<[1], [1], [0], [0], [0, 0, 1, 0], [], []>} : vector<8x8xf32>, vector<16x8xf32>, vector<8x16xf32> -> vector<8x16xf32>
    %c2 = arith.constant 2 : index
    %103 = memref.load %arg6[%c2] : memref<4xf32, #tpu.memory_space<smem>>
    %104 = vector.broadcast %103 : f32 to vector<8x16xf32>
    %105 = arith.mulf %104, %54 : vector<8x16xf32>
    %106 = arith.addf %56, %105 : vector<8x16xf32>
    %107 = arith.addf %102, %106 : vector<8x16xf32>
    %cst_46 = arith.constant dense<0xFF800000> : vector<8xf32>
    %108 = vector.multi_reduction <maximumf>, %107, %cst_46 [1] : vector<8x16xf32> to vector<8xf32>
    %109 = vector.shape_cast %108 : vector<8xf32> to vector<8x1xf32>
    %110 = vector.broadcast %109 : vector<8x1xf32> to vector<8x16xf32>
    %111 = arith.subf %107, %110 : vector<8x16xf32>
    %112 = math.exp %111 : vector<8x16xf32>
    %cst_47 = arith.constant dense<0.000000e+00> : vector<8xf32>
    %113 = vector.multi_reduction <add>, %112, %cst_47 [1] : vector<8x16xf32> to vector<8xf32>
    %114 = vector.shape_cast %113 : vector<8xf32> to vector<8x1xf32>
    %115 = tpu.reciprocal %114 : vector<8x1xf32> -> vector<8x1xf32>
    %116 = vector.broadcast %115 : vector<8x1xf32> to vector<8x16xf32>
    %117 = arith.mulf %112, %116 : vector<8x16xf32>
    %cst_48 = arith.constant dense<0.000000e+00> : vector<8x8xf32>
    %118 = tpu.matmul %117, %101, %cst_48 {dimension_numbers = #tpu.dot_dimension_numbers<[1], [0], [0], [1], [0, 0, 1, 1], [], []>} : vector<8x16xf32>, vector<16x8xf32>, vector<8x8xf32> -> vector<8x8xf32>
    %c0_49 = arith.constant 0 : index
    %c16_50 = arith.constant 16 : index
    %119 = vector.load %arg28[%c0_49, %c16_50] : memref<8x32xf32, #tpu.memory_space<vmem>>, vector<8x8xf32>
    tpu.vector_store %arg28[%c0_49, %c16_50], %118 {strides = array<i32>} : memref<8x32xf32, #tpu.memory_space<vmem>>, vector<8x8xf32>,
    %120 = vector.extract_strided_slice %52 {offsets = [0, 24], sizes = [8, 8], strides = [1, 1]} : vector<8x32xf32> to vector<8x8xf32>
    %c0_51 = arith.constant 0 : index
    %c24 = arith.constant 24 : index
    %121 = vector.load %arg27[%c0_51, %c24] : memref<16x64xf32, #tpu.memory_space<vmem>>, vector<16x8xf32>
    %c0_52 = arith.constant 0 : index
    %c56 = arith.constant 56 : index
    %122 = vector.load %arg27[%c0_52, %c56] : memref<16x64xf32, #tpu.memory_space<vmem>>, vector<16x8xf32>
    %cst_53 = arith.constant dense<0.000000e+00> : vector<8x16xf32>
    %123 = tpu.matmul %120, %121, %cst_53 {dimension_numbers = #tpu.dot_dimension_numbers<[1], [1], [0], [0], [0, 0, 1, 0], [], []>} : vector<8x8xf32>, vector<16x8xf32>, vector<8x16xf32> -> vector<8x16xf32>
    %c3 = arith.constant 3 : index
    %124 = memref.load %arg6[%c3] : memref<4xf32, #tpu.memory_space<smem>>
    %125 = vector.broadcast %124 : f32 to vector<8x16xf32>
    %126 = arith.mulf %125, %54 : vector<8x16xf32>
    %127 = arith.addf %56, %126 : vector<8x16xf32>
    %128 = arith.addf %123, %127 : vector<8x16xf32>
    %cst_54 = arith.constant dense<0xFF800000> : vector<8xf32>
    %129 = vector.multi_reduction <maximumf>, %128, %cst_54 [1] : vector<8x16xf32> to vector<8xf32>
    %130 = vector.shape_cast %129 : vector<8xf32> to vector<8x1xf32>
    %131 = vector.broadcast %130 : vector<8x1xf32> to vector<8x16xf32>
    %132 = arith.subf %128, %131 : vector<8x16xf32>
    %133 = math.exp %132 : vector<8x16xf32>
    %cst_55 = arith.constant dense<0.000000e+00> : vector<8xf32>
    %134 = vector.multi_reduction <add>, %133, %cst_55 [1] : vector<8x16xf32> to vector<8xf32>
    %135 = vector.shape_cast %134 : vector<8xf32> to vector<8x1xf32>
    %136 = tpu.reciprocal %135 : vector<8x1xf32> -> vector<8x1xf32>
    %137 = vector.broadcast %136 : vector<8x1xf32> to vector<8x16xf32>
    %138 = arith.mulf %133, %137 : vector<8x16xf32>
    %cst_56 = arith.constant dense<0.000000e+00> : vector<8x8xf32>
    %139 = tpu.matmul %138, %122, %cst_56 {dimension_numbers = #tpu.dot_dimension_numbers<[1], [0], [0], [1], [0, 0, 1, 1], [], []>} : vector<8x16xf32>, vector<16x8xf32>, vector<8x8xf32> -> vector<8x8xf32>
    %c0_57 = arith.constant 0 : index
    %c24_58 = arith.constant 24 : index
    %140 = vector.load %arg28[%c0_57, %c24_58] : memref<8x32xf32, #tpu.memory_space<vmem>>, vector<8x8xf32>
    tpu.vector_store %arg28[%c0_57, %c24_58], %139 {strides = array<i32>} : memref<8x32xf32, #tpu.memory_space<vmem>>, vector<8x8xf32>,
    %c0_59 = arith.constant 0 : index
    %c0_60 = arith.constant 0 : index
    %141 = vector.load %arg28[%c0_59, %c0_60] : memref<8x32xf32, #tpu.memory_space<vmem>>, vector<8x32xf32>
    %c0_61 = arith.constant 0 : index
    %c0_62 = arith.constant 0 : index
    %c0_63 = arith.constant 0 : index
    %142 = vector.load %arg25[%c0_61, %c0_62, %c0_63] : memref<1x8x32xf32, #tpu.memory_space<vmem>>, vector<1x8x32xf32>
    %143 = vector.shape_cast %142 : vector<1x8x32xf32> to vector<8x32xf32>
    %144 = vector.shape_cast %141 : vector<8x32xf32> to vector<1x8x32xf32>
    tpu.vector_store %arg25[%c0_61, %c0_62, %c0_63], %144 {strides = array<i32>} : memref<1x8x32xf32, #tpu.memory_space<vmem>>, vector<1x8x32xf32>,
    %c0_64 = arith.constant 0 : index
    %c0_65 = arith.constant 0 : index
    %145 = vector.load %arg9[%c0_64, %c0_65] : memref<32x32xf32, #tpu.memory_space<vmem>>, vector<32x32xf32>
    %cst_66 = arith.constant dense<0.000000e+00> : vector<8x32xf32>
    %146 = tpu.matmul %141, %145, %cst_66 {dimension_numbers = #tpu.dot_dimension_numbers<[1], [0], [0], [1], [0, 0, 1, 1], [], []>} : vector<8x32xf32>, vector<32x32xf32>, vector<8x32xf32> -> vector<8x32xf32>
    %c0_67 = arith.constant 0 : index
    %c0_68 = arith.constant 0 : index
    %147 = vector.load %arg12[%c0_67, %c0_68] : memref<1x32xf32, #tpu.memory_space<vmem>>, vector<1x32xf32>
    %148 = vector.shape_cast %147 : vector<1x32xf32> to vector<32xf32>
    %c0_69 = arith.constant 0 : index
    %c0_70 = arith.constant 0 : index
    %149 = vector.load %arg13[%c0_69, %c0_70] : memref<1x32xf32, #tpu.memory_space<vmem>>, vector<1x32xf32>
    %150 = vector.shape_cast %149 : vector<1x32xf32> to vector<32xf32>
    %cst_71 = arith.constant dense<0.000000e+00> : vector<8xf32>
    %151 = vector.multi_reduction <add>, %146, %cst_71 [1] : vector<8x32xf32> to vector<8xf32>
    %152 = vector.shape_cast %151 : vector<8xf32> to vector<8x1xf32>
    %cst_72 = arith.constant 3.200000e+01 : f32
    %153 = vector.broadcast %cst_72 : f32 to vector<8x1xf32>
    %154 = arith.divf %152, %153 : vector<8x1xf32>
    %155 = vector.broadcast %154 : vector<8x1xf32> to vector<8x32xf32>
    %156 = arith.subf %146, %155 : vector<8x32xf32>
    %157 = arith.mulf %156, %156 : vector<8x32xf32>
    %cst_73 = arith.constant dense<0.000000e+00> : vector<8xf32>
    %158 = vector.multi_reduction <add>, %157, %cst_73 [1] : vector<8x32xf32> to vector<8xf32>
    %159 = vector.shape_cast %158 : vector<8xf32> to vector<8x1xf32>
    %cst_74 = arith.constant 3.200000e+01 : f32
    %160 = vector.broadcast %cst_74 : f32 to vector<8x1xf32>
    %161 = arith.divf %159, %160 : vector<8x1xf32>
    %162 = vector.broadcast %154 : vector<8x1xf32> to vector<8x32xf32>
    %163 = arith.subf %146, %162 : vector<8x32xf32>
    %cst_75 = arith.constant 9.99999974E-6 : f32
    %164 = vector.broadcast %cst_75 : f32 to vector<8x1xf32>
    %165 = arith.addf %161, %164 : vector<8x1xf32>
    %166 = math.rsqrt %165 : vector<8x1xf32>
    %167 = vector.broadcast %166 : vector<8x1xf32> to vector<8x32xf32>
    %168 = arith.mulf %163, %167 : vector<8x32xf32>
    %169 = vector.shape_cast %148 : vector<32xf32> to vector<1x32xf32>
    %170 = vector.broadcast %169 : vector<1x32xf32> to vector<8x32xf32>
    %171 = arith.mulf %168, %170 : vector<8x32xf32>
    %172 = vector.shape_cast %150 : vector<32xf32> to vector<1x32xf32>
    %173 = vector.broadcast %172 : vector<1x32xf32> to vector<8x32xf32>
    %174 = arith.addf %171, %173 : vector<8x32xf32>
    %175 = arith.addf %26, %174 : vector<8x32xf32>
    %c0_76 = arith.constant 0 : index
    %c0_77 = arith.constant 0 : index
    %176 = vector.load %arg17[%c0_76, %c0_77] : memref<1x32xf32, #tpu.memory_space<vmem>>, vector<1x32xf32>
    %177 = vector.shape_cast %176 : vector<1x32xf32> to vector<32xf32>
    %c0_78 = arith.constant 0 : index
    %c0_79 = arith.constant 0 : index
    %178 = vector.load %arg18[%c0_78, %c0_79] : memref<1x32xf32, #tpu.memory_space<vmem>>, vector<1x32xf32>
    %179 = vector.shape_cast %178 : vector<1x32xf32> to vector<32xf32>
    %cst_80 = arith.constant dense<0.000000e+00> : vector<8xf32>
    %180 = vector.multi_reduction <add>, %175, %cst_80 [1] : vector<8x32xf32> to vector<8xf32>
    %181 = vector.shape_cast %180 : vector<8xf32> to vector<8x1xf32>
    %cst_81 = arith.constant 3.200000e+01 : f32
    %182 = vector.broadcast %cst_81 : f32 to vector<8x1xf32>
    %183 = arith.divf %181, %182 : vector<8x1xf32>
    %184 = vector.broadcast %183 : vector<8x1xf32> to vector<8x32xf32>
    %185 = arith.subf %175, %184 : vector<8x32xf32>
    %186 = arith.mulf %185, %185 : vector<8x32xf32>
    %cst_82 = arith.constant dense<0.000000e+00> : vector<8xf32>
    %187 = vector.multi_reduction <add>, %186, %cst_82 [1] : vector<8x32xf32> to vector<8xf32>
    %188 = vector.shape_cast %187 : vector<8xf32> to vector<8x1xf32>
    %cst_83 = arith.constant 3.200000e+01 : f32
    %189 = vector.broadcast %cst_83 : f32 to vector<8x1xf32>
    %190 = arith.divf %188, %189 : vector<8x1xf32>
    %191 = vector.broadcast %183 : vector<8x1xf32> to vector<8x32xf32>
    %192 = arith.subf %175, %191 : vector<8x32xf32>
    %cst_84 = arith.constant 9.99999974E-6 : f32
    %193 = vector.broadcast %cst_84 : f32 to vector<8x1xf32>
    %194 = arith.addf %190, %193 : vector<8x1xf32>
    %195 = math.rsqrt %194 : vector<8x1xf32>
    %196 = vector.broadcast %195 : vector<8x1xf32> to vector<8x32xf32>
    %197 = arith.mulf %192, %196 : vector<8x32xf32>
    %198 = vector.shape_cast %177 : vector<32xf32> to vector<1x32xf32>
    %199 = vector.broadcast %198 : vector<1x32xf32> to vector<8x32xf32>
    %200 = arith.mulf %197, %199 : vector<8x32xf32>
    %201 = vector.shape_cast %179 : vector<32xf32> to vector<1x32xf32>
    %202 = vector.broadcast %201 : vector<1x32xf32> to vector<8x32xf32>
    %203 = arith.addf %200, %202 : vector<8x32xf32>
    %cst_85 = arith.constant 0.000000e+00 : f32
    %204 = vector.broadcast %cst_85 : f32 to vector<8x32xf32>
    %c0_86 = arith.constant 0 : index
    %c0_87 = arith.constant 0 : index
    %205 = vector.load %arg14[%c0_86, %c0_87] : memref<32x128xf32, #tpu.memory_space<vmem>>, vector<32x128xf32>
    %cst_88 = arith.constant dense<0.000000e+00> : vector<8x128xf32>
    %206 = tpu.matmul %203, %205, %cst_88 {dimension_numbers = #tpu.dot_dimension_numbers<[1], [0], [0], [1], [0, 0, 1, 1], [], []>} : vector<8x32xf32>, vector<32x128xf32>, vector<8x128xf32> -> vector<8x128xf32>
    %c0_89 = arith.constant 0 : index
    %c0_90 = arith.constant 0 : index
    %207 = vector.load %arg15[%c0_89, %c0_90] : memref<32x128xf32, #tpu.memory_space<vmem>>, vector<32x128xf32>
    %cst_91 = arith.constant dense<0.000000e+00> : vector<8x128xf32>
    %208 = tpu.matmul %203, %207, %cst_91 {dimension_numbers = #tpu.dot_dimension_numbers<[1], [0], [0], [1], [0, 0, 1, 1], [], []>} : vector<8x32xf32>, vector<32x128xf32>, vector<8x128xf32> -> vector<8x128xf32>
    %209 = arith.mulf %206, %208 : vector<8x128xf32>
    %c0_92 = arith.constant 0 : index
    %c0_93 = arith.constant 0 : index
    %210 = vector.load %arg16[%c0_92, %c0_93] : memref<128x32xf32, #tpu.memory_space<vmem>>, vector<128x32xf32>
    %cst_94 = arith.constant dense<0.000000e+00> : vector<8x32xf32>
    %211 = tpu.matmul %209, %210, %cst_94 {dimension_numbers = #tpu.dot_dimension_numbers<[1], [0], [0], [1], [0, 0, 1, 1], [], []>} : vector<8x128xf32>, vector<128x32xf32>, vector<8x32xf32> -> vector<8x32xf32>
    %212 = arith.addf %204, %211 : vector<8x32xf32>
    %c0_95 = arith.constant 0 : index
    %c0_96 = arith.constant 0 : index
    %213 = vector.load %arg19[%c0_95, %c0_96] : memref<1x32xf32, #tpu.memory_space<vmem>>, vector<1x32xf32>
    %214 = vector.shape_cast %213 : vector<1x32xf32> to vector<32xf32>
    %c0_97 = arith.constant 0 : index
    %c0_98 = arith.constant 0 : index
    %215 = vector.load %arg20[%c0_97, %c0_98] : memref<1x32xf32, #tpu.memory_space<vmem>>, vector<1x32xf32>
    %216 = vector.shape_cast %215 : vector<1x32xf32> to vector<32xf32>
    %cst_99 = arith.constant dense<0.000000e+00> : vector<8xf32>
    %217 = vector.multi_reduction <add>, %212, %cst_99 [1] : vector<8x32xf32> to vector<8xf32>
    %218 = vector.shape_cast %217 : vector<8xf32> to vector<8x1xf32>
    %cst_100 = arith.constant 3.200000e+01 : f32
    %219 = vector.broadcast %cst_100 : f32 to vector<8x1xf32>
    %220 = arith.divf %218, %219 : vector<8x1xf32>
    %221 = vector.broadcast %220 : vector<8x1xf32> to vector<8x32xf32>
    %222 = arith.subf %212, %221 : vector<8x32xf32>
    %223 = arith.mulf %222, %222 : vector<8x32xf32>
    %cst_101 = arith.constant dense<0.000000e+00> : vector<8xf32>
    %224 = vector.multi_reduction <add>, %223, %cst_101 [1] : vector<8x32xf32> to vector<8xf32>
    %225 = vector.shape_cast %224 : vector<8xf32> to vector<8x1xf32>
    %cst_102 = arith.constant 3.200000e+01 : f32
    %226 = vector.broadcast %cst_102 : f32 to vector<8x1xf32>
    %227 = arith.divf %225, %226 : vector<8x1xf32>
    %228 = vector.broadcast %220 : vector<8x1xf32> to vector<8x32xf32>
    %229 = arith.subf %212, %228 : vector<8x32xf32>
    %cst_103 = arith.constant 9.99999974E-6 : f32
    %230 = vector.broadcast %cst_103 : f32 to vector<8x1xf32>
    %231 = arith.addf %227, %230 : vector<8x1xf32>
    %232 = math.rsqrt %231 : vector<8x1xf32>
    %233 = vector.broadcast %232 : vector<8x1xf32> to vector<8x32xf32>
    %234 = arith.mulf %229, %233 : vector<8x32xf32>
    %235 = vector.shape_cast %214 : vector<32xf32> to vector<1x32xf32>
    %236 = vector.broadcast %235 : vector<1x32xf32> to vector<8x32xf32>
    %237 = arith.mulf %234, %236 : vector<8x32xf32>
    %238 = vector.shape_cast %216 : vector<32xf32> to vector<1x32xf32>
    %239 = vector.broadcast %238 : vector<1x32xf32> to vector<8x32xf32>
    %240 = arith.addf %237, %239 : vector<8x32xf32>
    %241 = arith.addf %175, %240 : vector<8x32xf32>
    %c0_104 = arith.constant 0 : index
    %c0_105 = arith.constant 0 : index
    %c0_106 = arith.constant 0 : index
    %242 = vector.load %arg23[%c0_104, %c0_105, %c0_106] : memref<1x8x32xf32, #tpu.memory_space<vmem>>, vector<1x8x32xf32>
    %243 = vector.shape_cast %242 : vector<1x8x32xf32> to vector<8x32xf32>
    %244 = vector.shape_cast %241 : vector<8x32xf32> to vector<1x8x32xf32>
    tpu.vector_store %arg23[%c0_104, %c0_105, %c0_106], %244 {strides = array<i32>} : memref<1x8x32xf32, #tpu.memory_space<vmem>>, vector<1x8x32xf32>,
    %c0_107 = arith.constant 0 : index
    %c0_108 = arith.constant 0 : index
    %c0_109 = arith.constant 0 : index
    %245 = vector.load %arg24[%c0_107, %c0_108, %c0_109] : memref<1x8x32xf32, #tpu.memory_space<vmem>>, vector<1x8x32xf32>
    %246 = vector.shape_cast %245 : vector<1x8x32xf32> to vector<8x32xf32>
    %247 = vector.shape_cast %175 : vector<8x32xf32> to vector<1x8x32xf32>
    tpu.vector_store %arg24[%c0_107, %c0_108, %c0_109], %247 {strides = array<i32>} : memref<1x8x32xf32, #tpu.memory_space<vmem>>, vector<1x8x32xf32>,
    %c0_110 = arith.constant 0 : index
    %c0_111 = arith.constant 0 : index
    %c0_112 = arith.constant 0 : index
    %248 = vector.load %arg26[%c0_110, %c0_111, %c0_112] : memref<1x8x32xf32, #tpu.memory_space<vmem>>, vector<1x8x32xf32>
    %249 = vector.shape_cast %248 : vector<1x8x32xf32> to vector<8x32xf32>
    %250 = vector.shape_cast %212 : vector<8x32xf32> to vector<1x8x32xf32>
    tpu.vector_store %arg26[%c0_110, %c0_111, %c0_112], %250 {strides = array<i32>} : memref<1x8x32xf32, #tpu.memory_space<vmem>>, vector<1x8x32xf32>,
    return
  }
  func.func @transform_0(%arg0: i32, %arg1: i32) -> (i32, i32, i32) {
    %c0_i32 = arith.constant 0 : i32
    %c0_i32_0 = arith.constant 0 : i32
    %c0_i32_1 = arith.constant 0 : i32
    return %arg0, %c0_i32, %c0_i32_0 : i32, i32, i32
  }
  func.func @transform_1(%arg0: i32, %arg1: i32) -> (i32, i32, i32) {
    %c0_i32 = arith.constant 0 : i32
    %c0_i32_0 = arith.constant 0 : i32
    return %arg0, %arg1, %c0_i32 : i32, i32, i32
  }
  func.func @transform_2(%arg0: i32, %arg1: i32) -> (i32, i32, i32) {
    %c0_i32 = arith.constant 0 : i32
    %c0_i32_0 = arith.constant 0 : i32
    return %arg0, %arg1, %c0_i32 : i32, i32, i32
  }
  func.func @transform_3(%arg0: i32, %arg1: i32) -> (i32, i32, i32) {
    %c0_i32 = arith.constant 0 : i32
    %c0_i32_0 = arith.constant 0 : i32
    return %arg0, %arg1, %c0_i32 : i32, i32, i32
  }
  func.func @transform_4(%arg0: i32, %arg1: i32) -> i32 {
    %c0_i32 = arith.constant 0 : i32
    %c0_i32_0 = arith.constant 0 : i32
    return %c0_i32 : i32
  }
  func.func @transform_5(%arg0: i32, %arg1: i32) -> (i32, i32) {
    %c0_i32 = arith.constant 0 : i32
    %c0_i32_0 = arith.constant 0 : i32
    %c0_i32_1 = arith.constant 0 : i32
    return %c0_i32, %c0_i32_0 : i32, i32
  }
  func.func @transform_6(%arg0: i32, %arg1: i32) -> (i32, i32) {
    %c0_i32 = arith.constant 0 : i32
    %c0_i32_0 = arith.constant 0 : i32
    %c0_i32_1 = arith.constant 0 : i32
    return %c0_i32, %c0_i32_0 : i32, i32
  }
  func.func @transform_7(%arg0: i32, %arg1: i32) -> (i32, i32) {
    %c0_i32 = arith.constant 0 : i32
    %c0_i32_0 = arith.constant 0 : i32
    %c0_i32_1 = arith.constant 0 : i32
    return %c0_i32, %c0_i32_0 : i32, i32
  }
  func.func @transform_8(%arg0: i32, %arg1: i32) -> (i32, i32) {
    %c0_i32 = arith.constant 0 : i32
    %c0_i32_0 = arith.constant 0 : i32
    %c0_i32_1 = arith.constant 0 : i32
    return %c0_i32, %c0_i32_0 : i32, i32
  }
  func.func @transform_9(%arg0: i32, %arg1: i32) -> (i32, i32) {
    %c0_i32 = arith.constant 0 : i32
    %c0_i32_0 = arith.constant 0 : i32
    %c0_i32_1 = arith.constant 0 : i32
    return %c0_i32, %c0_i32_0 : i32, i32
  }
  func.func @transform_10(%arg0: i32, %arg1: i32) -> (i32, i32) {
    %c0_i32 = arith.constant 0 : i32
    %c0_i32_0 = arith.constant 0 : i32
    %c0_i32_1 = arith.constant 0 : i32
    return %c0_i32, %c0_i32_0 : i32, i32
  }
  func.func @transform_11(%arg0: i32, %arg1: i32) -> (i32, i32) {
    %c0_i32 = arith.constant 0 : i32
    %c0_i32_0 = arith.constant 0 : i32
    %c0_i32_1 = arith.constant 0 : i32
    return %c0_i32, %c0_i32_0 : i32, i32
  }
  func.func @transform_12(%arg0: i32, %arg1: i32) -> (i32, i32) {
    %c0_i32 = arith.constant 0 : i32
    %c0_i32_0 = arith.constant 0 : i32
    %c0_i32_1 = arith.constant 0 : i32
    return %c0_i32, %c0_i32_0 : i32, i32
  }
  func.func @transform_13(%arg0: i32, %arg1: i32) -> (i32, i32) {
    %c0_i32 = arith.constant 0 : i32
    %c0_i32_0 = arith.constant 0 : i32
    %c0_i32_1 = arith.constant 0 : i32
    return %c0_i32, %c0_i32_0 : i32, i32
  }
  func.func @transform_14(%arg0: i32, %arg1: i32) -> (i32, i32) {
    %c0_i32 = arith.constant 0 : i32
    %c0_i32_0 = arith.constant 0 : i32
    %c0_i32_1 = arith.constant 0 : i32
    return %c0_i32, %c0_i32_0 : i32, i32
  }
  func.func @transform_15(%arg0: i32, %arg1: i32) -> (i32, i32) {
    %c0_i32 = arith.constant 0 : i32
    %c0_i32_0 = arith.constant 0 : i32
    %c0_i32_1 = arith.constant 0 : i32
    return %c0_i32, %c0_i32_0 : i32, i32
  }
  func.func @transform_16(%arg0: i32, %arg1: i32) -> (i32, i32) {
    %c0_i32 = arith.constant 0 : i32
    %c0_i32_0 = arith.constant 0 : i32
    %c0_i32_1 = arith.constant 0 : i32
    return %c0_i32, %c0_i32_0 : i32, i32
  }
  func.func @transform_17(%arg0: i32, %arg1: i32) -> (i32, i32) {
    %c0_i32 = arith.constant 0 : i32
    %c0_i32_0 = arith.constant 0 : i32
    %c0_i32_1 = arith.constant 0 : i32
    return %c0_i32, %c0_i32_0 : i32, i32
  }
  func.func @transform_18(%arg0: i32, %arg1: i32) -> (i32, i32) {
    %c0_i32 = arith.constant 0 : i32
    %c0_i32_0 = arith.constant 0 : i32
    %c0_i32_1 = arith.constant 0 : i32
    return %c0_i32, %c0_i32_0 : i32, i32
  }
  func.func @transform_19(%arg0: i32, %arg1: i32) -> (i32, i32) {
    %c0_i32 = arith.constant 0 : i32
    %c0_i32_0 = arith.constant 0 : i32
    %c0_i32_1 = arith.constant 0 : i32
    return %c0_i32, %c0_i32_0 : i32, i32
  }
  func.func @transform_20(%arg0: i32, %arg1: i32) -> (i32, i32) {
    %c0_i32 = arith.constant 0 : i32
    %c0_i32_0 = arith.constant 0 : i32
    %c0_i32_1 = arith.constant 0 : i32
    return %c0_i32, %c0_i32_0 : i32, i32
  }
  func.func @transform_21(%arg0: i32, %arg1: i32) -> (i32, i32, i32) {
    %c0_i32 = arith.constant 0 : i32
    %c0_i32_0 = arith.constant 0 : i32
    return %arg0, %arg1, %c0_i32 : i32, i32, i32
  }
  func.func @transform_22(%arg0: i32, %arg1: i32) -> (i32, i32, i32) {
    %c0_i32 = arith.constant 0 : i32
    %c0_i32_0 = arith.constant 0 : i32
    return %arg0, %arg1, %c0_i32 : i32, i32, i32
  }
  func.func @transform_23(%arg0: i32, %arg1: i32) -> (i32, i32, i32) {
    %c0_i32 = arith.constant 0 : i32
    %c0_i32_0 = arith.constant 0 : i32
    return %arg0, %arg1, %c0_i32 : i32, i32, i32
  }
  func.func @transform_24(%arg0: i32, %arg1: i32) -> (i32, i32, i32) {
    %c0_i32 = arith.constant 0 : i32
    %c0_i32_0 = arith.constant 0 : i32
    return %arg0, %arg1, %c0_i32 : i32, i32, i32
  }
}

</mosaic_0001>

<llo_original>
// kernel: tpu_custom_call.1
$region0: #{tpu_custom_call.1}
  #allocation0 [shape = 'u32[]', space=smem, size = 0x4, offset = 0x4, fixed_abs, tag = 'smem constant byte address 0x4 - core index']
  #allocation1 [shape = 'u32[144,128]{1,0:T(1,128)}', space=vmem, size = 0x12000, scoped, tag = 'internal scratch']
  #allocation2 [shape = 'f32[16,64]{1,0:T(8,128)}', space=vmem, size = 0x2000, scoped, tag = 'scratch operand']
  #allocation3 [shape = 'f32[8,32]{1,0:T(8,128)}', space=vmem, size = 0x1000, scoped, tag = 'scratch operand']
  %s0 = inlined_call_operand.vmem [shape: f32[2,16,32], index: 0, kind: input, shape index: {}]
  %s1 = inlined_call_operand.vmem [shape: f32[2,16,32], index: 1, kind: input, shape index: {}]
  %s2 = inlined_call_operand.vmem [shape: f32[2,16,16], index: 2, kind: input, shape index: {}]
  %s3 = inlined_call_operand.vmem [shape: f32[2,16,16], index: 3, kind: input, shape index: {}]
  %s4 = inlined_call_operand.vmem [shape: f32[4], index: 4, kind: input, shape index: {}]
  %s5 = inlined_call_operand.vmem [shape: f32[32,32], index: 5, kind: input, shape index: {}]
  %s6 = inlined_call_operand.hbm [shape: f32[32,64], index: 6, kind: input, shape index: {}]
  %s7 = inlined_call_operand.hbm [shape: f32[32,32], index: 7, kind: input, shape index: {}]
  %s8 = inlined_call_operand.vmem [shape: f32[1,32], index: 8, kind: input, shape index: {}]
  %s9 = inlined_call_operand.vmem [shape: f32[1,32], index: 9, kind: input, shape index: {}]
  %s10 = inlined_call_operand.vmem [shape: f32[1,32], index: 10, kind: input, shape index: {}]
  %s11 = inlined_call_operand.vmem [shape: f32[1,32], index: 11, kind: input, shape index: {}]
  %s12 = inlined_call_operand.hbm [shape: f32[32,128], index: 12, kind: input, shape index: {}]
  %s13 = inlined_call_operand.hbm [shape: f32[32,128], index: 13, kind: input, shape index: {}]
  %s14 = inlined_call_operand.vmem [shape: f32[128,32], index: 14, kind: input, shape index: {}]
  %s15 = inlined_call_operand.vmem [shape: f32[1,32], index: 15, kind: input, shape index: {}]
  %s16 = inlined_call_operand.vmem [shape: f32[1,32], index: 16, kind: input, shape index: {}]
  %s17 = inlined_call_operand.vmem [shape: f32[1,32], index: 17, kind: input, shape index: {}]
  %s18 = inlined_call_operand.vmem [shape: f32[1,32], index: 18, kind: input, shape index: {}]
  %s19 = inlined_call_operand.vmem [shape: f32[1,32], index: 19, kind: input, shape index: {}]
  %s20 = inlined_call_operand.vmem [shape: f32[1,32], index: 20, kind: input, shape index: {}]
  %s21 = inlined_call_operand.hbm [shape: f32[2,16,32], index: 21, kind: output, shape index: {0}]
  %s22 = inlined_call_operand.hbm [shape: f32[2,16,32], index: 22, kind: output, shape index: {1}]
  %s23 = inlined_call_operand.hbm [shape: f32[2,16,32], index: 23, kind: output, shape index: {2}]
  %s24 = inlined_call_operand.hbm [shape: f32[2,16,32], index: 24, kind: output, shape index: {3}]
  %25 = xla_tuple %s21, %s22, %s23, %s24
  %s26 = sld [smem:[#allocation0]]
  $region165: #{tpu_custom_call.1} parent=0
    _
  %s28 = ssub.s32 1, %s26
  %s29 = scalar_select 0, %s28, %s26
  $region1: #{tpu_custom_call.1} parent=0
    #allocation4 [shape = 'u8[512]{0}', space=smem, size = 0x200, scoped, tag = 'input window, operand 4, single buffered']
    #allocation5 [shape = 's32[2]{0}', space=sflag, size = 0x8, scoped, tag = 'scoped memory for tpu_custom_call.1']
    #allocation6 [shape = 's32[2]{0}', space=sflag, size = 0x8, scoped, tag = 'scoped memory for tpu_custom_call.1']
    #allocation7 [shape = 's32[2]{0}', space=sflag, size = 0x8, scoped, tag = 'scoped memory for tpu_custom_call.1']
    #allocation8 [shape = 'u8[16384]{0}', space=vmem, size = 0x4000, scoped, tag = 'input window, operand 6, single buffered']
    #allocation9 [shape = 'u8[16384]{0}', space=vmem, size = 0x4000, scoped, tag = 'input window, operand 7, single buffered']
    #allocation10 [shape = 's32[1]{0}', space=sflag, size = 0x4, scoped, tag = 'scoped memory for tpu_custom_call.1']
    #allocation11 [shape = 'u8[16384]{0}', space=vmem, size = 0x4000, scoped, tag = 'input window, operand 12, single buffered']
    #allocation12 [shape = 'u8[16384]{0}', space=vmem, size = 0x4000, scoped, tag = 'input window, operand 13, single buffered']
    #allocation13 [shape = 's32[1]{0}', space=sflag, size = 0x4, scoped, tag = 'scoped memory for tpu_custom_call.1']
    #allocation14 [shape = 'u8[8192]{0}', space=vmem, size = 0x2000, scoped, tag = 'output window, operand 0']
    #allocation15 [shape = 'u8[8192]{0}', space=vmem, size = 0x2000, scoped, tag = 'output window, operand 1']
    #allocation16 [shape = 's32[2]{0}', space=sflag, size = 0x8, scoped, tag = 'scoped memory for tpu_custom_call.1']
    #allocation17 [shape = 'u8[8192]{0}', space=vmem, size = 0x2000, scoped, tag = 'output window, operand 2']
    #allocation18 [shape = 'u8[8192]{0}', space=vmem, size = 0x2000, scoped, tag = 'output window, operand 3']
    #allocation19 [shape = 's32[2]{0}', space=sflag, size = 0x8, scoped, tag = 'scoped memory for tpu_custom_call.1']
    %30 = vsyncpa [#allocation7], 0
    %31 = vsyncpa [#allocation5], 0
    %32 = vsyncpa [#allocation10], 0
    %33 = vsyncpa [#allocation13], 0
    %34 = vsyncpa [#allocation6], 0
    %s35 = scalar_lea.sflag [#allocation6], 1
    %36 = vsyncpa %s35, 0
    %37 = vsyncpa [#allocation16], 0
    %s38 = scalar_lea.sflag [#allocation16], 1
    %39 = vsyncpa %s38, 0
    %40 = vsyncpa [#allocation19], 0
    %s41 = scalar_lea.sflag [#allocation19], 1
    %42 = vsyncpa %s41, 0
    loop: start=0, step=1, limit=6
    $region2: #{tpu_custom_call.1} parent=1 // loop_pre_header
      _
    $region3: #{tpu_custom_call.1} parent=1 // loop_header
      %s44 = sphi 0, %s48
      %p45 = scmp.ge.s32.totalorder %s44, 6
      %s51 = sphi 0, %s63
      %s52 = sphi 0, %s59
      %s53 = sphi 0, %s51
      %s54 = sphi 0, %s52
      %s55 = sphi 0, %s53
      %s56 = sphi 0, %s54
      %s66 = sphi 0, %s68
      %s69 = sphi 0, %s66
      %s70 = sphi 0, %s69
      %s86 = sphi 0, %s70
      %s94 = sphi 0, %s96
      %s97 = sphi 0, %s94
      %s98 = sphi 0, %s97
      %s114 = sphi 0, %s98
      %s122 = sphi 0, %s124
      %s125 = sphi 0, %s122
      %s126 = sphi 0, %s125
      %s142 = sphi 0, %s126
      %s150 = sphi 0, %s152
      %s153 = sphi 0, %s150
      %s154 = sphi 0, %s153
      %s170 = sphi 0, %s154
      %s174 = sphi 0, %s174
      %s176 = sphi 0, %s174
      %s177 = sphi 0, %s176
      %s191 = sphi 0, %s177
      %s195 = sphi 0, %s195
      %s197 = sphi 0, %s195
      %s198 = sphi 0, %s197
      %s212 = sphi 0, %s198
      %s216 = sphi 0, %s216
      %s218 = sphi 0, %s216
      %s219 = sphi 0, %s218
      %s233 = sphi 0, %s219
      %s237 = sphi 0, %s237
      %s239 = sphi 0, %s237
      %s240 = sphi 0, %s239
      %s254 = sphi 0, %s240
      %s258 = sphi 0, %s258
      %s260 = sphi 0, %s258
      %s261 = sphi 0, %s260
      %s275 = sphi 0, %s261
      %s279 = sphi 0, %s279
      %s281 = sphi 0, %s279
      %s282 = sphi 0, %s281
      %s296 = sphi 0, %s282
      %s300 = sphi 0, %s300
      %s302 = sphi 0, %s300
      %s303 = sphi 0, %s302
      %s317 = sphi 0, %s303
      %s321 = sphi 0, %s321
      %s323 = sphi 0, %s321
      %s324 = sphi 0, %s323
      %s338 = sphi 0, %s324
      %s342 = sphi 0, %s342
      %s344 = sphi 0, %s342
      %s345 = sphi 0, %s344
      %s359 = sphi 0, %s345
      %s363 = sphi 0, %s363
      %s365 = sphi 0, %s363
      %s366 = sphi 0, %s365
      %s380 = sphi 0, %s366
      %s384 = sphi 0, %s384
      %s386 = sphi 0, %s384
      %s387 = sphi 0, %s386
      %s401 = sphi 0, %s387
      %s405 = sphi 0, %s405
      %s407 = sphi 0, %s405
      %s408 = sphi 0, %s407
      %s422 = sphi 0, %s408
      %s426 = sphi 0, %s426
      %s428 = sphi 0, %s426
      %s429 = sphi 0, %s428
      %s443 = sphi 0, %s429
      %s447 = sphi 0, %s447
      %s449 = sphi 0, %s447
      %s450 = sphi 0, %s449
      %s464 = sphi 0, %s450
      %s468 = sphi 0, %s468
      %s470 = sphi 0, %s468
      %s471 = sphi 0, %s470
      %s485 = sphi 0, %s471
      %s489 = sphi 0, %s489
      %s491 = sphi 0, %s489
      %s492 = sphi 0, %s491
      %s506 = sphi 0, %s492
      %s510 = sphi 0, %s510
      %s512 = sphi 0, %s510
      %s513 = sphi 0, %s512
      %s527 = sphi 0, %s513
      %s535 = sphi 0, %s537
      %s538 = sphi 0, %s535
      %s539 = sphi 0, %s538
      %s555 = sphi 0, %s539
      %s563 = sphi 0, %s565
      %s566 = sphi 0, %s563
      %s567 = sphi 0, %s566
      %s583 = sphi 0, %s567
      %s591 = sphi 0, %s593
      %s594 = sphi 0, %s591
      %s595 = sphi 0, %s594
      %s611 = sphi 0, %s595
      %s619 = sphi 0, %s621
      %s622 = sphi 0, %s619
      %s623 = sphi 0, %s622
      %s639 = sphi 0, %s623
    $region4: #{tpu_custom_call.1} parent=1 // loop_header_branch
      %47 = sbr.rel (%p45) target = $region8
    $region5: #{tpu_custom_call.1} parent=1 // loop_body
      %s49 = ssub.s32 %s44, 1
      %s50 = ssub.s32 %s44, 2
      %s57 = sadd.s32 1, %s52
      %p58 = scmp.ge.s32.totalorder %s57, 2
      %s59 = scalar_select %p58, 0, %s57
      %s60 = sadd.s32 1, %s51
      %s61 = scalar_select %p58, %s60, %s51
      %p62 = scmp.ge.s32.totalorder %s61, 2
      %s63 = scalar_select %p62, 0, %s61
      %s64 = ssub.s32 %s51, %s63
      %p65 = scmp.eq.s32.totalorder %s64, 0
      %s67 = sadd.s32 %s66, 1
      %s68 = scalar_select %p65, %s66, %s67
      %p71 = pneg %p65
      %p72 = scmp.eq.s32.totalorder %s44, 3
      %p73 = por %p71, %p72
      %p74 = scmp.ne.s32.totalorder %s66, %s69
      %p75 = scmp.eq.s32.totalorder %s44, 0
      %p76 = por %p74, %p75
      %p77 = scmp.ne.s32.totalorder %s66, %s69
      %p78 = scmp.eq.s32.totalorder %s49, 3
      %p79 = por %p77, %p78
      %p80 = scmp.ne.s32.totalorder %s69, %s70
      %p81 = scmp.eq.s32.totalorder %s49, 0
      %p82 = por %p80, %p81
      %p83 = scmp.ne.s32.totalorder %s69, %s70
      %p84 = scmp.eq.s32.totalorder %s50, 3
      %p85 = por %p83, %p84
      %p87 = scmp.ne.s32.totalorder %s70, %s86
      %p88 = scmp.eq.s32.totalorder %s50, 0
      %p89 = por %p87, %p88
      %s90 = ssub.s32 %s51, %s63
      %s91 = ssub.s32 %s52, %s59
      %s92 = sor.u32 %s90, %s91
      %p93 = scmp.eq.s32.totalorder %s92, 0
      %s95 = sadd.s32 %s94, 1
      %s96 = scalar_select %p93, %s94, %s95
      %p99 = pneg %p93
      %p100 = scmp.eq.s32.totalorder %s44, 3
      %p101 = por %p99, %p100
      %p102 = scmp.ne.s32.totalorder %s94, %s97
      %p103 = scmp.eq.s32.totalorder %s44, 0
      %p104 = por %p102, %p103
      %p105 = scmp.ne.s32.totalorder %s94, %s97
      %p106 = scmp.eq.s32.totalorder %s49, 3
      %p107 = por %p105, %p106
      %p108 = scmp.ne.s32.totalorder %s97, %s98
      %p109 = scmp.eq.s32.totalorder %s49, 0
      %p110 = por %p108, %p109
      %p111 = scmp.ne.s32.totalorder %s97, %s98
      %p112 = scmp.eq.s32.totalorder %s50, 3
      %p113 = por %p111, %p112
      %p115 = scmp.ne.s32.totalorder %s98, %s114
      %p116 = scmp.eq.s32.totalorder %s50, 0
      %p117 = por %p115, %p116
      %s118 = ssub.s32 %s51, %s63
      %s119 = ssub.s32 %s52, %s59
      %s120 = sor.u32 %s118, %s119
      %p121 = scmp.eq.s32.totalorder %s120, 0
      %s123 = sadd.s32 %s122, 1
      %s124 = scalar_select %p121, %s122, %s123
      %p127 = pneg %p121
      %p128 = scmp.eq.s32.totalorder %s44, 3
      %p129 = por %p127, %p128
      %p130 = scmp.ne.s32.totalorder %s122, %s125
      %p131 = scmp.eq.s32.totalorder %s44, 0
      %p132 = por %p130, %p131
      %p133 = scmp.ne.s32.totalorder %s122, %s125
      %p134 = scmp.eq.s32.totalorder %s49, 3
      %p135 = por %p133, %p134
      %p136 = scmp.ne.s32.totalorder %s125, %s126
      %p137 = scmp.eq.s32.totalorder %s49, 0
      %p138 = por %p136, %p137
      %p139 = scmp.ne.s32.totalorder %s125, %s126
      %p140 = scmp.eq.s32.totalorder %s50, 3
      %p141 = por %p139, %p140
      %p143 = scmp.ne.s32.totalorder %s126, %s142
      %p144 = scmp.eq.s32.totalorder %s50, 0
      %p145 = por %p143, %p144
      %s146 = ssub.s32 %s51, %s63
      %s147 = ssub.s32 %s52, %s59
      %s148 = sor.u32 %s146, %s147
      %p149 = scmp.eq.s32.totalorder %s148, 0
      %s151 = sadd.s32 %s150, 1
      %s152 = scalar_select %p149, %s150, %s151
      %p155 = pneg %p149
      %p156 = scmp.eq.s32.totalorder %s44, 3
      %p157 = por %p155, %p156
      %p158 = scmp.ne.s32.totalorder %s150, %s153
      %p159 = scmp.eq.s32.totalorder %s44, 0
      %p160 = por %p158, %p159
      %p161 = scmp.ne.s32.totalorder %s150, %s153
      %p162 = scmp.eq.s32.totalorder %s49, 3
      %p163 = por %p161, %p162
      %p164 = scmp.ne.s32.totalorder %s153, %s154
      %p165 = scmp.eq.s32.totalorder %s49, 0
      %p166 = por %p164, %p165
      %p167 = scmp.ne.s32.totalorder %s153, %s154
      %p168 = scmp.eq.s32.totalorder %s50, 3
      %p169 = por %p167, %p168
      %p171 = scmp.ne.s32.totalorder %s154, %s170
      %p172 = scmp.eq.s32.totalorder %s50, 0
      %p173 = por %p171, %p172
      %s175 = sadd.s32 %s174, 1
      %p178 = scmp.eq.s32.totalorder %s44, 3
      %p179 = scmp.ne.s32.totalorder %s174, %s176
      %p180 = scmp.eq.s32.totalorder %s44, 0
      %p181 = por %p179, %p180
      %p182 = scmp.ne.s32.totalorder %s174, %s176
      %p183 = scmp.eq.s32.totalorder %s49, 3
      %p184 = por %p182, %p183
      %p185 = scmp.ne.s32.totalorder %s176, %s177
      %p186 = scmp.eq.s32.totalorder %s49, 0
      %p187 = por %p185, %p186
      %p188 = scmp.ne.s32.totalorder %s176, %s177
      %p189 = scmp.eq.s32.totalorder %s50, 3
      %p190 = por %p188, %p189
      %p192 = scmp.ne.s32.totalorder %s177, %s191
      %p193 = scmp.eq.s32.totalorder %s50, 0
      %p194 = por %p192, %p193
      %s196 = sadd.s32 %s195, 1
      %p199 = scmp.eq.s32.totalorder %s44, 3
      %p200 = scmp.ne.s32.totalorder %s195, %s197
      %p201 = scmp.eq.s32.totalorder %s44, 0
      %p202 = por %p200, %p201
      %p203 = scmp.ne.s32.totalorder %s195, %s197
      %p204 = scmp.eq.s32.totalorder %s49, 3
      %p205 = por %p203, %p204
      %p206 = scmp.ne.s32.totalorder %s197, %s198
      %p207 = scmp.eq.s32.totalorder %s49, 0
      %p208 = por %p206, %p207
      %p209 = scmp.ne.s32.totalorder %s197, %s198
      %p210 = scmp.eq.s32.totalorder %s50, 3
      %p211 = por %p209, %p210
      %p213 = scmp.ne.s32.totalorder %s198, %s212
      %p214 = scmp.eq.s32.totalorder %s50, 0
      %p215 = por %p213, %p214
      %s217 = sadd.s32 %s216, 1
      %p220 = scmp.eq.s32.totalorder %s44, 3
      %p221 = scmp.ne.s32.totalorder %s216, %s218
      %p222 = scmp.eq.s32.totalorder %s44, 0
      %p223 = por %p221, %p222
      %p224 = scmp.ne.s32.totalorder %s216, %s218
      %p225 = scmp.eq.s32.totalorder %s49, 3
      %p226 = por %p224, %p225
      %p227 = scmp.ne.s32.totalorder %s218, %s219
      %p228 = scmp.eq.s32.totalorder %s49, 0
      %p229 = por %p227, %p228
      %p230 = scmp.ne.s32.totalorder %s218, %s219
      %p231 = scmp.eq.s32.totalorder %s50, 3
      %p232 = por %p230, %p231
      %p234 = scmp.ne.s32.totalorder %s219, %s233
      %p235 = scmp.eq.s32.totalorder %s50, 0
      %p236 = por %p234, %p235
      %s238 = sadd.s32 %s237, 1
      %p241 = scmp.eq.s32.totalorder %s44, 3
      %p242 = scmp.ne.s32.totalorder %s237, %s239
      %p243 = scmp.eq.s32.totalorder %s44, 0
      %p244 = por %p242, %p243
      %p245 = scmp.ne.s32.totalorder %s237, %s239
      %p246 = scmp.eq.s32.totalorder %s49, 3
      %p247 = por %p245, %p246
      %p248 = scmp.ne.s32.totalorder %s239, %s240
      %p249 = scmp.eq.s32.totalorder %s49, 0
      %p250 = por %p248, %p249
      %p251 = scmp.ne.s32.totalorder %s239, %s240
      %p252 = scmp.eq.s32.totalorder %s50, 3
      %p253 = por %p251, %p252
      %p255 = scmp.ne.s32.totalorder %s240, %s254
      %p256 = scmp.eq.s32.totalorder %s50, 0
      %p257 = por %p255, %p256
      %s259 = sadd.s32 %s258, 1
      %p262 = scmp.eq.s32.totalorder %s44, 3
      %p263 = scmp.ne.s32.totalorder %s258, %s260
      %p264 = scmp.eq.s32.totalorder %s44, 0
      %p265 = por %p263, %p264
      %p266 = scmp.ne.s32.totalorder %s258, %s260
      %p267 = scmp.eq.s32.totalorder %s49, 3
      %p268 = por %p266, %p267
      %p269 = scmp.ne.s32.totalorder %s260, %s261
      %p270 = scmp.eq.s32.totalorder %s49, 0
      %p271 = por %p269, %p270
      %p272 = scmp.ne.s32.totalorder %s260, %s261
      %p273 = scmp.eq.s32.totalorder %s50, 3
      %p274 = por %p272, %p273
      %p276 = scmp.ne.s32.totalorder %s261, %s275
      %p277 = scmp.eq.s32.totalorder %s50, 0
      %p278 = por %p276, %p277
      %s280 = sadd.s32 %s279, 1
      %p283 = scmp.eq.s32.totalorder %s44, 3
      %p284 = scmp.ne.s32.totalorder %s279, %s281
      %p285 = scmp.eq.s32.totalorder %s44, 0
      %p286 = por %p284, %p285
      %p287 = scmp.ne.s32.totalorder %s279, %s281
      %p288 = scmp.eq.s32.totalorder %s49, 3
      %p289 = por %p287, %p288
      %p290 = scmp.ne.s32.totalorder %s281, %s282
      %p291 = scmp.eq.s32.totalorder %s49, 0
      %p292 = por %p290, %p291
      %p293 = scmp.ne.s32.totalorder %s281, %s282
      %p294 = scmp.eq.s32.totalorder %s50, 3
      %p295 = por %p293, %p294
      %p297 = scmp.ne.s32.totalorder %s282, %s296
      %p298 = scmp.eq.s32.totalorder %s50, 0
      %p299 = por %p297, %p298
      %s301 = sadd.s32 %s300, 1
      %p304 = scmp.eq.s32.totalorder %s44, 3
      %p305 = scmp.ne.s32.totalorder %s300, %s302
      %p306 = scmp.eq.s32.totalorder %s44, 0
      %p307 = por %p305, %p306
      %p308 = scmp.ne.s32.totalorder %s300, %s302
      %p309 = scmp.eq.s32.totalorder %s49, 3
      %p310 = por %p308, %p309
      %p311 = scmp.ne.s32.totalorder %s302, %s303
      %p312 = scmp.eq.s32.totalorder %s49, 0
      %p313 = por %p311, %p312
      %p314 = scmp.ne.s32.totalorder %s302, %s303
      %p315 = scmp.eq.s32.totalorder %s50, 3
      %p316 = por %p314, %p315
      %p318 = scmp.ne.s32.totalorder %s303, %s317
      %p319 = scmp.eq.s32.totalorder %s50, 0
      %p320 = por %p318, %p319
      %s322 = sadd.s32 %s321, 1
      %p325 = scmp.eq.s32.totalorder %s44, 3
      %p326 = scmp.ne.s32.totalorder %s321, %s323
      %p327 = scmp.eq.s32.totalorder %s44, 0
      %p328 = por %p326, %p327
      %p329 = scmp.ne.s32.totalorder %s321, %s323
      %p330 = scmp.eq.s32.totalorder %s49, 3
      %p331 = por %p329, %p330
      %p332 = scmp.ne.s32.totalorder %s323, %s324
      %p333 = scmp.eq.s32.totalorder %s49, 0
      %p334 = por %p332, %p333
      %p335 = scmp.ne.s32.totalorder %s323, %s324
      %p336 = scmp.eq.s32.totalorder %s50, 3
      %p337 = por %p335, %p336
      %p339 = scmp.ne.s32.totalorder %s324, %s338
      %p340 = scmp.eq.s32.totalorder %s50, 0
      %p341 = por %p339, %p340
      %s343 = sadd.s32 %s342, 1
      %p346 = scmp.eq.s32.totalorder %s44, 3
      %p347 = scmp.ne.s32.totalorder %s342, %s344
      %p348 = scmp.eq.s32.totalorder %s44, 0
      %p349 = por %p347, %p348
      %p350 = scmp.ne.s32.totalorder %s342, %s344
      %p351 = scmp.eq.s32.totalorder %s49, 3
      %p352 = por %p350, %p351
      %p353 = scmp.ne.s32.totalorder %s344, %s345
      %p354 = scmp.eq.s32.totalorder %s49, 0
      %p355 = por %p353, %p354
      %p356 = scmp.ne.s32.totalorder %s344, %s345
      %p357 = scmp.eq.s32.totalorder %s50, 3
      %p358 = por %p356, %p357
      %p360 = scmp.ne.s32.totalorder %s345, %s359
      %p361 = scmp.eq.s32.totalorder %s50, 0
      %p362 = por %p360, %p361
      %s364 = sadd.s32 %s363, 1
      %p367 = scmp.eq.s32.totalorder %s44, 3
      %p368 = scmp.ne.s32.totalorder %s363, %s365
      %p369 = scmp.eq.s32.totalorder %s44, 0
      %p370 = por %p368, %p369
      %p371 = scmp.ne.s32.totalorder %s363, %s365
      %p372 = scmp.eq.s32.totalorder %s49, 3
      %p373 = por %p371, %p372
      %p374 = scmp.ne.s32.totalorder %s365, %s366
      %p375 = scmp.eq.s32.totalorder %s49, 0
      %p376 = por %p374, %p375
      %p377 = scmp.ne.s32.totalorder %s365, %s366
      %p378 = scmp.eq.s32.totalorder %s50, 3
      %p379 = por %p377, %p378
      %p381 = scmp.ne.s32.totalorder %s366, %s380
      %p382 = scmp.eq.s32.totalorder %s50, 0
      %p383 = por %p381, %p382
      %s385 = sadd.s32 %s384, 1
      %p388 = scmp.eq.s32.totalorder %s44, 3
      %p389 = scmp.ne.s32.totalorder %s384, %s386
      %p390 = scmp.eq.s32.totalorder %s44, 0
      %p391 = por %p389, %p390
      %p392 = scmp.ne.s32.totalorder %s384, %s386
      %p393 = scmp.eq.s32.totalorder %s49, 3
      %p394 = por %p392, %p393
      %p395 = scmp.ne.s32.totalorder %s386, %s387
      %p396 = scmp.eq.s32.totalorder %s49, 0
      %p397 = por %p395, %p396
      %p398 = scmp.ne.s32.totalorder %s386, %s387
      %p399 = scmp.eq.s32.totalorder %s50, 3
      %p400 = por %p398, %p399
      %p402 = scmp.ne.s32.totalorder %s387, %s401
      %p403 = scmp.eq.s32.totalorder %s50, 0
      %p404 = por %p402, %p403
      %s406 = sadd.s32 %s405, 1
      %p409 = scmp.eq.s32.totalorder %s44, 3
      %p410 = scmp.ne.s32.totalorder %s405, %s407
      %p411 = scmp.eq.s32.totalorder %s44, 0
      %p412 = por %p410, %p411
      %p413 = scmp.ne.s32.totalorder %s405, %s407
      %p414 = scmp.eq.s32.totalorder %s49, 3
      %p415 = por %p413, %p414
      %p416 = scmp.ne.s32.totalorder %s407, %s408
      %p417 = scmp.eq.s32.totalorder %s49, 0
      %p418 = por %p416, %p417
      %p419 = scmp.ne.s32.totalorder %s407, %s408
      %p420 = scmp.eq.s32.totalorder %s50, 3
      %p421 = por %p419, %p420
      %p423 = scmp.ne.s32.totalorder %s408, %s422
      %p424 = scmp.eq.s32.totalorder %s50, 0
      %p425 = por %p423, %p424
      %s427 = sadd.s32 %s426, 1
      %p430 = scmp.eq.s32.totalorder %s44, 3
      %p431 = scmp.ne.s32.totalorder %s426, %s428
      %p432 = scmp.eq.s32.totalorder %s44, 0
      %p433 = por %p431, %p432
      %p434 = scmp.ne.s32.totalorder %s426, %s428
      %p435 = scmp.eq.s32.totalorder %s49, 3
      %p436 = por %p434, %p435
      %p437 = scmp.ne.s32.totalorder %s428, %s429
      %p438 = scmp.eq.s32.totalorder %s49, 0
      %p439 = por %p437, %p438
      %p440 = scmp.ne.s32.totalorder %s428, %s429
      %p441 = scmp.eq.s32.totalorder %s50, 3
      %p442 = por %p440, %p441
      %p444 = scmp.ne.s32.totalorder %s429, %s443
      %p445 = scmp.eq.s32.totalorder %s50, 0
      %p446 = por %p444, %p445
      %s448 = sadd.s32 %s447, 1
      %p451 = scmp.eq.s32.totalorder %s44, 3
      %p452 = scmp.ne.s32.totalorder %s447, %s449
      %p453 = scmp.eq.s32.totalorder %s44, 0
      %p454 = por %p452, %p453
      %p455 = scmp.ne.s32.totalorder %s447, %s449
      %p456 = scmp.eq.s32.totalorder %s49, 3
      %p457 = por %p455, %p456
      %p458 = scmp.ne.s32.totalorder %s449, %s450
      %p459 = scmp.eq.s32.totalorder %s49, 0
      %p460 = por %p458, %p459
      %p461 = scmp.ne.s32.totalorder %s449, %s450
      %p462 = scmp.eq.s32.totalorder %s50, 3
      %p463 = por %p461, %p462
      %p465 = scmp.ne.s32.totalorder %s450, %s464
      %p466 = scmp.eq.s32.totalorder %s50, 0
      %p467 = por %p465, %p466
      %s469 = sadd.s32 %s468, 1
      %p472 = scmp.eq.s32.totalorder %s44, 3
      %p473 = scmp.ne.s32.totalorder %s468, %s470
      %p474 = scmp.eq.s32.totalorder %s44, 0
      %p475 = por %p473, %p474
      %p476 = scmp.ne.s32.totalorder %s468, %s470
      %p477 = scmp.eq.s32.totalorder %s49, 3
      %p478 = por %p476, %p477
      %p479 = scmp.ne.s32.totalorder %s470, %s471
      %p480 = scmp.eq.s32.totalorder %s49, 0
      %p481 = por %p479, %p480
      %p482 = scmp.ne.s32.totalorder %s470, %s471
      %p483 = scmp.eq.s32.totalorder %s50, 3
      %p484 = por %p482, %p483
      %p486 = scmp.ne.s32.totalorder %s471, %s485
      %p487 = scmp.eq.s32.totalorder %s50, 0
      %p488 = por %p486, %p487
      %s490 = sadd.s32 %s489, 1
      %p493 = scmp.eq.s32.totalorder %s44, 3
      %p494 = scmp.ne.s32.totalorder %s489, %s491
      %p495 = scmp.eq.s32.totalorder %s44, 0
      %p496 = por %p494, %p495
      %p497 = scmp.ne.s32.totalorder %s489, %s491
      %p498 = scmp.eq.s32.totalorder %s49, 3
      %p499 = por %p497, %p498
      %p500 = scmp.ne.s32.totalorder %s491, %s492
      %p501 = scmp.eq.s32.totalorder %s49, 0
      %p502 = por %p500, %p501
      %p503 = scmp.ne.s32.totalorder %s491, %s492
      %p504 = scmp.eq.s32.totalorder %s50, 3
      %p505 = por %p503, %p504
      %p507 = scmp.ne.s32.totalorder %s492, %s506
      %p508 = scmp.eq.s32.totalorder %s50, 0
      %p509 = por %p507, %p508
      %s511 = sadd.s32 %s510, 1
      %p514 = scmp.eq.s32.totalorder %s44, 3
      %p515 = scmp.ne.s32.totalorder %s510, %s512
      %p516 = scmp.eq.s32.totalorder %s44, 0
      %p517 = por %p515, %p516
      %p518 = scmp.ne.s32.totalorder %s510, %s512
      %p519 = scmp.eq.s32.totalorder %s49, 3
      %p520 = por %p518, %p519
      %p521 = scmp.ne.s32.totalorder %s512, %s513
      %p522 = scmp.eq.s32.totalorder %s49, 0
      %p523 = por %p521, %p522
      %p524 = scmp.ne.s32.totalorder %s512, %s513
      %p525 = scmp.eq.s32.totalorder %s50, 3
      %p526 = por %p524, %p525
      %p528 = scmp.ne.s32.totalorder %s513, %s527
      %p529 = scmp.eq.s32.totalorder %s50, 0
      %p530 = por %p528, %p529
      %s531 = ssub.s32 %s51, %s63
      %s532 = ssub.s32 %s52, %s59
      %s533 = sor.u32 %s531, %s532
      %p534 = scmp.eq.s32.totalorder %s533, 0
      %s536 = sadd.s32 %s535, 1
      %s537 = scalar_select %p534, %s535, %s536
      %p540 = pneg %p534
      %p541 = scmp.eq.s32.totalorder %s44, 3
      %p542 = por %p540, %p541
      %p543 = scmp.ne.s32.totalorder %s535, %s538
      %p544 = scmp.eq.s32.totalorder %s44, 0
      %p545 = por %p543, %p544
      %p546 = scmp.ne.s32.totalorder %s535, %s538
      %p547 = scmp.eq.s32.totalorder %s49, 3
      %p548 = por %p546, %p547
      %p549 = scmp.ne.s32.totalorder %s538, %s539
      %p550 = scmp.eq.s32.totalorder %s49, 0
      %p551 = por %p549, %p550
      %p552 = scmp.ne.s32.totalorder %s538, %s539
      %p553 = scmp.eq.s32.totalorder %s50, 3
      %p554 = por %p552, %p553
      %p556 = scmp.ne.s32.totalorder %s539, %s555
      %p557 = scmp.eq.s32.totalorder %s50, 0
      %p558 = por %p556, %p557
      %s559 = ssub.s32 %s51, %s63
      %s560 = ssub.s32 %s52, %s59
      %s561 = sor.u32 %s559, %s560
      %p562 = scmp.eq.s32.totalorder %s561, 0
      %s564 = sadd.s32 %s563, 1
      %s565 = scalar_select %p562, %s563, %s564
      %p568 = pneg %p562
      %p569 = scmp.eq.s32.totalorder %s44, 3
      %p570 = por %p568, %p569
      %p571 = scmp.ne.s32.totalorder %s563, %s566
      %p572 = scmp.eq.s32.totalorder %s44, 0
      %p573 = por %p571, %p572
      %p574 = scmp.ne.s32.totalorder %s563, %s566
      %p575 = scmp.eq.s32.totalorder %s49, 3
      %p576 = por %p574, %p575
      %p577 = scmp.ne.s32.totalorder %s566, %s567
      %p578 = scmp.eq.s32.totalorder %s49, 0
      %p579 = por %p577, %p578
      %p580 = scmp.ne.s32.totalorder %s566, %s567
      %p581 = scmp.eq.s32.totalorder %s50, 3
      %p582 = por %p580, %p581
      %p584 = scmp.ne.s32.totalorder %s567, %s583
      %p585 = scmp.eq.s32.totalorder %s50, 0
      %p586 = por %p584, %p585
      %s587 = ssub.s32 %s51, %s63
      %s588 = ssub.s32 %s52, %s59
      %s589 = sor.u32 %s587, %s588
      %p590 = scmp.eq.s32.totalorder %s589, 0
      %s592 = sadd.s32 %s591, 1
      %s593 = scalar_select %p590, %s591, %s592
      %p596 = pneg %p590
      %p597 = scmp.eq.s32.totalorder %s44, 3
      %p598 = por %p596, %p597
      %p599 = scmp.ne.s32.totalorder %s591, %s594
      %p600 = scmp.eq.s32.totalorder %s44, 0
      %p601 = por %p599, %p600
      %p602 = scmp.ne.s32.totalorder %s591, %s594
      %p603 = scmp.eq.s32.totalorder %s49, 3
      %p604 = por %p602, %p603
      %p605 = scmp.ne.s32.totalorder %s594, %s595
      %p606 = scmp.eq.s32.totalorder %s49, 0
      %p607 = por %p605, %p606
      %p608 = scmp.ne.s32.totalorder %s594, %s595
      %p609 = scmp.eq.s32.totalorder %s50, 3
      %p610 = por %p608, %p609
      %p612 = scmp.ne.s32.totalorder %s595, %s611
      %p613 = scmp.eq.s32.totalorder %s50, 0
      %p614 = por %p612, %p613
      %s615 = ssub.s32 %s51, %s63
      %s616 = ssub.s32 %s52, %s59
      %s617 = sor.u32 %s615, %s616
      %p618 = scmp.eq.s32.totalorder %s617, 0
      %s620 = sadd.s32 %s619, 1
      %s621 = scalar_select %p618, %s619, %s620
      %p624 = pneg %p618
      %p625 = scmp.eq.s32.totalorder %s44, 3
      %p626 = por %p624, %p625
      %p627 = scmp.ne.s32.totalorder %s619, %s622
      %p628 = scmp.eq.s32.totalorder %s44, 0
      %p629 = por %p627, %p628
      %p630 = scmp.ne.s32.totalorder %s619, %s622
      %p631 = scmp.eq.s32.totalorder %s49, 3
      %p632 = por %p630, %p631
      %p633 = scmp.ne.s32.totalorder %s622, %s623
      %p634 = scmp.eq.s32.totalorder %s49, 0
      %p635 = por %p633, %p634
      %p636 = scmp.ne.s32.totalorder %s622, %s623
      %p637 = scmp.eq.s32.totalorder %s50, 3
      %p638 = por %p636, %p637
      %p640 = scmp.ne.s32.totalorder %s623, %s639
      %p641 = scmp.eq.s32.totalorder %s50, 0
      %p642 = por %p640, %p641
      %p643 = scmp.le.s32.totalorder 1, %s44
      %p644 = scmp.lt.s32.totalorder %s44, 5
      %p645 = pnand %p643, %p644
      %p646 = pneg %p645
      // Predicated region
      $region9: #{tpu_custom_call.1} parent=5 // pred_check
        _
      $region10: #{tpu_custom_call.1} parent=5 // pred_check_branch
        %648 = sbr.rel (%p645) target = $region12
      $region11: #{tpu_custom_call.1} parent=5 // pred_region
        %s649 = ssub.s32 %s44, 1
        // Predicated region
        $region13: #{tpu_custom_call.1} parent=11 // pred_check
          %p650 = pneg %p187
        $region14: #{tpu_custom_call.1} parent=11 // pred_check_branch
          %652 = sbr.rel (%p650) target = $region16
        $region15: #{tpu_custom_call.1} parent=11 // pred_region
          %s654 = ssub.s32 16, 16
          %655 = vsyncadd [#allocation7], %s654
          %s657 = sshll.u32 %s4, 4
          %s658 = int_to_ptr.vmem [resolvable:$true] %s657
          %660 = dma.vmem_to_smem %s658, 16, [#allocation4], [#allocation7]
        $region16: #{tpu_custom_call.1} parent=11 // pred_fallthru
          _
        // Predicated region
        $region17: #{tpu_custom_call.1} parent=11 // pred_check
          %p661 = pneg %p208
        $region18: #{tpu_custom_call.1} parent=11 // pred_check_branch
          %663 = sbr.rel (%p661) target = $region20
        $region19: #{tpu_custom_call.1} parent=11 // pred_region
          _
        $region20: #{tpu_custom_call.1} parent=11 // pred_fallthru
          _
        // Predicated region
        $region21: #{tpu_custom_call.1} parent=11 // pred_check
          %p664 = pneg %p229
        $region22: #{tpu_custom_call.1} parent=11 // pred_check_branch
          %666 = sbr.rel (%p664) target = $region24
        $region23: #{tpu_custom_call.1} parent=11 // pred_region
          %s668 = ssub.s32 512, 512
          %669 = vsyncadd [#allocation5], %s668
          %s670 = sshll.u32 [#allocation8], 4
          %s671 = int_to_ptr.vmem [resolvable:$true] %s670
          %676 = dma.hbm_to_vmem [thread:$0]  %s6, 512, %s671, [#allocation5], 128, 128, 8
        $region24: #{tpu_custom_call.1} parent=11 // pred_fallthru
          _
        // Predicated region
        $region25: #{tpu_custom_call.1} parent=11 // pred_check
          %p677 = pneg %p250
        $region26: #{tpu_custom_call.1} parent=11 // pred_check_branch
          %679 = sbr.rel (%p677) target = $region28
        $region27: #{tpu_custom_call.1} parent=11 // pred_region
          %s681 = ssub.s32 512, 512
          %682 = vsyncadd [#allocation10], %s681
          %s683 = sshll.u32 [#allocation9], 4
          %s684 = int_to_ptr.vmem [resolvable:$true] %s683
          %689 = dma.hbm_to_vmem [thread:$0]  %s7, 512, %s684, [#allocation10], 128, 128, 8
        $region28: #{tpu_custom_call.1} parent=11 // pred_fallthru
          _
        // Predicated region
        $region29: #{tpu_custom_call.1} parent=11 // pred_check
          %p690 = pneg %p271
        $region30: #{tpu_custom_call.1} parent=11 // pred_check_branch
          %692 = sbr.rel (%p690) target = $region32
        $region31: #{tpu_custom_call.1} parent=11 // pred_region
          _
        $region32: #{tpu_custom_call.1} parent=11 // pred_fallthru
          _
        // Predicated region
        $region33: #{tpu_custom_call.1} parent=11 // pred_check
          %p693 = pneg %p292
        $region34: #{tpu_custom_call.1} parent=11 // pred_check_branch
          %695 = sbr.rel (%p693) target = $region36
        $region35: #{tpu_custom_call.1} parent=11 // pred_region
          _
        $region36: #{tpu_custom_call.1} parent=11 // pred_fallthru
          _
        // Predicated region
        $region37: #{tpu_custom_call.1} parent=11 // pred_check
          %p696 = pneg %p313
        $region38: #{tpu_custom_call.1} parent=11 // pred_check_branch
          %698 = sbr.rel (%p696) target = $region40
        $region39: #{tpu_custom_call.1} parent=11 // pred_region
          _
        $region40: #{tpu_custom_call.1} parent=11 // pred_fallthru
          _
        // Predicated region
        $region41: #{tpu_custom_call.1} parent=11 // pred_check
          %p699 = pneg %p334
        $region42: #{tpu_custom_call.1} parent=11 // pred_check_branch
          %701 = sbr.rel (%p699) target = $region44
        $region43: #{tpu_custom_call.1} parent=11 // pred_region
          _
        $region44: #{tpu_custom_call.1} parent=11 // pred_fallthru
          _
        // Predicated region
        $region45: #{tpu_custom_call.1} parent=11 // pred_check
          %p702 = pneg %p355
        $region46: #{tpu_custom_call.1} parent=11 // pred_check_branch
          %704 = sbr.rel (%p702) target = $region48
        $region47: #{tpu_custom_call.1} parent=11 // pred_region
          %s706 = ssub.s32 512, 512
          %707 = vsyncadd [#allocation10], %s706
          %s708 = sshll.u32 [#allocation11], 4
          %s709 = int_to_ptr.vmem [resolvable:$true] %s708
          %714 = dma.hbm_to_vmem [thread:$0]  %s12, 512, %s709, [#allocation10], 128, 128, 8
        $region48: #{tpu_custom_call.1} parent=11 // pred_fallthru
          _
        // Predicated region
        $region49: #{tpu_custom_call.1} parent=11 // pred_check
          %p715 = pneg %p376
        $region50: #{tpu_custom_call.1} parent=11 // pred_check_branch
          %717 = sbr.rel (%p715) target = $region52
        $region51: #{tpu_custom_call.1} parent=11 // pred_region
          %s719 = ssub.s32 512, 512
          %720 = vsyncadd [#allocation13], %s719
          %s721 = sshll.u32 [#allocation12], 4
          %s722 = int_to_ptr.vmem [resolvable:$true] %s721
          %727 = dma.hbm_to_vmem [thread:$0]  %s13, 512, %s722, [#allocation13], 128, 128, 8
        $region52: #{tpu_custom_call.1} parent=11 // pred_fallthru
          _
        // Predicated region
        $region53: #{tpu_custom_call.1} parent=11 // pred_check
          %p728 = pneg %p397
        $region54: #{tpu_custom_call.1} parent=11 // pred_check_branch
          %730 = sbr.rel (%p728) target = $region56
        $region55: #{tpu_custom_call.1} parent=11 // pred_region
          _
        $region56: #{tpu_custom_call.1} parent=11 // pred_fallthru
          _
        // Predicated region
        $region57: #{tpu_custom_call.1} parent=11 // pred_check
          %p731 = pneg %p418
        $region58: #{tpu_custom_call.1} parent=11 // pred_check_branch
          %733 = sbr.rel (%p731) target = $region60
        $region59: #{tpu_custom_call.1} parent=11 // pred_region
          _
        $region60: #{tpu_custom_call.1} parent=11 // pred_fallthru
          _
        // Predicated region
        $region61: #{tpu_custom_call.1} parent=11 // pred_check
          %p734 = pneg %p439
        $region62: #{tpu_custom_call.1} parent=11 // pred_check_branch
          %736 = sbr.rel (%p734) target = $region64
        $region63: #{tpu_custom_call.1} parent=11 // pred_region
          _
        $region64: #{tpu_custom_call.1} parent=11 // pred_fallthru
          _
        // Predicated region
        $region65: #{tpu_custom_call.1} parent=11 // pred_check
          %p737 = pneg %p460
        $region66: #{tpu_custom_call.1} parent=11 // pred_check_branch
          %739 = sbr.rel (%p737) target = $region68
        $region67: #{tpu_custom_call.1} parent=11 // pred_region
          _
        $region68: #{tpu_custom_call.1} parent=11 // pred_fallthru
          _
        // Predicated region
        $region69: #{tpu_custom_call.1} parent=11 // pred_check
          %p740 = pneg %p481
        $region70: #{tpu_custom_call.1} parent=11 // pred_check_branch
          %742 = sbr.rel (%p740) target = $region72
        $region71: #{tpu_custom_call.1} parent=11 // pred_region
          _
        $region72: #{tpu_custom_call.1} parent=11 // pred_fallthru
          _
        // Predicated region
        $region73: #{tpu_custom_call.1} parent=11 // pred_check
          %p743 = pneg %p502
        $region74: #{tpu_custom_call.1} parent=11 // pred_check_branch
          %745 = sbr.rel (%p743) target = $region76
        $region75: #{tpu_custom_call.1} parent=11 // pred_region
          _
        $region76: #{tpu_custom_call.1} parent=11 // pred_fallthru
          _
        // Predicated region
        $region77: #{tpu_custom_call.1} parent=11 // pred_check
          %p746 = pneg %p523
        $region78: #{tpu_custom_call.1} parent=11 // pred_check_branch
          %748 = sbr.rel (%p746) target = $region80
        $region79: #{tpu_custom_call.1} parent=11 // pred_region
          _
        $region80: #{tpu_custom_call.1} parent=11 // pred_fallthru
          _
      $region12: #{tpu_custom_call.1} parent=5 // pred_fallthru
        _
      %p749 = scmp.lt.s32.totalorder %s44, 4
      // Predicated region
      $region81: #{tpu_custom_call.1} parent=5 // pred_check
        %p750 = pneg %p749
      $region82: #{tpu_custom_call.1} parent=5 // pred_check_branch
        %752 = sbr.rel (%p750) target = $region84
      $region83: #{tpu_custom_call.1} parent=5 // pred_region
        // Predicated region
        $region85: #{tpu_custom_call.1} parent=83 // pred_check
          %p753 = pneg %p76
        $region86: #{tpu_custom_call.1} parent=83 // pred_check_branch
          %755 = sbr.rel (%p753) target = $region88
        $region87: #{tpu_custom_call.1} parent=83 // pred_region
          %p756 = scmp.lt.s32.totalorder %s51, 1
          %s757 = scalar_select %p756, %s51, 1
          %s758 = smul.addr %s757, 2
          %s759 = smul.addr %s758, 8
          %s760 = scalar_lea.vmem %s0, %s759
        $region88: #{tpu_custom_call.1} parent=83 // pred_fallthru
          _
        // Predicated region
        $region89: #{tpu_custom_call.1} parent=83 // pred_check
          %p761 = pneg %p104
        $region90: #{tpu_custom_call.1} parent=83 // pred_check_branch
          %763 = sbr.rel (%p761) target = $region92
        $region91: #{tpu_custom_call.1} parent=83 // pred_region
          %p764 = scmp.lt.s32.totalorder %s51, 1
          %s765 = scalar_select %p764, %s51, 1
          %p766 = scmp.lt.s32.totalorder %s52, 1
          %s767 = scalar_select %p766, %s52, 1
          %s768 = smul.addr %s765, 2
          %s769 = sadd.s32 %s767, %s768
          %s770 = smul.addr %s769, 8
          %s771 = scalar_lea.vmem %s1, %s770
        $region92: #{tpu_custom_call.1} parent=83 // pred_fallthru
          _
        // Predicated region
        $region93: #{tpu_custom_call.1} parent=83 // pred_check
          %p772 = pneg %p132
        $region94: #{tpu_custom_call.1} parent=83 // pred_check_branch
          %774 = sbr.rel (%p772) target = $region96
        $region95: #{tpu_custom_call.1} parent=83 // pred_region
          %p775 = scmp.lt.s32.totalorder %s51, 1
          %s776 = scalar_select %p775, %s51, 1
          %p777 = scmp.lt.s32.totalorder %s52, 1
          %s778 = scalar_select %p777, %s52, 1
          %s779 = smul.addr %s776, 2
          %s780 = sadd.s32 %s778, %s779
          %s781 = smul.addr %s780, 8
          %s782 = scalar_lea.vmem %s2, %s781
        $region96: #{tpu_custom_call.1} parent=83 // pred_fallthru
          _
        // Predicated region
        $region97: #{tpu_custom_call.1} parent=83 // pred_check
          %p783 = pneg %p160
        $region98: #{tpu_custom_call.1} parent=83 // pred_check_branch
          %785 = sbr.rel (%p783) target = $region100
        $region99: #{tpu_custom_call.1} parent=83 // pred_region
          %p786 = scmp.lt.s32.totalorder %s51, 1
          %s787 = scalar_select %p786, %s51, 1
          %p788 = scmp.lt.s32.totalorder %s52, 1
          %s789 = scalar_select %p788, %s52, 1
          %s790 = smul.addr %s787, 2
          %s791 = sadd.s32 %s789, %s790
          %s792 = smul.addr %s791, 8
          %s793 = scalar_lea.vmem %s3, %s792
        $region100: #{tpu_custom_call.1} parent=83 // pred_fallthru
          _
      $region84: #{tpu_custom_call.1} parent=5 // pred_fallthru
        _
      %p794 = scmp.le.s32.totalorder 1, %s44
      %p795 = scmp.lt.s32.totalorder %s44, 5
      %p796 = pnand %p794, %p795
      %p797 = pneg %p796
      // Predicated region
      $region101: #{tpu_custom_call.1} parent=5 // pred_check
        _
      $region102: #{tpu_custom_call.1} parent=5 // pred_check_branch
        %799 = sbr.rel (%p796) target = $region104
      $region103: #{tpu_custom_call.1} parent=5 // pred_region
        %s800 = ssub.s32 %s44, 1
        // Predicated region
        $region105: #{tpu_custom_call.1} parent=103 // pred_check
          %p801 = pneg %p187
        $region106: #{tpu_custom_call.1} parent=103 // pred_check_branch
          %803 = sbr.rel (%p801) target = $region108
        $region107: #{tpu_custom_call.1} parent=103 // pred_region
          %804 = dma.done [#allocation7], 16
        $region108: #{tpu_custom_call.1} parent=103 // pred_fallthru
          _
        // Predicated region
        $region109: #{tpu_custom_call.1} parent=103 // pred_check
          %p805 = pneg %p229
        $region110: #{tpu_custom_call.1} parent=103 // pred_check_branch
          %807 = sbr.rel (%p805) target = $region112
        $region111: #{tpu_custom_call.1} parent=103 // pred_region
          %808 = dma.done [#allocation5], 512
        $region112: #{tpu_custom_call.1} parent=103 // pred_fallthru
          _
        // Predicated region
        $region113: #{tpu_custom_call.1} parent=103 // pred_check
          %p809 = pneg %p250
        $region114: #{tpu_custom_call.1} parent=103 // pred_check_branch
          %811 = sbr.rel (%p809) target = $region116
        $region115: #{tpu_custom_call.1} parent=103 // pred_region
          %812 = dma.done [#allocation10], 512
        $region116: #{tpu_custom_call.1} parent=103 // pred_fallthru
          _
        // Predicated region
        $region117: #{tpu_custom_call.1} parent=103 // pred_check
          %p813 = pneg %p355
        $region118: #{tpu_custom_call.1} parent=103 // pred_check_branch
          %815 = sbr.rel (%p813) target = $region120
        $region119: #{tpu_custom_call.1} parent=103 // pred_region
          %816 = dma.done [#allocation10], 512
        $region120: #{tpu_custom_call.1} parent=103 // pred_fallthru
          _
        // Predicated region
        $region121: #{tpu_custom_call.1} parent=103 // pred_check
          %p817 = pneg %p376
        $region122: #{tpu_custom_call.1} parent=103 // pred_check_branch
          %819 = sbr.rel (%p817) target = $region124
        $region123: #{tpu_custom_call.1} parent=103 // pred_region
          %820 = dma.done [#allocation13], 512
        $region124: #{tpu_custom_call.1} parent=103 // pred_fallthru
          _
        %821 = sfence
        %p822 = scmp.lt.s32.totalorder %s53, 1
        %s823 = scalar_select %p822, %s53, 1
        %s824 = smul.addr %s823, 2
        %s825 = smul.addr %s824, 8
        %s826 = scalar_lea.vmem %s0, %s825
        %p827 = pneg %p82
        %p828 = pneg %p79
        %p829 = scmp.lt.s32.totalorder %s53, 1
        %s830 = scalar_select %p829, %s53, 1
        %p831 = scmp.lt.s32.totalorder %s54, 1
        %s832 = scalar_select %p831, %s54, 1
        %s833 = smul.addr %s830, 2
        %s834 = sadd.s32 %s832, %s833
        %s835 = smul.addr %s834, 8
        %s836 = scalar_lea.vmem %s1, %s835
        %p837 = pneg %p110
        %p838 = pneg %p107
        %p839 = scmp.lt.s32.totalorder %s53, 1
        %s840 = scalar_select %p839, %s53, 1
        %p841 = scmp.lt.s32.totalorder %s54, 1
        %s842 = scalar_select %p841, %s54, 1
        %s843 = smul.addr %s840, 2
        %s844 = sadd.s32 %s842, %s843
        %s845 = smul.addr %s844, 8
        %s846 = scalar_lea.vmem %s2, %s845
        %p847 = pneg %p138
        %p848 = pneg %p135
        %p849 = scmp.lt.s32.totalorder %s53, 1
        %s850 = scalar_select %p849, %s53, 1
        %p851 = scmp.lt.s32.totalorder %s54, 1
        %s852 = scalar_select %p851, %s54, 1
        %s853 = smul.addr %s850, 2
        %s854 = sadd.s32 %s852, %s853
        %s855 = smul.addr %s854, 8
        %s856 = scalar_lea.vmem %s3, %s855
        %p857 = pneg %p166
        %p858 = pneg %p163
        %p859 = pneg %p187
        %p860 = pneg %p184
        %p861 = pneg %p208
        %p862 = pneg %p205
        %p863 = pneg %p229
        %p864 = pneg %p226
        %p865 = pneg %p250
        %p866 = pneg %p247
        %p867 = pneg %p271
        %p868 = pneg %p268
        %p869 = pneg %p292
        %p870 = pneg %p289
        %p871 = pneg %p313
        %p872 = pneg %p310
        %p873 = pneg %p334
        %p874 = pneg %p331
        %p875 = pneg %p355
        %p876 = pneg %p352
        %p877 = pneg %p376
        %p878 = pneg %p373
        %p879 = pneg %p397
        %p880 = pneg %p394
        %p881 = pneg %p418
        %p882 = pneg %p415
        %p883 = pneg %p439
        %p884 = pneg %p436
        %p885 = pneg %p460
        %p886 = pneg %p457
        %p887 = pneg %p481
        %p888 = pneg %p478
        %p889 = pneg %p502
        %p890 = pneg %p499
        %p891 = pneg %p523
        %p892 = pneg %p520
        %p893 = pneg %p551
        %p894 = pneg %p548
        %s895 = sand.u32 %s538, 1
        %s896 = scalar_lea.sflag [#allocation6], %s895
        %s897 = sand.u32 %s538, 1
        %s898 = smul.addr %s897, 8
        %s899 = scalar_lea.vmem [#allocation14], %s898
        %p900 = pneg %p579
        %p901 = pneg %p576
        %s902 = sand.u32 %s49, 1
        %s903 = scalar_lea.sflag [#allocation16], %s902
        %s904 = sand.u32 %s566, 1
        %s905 = smul.addr %s904, 8
        %s906 = scalar_lea.vmem [#allocation15], %s905
        %p907 = pneg %p607
        %p908 = pneg %p604
        %s909 = sand.u32 %s49, 1
        %s910 = scalar_lea.sflag [#allocation16], %s909
        %s911 = sand.u32 %s594, 1
        %s912 = smul.addr %s911, 8
        %s913 = scalar_lea.vmem [#allocation17], %s912
        %p914 = pneg %p635
        %p915 = pneg %p632
        %s916 = sand.u32 %s622, 1
        %s917 = scalar_lea.sflag [#allocation19], %s916
        %s918 = sand.u32 %s622, 1
        %s919 = smul.addr %s918, 8
        %s920 = scalar_lea.vmem [#allocation18], %s919
        %p921 = scmp.lt.s32.totalorder %s53, 1
        %s922 = scalar_select %p921, %s53, 1
        %s923 = smul.addr %s922, 2
        %s924 = smul.addr %s923, 8
        %s925 = scalar_lea.vmem %s0, %s924
        %p926 = scmp.lt.s32.totalorder %s53, 1
        %s927 = scalar_select %p926, %s53, 1
        %p928 = scmp.lt.s32.totalorder %s54, 1
        %s929 = scalar_select %p928, %s54, 1
        %s930 = smul.addr %s927, 2
        %s931 = sadd.s32 %s929, %s930
        %s932 = smul.addr %s931, 8
        %s933 = scalar_lea.vmem %s1, %s932
        %p934 = scmp.lt.s32.totalorder %s53, 1
        %s935 = scalar_select %p934, %s53, 1
        %p936 = scmp.lt.s32.totalorder %s54, 1
        %s937 = scalar_select %p936, %s54, 1
        %s938 = smul.addr %s935, 2
        %s939 = sadd.s32 %s937, %s938
        %s940 = smul.addr %s939, 8
        %s941 = scalar_lea.vmem %s2, %s940
        %p942 = scmp.lt.s32.totalorder %s53, 1
        %s943 = scalar_select %p942, %s53, 1
        %p944 = scmp.lt.s32.totalorder %s54, 1
        %s945 = scalar_select %p944, %s54, 1
        %s946 = smul.addr %s943, 2
        %s947 = sadd.s32 %s945, %s946
        %s948 = smul.addr %s947, 8
        %s949 = scalar_lea.vmem %s3, %s948
        %v950 = vld [vmem:[%s8] sm:$0x1]
        %v951 = vld [vmem:[%s9] sm:$0x1]
        %p952 = scmp.eq.s32.totalorder %s54, 0
        // Predicated region
        $region125: #{tpu_custom_call.1} parent=103 // pred_check
          %p953 = pneg %p952
        $region126: #{tpu_custom_call.1} parent=103 // pred_check_branch
          %955 = sbr.rel (%p953) target = $region128
        $region127: #{tpu_custom_call.1} parent=103 // pred_region
          %v956 = vld [vmem:[%s925] sm:$0xff]
          %v957 = vld [vmem:[%s925 + $0x8] sm:$0xff]
          %vm958 = vcmask 261120
          %v959 = vsel %vm958, %v956, 0.0
          %960 = vadd.xlane.f32.xlu0 %v959
          %v961 = vpop.xlane.xlu0 %960
          %v962 = vsel %vm958, %v957, 0.0
          %963 = vadd.xlane.f32.xlu0 %v962
          %v964 = vpop.xlane.xlu0 %963
          %v965 = vrcp.pop 32.0
          %v966 = vmul.f32 %v961, %v965
          %v967 = vmul.f32 %v964, %v965
          %v968 = vsub.f32 %v956, %v966
          %v969 = vsub.f32 %v957, %v967
          %v970 = vmul.f32 %v968, %v968
          %v971 = vmul.f32 %v969, %v969
          %v972 = vsel %vm958, %v970, 0.0
          %973 = vadd.xlane.f32.xlu0 %v972
          %v974 = vpop.xlane.xlu0 %973
          %v975 = vsel %vm958, %v971, 0.0
          %976 = vadd.xlane.f32.xlu0 %v975
          %v977 = vpop.xlane.xlu0 %976
          %v978 = vmul.f32 %v974, %v965
          %v979 = vmul.f32 %v977, %v965
          %v980 = vadd.f32 %v978, 1e-05
          %v981 = vadd.f32 %v979, 1e-05
          %v982 = vrsqrt.pop %v980
          %v983 = vrsqrt.pop %v981
          %v984 = vmul.f32 %v968, %v982
          %v985 = vmul.f32 %v969, %v983
          %v986 = vsel %vm958, %v984, 0.0
          %987 = vadd.xlane.f32.xlu0 %v986
          %v988 = vpop.xlane.xlu0 %987
          %v989 = vsel %vm958, %v985, 0.0
          %990 = vadd.xlane.f32.xlu0 %v989
          %v991 = vpop.xlane.xlu0 %990
          %v992 = vmul.f32 %v988, %v965
          %v993 = vmul.f32 %v991, %v965
          %v994 = vsub.f32 %v984, %v992
          %v995 = vsub.f32 %v985, %v993
          %v996 = vmul.f32 %v994, %v994
          %v997 = vmul.f32 %v995, %v995
          %v998 = vsel %vm958, %v996, 0.0
          %999 = vadd.xlane.f32.xlu0 %v998
          %v1000 = vpop.xlane.xlu0 %999
          %v1001 = vsel %vm958, %v997, 0.0
          %1002 = vadd.xlane.f32.xlu0 %v1001
          %v1003 = vpop.xlane.xlu0 %1002
          %v1004 = vmul.f32 %v1000, %v965
          %v1005 = vmul.f32 %v1003, %v965
          %v1006 = vadd.f32 %v1004, 1e-05
          %v1007 = vadd.f32 %v1005, 1e-05
          %v1008 = vrsqrt.pop %v1006
          %v1009 = vrsqrt.pop %v1007
          %v1010 = vmul.f32 %v994, %v1008
          %v1011 = vmul.f32 %v995, %v1009
          %v1013 = vlaneseq
          %v1014 = vshrl.u32 %v1013, 7
          %v1015 = vsub.s32 0, %v1014
          %v1016 = vrot.slane %v950, %v1015
          %v1018 = vmul.f32 %v1010, %v1016
          %v1019 = vmul.f32 %v1011, %v1016
          %v1021 = vlaneseq
          %v1022 = vshrl.u32 %v1021, 7
          %v1023 = vsub.s32 0, %v1022
          %v1024 = vrot.slane %v951, %v1023
          %v1026 = vadd.f32 %v1018, %v1024
          %v1027 = vadd.f32 %v1019, %v1024
          %v1028 = vld [vmem:[#allocation8] sm:$0xff]
          %v1029 = vld [vmem:[#allocation8 + $0x8] sm:$0xff]
          %v1030 = vld [vmem:[#allocation8 + $0x10] sm:$0xff]
          %v1031 = vld [vmem:[#allocation8 + $0x18] sm:$0xff]
          %v1033 = vsel %vm958, %v1026, 0
          %v1036 = vsel %vm958, %v1027, 0
          %1038 = vmatprep.subr.mxu0 0.0
          %1039 = vmatpush1.msra.mxu0 %v1028
          %1040 = vmatprep.subr.mxu0 0.0
          %1041 = vmatpush1.msra.mxu0 %v1029
          %1042 = vmatprep.subr.mxu0 0.0
          %1043 = vmatpush1.msra.mxu0 %v1030
          %1044 = vmatprep.subr.mxu0 0.0
          %1045 = vmatpush1.msra.mxu0 %v1031
          %1046 = vmatprep.subr.mxu0 0.0
          %1047 = vmatpush1.msra.mxu0 0.0
          %1048 = vmatprep.subr.mxu0 0.0
          %1049 = vmatpush1.msra.mxu0 0.0
          %1050 = vmatprep.subr.mxu0 0.0
          %1051 = vmatpush1.msra.mxu0 0.0
          %1052 = vmatprep.subr.mxu0 0.0
          %1053 = vmatpush1.msra.mxu0 0.0
          %1054 = vmatprep.subr.mxu0 0.0
          %1055 = vmatpush1.msra.mxu0 0.0
          %1056 = vmatprep.subr.mxu0 0.0
          %1057 = vmatpush1.msra.mxu0 0.0
          %1058 = vmatprep.subr.mxu0 0.0
          %1059 = vmatpush1.msra.mxu0 0.0
          %1060 = vmatprep.subr.mxu0 0.0
          %1061 = vmatpush1.msra.mxu0 0.0
          %1062 = vmatprep.subr.mxu0 0.0
          %1063 = vmatpush1.msra.mxu0 0.0
          %1064 = vmatprep.subr.mxu0 0.0
          %1065 = vmatpush1.msra.mxu0 0.0
          %1066 = vmatprep.subr.mxu0 0.0
          %1067 = vmatpush1.msra.mxu0 0.0
          %1068 = vmatprep.subr.mxu0 0.0
          %1069 = vmatpush1.msra.mxu0 0.0
          %1070 = vmatprep.subr.mxu0 0.0
          %1071 = vmatpush1.msra.mxu0 0.0
          %1072 = vmatprep.subr.mxu0 0.0
          %1073 = vmatpush1.msra.mxu0 0.0
          %1074 = vmatprep.subr.mxu0 0.0
          %1075 = vmatpush1.msra.mxu0 0.0
          %1076 = vmatprep.subr.mxu0 0.0
          %1077 = vmatpush1.msra.mxu0 0.0
          %1078 = vmatprep.subr.mxu0 0.0
          %1079 = vmatpush1.msra.mxu0 0.0
          %1080 = vmatprep.subr.mxu0 0.0
          %1081 = vmatpush1.msra.mxu0 0.0
          %1082 = vmatprep.subr.mxu0 0.0
          %1083 = vmatpush1.msra.mxu0 0.0
          %1084 = vmatprep.subr.mxu0 0.0
          %1085 = vmatpush1.msra.mxu0 0.0
          %1086 = vmatprep.subr.mxu0 0.0
          %1087 = vmatpush1.msra.mxu0 0.0
          %1088 = vmatprep.subr.mxu0 0.0
          %1089 = vmatpush1.msra.mxu0 0.0
          %1090 = vmatprep.subr.mxu0 0.0
          %1091 = vmatpush1.msra.mxu0 0.0
          %1092 = vmatprep.subr.mxu0 0.0
          %1093 = vmatpush1.msra.mxu0 0.0
          %1094 = vmatprep.subr.mxu0 0.0
          %1095 = vmatpush1.msra.mxu0 0.0
          %1096 = vmatprep.subr.mxu0 0.0
          %1097 = vmatpush1.msra.mxu0 0.0
          %1098 = vmatprep.subr.mxu0 0.0
          %1099 = vmatpush1.msra.mxu0 0.0
          %1100 = vmatprep.subr.mxu0 0.0
          %1101 = vmatpush1.msra.mxu0 0.0
          %1102 = vmatprep.mubr.f32.mxu0 0.0
          %1103 = vmatmul.mubr.f32.gmra.mrb[0].mxu0 %v1033
          %v1104 = vpop.f32.mrb[0].mxu0
          %v1105 = vadd.f32 0.0, %v1104
          %v1106 = vpop.f32.mrb[0].mxu0
          %1107 = vmatprep.mubr.f32.mxu0 0.0
          %1108 = vmatmul.mubr.f32.gmra.mrb[0].mxu0 %v1036
          %v1109 = vpop.f32.mrb[0].mxu0
          %v1110 = vadd.f32 0.0, %v1109
          %v1111 = vpop.f32.mrb[0].mxu0
          %1112 = vdwg.mxu0
          %vm1113 = vcmask 523264
          %1114 = vst.msk [vmem:[#allocation2] sm:$0xff] %vm1113, %v1105
          %1115 = vst.msk [vmem:[#allocation2 + $0x8] sm:$0xff] %vm1113, %v1110
        $region128: #{tpu_custom_call.1} parent=103 // pred_fallthru
          _
        %v1116 = vld [vmem:[%s933] sm:$0xff]
        %vm1117 = vcmask 261120
        %v1118 = vsel %vm1117, %v1116, 0.0
        %1119 = vadd.xlane.f32.xlu0 %v1118
        %v1120 = vpop.xlane.xlu0 %1119
        %v1121 = vrcp.pop 32.0
        %v1122 = vmul.f32 %v1120, %v1121
        %v1123 = vsub.f32 %v1116, %v1122
        %v1124 = vmul.f32 %v1123, %v1123
        %v1125 = vsel %vm1117, %v1124, 0.0
        %1126 = vadd.xlane.f32.xlu0 %v1125
        %v1127 = vpop.xlane.xlu0 %1126
        %v1128 = vmul.f32 %v1127, %v1121
        %v1129 = vadd.f32 %v1128, 1e-05
        %v1130 = vrsqrt.pop %v1129
        %v1131 = vmul.f32 %v1123, %v1130
        %v1132 = vsel %vm1117, %v1131, 0.0
        %1133 = vadd.xlane.f32.xlu0 %v1132
        %v1134 = vpop.xlane.xlu0 %1133
        %v1135 = vmul.f32 %v1134, %v1121
        %v1136 = vsub.f32 %v1131, %v1135
        %v1137 = vmul.f32 %v1136, %v1136
        %v1138 = vsel %vm1117, %v1137, 0.0
        %1139 = vadd.xlane.f32.xlu0 %v1138
        %v1140 = vpop.xlane.xlu0 %1139
        %v1141 = vmul.f32 %v1140, %v1121
        %v1142 = vadd.f32 %v1141, 1e-05
        %v1143 = vrsqrt.pop %v1142
        %v1144 = vmul.f32 %v1136, %v1143
        %v1146 = vlaneseq
        %v1147 = vshrl.u32 %v1146, 7
        %v1148 = vsub.s32 0, %v1147
        %v1149 = vrot.slane %v950, %v1148
        %v1151 = vmul.f32 %v1144, %v1149
        %v1153 = vlaneseq
        %v1154 = vshrl.u32 %v1153, 7
        %v1155 = vsub.s32 0, %v1154
        %v1156 = vrot.slane %v951, %v1155
        %v1158 = vadd.f32 %v1151, %v1156
        %v1159 = vld [vmem:[%s5] sm:$0xff]
        %v1160 = vld [vmem:[%s5 + $0x8] sm:$0xff]
        %v1161 = vld [vmem:[%s5 + $0x10] sm:$0xff]
        %v1162 = vld [vmem:[%s5 + $0x18] sm:$0xff]
        %v1164 = vsel %vm1117, %v1158, 0
        %1166 = vmatprep.subr.mxu0 0.0
        %1167 = vmatpush1.msra.mxu0 %v1159
        %1168 = vmatprep.subr.mxu0 0.0
        %1169 = vmatpush1.msra.mxu0 %v1160
        %1170 = vmatprep.subr.mxu0 0.0
        %1171 = vmatpush1.msra.mxu0 %v1161
        %1172 = vmatprep.subr.mxu0 0.0
        %1173 = vmatpush1.msra.mxu0 %v1162
        %1174 = vmatprep.subr.mxu0 0.0
        %1175 = vmatpush1.msra.mxu0 0.0
        %1176 = vmatprep.subr.mxu0 0.0
        %1177 = vmatpush1.msra.mxu0 0.0
        %1178 = vmatprep.subr.mxu0 0.0
        %1179 = vmatpush1.msra.mxu0 0.0
        %1180 = vmatprep.subr.mxu0 0.0
        %1181 = vmatpush1.msra.mxu0 0.0
        %1182 = vmatprep.subr.mxu0 0.0
        %1183 = vmatpush1.msra.mxu0 0.0
        %1184 = vmatprep.subr.mxu0 0.0
        %1185 = vmatpush1.msra.mxu0 0.0
        %1186 = vmatprep.subr.mxu0 0.0
        %1187 = vmatpush1.msra.mxu0 0.0
        %1188 = vmatprep.subr.mxu0 0.0
        %1189 = vmatpush1.msra.mxu0 0.0
        %1190 = vmatprep.subr.mxu0 0.0
        %1191 = vmatpush1.msra.mxu0 0.0
        %1192 = vmatprep.subr.mxu0 0.0
        %1193 = vmatpush1.msra.mxu0 0.0
        %1194 = vmatprep.subr.mxu0 0.0
        %1195 = vmatpush1.msra.mxu0 0.0
        %1196 = vmatprep.subr.mxu0 0.0
        %1197 = vmatpush1.msra.mxu0 0.0
        %1198 = vmatprep.subr.mxu0 0.0
        %1199 = vmatpush1.msra.mxu0 0.0
        %1200 = vmatprep.subr.mxu0 0.0
        %1201 = vmatpush1.msra.mxu0 0.0
        %1202 = vmatprep.subr.mxu0 0.0
        %1203 = vmatpush1.msra.mxu0 0.0
        %1204 = vmatprep.subr.mxu0 0.0
        %1205 = vmatpush1.msra.mxu0 0.0
        %1206 = vmatprep.subr.mxu0 0.0
        %1207 = vmatpush1.msra.mxu0 0.0
        %1208 = vmatprep.subr.mxu0 0.0
        %1209 = vmatpush1.msra.mxu0 0.0
        %1210 = vmatprep.subr.mxu0 0.0
        %1211 = vmatpush1.msra.mxu0 0.0
        %1212 = vmatprep.subr.mxu0 0.0
        %1213 = vmatpush1.msra.mxu0 0.0
        %1214 = vmatprep.subr.mxu0 0.0
        %1215 = vmatpush1.msra.mxu0 0.0
        %1216 = vmatprep.subr.mxu0 0.0
        %1217 = vmatpush1.msra.mxu0 0.0
        %1218 = vmatprep.subr.mxu0 0.0
        %1219 = vmatpush1.msra.mxu0 0.0
        %1220 = vmatprep.subr.mxu0 0.0
        %1221 = vmatpush1.msra.mxu0 0.0
        %1222 = vmatprep.subr.mxu0 0.0
        %1223 = vmatpush1.msra.mxu0 0.0
        %1224 = vmatprep.subr.mxu0 0.0
        %1225 = vmatpush1.msra.mxu0 0.0
        %1226 = vmatprep.subr.mxu0 0.0
        %1227 = vmatpush1.msra.mxu0 0.0
        %1228 = vmatprep.subr.mxu0 0.0
        %1229 = vmatpush1.msra.mxu0 0.0
        %1230 = vmatprep.mubr.f32.mxu0 0.0
        %1231 = vmatmul.mubr.f32.gmra.mrb[0].mxu0 %v1164
        %v1232 = vpop.f32.mrb[0].mxu0
        %v1233 = vadd.f32 0.0, %v1232
        %v1234 = vpop.f32.mrb[0].mxu0
        %1235 = vdwg.mxu0
        %v1236 = vld [vmem:[%s941] sm:$0xff]
        %v1237 = vld [vmem:[%s949] sm:$0xff]
        %v1238 = vld [vmem:[#allocation2] sm:$0xff]
        %v1239 = vld [vmem:[#allocation2 + $0x8] sm:$0xff]
        %s1240 = sld [smem:[#allocation4]]
        %v1241 = vstv %s1240
        %v1242 = vmul.f32 %v1241, %v1236
        %v1243 = vadd.f32 %v1237, %v1242
        %vm1244 = vcmask 64512
        %v1246 = vsel %vm1244, %v1233, 0
        %v1249 = vsel %vm1244, %v1238, 0
        %v1252 = vsel %vm1244, %v1239, 0
        %1254 = vmatprep.subr.mxu0 0.0
        %1255 = vmatpush1.xpose.msra.mxu0 %v1249
        %1256 = vmatprep.subr.mxu0 0.0
        %1257 = vmatpush1.xpose.msra.mxu0 %v1252
        %1258 = vmatprep.subr.mxu0 0.0
        %1259 = vmatpush1.xpose.msra.mxu0 0.0
        %1260 = vmatprep.subr.mxu0 0.0
        %1261 = vmatpush1.xpose.msra.mxu0 0.0
        %1262 = vmatprep.subr.mxu0 0.0
        %1263 = vmatpush1.xpose.msra.mxu0 0.0
        %1264 = vmatprep.subr.mxu0 0.0
        %1265 = vmatpush1.xpose.msra.mxu0 0.0
        %1266 = vmatprep.subr.mxu0 0.0
        %1267 = vmatpush1.xpose.msra.mxu0 0.0
        %1268 = vmatprep.subr.mxu0 0.0
        %1269 = vmatpush1.xpose.msra.mxu0 0.0
        %1270 = vmatprep.subr.mxu0 0.0
        %1271 = vmatpush1.xpose.msra.mxu0 0.0
        %1272 = vmatprep.subr.mxu0 0.0
        %1273 = vmatpush1.xpose.msra.mxu0 0.0
        %1274 = vmatprep.subr.mxu0 0.0
        %1275 = vmatpush1.xpose.msra.mxu0 0.0
        %1276 = vmatprep.subr.mxu0 0.0
        %1277 = vmatpush1.xpose.msra.mxu0 0.0
        %1278 = vmatprep.subr.mxu0 0.0
        %1279 = vmatpush1.xpose.msra.mxu0 0.0
        %1280 = vmatprep.subr.mxu0 0.0
        %1281 = vmatpush1.xpose.msra.mxu0 0.0
        %1282 = vmatprep.subr.mxu0 0.0
        %1283 = vmatpush1.xpose.msra.mxu0 0.0
        %1284 = vmatprep.subr.mxu0 0.0
        %1285 = vmatpush1.xpose.msra.mxu0 0.0
        %1286 = vmatprep.subr.mxu0 0.0
        %1287 = vmatpush1.xpose.msra.mxu0 0.0
        %1288 = vmatprep.subr.mxu0 0.0
        %1289 = vmatpush1.xpose.msra.mxu0 0.0
        %1290 = vmatprep.subr.mxu0 0.0
        %1291 = vmatpush1.xpose.msra.mxu0 0.0
        %1292 = vmatprep.subr.mxu0 0.0
        %1293 = vmatpush1.xpose.msra.mxu0 0.0
        %1294 = vmatprep.subr.mxu0 0.0
        %1295 = vmatpush1.xpose.msra.mxu0 0.0
        %1296 = vmatprep.subr.mxu0 0.0
        %1297 = vmatpush1.xpose.msra.mxu0 0.0
        %1298 = vmatprep.subr.mxu0 0.0
        %1299 = vmatpush1.xpose.msra.mxu0 0.0
        %1300 = vmatprep.subr.mxu0 0.0
        %1301 = vmatpush1.xpose.msra.mxu0 0.0
        %1302 = vmatprep.subr.mxu0 0.0
        %1303 = vmatpush1.xpose.msra.mxu0 0.0
        %1304 = vmatprep.subr.mxu0 0.0
        %1305 = vmatpush1.xpose.msra.mxu0 0.0
        %1306 = vmatprep.subr.mxu0 0.0
        %1307 = vmatpush1.xpose.msra.mxu0 0.0
        %1308 = vmatprep.subr.mxu0 0.0
        %1309 = vmatpush1.xpose.msra.mxu0 0.0
        %1310 = vmatprep.subr.mxu0 0.0
        %1311 = vmatpush1.xpose.msra.mxu0 0.0
        %1312 = vmatprep.subr.mxu0 0.0
        %1313 = vmatpush1.xpose.msra.mxu0 0.0
        %1314 = vmatprep.subr.mxu0 0.0
        %1315 = vmatpush1.xpose.msra.mxu0 0.0
        %1316 = vmatprep.subr.mxu0 0.0
        %1317 = vmatpush1.xpose.msra.mxu0 0.0
        %1318 = vmatprep.mubr.f32.mxu0 0.0
        %1319 = vmatmul.mubr.f32.gmra.mrb[0].mxu0 %v1246
        %v1320 = vpop.f32.mrb[0].mxu0
        %v1321 = vadd.f32 %v1243, %v1320
        %v1322 = vpop.f32.mrb[0].mxu0
        %1323 = vdwg.mxu0
        %vm1324 = vcmask 130048
        %v1325 = vsel %vm1324, %v1321, -inf
        %1326 = vmax.xlane.f32.xlu0 %v1325
        %v1327 = vpop.xlane.xlu0 %1326
        %v1328 = vsub.f32 %v1321, %v1327
        %v1329 = vmul.f32 %v1328, 1.442695
        %v1330 = vpow.pop %v1329
        %v1331 = vsel %vm1324, %v1330, 0.0
        %1332 = vadd.xlane.f32.xlu0 %v1331
        %v1333 = vpop.xlane.xlu0 %1332
        %v1334 = vrcp.pop %v1333
        %v1335 = vmul.f32 %v1330, %v1334
        %1336 = vrot.lane.b32.xlu0 %v1238, 96
        %v1337 = vpop.permute.xlu0 %1336
        %1338 = vrot.lane.b32.xlu0 %v1239, 96
        %v1339 = vpop.permute.xlu0 %1338
        %v1343 = vsel %vm1324, %v1335, 0
        %1345 = vmatprep.subr.mxu0 0.0
        %1346 = vmatpush1.msra.mxu0 %v1337
        %1347 = vmatprep.subr.mxu0 0.0
        %1348 = vmatpush1.msra.mxu0 %v1339
        %1349 = vmatprep.subr.mxu0 0.0
        %1350 = vmatpush1.msra.mxu0 0.0
        %1351 = vmatprep.subr.mxu0 0.0
        %1352 = vmatpush1.msra.mxu0 0.0
        %1353 = vmatprep.subr.mxu0 0.0
        %1354 = vmatpush1.msra.mxu0 0.0
        %1355 = vmatprep.subr.mxu0 0.0
        %1356 = vmatpush1.msra.mxu0 0.0
        %1357 = vmatprep.subr.mxu0 0.0
        %1358 = vmatpush1.msra.mxu0 0.0
        %1359 = vmatprep.subr.mxu0 0.0
        %1360 = vmatpush1.msra.mxu0 0.0
        %1361 = vmatprep.subr.mxu0 0.0
        %1362 = vmatpush1.msra.mxu0 0.0
        %1363 = vmatprep.subr.mxu0 0.0
        %1364 = vmatpush1.msra.mxu0 0.0
        %1365 = vmatprep.subr.mxu0 0.0
        %1366 = vmatpush1.msra.mxu0 0.0
        %1367 = vmatprep.subr.mxu0 0.0
        %1368 = vmatpush1.msra.mxu0 0.0
        %1369 = vmatprep.subr.mxu0 0.0
        %1370 = vmatpush1.msra.mxu0 0.0
        %1371 = vmatprep.subr.mxu0 0.0
        %1372 = vmatpush1.msra.mxu0 0.0
        %1373 = vmatprep.subr.mxu0 0.0
        %1374 = vmatpush1.msra.mxu0 0.0
        %1375 = vmatprep.subr.mxu0 0.0
        %1376 = vmatpush1.msra.mxu0 0.0
        %1377 = vmatprep.subr.mxu0 0.0
        %1378 = vmatpush1.msra.mxu0 0.0
        %1379 = vmatprep.subr.mxu0 0.0
        %1380 = vmatpush1.msra.mxu0 0.0
        %1381 = vmatprep.subr.mxu0 0.0
        %1382 = vmatpush1.msra.mxu0 0.0
        %1383 = vmatprep.subr.mxu0 0.0
        %1384 = vmatpush1.msra.mxu0 0.0
        %1385 = vmatprep.subr.mxu0 0.0
        %1386 = vmatpush1.msra.mxu0 0.0
        %1387 = vmatprep.subr.mxu0 0.0
        %1388 = vmatpush1.msra.mxu0 0.0
        %1389 = vmatprep.subr.mxu0 0.0
        %1390 = vmatpush1.msra.mxu0 0.0
        %1391 = vmatprep.subr.mxu0 0.0
        %1392 = vmatpush1.msra.mxu0 0.0
        %1393 = vmatprep.subr.mxu0 0.0
        %1394 = vmatpush1.msra.mxu0 0.0
        %1395 = vmatprep.subr.mxu0 0.0
        %1396 = vmatpush1.msra.mxu0 0.0
        %1397 = vmatprep.subr.mxu0 0.0
        %1398 = vmatpush1.msra.mxu0 0.0
        %1399 = vmatprep.subr.mxu0 0.0
        %1400 = vmatpush1.msra.mxu0 0.0
        %1401 = vmatprep.subr.mxu0 0.0
        %1402 = vmatpush1.msra.mxu0 0.0
        %1403 = vmatprep.subr.mxu0 0.0
        %1404 = vmatpush1.msra.mxu0 0.0
        %1405 = vmatprep.subr.mxu0 0.0
        %1406 = vmatpush1.msra.mxu0 0.0
        %1407 = vmatprep.subr.mxu0 0.0
        %1408 = vmatpush1.msra.mxu0 0.0
        %1409 = vmatprep.mubr.f32.mxu0 0.0
        %1410 = vmatmul.mubr.f32.gmra.mrb[0].mxu0 %v1343
        %v1411 = vpop.f32.mrb[0].mxu0
        %v1412 = vadd.f32 0.0, %v1411
        %v1413 = vpop.f32.mrb[0].mxu0
        %1414 = vdwg.mxu0
        %1415 = vst.msk [vmem:[#allocation3] sm:$0xff] %vm1244, %v1412
        %v1416 = vld [vmem:[#allocation2] sm:$0xff]
        %v1417 = vld [vmem:[#allocation2 + $0x8] sm:$0xff]
        %s1418 = sld [smem:[#allocation4 + $0x1]]
        %v1419 = vstv %s1418
        %v1420 = vmul.f32 %v1419, %v1236
        %v1421 = vadd.f32 %v1237, %v1420
        %1422 = vrot.lane.b32.xlu0 %v1233, 120
        %v1423 = vpop.permute.xlu0 %1422
        %1426 = vrot.lane.b32.xlu0 %v1416, 120
        %v1427 = vpop.permute.xlu0 %1426
        %1428 = vrot.lane.b32.xlu0 %v1417, 120
        %v1429 = vpop.permute.xlu0 %1428
        %v1430 = vsel %vm1244, %v1423, 0
        %v1432 = vsel %vm1244, %v1427, 0
        %v1434 = vsel %vm1244, %v1429, 0
        %1436 = vmatprep.subr.mxu0 0.0
        %1437 = vmatpush1.xpose.msra.mxu0 %v1432
        %1438 = vmatprep.subr.mxu0 0.0
        %1439 = vmatpush1.xpose.msra.mxu0 %v1434
        %1440 = vmatprep.subr.mxu0 0.0
        %1441 = vmatpush1.xpose.msra.mxu0 0.0
        %1442 = vmatprep.subr.mxu0 0.0
        %1443 = vmatpush1.xpose.msra.mxu0 0.0
        %1444 = vmatprep.subr.mxu0 0.0
        %1445 = vmatpush1.xpose.msra.mxu0 0.0
        %1446 = vmatprep.subr.mxu0 0.0
        %1447 = vmatpush1.xpose.msra.mxu0 0.0
        %1448 = vmatprep.subr.mxu0 0.0
        %1449 = vmatpush1.xpose.msra.mxu0 0.0
        %1450 = vmatprep.subr.mxu0 0.0
        %1451 = vmatpush1.xpose.msra.mxu0 0.0
        %1452 = vmatprep.subr.mxu0 0.0
        %1453 = vmatpush1.xpose.msra.mxu0 0.0
        %1454 = vmatprep.subr.mxu0 0.0
        %1455 = vmatpush1.xpose.msra.mxu0 0.0
        %1456 = vmatprep.subr.mxu0 0.0
        %1457 = vmatpush1.xpose.msra.mxu0 0.0
        %1458 = vmatprep.subr.mxu0 0.0
        %1459 = vmatpush1.xpose.msra.mxu0 0.0
        %1460 = vmatprep.subr.mxu0 0.0
        %1461 = vmatpush1.xpose.msra.mxu0 0.0
        %1462 = vmatprep.subr.mxu0 0.0
        %1463 = vmatpush1.xpose.msra.mxu0 0.0
        %1464 = vmatprep.subr.mxu0 0.0
        %1465 = vmatpush1.xpose.msra.mxu0 0.0
        %1466 = vmatprep.subr.mxu0 0.0
        %1467 = vmatpush1.xpose.msra.mxu0 0.0
        %1468 = vmatprep.subr.mxu0 0.0
        %1469 = vmatpush1.xpose.msra.mxu0 0.0
        %1470 = vmatprep.subr.mxu0 0.0
        %1471 = vmatpush1.xpose.msra.mxu0 0.0
        %1472 = vmatprep.subr.mxu0 0.0
        %1473 = vmatpush1.xpose.msra.mxu0 0.0
        %1474 = vmatprep.subr.mxu0 0.0
        %1475 = vmatpush1.xpose.msra.mxu0 0.0
        %1476 = vmatprep.subr.mxu0 0.0
        %1477 = vmatpush1.xpose.msra.mxu0 0.0
        %1478 = vmatprep.subr.mxu0 0.0
        %1479 = vmatpush1.xpose.msra.mxu0 0.0
        %1480 = vmatprep.subr.mxu0 0.0
        %1481 = vmatpush1.xpose.msra.mxu0 0.0
        %1482 = vmatprep.subr.mxu0 0.0
        %1483 = vmatpush1.xpose.msra.mxu0 0.0
        %1484 = vmatprep.subr.mxu0 0.0
        %1485 = vmatpush1.xpose.msra.mxu0 0.0
        %1486 = vmatprep.subr.mxu0 0.0
        %1487 = vmatpush1.xpose.msra.mxu0 0.0
        %1488 = vmatprep.subr.mxu0 0.0
        %1489 = vmatpush1.xpose.msra.mxu0 0.0
        %1490 = vmatprep.subr.mxu0 0.0
        %1491 = vmatpush1.xpose.msra.mxu0 0.0
        %1492 = vmatprep.subr.mxu0 0.0
        %1493 = vmatpush1.xpose.msra.mxu0 0.0
        %1494 = vmatprep.subr.mxu0 0.0
        %1495 = vmatpush1.xpose.msra.mxu0 0.0
        %1496 = vmatprep.subr.mxu0 0.0
        %1497 = vmatpush1.xpose.msra.mxu0 0.0
        %1498 = vmatprep.subr.mxu0 0.0
        %1499 = vmatpush1.xpose.msra.mxu0 0.0
        %1500 = vmatprep.mubr.f32.mxu0 0.0
        %1501 = vmatmul.mubr.f32.gmra.mrb[0].mxu0 %v1430
        %v1502 = vpop.f32.mrb[0].mxu0
        %v1503 = vadd.f32 %v1421, %v1502
        %v1504 = vpop.f32.mrb[0].mxu0
        %1505 = vdwg.mxu0
        %v1506 = vsel %vm1324, %v1503, -inf
        %1507 = vmax.xlane.f32.xlu0 %v1506
        %v1508 = vpop.xlane.xlu0 %1507
        %v1509 = vsub.f32 %v1503, %v1508
        %v1510 = vmul.f32 %v1509, 1.442695
        %v1511 = vpow.pop %v1510
        %v1512 = vsel %vm1324, %v1511, 0.0
        %1513 = vadd.xlane.f32.xlu0 %v1512
        %v1514 = vpop.xlane.xlu0 %1513
        %v1515 = vrcp.pop %v1514
        %v1516 = vmul.f32 %v1511, %v1515
        %1517 = vrot.lane.b32.xlu0 %v1416, 88
        %v1518 = vpop.permute.xlu0 %1517
        %1519 = vrot.lane.b32.xlu0 %v1417, 88
        %v1520 = vpop.permute.xlu0 %1519
        %v1524 = vsel %vm1324, %v1516, 0
        %1526 = vmatprep.subr.mxu0 0.0
        %1527 = vmatpush1.msra.mxu0 %v1518
        %1528 = vmatprep.subr.mxu0 0.0
        %1529 = vmatpush1.msra.mxu0 %v1520
        %1530 = vmatprep.subr.mxu0 0.0
        %1531 = vmatpush1.msra.mxu0 0.0
        %1532 = vmatprep.subr.mxu0 0.0
        %1533 = vmatpush1.msra.mxu0 0.0
        %1534 = vmatprep.subr.mxu0 0.0
        %1535 = vmatpush1.msra.mxu0 0.0
        %1536 = vmatprep.subr.mxu0 0.0
        %1537 = vmatpush1.msra.mxu0 0.0
        %1538 = vmatprep.subr.mxu0 0.0
        %1539 = vmatpush1.msra.mxu0 0.0
        %1540 = vmatprep.subr.mxu0 0.0
        %1541 = vmatpush1.msra.mxu0 0.0
        %1542 = vmatprep.subr.mxu0 0.0
        %1543 = vmatpush1.msra.mxu0 0.0
        %1544 = vmatprep.subr.mxu0 0.0
        %1545 = vmatpush1.msra.mxu0 0.0
        %1546 = vmatprep.subr.mxu0 0.0
        %1547 = vmatpush1.msra.mxu0 0.0
        %1548 = vmatprep.subr.mxu0 0.0
        %1549 = vmatpush1.msra.mxu0 0.0
        %1550 = vmatprep.subr.mxu0 0.0
        %1551 = vmatpush1.msra.mxu0 0.0
        %1552 = vmatprep.subr.mxu0 0.0
        %1553 = vmatpush1.msra.mxu0 0.0
        %1554 = vmatprep.subr.mxu0 0.0
        %1555 = vmatpush1.msra.mxu0 0.0
        %1556 = vmatprep.subr.mxu0 0.0
        %1557 = vmatpush1.msra.mxu0 0.0
        %1558 = vmatprep.subr.mxu0 0.0
        %1559 = vmatpush1.msra.mxu0 0.0
        %1560 = vmatprep.subr.mxu0 0.0
        %1561 = vmatpush1.msra.mxu0 0.0
        %1562 = vmatprep.subr.mxu0 0.0
        %1563 = vmatpush1.msra.mxu0 0.0
        %1564 = vmatprep.subr.mxu0 0.0
        %1565 = vmatpush1.msra.mxu0 0.0
        %1566 = vmatprep.subr.mxu0 0.0
        %1567 = vmatpush1.msra.mxu0 0.0
        %1568 = vmatprep.subr.mxu0 0.0
        %1569 = vmatpush1.msra.mxu0 0.0
        %1570 = vmatprep.subr.mxu0 0.0
        %1571 = vmatpush1.msra.mxu0 0.0
        %1572 = vmatprep.subr.mxu0 0.0
        %1573 = vmatpush1.msra.mxu0 0.0
        %1574 = vmatprep.subr.mxu0 0.0
        %1575 = vmatpush1.msra.mxu0 0.0
        %1576 = vmatprep.subr.mxu0 0.0
        %1577 = vmatpush1.msra.mxu0 0.0
        %1578 = vmatprep.subr.mxu0 0.0
        %1579 = vmatpush1.msra.mxu0 0.0
        %1580 = vmatprep.subr.mxu0 0.0
        %1581 = vmatpush1.msra.mxu0 0.0
        %1582 = vmatprep.subr.mxu0 0.0
        %1583 = vmatpush1.msra.mxu0 0.0
        %1584 = vmatprep.subr.mxu0 0.0
        %1585 = vmatpush1.msra.mxu0 0.0
        %1586 = vmatprep.subr.mxu0 0.0
        %1587 = vmatpush1.msra.mxu0 0.0
        %1588 = vmatprep.subr.mxu0 0.0
        %1589 = vmatpush1.msra.mxu0 0.0
        %1590 = vmatprep.mubr.f32.mxu0 0.0
        %1591 = vmatmul.mubr.f32.gmra.mrb[0].mxu0 %v1524
        %v1592 = vpop.f32.mrb[0].mxu0
        %v1593 = vadd.f32 0.0, %v1592
        %v1594 = vpop.f32.mrb[0].mxu0
        %1595 = vdwg.mxu0
        %1597 = vrot.lane.b32.xlu0 %v1593, 8
        %v1598 = vpop.permute.xlu0 %1597
        %vm1600 = vcmask 130112
        %1601 = vst.msk [vmem:[#allocation3] sm:$0xff] %vm1600, %v1598
        %v1602 = vld [vmem:[#allocation2] sm:$0xff]
        %v1603 = vld [vmem:[#allocation2 + $0x8] sm:$0xff]
        %s1604 = sld [smem:[#allocation4 + $0x2]]
        %v1605 = vstv %s1604
        %v1606 = vmul.f32 %v1605, %v1236
        %v1607 = vadd.f32 %v1237, %v1606
        %1608 = vrot.lane.b32.xlu0 %v1233, 112
        %v1609 = vpop.permute.xlu0 %1608
        %1612 = vrot.lane.b32.xlu0 %v1602, 112
        %v1613 = vpop.permute.xlu0 %1612
        %1614 = vrot.lane.b32.xlu0 %v1603, 112
        %v1615 = vpop.permute.xlu0 %1614
        %v1616 = vsel %vm1244, %v1609, 0
        %v1618 = vsel %vm1244, %v1613, 0
        %v1620 = vsel %vm1244, %v1615, 0
        %1622 = vmatprep.subr.mxu0 0.0
        %1623 = vmatpush1.xpose.msra.mxu0 %v1618
        %1624 = vmatprep.subr.mxu0 0.0
        %1625 = vmatpush1.xpose.msra.mxu0 %v1620
        %1626 = vmatprep.subr.mxu0 0.0
        %1627 = vmatpush1.xpose.msra.mxu0 0.0
        %1628 = vmatprep.subr.mxu0 0.0
        %1629 = vmatpush1.xpose.msra.mxu0 0.0
        %1630 = vmatprep.subr.mxu0 0.0
        %1631 = vmatpush1.xpose.msra.mxu0 0.0
        %1632 = vmatprep.subr.mxu0 0.0
        %1633 = vmatpush1.xpose.msra.mxu0 0.0
        %1634 = vmatprep.subr.mxu0 0.0
        %1635 = vmatpush1.xpose.msra.mxu0 0.0
        %1636 = vmatprep.subr.mxu0 0.0
        %1637 = vmatpush1.xpose.msra.mxu0 0.0
        %1638 = vmatprep.subr.mxu0 0.0
        %1639 = vmatpush1.xpose.msra.mxu0 0.0
        %1640 = vmatprep.subr.mxu0 0.0
        %1641 = vmatpush1.xpose.msra.mxu0 0.0
        %1642 = vmatprep.subr.mxu0 0.0
        %1643 = vmatpush1.xpose.msra.mxu0 0.0
        %1644 = vmatprep.subr.mxu0 0.0
        %1645 = vmatpush1.xpose.msra.mxu0 0.0
        %1646 = vmatprep.subr.mxu0 0.0
        %1647 = vmatpush1.xpose.msra.mxu0 0.0
        %1648 = vmatprep.subr.mxu0 0.0
        %1649 = vmatpush1.xpose.msra.mxu0 0.0
        %1650 = vmatprep.subr.mxu0 0.0
        %1651 = vmatpush1.xpose.msra.mxu0 0.0
        %1652 = vmatprep.subr.mxu0 0.0
        %1653 = vmatpush1.xpose.msra.mxu0 0.0
        %1654 = vmatprep.subr.mxu0 0.0
        %1655 = vmatpush1.xpose.msra.mxu0 0.0
        %1656 = vmatprep.subr.mxu0 0.0
        %1657 = vmatpush1.xpose.msra.mxu0 0.0
        %1658 = vmatprep.subr.mxu0 0.0
        %1659 = vmatpush1.xpose.msra.mxu0 0.0
        %1660 = vmatprep.subr.mxu0 0.0
        %1661 = vmatpush1.xpose.msra.mxu0 0.0
        %1662 = vmatprep.subr.mxu0 0.0
        %1663 = vmatpush1.xpose.msra.mxu0 0.0
        %1664 = vmatprep.subr.mxu0 0.0
        %1665 = vmatpush1.xpose.msra.mxu0 0.0
        %1666 = vmatprep.subr.mxu0 0.0
        %1667 = vmatpush1.xpose.msra.mxu0 0.0
        %1668 = vmatprep.subr.mxu0 0.0
        %1669 = vmatpush1.xpose.msra.mxu0 0.0
        %1670 = vmatprep.subr.mxu0 0.0
        %1671 = vmatpush1.xpose.msra.mxu0 0.0
        %1672 = vmatprep.subr.mxu0 0.0
        %1673 = vmatpush1.xpose.msra.mxu0 0.0
        %1674 = vmatprep.subr.mxu0 0.0
        %1675 = vmatpush1.xpose.msra.mxu0 0.0
        %1676 = vmatprep.subr.mxu0 0.0
        %1677 = vmatpush1.xpose.msra.mxu0 0.0
        %1678 = vmatprep.subr.mxu0 0.0
        %1679 = vmatpush1.xpose.msra.mxu0 0.0
        %1680 = vmatprep.subr.mxu0 0.0
        %1681 = vmatpush1.xpose.msra.mxu0 0.0
        %1682 = vmatprep.subr.mxu0 0.0
        %1683 = vmatpush1.xpose.msra.mxu0 0.0
        %1684 = vmatprep.subr.mxu0 0.0
        %1685 = vmatpush1.xpose.msra.mxu0 0.0
        %1686 = vmatprep.mubr.f32.mxu0 0.0
        %1687 = vmatmul.mubr.f32.gmra.mrb[0].mxu0 %v1616
        %v1688 = vpop.f32.mrb[0].mxu0
        %v1689 = vadd.f32 %v1607, %v1688
        %v1690 = vpop.f32.mrb[0].mxu0
        %1691 = vdwg.mxu0
        %v1692 = vsel %vm1324, %v1689, -inf
        %1693 = vmax.xlane.f32.xlu0 %v1692
        %v1694 = vpop.xlane.xlu0 %1693
        %v1695 = vsub.f32 %v1689, %v1694
        %v1696 = vmul.f32 %v1695, 1.442695
        %v1697 = vpow.pop %v1696
        %v1698 = vsel %vm1324, %v1697, 0.0
        %1699 = vadd.xlane.f32.xlu0 %v1698
        %v1700 = vpop.xlane.xlu0 %1699
        %v1701 = vrcp.pop %v1700
        %v1702 = vmul.f32 %v1697, %v1701
        %1703 = vrot.lane.b32.xlu0 %v1602, 80
        %v1704 = vpop.permute.xlu0 %1703
        %1705 = vrot.lane.b32.xlu0 %v1603, 80
        %v1706 = vpop.permute.xlu0 %1705
        %v1710 = vsel %vm1324, %v1702, 0
        %1712 = vmatprep.subr.mxu0 0.0
        %1713 = vmatpush1.msra.mxu0 %v1704
        %1714 = vmatprep.subr.mxu0 0.0
        %1715 = vmatpush1.msra.mxu0 %v1706
        %1716 = vmatprep.subr.mxu0 0.0
        %1717 = vmatpush1.msra.mxu0 0.0
        %1718 = vmatprep.subr.mxu0 0.0
        %1719 = vmatpush1.msra.mxu0 0.0
        %1720 = vmatprep.subr.mxu0 0.0
        %1721 = vmatpush1.msra.mxu0 0.0
        %1722 = vmatprep.subr.mxu0 0.0
        %1723 = vmatpush1.msra.mxu0 0.0
        %1724 = vmatprep.subr.mxu0 0.0
        %1725 = vmatpush1.msra.mxu0 0.0
        %1726 = vmatprep.subr.mxu0 0.0
        %1727 = vmatpush1.msra.mxu0 0.0
        %1728 = vmatprep.subr.mxu0 0.0
        %1729 = vmatpush1.msra.mxu0 0.0
        %1730 = vmatprep.subr.mxu0 0.0
        %1731 = vmatpush1.msra.mxu0 0.0
        %1732 = vmatprep.subr.mxu0 0.0
        %1733 = vmatpush1.msra.mxu0 0.0
        %1734 = vmatprep.subr.mxu0 0.0
        %1735 = vmatpush1.msra.mxu0 0.0
        %1736 = vmatprep.subr.mxu0 0.0
        %1737 = vmatpush1.msra.mxu0 0.0
        %1738 = vmatprep.subr.mxu0 0.0
        %1739 = vmatpush1.msra.mxu0 0.0
        %1740 = vmatprep.subr.mxu0 0.0
        %1741 = vmatpush1.msra.mxu0 0.0
        %1742 = vmatprep.subr.mxu0 0.0
        %1743 = vmatpush1.msra.mxu0 0.0
        %1744 = vmatprep.subr.mxu0 0.0
        %1745 = vmatpush1.msra.mxu0 0.0
        %1746 = vmatprep.subr.mxu0 0.0
        %1747 = vmatpush1.msra.mxu0 0.0
        %1748 = vmatprep.subr.mxu0 0.0
        %1749 = vmatpush1.msra.mxu0 0.0
        %1750 = vmatprep.subr.mxu0 0.0
        %1751 = vmatpush1.msra.mxu0 0.0
        %1752 = vmatprep.subr.mxu0 0.0
        %1753 = vmatpush1.msra.mxu0 0.0
        %1754 = vmatprep.subr.mxu0 0.0
        %1755 = vmatpush1.msra.mxu0 0.0
        %1756 = vmatprep.subr.mxu0 0.0
        %1757 = vmatpush1.msra.mxu0 0.0
        %1758 = vmatprep.subr.mxu0 0.0
        %1759 = vmatpush1.msra.mxu0 0.0
        %1760 = vmatprep.subr.mxu0 0.0
        %1761 = vmatpush1.msra.mxu0 0.0
        %1762 = vmatprep.subr.mxu0 0.0
        %1763 = vmatpush1.msra.mxu0 0.0
        %1764 = vmatprep.subr.mxu0 0.0
        %1765 = vmatpush1.msra.mxu0 0.0
        %1766 = vmatprep.subr.mxu0 0.0
        %1767 = vmatpush1.msra.mxu0 0.0
        %1768 = vmatprep.subr.mxu0 0.0
        %1769 = vmatpush1.msra.mxu0 0.0
        %1770 = vmatprep.subr.mxu0 0.0
        %1771 = vmatpush1.msra.mxu0 0.0
        %1772 = vmatprep.subr.mxu0 0.0
        %1773 = vmatpush1.msra.mxu0 0.0
        %1774 = vmatprep.subr.mxu0 0.0
        %1775 = vmatpush1.msra.mxu0 0.0
        %1776 = vmatprep.mubr.f32.mxu0 0.0
        %1777 = vmatmul.mubr.f32.gmra.mrb[0].mxu0 %v1710
        %v1778 = vpop.f32.mrb[0].mxu0
        %v1779 = vadd.f32 0.0, %v1778
        %v1780 = vpop.f32.mrb[0].mxu0
        %1781 = vdwg.mxu0
        %1783 = vrot.lane.b32.xlu0 %v1779, 16
        %v1784 = vpop.permute.xlu0 %1783
        %vm1786 = vcmask 195712
        %1787 = vst.msk [vmem:[#allocation3] sm:$0xff] %vm1786, %v1784
        %v1788 = vld [vmem:[#allocation2] sm:$0xff]
        %v1789 = vld [vmem:[#allocation2 + $0x8] sm:$0xff]
        %s1790 = sld [smem:[#allocation4 + $0x3]]
        %v1791 = vstv %s1790
        %v1792 = vmul.f32 %v1791, %v1236
        %v1793 = vadd.f32 %v1237, %v1792
        %1794 = vrot.lane.b32.xlu0 %v1233, 104
        %v1795 = vpop.permute.xlu0 %1794
        %1798 = vrot.lane.b32.xlu0 %v1788, 104
        %v1799 = vpop.permute.xlu0 %1798
        %1800 = vrot.lane.b32.xlu0 %v1789, 104
        %v1801 = vpop.permute.xlu0 %1800
        %v1802 = vsel %vm1244, %v1795, 0
        %v1804 = vsel %vm1244, %v1799, 0
        %v1806 = vsel %vm1244, %v1801, 0
        %1808 = vmatprep.subr.mxu0 0.0
        %1809 = vmatpush1.xpose.msra.mxu0 %v1804
        %1810 = vmatprep.subr.mxu0 0.0
        %1811 = vmatpush1.xpose.msra.mxu0 %v1806
        %1812 = vmatprep.subr.mxu0 0.0
        %1813 = vmatpush1.xpose.msra.mxu0 0.0
        %1814 = vmatprep.subr.mxu0 0.0
        %1815 = vmatpush1.xpose.msra.mxu0 0.0
        %1816 = vmatprep.subr.mxu0 0.0
        %1817 = vmatpush1.xpose.msra.mxu0 0.0
        %1818 = vmatprep.subr.mxu0 0.0
        %1819 = vmatpush1.xpose.msra.mxu0 0.0
        %1820 = vmatprep.subr.mxu0 0.0
        %1821 = vmatpush1.xpose.msra.mxu0 0.0
        %1822 = vmatprep.subr.mxu0 0.0
        %1823 = vmatpush1.xpose.msra.mxu0 0.0
        %1824 = vmatprep.subr.mxu0 0.0
        %1825 = vmatpush1.xpose.msra.mxu0 0.0
        %1826 = vmatprep.subr.mxu0 0.0
        %1827 = vmatpush1.xpose.msra.mxu0 0.0
        %1828 = vmatprep.subr.mxu0 0.0
        %1829 = vmatpush1.xpose.msra.mxu0 0.0
        %1830 = vmatprep.subr.mxu0 0.0
        %1831 = vmatpush1.xpose.msra.mxu0 0.0
        %1832 = vmatprep.subr.mxu0 0.0
        %1833 = vmatpush1.xpose.msra.mxu0 0.0
        %1834 = vmatprep.subr.mxu0 0.0
        %1835 = vmatpush1.xpose.msra.mxu0 0.0
        %1836 = vmatprep.subr.mxu0 0.0
        %1837 = vmatpush1.xpose.msra.mxu0 0.0
        %1838 = vmatprep.subr.mxu0 0.0
        %1839 = vmatpush1.xpose.msra.mxu0 0.0
        %1840 = vmatprep.subr.mxu0 0.0
        %1841 = vmatpush1.xpose.msra.mxu0 0.0
        %1842 = vmatprep.subr.mxu0 0.0
        %1843 = vmatpush1.xpose.msra.mxu0 0.0
        %1844 = vmatprep.subr.mxu0 0.0
        %1845 = vmatpush1.xpose.msra.mxu0 0.0
        %1846 = vmatprep.subr.mxu0 0.0
        %1847 = vmatpush1.xpose.msra.mxu0 0.0
        %1848 = vmatprep.subr.mxu0 0.0
        %1849 = vmatpush1.xpose.msra.mxu0 0.0
        %1850 = vmatprep.subr.mxu0 0.0
        %1851 = vmatpush1.xpose.msra.mxu0 0.0
        %1852 = vmatprep.subr.mxu0 0.0
        %1853 = vmatpush1.xpose.msra.mxu0 0.0
        %1854 = vmatprep.subr.mxu0 0.0
        %1855 = vmatpush1.xpose.msra.mxu0 0.0
        %1856 = vmatprep.subr.mxu0 0.0
        %1857 = vmatpush1.xpose.msra.mxu0 0.0
        %1858 = vmatprep.subr.mxu0 0.0
        %1859 = vmatpush1.xpose.msra.mxu0 0.0
        %1860 = vmatprep.subr.mxu0 0.0
        %1861 = vmatpush1.xpose.msra.mxu0 0.0
        %1862 = vmatprep.subr.mxu0 0.0
        %1863 = vmatpush1.xpose.msra.mxu0 0.0
        %1864 = vmatprep.subr.mxu0 0.0
        %1865 = vmatpush1.xpose.msra.mxu0 0.0
        %1866 = vmatprep.subr.mxu0 0.0
        %1867 = vmatpush1.xpose.msra.mxu0 0.0
        %1868 = vmatprep.subr.mxu0 0.0
        %1869 = vmatpush1.xpose.msra.mxu0 0.0
        %1870 = vmatprep.subr.mxu0 0.0
        %1871 = vmatpush1.xpose.msra.mxu0 0.0
        %1872 = vmatprep.mubr.f32.mxu0 0.0
        %1873 = vmatmul.mubr.f32.gmra.mrb[0].mxu0 %v1802
        %v1874 = vpop.f32.mrb[0].mxu0
        %v1875 = vadd.f32 %v1793, %v1874
        %v1876 = vpop.f32.mrb[0].mxu0
        %1877 = vdwg.mxu0
        %v1878 = vsel %vm1324, %v1875, -inf
        %1879 = vmax.xlane.f32.xlu0 %v1878
        %v1880 = vpop.xlane.xlu0 %1879
        %v1881 = vsub.f32 %v1875, %v1880
        %v1882 = vmul.f32 %v1881, 1.442695
        %v1883 = vpow.pop %v1882
        %v1884 = vsel %vm1324, %v1883, 0.0
        %1885 = vadd.xlane.f32.xlu0 %v1884
        %v1886 = vpop.xlane.xlu0 %1885
        %v1887 = vrcp.pop %v1886
        %v1888 = vmul.f32 %v1883, %v1887
        %1889 = vrot.lane.b32.xlu0 %v1788, 72
        %v1890 = vpop.permute.xlu0 %1889
        %1891 = vrot.lane.b32.xlu0 %v1789, 72
        %v1892 = vpop.permute.xlu0 %1891
        %v1896 = vsel %vm1324, %v1888, 0
        %1898 = vmatprep.subr.mxu0 0.0
        %1899 = vmatpush1.msra.mxu0 %v1890
        %1900 = vmatprep.subr.mxu0 0.0
        %1901 = vmatpush1.msra.mxu0 %v1892
        %1902 = vmatprep.subr.mxu0 0.0
        %1903 = vmatpush1.msra.mxu0 0.0
        %1904 = vmatprep.subr.mxu0 0.0
        %1905 = vmatpush1.msra.mxu0 0.0
        %1906 = vmatprep.subr.mxu0 0.0
        %1907 = vmatpush1.msra.mxu0 0.0
        %1908 = vmatprep.subr.mxu0 0.0
        %1909 = vmatpush1.msra.mxu0 0.0
        %1910 = vmatprep.subr.mxu0 0.0
        %1911 = vmatpush1.msra.mxu0 0.0
        %1912 = vmatprep.subr.mxu0 0.0
        %1913 = vmatpush1.msra.mxu0 0.0
        %1914 = vmatprep.subr.mxu0 0.0
        %1915 = vmatpush1.msra.mxu0 0.0
        %1916 = vmatprep.subr.mxu0 0.0
        %1917 = vmatpush1.msra.mxu0 0.0
        %1918 = vmatprep.subr.mxu0 0.0
        %1919 = vmatpush1.msra.mxu0 0.0
        %1920 = vmatprep.subr.mxu0 0.0
        %1921 = vmatpush1.msra.mxu0 0.0
        %1922 = vmatprep.subr.mxu0 0.0
        %1923 = vmatpush1.msra.mxu0 0.0
        %1924 = vmatprep.subr.mxu0 0.0
        %1925 = vmatpush1.msra.mxu0 0.0
        %1926 = vmatprep.subr.mxu0 0.0
        %1927 = vmatpush1.msra.mxu0 0.0
        %1928 = vmatprep.subr.mxu0 0.0
        %1929 = vmatpush1.msra.mxu0 0.0
        %1930 = vmatprep.subr.mxu0 0.0
        %1931 = vmatpush1.msra.mxu0 0.0
        %1932 = vmatprep.subr.mxu0 0.0
        %1933 = vmatpush1.msra.mxu0 0.0
        %1934 = vmatprep.subr.mxu0 0.0
        %1935 = vmatpush1.msra.mxu0 0.0
        %1936 = vmatprep.subr.mxu0 0.0
        %1937 = vmatpush1.msra.mxu0 0.0
        %1938 = vmatprep.subr.mxu0 0.0
        %1939 = vmatpush1.msra.mxu0 0.0
        %1940 = vmatprep.subr.mxu0 0.0
        %1941 = vmatpush1.msra.mxu0 0.0
        %1942 = vmatprep.subr.mxu0 0.0
        %1943 = vmatpush1.msra.mxu0 0.0
        %1944 = vmatprep.subr.mxu0 0.0
        %1945 = vmatpush1.msra.mxu0 0.0
        %1946 = vmatprep.subr.mxu0 0.0
        %1947 = vmatpush1.msra.mxu0 0.0
        %1948 = vmatprep.subr.mxu0 0.0
        %1949 = vmatpush1.msra.mxu0 0.0
        %1950 = vmatprep.subr.mxu0 0.0
        %1951 = vmatpush1.msra.mxu0 0.0
        %1952 = vmatprep.subr.mxu0 0.0
        %1953 = vmatpush1.msra.mxu0 0.0
        %1954 = vmatprep.subr.mxu0 0.0
        %1955 = vmatpush1.msra.mxu0 0.0
        %1956 = vmatprep.subr.mxu0 0.0
        %1957 = vmatpush1.msra.mxu0 0.0
        %1958 = vmatprep.subr.mxu0 0.0
        %1959 = vmatpush1.msra.mxu0 0.0
        %1960 = vmatprep.subr.mxu0 0.0
        %1961 = vmatpush1.msra.mxu0 0.0
        %1962 = vmatprep.mubr.f32.mxu0 0.0
        %1963 = vmatmul.mubr.f32.gmra.mrb[0].mxu0 %v1896
        %v1964 = vpop.f32.mrb[0].mxu0
        %v1965 = vadd.f32 0.0, %v1964
        %v1966 = vpop.f32.mrb[0].mxu0
        %1967 = vdwg.mxu0
        %1969 = vrot.lane.b32.xlu0 %v1965, 24
        %v1970 = vpop.permute.xlu0 %1969
        %vm1972 = vcmask 261312
        %1973 = vst.msk [vmem:[#allocation3] sm:$0xff] %vm1972, %v1970
        %v1974 = vld [vmem:[#allocation3] sm:$0xff]
        %1975 = vst.msk [vmem:[%s913] sm:$0xff] %vm1117, %v1974
        %v1976 = vld [vmem:[#allocation9] sm:$0xff]
        %v1977 = vld [vmem:[#allocation9 + $0x8] sm:$0xff]
        %v1978 = vld [vmem:[#allocation9 + $0x10] sm:$0xff]
        %v1979 = vld [vmem:[#allocation9 + $0x18] sm:$0xff]
        %v1981 = vsel %vm1117, %v1974, 0
        %1983 = vmatprep.subr.mxu0 0.0
        %1984 = vmatpush1.msra.mxu0 %v1976
        %1985 = vmatprep.subr.mxu0 0.0
        %1986 = vmatpush1.msra.mxu0 %v1977
        %1987 = vmatprep.subr.mxu0 0.0
        %1988 = vmatpush1.msra.mxu0 %v1978
        %1989 = vmatprep.subr.mxu0 0.0
        %1990 = vmatpush1.msra.mxu0 %v1979
        %1991 = vmatprep.subr.mxu0 0.0
        %1992 = vmatpush1.msra.mxu0 0.0
        %1993 = vmatprep.subr.mxu0 0.0
        %1994 = vmatpush1.msra.mxu0 0.0
        %1995 = vmatprep.subr.mxu0 0.0
        %1996 = vmatpush1.msra.mxu0 0.0
        %1997 = vmatprep.subr.mxu0 0.0
        %1998 = vmatpush1.msra.mxu0 0.0
        %1999 = vmatprep.subr.mxu0 0.0
        %2000 = vmatpush1.msra.mxu0 0.0
        %2001 = vmatprep.subr.mxu0 0.0
        %2002 = vmatpush1.msra.mxu0 0.0
        %2003 = vmatprep.subr.mxu0 0.0
        %2004 = vmatpush1.msra.mxu0 0.0
        %2005 = vmatprep.subr.mxu0 0.0
        %2006 = vmatpush1.msra.mxu0 0.0
        %2007 = vmatprep.subr.mxu0 0.0
        %2008 = vmatpush1.msra.mxu0 0.0
        %2009 = vmatprep.subr.mxu0 0.0
        %2010 = vmatpush1.msra.mxu0 0.0
        %2011 = vmatprep.subr.mxu0 0.0
        %2012 = vmatpush1.msra.mxu0 0.0
        %2013 = vmatprep.subr.mxu0 0.0
        %2014 = vmatpush1.msra.mxu0 0.0
        %2015 = vmatprep.subr.mxu0 0.0
        %2016 = vmatpush1.msra.mxu0 0.0
        %2017 = vmatprep.subr.mxu0 0.0
        %2018 = vmatpush1.msra.mxu0 0.0
        %2019 = vmatprep.subr.mxu0 0.0
        %2020 = vmatpush1.msra.mxu0 0.0
        %2021 = vmatprep.subr.mxu0 0.0
        %2022 = vmatpush1.msra.mxu0 0.0
        %2023 = vmatprep.subr.mxu0 0.0
        %2024 = vmatpush1.msra.mxu0 0.0
        %2025 = vmatprep.subr.mxu0 0.0
        %2026 = vmatpush1.msra.mxu0 0.0
        %2027 = vmatprep.subr.mxu0 0.0
        %2028 = vmatpush1.msra.mxu0 0.0
        %2029 = vmatprep.subr.mxu0 0.0
        %2030 = vmatpush1.msra.mxu0 0.0
        %2031 = vmatprep.subr.mxu0 0.0
        %2032 = vmatpush1.msra.mxu0 0.0
        %2033 = vmatprep.subr.mxu0 0.0
        %2034 = vmatpush1.msra.mxu0 0.0
        %2035 = vmatprep.subr.mxu0 0.0
        %2036 = vmatpush1.msra.mxu0 0.0
        %2037 = vmatprep.subr.mxu0 0.0
        %2038 = vmatpush1.msra.mxu0 0.0
        %2039 = vmatprep.subr.mxu0 0.0
        %2040 = vmatpush1.msra.mxu0 0.0
        %2041 = vmatprep.subr.mxu0 0.0
        %2042 = vmatpush1.msra.mxu0 0.0
        %2043 = vmatprep.subr.mxu0 0.0
        %2044 = vmatpush1.msra.mxu0 0.0
        %2045 = vmatprep.subr.mxu0 0.0
        %2046 = vmatpush1.msra.mxu0 0.0
        %2047 = vmatprep.mubr.f32.mxu0 0.0
        %2048 = vmatmul.mubr.f32.gmra.mrb[0].mxu0 %v1981
        %v2049 = vpop.f32.mrb[0].mxu0
        %v2050 = vadd.f32 0.0, %v2049
        %v2051 = vpop.f32.mrb[0].mxu0
        %2052 = vdwg.mxu0
        %v2053 = vld [vmem:[%s10] sm:$0x1]
        %v2054 = vld [vmem:[%s11] sm:$0x1]
        %v2055 = vsel %vm1117, %v2050, 0.0
        %2056 = vadd.xlane.f32.xlu0 %v2055
        %v2057 = vpop.xlane.xlu0 %2056
        %v2058 = vmul.f32 %v2057, %v1121
        %v2059 = vsub.f32 %v2050, %v2058
        %v2060 = vmul.f32 %v2059, %v2059
        %v2061 = vsel %vm1117, %v2060, 0.0
        %2062 = vadd.xlane.f32.xlu0 %v2061
        %v2063 = vpop.xlane.xlu0 %2062
        %v2064 = vmul.f32 %v2063, %v1121
        %v2065 = vadd.f32 %v2064, 1e-05
        %v2066 = vrsqrt.pop %v2065
        %v2067 = vmul.f32 %v2059, %v2066
        %v2069 = vlaneseq
        %v2070 = vshrl.u32 %v2069, 7
        %v2071 = vsub.s32 0, %v2070
        %v2072 = vrot.slane %v2053, %v2071
        %v2074 = vmul.f32 %v2067, %v2072
        %v2076 = vlaneseq
        %v2077 = vshrl.u32 %v2076, 7
        %v2078 = vsub.s32 0, %v2077
        %v2079 = vrot.slane %v2054, %v2078
        %v2081 = vadd.f32 %v2074, %v2079
        %v2082 = vadd.f32 %v1131, %v2081
        %v2083 = vld [vmem:[%s15] sm:$0x1]
        %v2084 = vld [vmem:[%s16] sm:$0x1]
        %v2085 = vsel %vm1117, %v2082, 0.0
        %2086 = vadd.xlane.f32.xlu0 %v2085
        %v2087 = vpop.xlane.xlu0 %2086
        %v2088 = vmul.f32 %v2087, %v1121
        %v2089 = vsub.f32 %v2082, %v2088
        %v2090 = vmul.f32 %v2089, %v2089
        %v2091 = vsel %vm1117, %v2090, 0.0
        %2092 = vadd.xlane.f32.xlu0 %v2091
        %v2093 = vpop.xlane.xlu0 %2092
        %v2094 = vmul.f32 %v2093, %v1121
        %v2095 = vadd.f32 %v2094, 1e-05
        %v2096 = vrsqrt.pop %v2095
        %v2097 = vmul.f32 %v2089, %v2096
        %v2099 = vlaneseq
        %v2100 = vshrl.u32 %v2099, 7
        %v2101 = vsub.s32 0, %v2100
        %v2102 = vrot.slane %v2083, %v2101
        %v2104 = vmul.f32 %v2097, %v2102
        %v2106 = vlaneseq
        %v2107 = vshrl.u32 %v2106, 7
        %v2108 = vsub.s32 0, %v2107
        %v2109 = vrot.slane %v2084, %v2108
        %v2111 = vadd.f32 %v2104, %v2109
        %v2112 = vld [vmem:[#allocation11] sm:$0xff]
        %v2113 = vld [vmem:[#allocation11 + $0x8] sm:$0xff]
        %v2114 = vld [vmem:[#allocation11 + $0x10] sm:$0xff]
        %v2115 = vld [vmem:[#allocation11 + $0x18] sm:$0xff]
        %v2117 = vsel %vm1117, %v2111, 0
        %2119 = vmatprep.subr.mxu0 0.0
        %2120 = vmatpush1.msra.mxu0 %v2112
        %2121 = vmatprep.subr.mxu0 0.0
        %2122 = vmatpush1.msra.mxu0 %v2113
        %2123 = vmatprep.subr.mxu0 0.0
        %2124 = vmatpush1.msra.mxu0 %v2114
        %2125 = vmatprep.subr.mxu0 0.0
        %2126 = vmatpush1.msra.mxu0 %v2115
        %2127 = vmatprep.subr.mxu0 0.0
        %2128 = vmatpush1.msra.mxu0 0.0
        %2129 = vmatprep.subr.mxu0 0.0
        %2130 = vmatpush1.msra.mxu0 0.0
        %2131 = vmatprep.subr.mxu0 0.0
        %2132 = vmatpush1.msra.mxu0 0.0
        %2133 = vmatprep.subr.mxu0 0.0
        %2134 = vmatpush1.msra.mxu0 0.0
        %2135 = vmatprep.subr.mxu0 0.0
        %2136 = vmatpush1.msra.mxu0 0.0
        %2137 = vmatprep.subr.mxu0 0.0
        %2138 = vmatpush1.msra.mxu0 0.0
        %2139 = vmatprep.subr.mxu0 0.0
        %2140 = vmatpush1.msra.mxu0 0.0
        %2141 = vmatprep.subr.mxu0 0.0
        %2142 = vmatpush1.msra.mxu0 0.0
        %2143 = vmatprep.subr.mxu0 0.0
        %2144 = vmatpush1.msra.mxu0 0.0
        %2145 = vmatprep.subr.mxu0 0.0
        %2146 = vmatpush1.msra.mxu0 0.0
        %2147 = vmatprep.subr.mxu0 0.0
        %2148 = vmatpush1.msra.mxu0 0.0
        %2149 = vmatprep.subr.mxu0 0.0
        %2150 = vmatpush1.msra.mxu0 0.0
        %2151 = vmatprep.subr.mxu0 0.0
        %2152 = vmatpush1.msra.mxu0 0.0
        %2153 = vmatprep.subr.mxu0 0.0
        %2154 = vmatpush1.msra.mxu0 0.0
        %2155 = vmatprep.subr.mxu0 0.0
        %2156 = vmatpush1.msra.mxu0 0.0
        %2157 = vmatprep.subr.mxu0 0.0
        %2158 = vmatpush1.msra.mxu0 0.0
        %2159 = vmatprep.subr.mxu0 0.0
        %2160 = vmatpush1.msra.mxu0 0.0
        %2161 = vmatprep.subr.mxu0 0.0
        %2162 = vmatpush1.msra.mxu0 0.0
        %2163 = vmatprep.subr.mxu0 0.0
        %2164 = vmatpush1.msra.mxu0 0.0
        %2165 = vmatprep.subr.mxu0 0.0
        %2166 = vmatpush1.msra.mxu0 0.0
        %2167 = vmatprep.subr.mxu0 0.0
        %2168 = vmatpush1.msra.mxu0 0.0
        %2169 = vmatprep.subr.mxu0 0.0
        %2170 = vmatpush1.msra.mxu0 0.0
        %2171 = vmatprep.subr.mxu0 0.0
        %2172 = vmatpush1.msra.mxu0 0.0
        %2173 = vmatprep.subr.mxu0 0.0
        %2174 = vmatpush1.msra.mxu0 0.0
        %2175 = vmatprep.subr.mxu0 0.0
        %2176 = vmatpush1.msra.mxu0 0.0
        %2177 = vmatprep.subr.mxu0 0.0
        %2178 = vmatpush1.msra.mxu0 0.0
        %2179 = vmatprep.subr.mxu0 0.0
        %2180 = vmatpush1.msra.mxu0 0.0
        %2181 = vmatprep.subr.mxu0 0.0
        %2182 = vmatpush1.msra.mxu0 0.0
        %2183 = vmatprep.mubr.f32.mxu0 0.0
        %2184 = vmatmul.mubr.f32.gmra.mrb[0].mxu0 %v2117
        %v2185 = vpop.f32.mrb[0].mxu0
        %v2186 = vadd.f32 0.0, %v2185
        %v2187 = vpop.f32.mrb[0].mxu0
        %2188 = vdwg.mxu0
        %v2189 = vld [vmem:[#allocation12] sm:$0xff]
        %v2190 = vld [vmem:[#allocation12 + $0x8] sm:$0xff]
        %v2191 = vld [vmem:[#allocation12 + $0x10] sm:$0xff]
        %v2192 = vld [vmem:[#allocation12 + $0x18] sm:$0xff]
        %2193 = vmatprep.subr.mxu0 0.0
        %2194 = vmatpush1.msra.mxu0 %v2189
        %2195 = vmatprep.subr.mxu0 0.0
        %2196 = vmatpush1.msra.mxu0 %v2190
        %2197 = vmatprep.subr.mxu0 0.0
        %2198 = vmatpush1.msra.mxu0 %v2191
        %2199 = vmatprep.subr.mxu0 0.0
        %2200 = vmatpush1.msra.mxu0 %v2192
        %2201 = vmatprep.subr.mxu0 0.0
        %2202 = vmatpush1.msra.mxu0 0.0
        %2203 = vmatprep.subr.mxu0 0.0
        %2204 = vmatpush1.msra.mxu0 0.0
        %2205 = vmatprep.subr.mxu0 0.0
        %2206 = vmatpush1.msra.mxu0 0.0
        %2207 = vmatprep.subr.mxu0 0.0
        %2208 = vmatpush1.msra.mxu0 0.0
        %2209 = vmatprep.subr.mxu0 0.0
        %2210 = vmatpush1.msra.mxu0 0.0
        %2211 = vmatprep.subr.mxu0 0.0
        %2212 = vmatpush1.msra.mxu0 0.0
        %2213 = vmatprep.subr.mxu0 0.0
        %2214 = vmatpush1.msra.mxu0 0.0
        %2215 = vmatprep.subr.mxu0 0.0
        %2216 = vmatpush1.msra.mxu0 0.0
        %2217 = vmatprep.subr.mxu0 0.0
        %2218 = vmatpush1.msra.mxu0 0.0
        %2219 = vmatprep.subr.mxu0 0.0
        %2220 = vmatpush1.msra.mxu0 0.0
        %2221 = vmatprep.subr.mxu0 0.0
        %2222 = vmatpush1.msra.mxu0 0.0
        %2223 = vmatprep.subr.mxu0 0.0
        %2224 = vmatpush1.msra.mxu0 0.0
        %2225 = vmatprep.subr.mxu0 0.0
        %2226 = vmatpush1.msra.mxu0 0.0
        %2227 = vmatprep.subr.mxu0 0.0
        %2228 = vmatpush1.msra.mxu0 0.0
        %2229 = vmatprep.subr.mxu0 0.0
        %2230 = vmatpush1.msra.mxu0 0.0
        %2231 = vmatprep.subr.mxu0 0.0
        %2232 = vmatpush1.msra.mxu0 0.0
        %2233 = vmatprep.subr.mxu0 0.0
        %2234 = vmatpush1.msra.mxu0 0.0
        %2235 = vmatprep.subr.mxu0 0.0
        %2236 = vmatpush1.msra.mxu0 0.0
        %2237 = vmatprep.subr.mxu0 0.0
        %2238 = vmatpush1.msra.mxu0 0.0
        %2239 = vmatprep.subr.mxu0 0.0
        %2240 = vmatpush1.msra.mxu0 0.0
        %2241 = vmatprep.subr.mxu0 0.0
        %2242 = vmatpush1.msra.mxu0 0.0
        %2243 = vmatprep.subr.mxu0 0.0
        %2244 = vmatpush1.msra.mxu0 0.0
        %2245 = vmatprep.subr.mxu0 0.0
        %2246 = vmatpush1.msra.mxu0 0.0
        %2247 = vmatprep.subr.mxu0 0.0
        %2248 = vmatpush1.msra.mxu0 0.0
        %2249 = vmatprep.subr.mxu0 0.0
        %2250 = vmatpush1.msra.mxu0 0.0
        %2251 = vmatprep.subr.mxu0 0.0
        %2252 = vmatpush1.msra.mxu0 0.0
        %2253 = vmatprep.subr.mxu0 0.0
        %2254 = vmatpush1.msra.mxu0 0.0
        %2255 = vmatprep.subr.mxu0 0.0
        %2256 = vmatpush1.msra.mxu0 0.0
        %2257 = vmatprep.mubr.f32.mxu0 0.0
        %2258 = vmatmul.mubr.f32.gmra.mrb[0].mxu0 %v2117
        %v2259 = vpop.f32.mrb[0].mxu0
        %v2260 = vadd.f32 0.0, %v2259
        %v2261 = vpop.f32.mrb[0].mxu0
        %2262 = vdwg.mxu0
        %v2263 = vmul.f32 %v2186, %v2260
        %v2264 = vld [vmem:[%s14] sm:$0xff]
        %v2265 = vld [vmem:[%s14 + $0x8] sm:$0xff]
        %v2266 = vld [vmem:[%s14 + $0x10] sm:$0xff]
        %v2267 = vld [vmem:[%s14 + $0x18] sm:$0xff]
        %v2268 = vld [vmem:[%s14 + $0x20] sm:$0xff]
        %v2269 = vld [vmem:[%s14 + $0x28] sm:$0xff]
        %v2270 = vld [vmem:[%s14 + $0x30] sm:$0xff]
        %v2271 = vld [vmem:[%s14 + $0x38] sm:$0xff]
        %v2272 = vld [vmem:[%s14 + $0x40] sm:$0xff]
        %v2273 = vld [vmem:[%s14 + $0x48] sm:$0xff]
        %v2274 = vld [vmem:[%s14 + $0x50] sm:$0xff]
        %v2275 = vld [vmem:[%s14 + $0x58] sm:$0xff]
        %v2276 = vld [vmem:[%s14 + $0x60] sm:$0xff]
        %v2277 = vld [vmem:[%s14 + $0x68] sm:$0xff]
        %v2278 = vld [vmem:[%s14 + $0x70] sm:$0xff]
        %v2279 = vld [vmem:[%s14 + $0x78] sm:$0xff]
        %2280 = vmatprep.subr.mxu0 0.0
        %2281 = vmatpush1.msra.mxu0 %v2264
        %2282 = vmatprep.subr.mxu0 0.0
        %2283 = vmatpush1.msra.mxu0 %v2265
        %2284 = vmatprep.subr.mxu0 0.0
        %2285 = vmatpush1.msra.mxu0 %v2266
        %2286 = vmatprep.subr.mxu0 0.0
        %2287 = vmatpush1.msra.mxu0 %v2267
        %2288 = vmatprep.subr.mxu0 0.0
        %2289 = vmatpush1.msra.mxu0 %v2268
        %2290 = vmatprep.subr.mxu0 0.0
        %2291 = vmatpush1.msra.mxu0 %v2269
        %2292 = vmatprep.subr.mxu0 0.0
        %2293 = vmatpush1.msra.mxu0 %v2270
        %2294 = vmatprep.subr.mxu0 0.0
        %2295 = vmatpush1.msra.mxu0 %v2271
        %2296 = vmatprep.subr.mxu0 0.0
        %2297 = vmatpush1.msra.mxu0 %v2272
        %2298 = vmatprep.subr.mxu0 0.0
        %2299 = vmatpush1.msra.mxu0 %v2273
        %2300 = vmatprep.subr.mxu0 0.0
        %2301 = vmatpush1.msra.mxu0 %v2274
        %2302 = vmatprep.subr.mxu0 0.0
        %2303 = vmatpush1.msra.mxu0 %v2275
        %2304 = vmatprep.subr.mxu0 0.0
        %2305 = vmatpush1.msra.mxu0 %v2276
        %2306 = vmatprep.subr.mxu0 0.0
        %2307 = vmatpush1.msra.mxu0 %v2277
        %2308 = vmatprep.subr.mxu0 0.0
        %2309 = vmatpush1.msra.mxu0 %v2278
        %2310 = vmatprep.subr.mxu0 0.0
        %2311 = vmatpush1.msra.mxu0 %v2279
        %2312 = vmatprep.subr.mxu0 0.0
        %2313 = vmatpush1.msra.mxu0 0.0
        %2314 = vmatprep.subr.mxu0 0.0
        %2315 = vmatpush1.msra.mxu0 0.0
        %2316 = vmatprep.subr.mxu0 0.0
        %2317 = vmatpush1.msra.mxu0 0.0
        %2318 = vmatprep.subr.mxu0 0.0
        %2319 = vmatpush1.msra.mxu0 0.0
        %2320 = vmatprep.subr.mxu0 0.0
        %2321 = vmatpush1.msra.mxu0 0.0
        %2322 = vmatprep.subr.mxu0 0.0
        %2323 = vmatpush1.msra.mxu0 0.0
        %2324 = vmatprep.subr.mxu0 0.0
        %2325 = vmatpush1.msra.mxu0 0.0
        %2326 = vmatprep.subr.mxu0 0.0
        %2327 = vmatpush1.msra.mxu0 0.0
        %2328 = vmatprep.subr.mxu0 0.0
        %2329 = vmatpush1.msra.mxu0 0.0
        %2330 = vmatprep.subr.mxu0 0.0
        %2331 = vmatpush1.msra.mxu0 0.0
        %2332 = vmatprep.subr.mxu0 0.0
        %2333 = vmatpush1.msra.mxu0 0.0
        %2334 = vmatprep.subr.mxu0 0.0
        %2335 = vmatpush1.msra.mxu0 0.0
        %2336 = vmatprep.subr.mxu0 0.0
        %2337 = vmatpush1.msra.mxu0 0.0
        %2338 = vmatprep.subr.mxu0 0.0
        %2339 = vmatpush1.msra.mxu0 0.0
        %2340 = vmatprep.subr.mxu0 0.0
        %2341 = vmatpush1.msra.mxu0 0.0
        %2342 = vmatprep.subr.mxu0 0.0
        %2343 = vmatpush1.msra.mxu0 0.0
        %2344 = vmatprep.mubr.f32.mxu0 0.0
        %2345 = vmatmul.mubr.f32.gmra.mrb[0].mxu0 %v2263
        %v2346 = vpop.f32.mrb[0].mxu0
        %v2347 = vadd.f32 0.0, %v2346
        %v2348 = vpop.f32.mrb[0].mxu0
        %2349 = vdwg.mxu0
        %v2350 = vld [vmem:[%s17] sm:$0x1]
        %v2351 = vld [vmem:[%s18] sm:$0x1]
        %v2352 = vsel %vm1117, %v2347, 0.0
        %2353 = vadd.xlane.f32.xlu0 %v2352
        %v2354 = vpop.xlane.xlu0 %2353
        %v2355 = vmul.f32 %v2354, %v1121
        %v2356 = vsub.f32 %v2347, %v2355
        %v2357 = vmul.f32 %v2356, %v2356
        %v2358 = vsel %vm1117, %v2357, 0.0
        %2359 = vadd.xlane.f32.xlu0 %v2358
        %v2360 = vpop.xlane.xlu0 %2359
        %v2361 = vmul.f32 %v2360, %v1121
        %v2362 = vadd.f32 %v2361, 1e-05
        %v2363 = vrsqrt.pop %v2362
        %v2364 = vmul.f32 %v2356, %v2363
        %v2366 = vlaneseq
        %v2367 = vshrl.u32 %v2366, 7
        %v2368 = vsub.s32 0, %v2367
        %v2369 = vrot.slane %v2350, %v2368
        %v2371 = vmul.f32 %v2364, %v2369
        %v2373 = vlaneseq
        %v2374 = vshrl.u32 %v2373, 7
        %v2375 = vsub.s32 0, %v2374
        %v2376 = vrot.slane %v2351, %v2375
        %v2378 = vadd.f32 %v2371, %v2376
        %v2379 = vadd.f32 %v2082, %v2378
        %2380 = vst.msk [vmem:[%s899] sm:$0xff] %vm1117, %v2379
        %2381 = vst.msk [vmem:[%s906] sm:$0xff] %vm1117, %v2082
        %2382 = vst.msk [vmem:[%s920] sm:$0xff] %vm1117, %v2347
        %s2383 = sand.u32 %s538, 1
        %s2384 = scalar_lea.sflag [#allocation6], %s2383
        %s2385 = sand.u32 %s538, 1
        %s2386 = smul.addr %s2385, 8
        %s2387 = scalar_lea.vmem [#allocation14], %s2386
        %s2388 = sand.u32 %s49, 1
        %s2389 = scalar_lea.sflag [#allocation16], %s2388
        %s2390 = sand.u32 %s566, 1
        %s2391 = smul.addr %s2390, 8
        %s2392 = scalar_lea.vmem [#allocation15], %s2391
        %s2393 = sand.u32 %s49, 1
        %s2394 = scalar_lea.sflag [#allocation16], %s2393
        %s2395 = sand.u32 %s594, 1
        %s2396 = smul.addr %s2395, 8
        %s2397 = scalar_lea.vmem [#allocation17], %s2396
        %s2398 = sand.u32 %s622, 1
        %s2399 = scalar_lea.sflag [#allocation19], %s2398
        %s2400 = sand.u32 %s622, 1
        %s2401 = smul.addr %s2400, 8
        %s2402 = scalar_lea.vmem [#allocation18], %s2401
        // Predicated region
        $region129: #{tpu_custom_call.1} parent=103 // pred_check
          %p2403 = pneg %p548
        $region130: #{tpu_custom_call.1} parent=103 // pred_check_branch
          %2405 = sbr.rel (%p2403) target = $region132
        $region131: #{tpu_custom_call.1} parent=103 // pred_region
          %s2407 = ssub.s32 128, 128
          %2408 = vsyncadd %s2384, %s2407
          %s2409 = smul.addr %s53, 2
          %s2410 = sadd.s32 %s54, %s2409
          %s2411 = smul.addr %s2410, 128
          %s2412 = scalar_lea.hbm %s21, %s2411
          %s2414 = sshll.u32 %s2387, 4
          %s2415 = int_to_ptr.vmem [resolvable:$true] %s2414
          %2417 = dma.vmem_to_hbm [thread:$0]  %s2415, 128, %s2412, %s2384
        $region132: #{tpu_custom_call.1} parent=103 // pred_fallthru
          _
        // Predicated region
        $region133: #{tpu_custom_call.1} parent=103 // pred_check
          %p2418 = pneg %p576
        $region134: #{tpu_custom_call.1} parent=103 // pred_check_branch
          %2420 = sbr.rel (%p2418) target = $region136
        $region135: #{tpu_custom_call.1} parent=103 // pred_region
          %s2422 = ssub.s32 128, 128
          %2423 = vsyncadd %s2389, %s2422
          %s2424 = smul.addr %s53, 2
          %s2425 = sadd.s32 %s54, %s2424
          %s2426 = smul.addr %s2425, 128
          %s2427 = scalar_lea.hbm %s22, %s2426
          %s2429 = sshll.u32 %s2392, 4
          %s2430 = int_to_ptr.vmem [resolvable:$true] %s2429
          %2432 = dma.vmem_to_hbm [thread:$0]  %s2430, 128, %s2427, %s2389
        $region136: #{tpu_custom_call.1} parent=103 // pred_fallthru
          _
        // Predicated region
        $region137: #{tpu_custom_call.1} parent=103 // pred_check
          %p2433 = pneg %p604
        $region138: #{tpu_custom_call.1} parent=103 // pred_check_branch
          %2435 = sbr.rel (%p2433) target = $region140
        $region139: #{tpu_custom_call.1} parent=103 // pred_region
          %s2437 = ssub.s32 128, 128
          %2438 = vsyncadd %s2394, %s2437
          %s2439 = smul.addr %s53, 2
          %s2440 = sadd.s32 %s54, %s2439
          %s2441 = smul.addr %s2440, 128
          %s2442 = scalar_lea.hbm %s23, %s2441
          %s2444 = sshll.u32 %s2397, 4
          %s2445 = int_to_ptr.vmem [resolvable:$true] %s2444
          %2447 = dma.vmem_to_hbm [thread:$0]  %s2445, 128, %s2442, %s2394
        $region140: #{tpu_custom_call.1} parent=103 // pred_fallthru
          _
        // Predicated region
        $region141: #{tpu_custom_call.1} parent=103 // pred_check
          %p2448 = pneg %p632
        $region142: #{tpu_custom_call.1} parent=103 // pred_check_branch
          %2450 = sbr.rel (%p2448) target = $region144
        $region143: #{tpu_custom_call.1} parent=103 // pred_region
          %s2452 = ssub.s32 128, 128
          %2453 = vsyncadd %s2399, %s2452
          %s2454 = smul.addr %s53, 2
          %s2455 = sadd.s32 %s54, %s2454
          %s2456 = smul.addr %s2455, 128
          %s2457 = scalar_lea.hbm %s24, %s2456
          %s2459 = sshll.u32 %s2402, 4
          %s2460 = int_to_ptr.vmem [resolvable:$true] %s2459
          %2462 = dma.vmem_to_hbm [thread:$0]  %s2460, 128, %s2457, %s2399
        $region144: #{tpu_custom_call.1} parent=103 // pred_fallthru
          _
      $region104: #{tpu_custom_call.1} parent=5 // pred_fallthru
        _
      %p2463 = scmp.le.s32.totalorder 2, %s44
      // Predicated region
      $region145: #{tpu_custom_call.1} parent=5 // pred_check
        %p2464 = pneg %p2463
      $region146: #{tpu_custom_call.1} parent=5 // pred_check_branch
        %2466 = sbr.rel (%p2464) target = $region148
      $region147: #{tpu_custom_call.1} parent=5 // pred_region
        %s2467 = ssub.s32 %s44, 2
        // Predicated region
        $region149: #{tpu_custom_call.1} parent=147 // pred_check
          %p2468 = pneg %p554
        $region150: #{tpu_custom_call.1} parent=147 // pred_check_branch
          %2470 = sbr.rel (%p2468) target = $region152
        $region151: #{tpu_custom_call.1} parent=147 // pred_region
          %s2471 = sand.u32 %s539, 1
          %s2472 = scalar_lea.sflag [#allocation6], %s2471
          %s2473 = sand.u32 %s539, 1
          %s2474 = smul.addr %s2473, 8
          %s2475 = scalar_lea.vmem [#allocation14], %s2474
          %2476 = dma.done %s2472, 128
        $region152: #{tpu_custom_call.1} parent=147 // pred_fallthru
          _
        // Predicated region
        $region153: #{tpu_custom_call.1} parent=147 // pred_check
          %p2477 = pneg %p582
        $region154: #{tpu_custom_call.1} parent=147 // pred_check_branch
          %2479 = sbr.rel (%p2477) target = $region156
        $region155: #{tpu_custom_call.1} parent=147 // pred_region
          %s2480 = sand.u32 %s50, 1
          %s2481 = scalar_lea.sflag [#allocation16], %s2480
          %s2482 = sand.u32 %s567, 1
          %s2483 = smul.addr %s2482, 8
          %s2484 = scalar_lea.vmem [#allocation15], %s2483
          %2485 = dma.done %s2481, 128
        $region156: #{tpu_custom_call.1} parent=147 // pred_fallthru
          _
        // Predicated region
        $region157: #{tpu_custom_call.1} parent=147 // pred_check
          %p2486 = pneg %p610
        $region158: #{tpu_custom_call.1} parent=147 // pred_check_branch
          %2488 = sbr.rel (%p2486) target = $region160
        $region159: #{tpu_custom_call.1} parent=147 // pred_region
          %s2489 = sand.u32 %s50, 1
          %s2490 = scalar_lea.sflag [#allocation16], %s2489
          %s2491 = sand.u32 %s595, 1
          %s2492 = smul.addr %s2491, 8
          %s2493 = scalar_lea.vmem [#allocation17], %s2492
          %2494 = dma.done %s2490, 128
        $region160: #{tpu_custom_call.1} parent=147 // pred_fallthru
          _
        // Predicated region
        $region161: #{tpu_custom_call.1} parent=147 // pred_check
          %p2495 = pneg %p638
        $region162: #{tpu_custom_call.1} parent=147 // pred_check_branch
          %2497 = sbr.rel (%p2495) target = $region164
        $region163: #{tpu_custom_call.1} parent=147 // pred_region
          %s2498 = sand.u32 %s623, 1
          %s2499 = scalar_lea.sflag [#allocation19], %s2498
          %s2500 = sand.u32 %s623, 1
          %s2501 = smul.addr %s2500, 8
          %s2502 = scalar_lea.vmem [#allocation18], %s2501
          %2503 = dma.done %s2499, 128
        $region164: #{tpu_custom_call.1} parent=147 // pred_fallthru
          _
      $region148: #{tpu_custom_call.1} parent=5 // pred_fallthru
        _
    $region6: #{tpu_custom_call.1} parent=1 // loop_footer
      %s48 = sadd.s32 1, %s44
    $region7: #{tpu_custom_call.1} parent=1 // loop_footer_branch
      %43 = sbr.rel target = $region3
    $region8: #{tpu_custom_call.1} parent=1 // loop_exit
      _
    %2504 = vsyncpa [#allocation5], 1
    %s2505 = scalar_lea.sflag [#allocation5], 1
    %2506 = vsyncpa %s2505, 1
    %2507 = vsyncpa [#allocation10], 1
    %2508 = vsyncpa [#allocation13], 1
    %2509 = vsyncpa [#allocation6], 1
    %s2510 = scalar_lea.sflag [#allocation6], 1
    %2511 = vsyncpa %s2510, 1
    %2512 = vsyncpa [#allocation16], 1
    %s2513 = scalar_lea.sflag [#allocation16], 1
    %2514 = vsyncpa %s2513, 1
    %2515 = vsyncpa [#allocation19], 1
    %s2516 = scalar_lea.sflag [#allocation19], 1
    %2517 = vsyncpa %s2516, 1
    %2518 = vsyncpa [#allocation7], 1
    %s2519 = scalar_lea.sflag [#allocation7], 1
    %2520 = vsyncpa %s2519, 1

// kernel: tpu_custom_call.1
$region0: #{tpu_custom_call.1}
  #allocation0 [shape = 'u32[]', space=smem, size = 0x4, offset = 0x4, fixed_abs, tag = 'smem constant byte address 0x4 - core index']
  #allocation1 [shape = 'u32[144,128]{1,0:T(1,128)}', space=vmem, size = 0x12000, scoped, tag = 'internal scratch']
  #allocation2 [shape = 'f32[16,64]{1,0:T(8,128)}', space=vmem, size = 0x2000, scoped, tag = 'scratch operand']
  #allocation3 [shape = 'f32[8,32]{1,0:T(8,128)}', space=vmem, size = 0x1000, scoped, tag = 'scratch operand']
  %s0 = inlined_call_operand.vmem [shape: f32[2,16,32], index: 0, kind: input, shape index: {}]
  %s1 = inlined_call_operand.vmem [shape: f32[2,16,32], index: 1, kind: input, shape index: {}]
  %s2 = inlined_call_operand.vmem [shape: f32[2,16,16], index: 2, kind: input, shape index: {}]
  %s3 = inlined_call_operand.vmem [shape: f32[2,16,16], index: 3, kind: input, shape index: {}]
  %s4 = inlined_call_operand.vmem [shape: f32[4], index: 4, kind: input, shape index: {}]
  %s5 = inlined_call_operand.vmem [shape: f32[32,32], index: 5, kind: input, shape index: {}]
  %s6 = inlined_call_operand.hbm [shape: f32[32,64], index: 6, kind: input, shape index: {}]
  %s7 = inlined_call_operand.hbm [shape: f32[32,32], index: 7, kind: input, shape index: {}]
  %s8 = inlined_call_operand.vmem [shape: f32[1,32], index: 8, kind: input, shape index: {}]
  %s9 = inlined_call_operand.vmem [shape: f32[1,32], index: 9, kind: input, shape index: {}]
  %s10 = inlined_call_operand.vmem [shape: f32[1,32], index: 10, kind: input, shape index: {}]
  %s11 = inlined_call_operand.vmem [shape: f32[1,32], index: 11, kind: input, shape index: {}]
  %s12 = inlined_call_operand.hbm [shape: f32[32,128], index: 12, kind: input, shape index: {}]
  %s13 = inlined_call_operand.hbm [shape: f32[32,128], index: 13, kind: input, shape index: {}]
  %s14 = inlined_call_operand.vmem [shape: f32[128,32], index: 14, kind: input, shape index: {}]
  %s15 = inlined_call_operand.vmem [shape: f32[1,32], index: 15, kind: input, shape index: {}]
  %s16 = inlined_call_operand.vmem [shape: f32[1,32], index: 16, kind: input, shape index: {}]
  %s17 = inlined_call_operand.vmem [shape: f32[1,32], index: 17, kind: input, shape index: {}]
  %s18 = inlined_call_operand.vmem [shape: f32[1,32], index: 18, kind: input, shape index: {}]
  %s19 = inlined_call_operand.vmem [shape: f32[1,32], index: 19, kind: input, shape index: {}]
  %s20 = inlined_call_operand.vmem [shape: f32[1,32], index: 20, kind: input, shape index: {}]
  %s21 = inlined_call_operand.hbm [shape: f32[2,16,32], index: 21, kind: output, shape index: {0}]
  %s22 = inlined_call_operand.hbm [shape: f32[2,16,32], index: 22, kind: output, shape index: {1}]
  %s23 = inlined_call_operand.hbm [shape: f32[2,16,32], index: 23, kind: output, shape index: {2}]
  %s24 = inlined_call_operand.hbm [shape: f32[2,16,32], index: 24, kind: output, shape index: {3}]
  %25 = xla_tuple %s21, %s22, %s23, %s24
  %s26 = sld [smem:[#allocation0]]
  $region165: #{tpu_custom_call.1} parent=0
    _
  %s28 = ssub.s32 1, %s26
  %s29 = scalar_select 0, %s28, %s26
  $region1: #{tpu_custom_call.1} parent=0
    #allocation4 [shape = 'u8[512]{0}', space=smem, size = 0x200, scoped, tag = 'input window, operand 4, single buffered']
    #allocation5 [shape = 's32[2]{0}', space=sflag, size = 0x8, scoped, tag = 'scoped memory for tpu_custom_call.1']
    #allocation6 [shape = 's32[2]{0}', space=sflag, size = 0x8, scoped, tag = 'scoped memory for tpu_custom_call.1']
    #allocation7 [shape = 's32[2]{0}', space=sflag, size = 0x8, scoped, tag = 'scoped memory for tpu_custom_call.1']
    #allocation8 [shape = 'u8[16384]{0}', space=vmem, size = 0x4000, scoped, tag = 'input window, operand 6, single buffered']
    #allocation9 [shape = 'u8[16384]{0}', space=vmem, size = 0x4000, scoped, tag = 'input window, operand 7, single buffered']
    #allocation10 [shape = 's32[1]{0}', space=sflag, size = 0x4, scoped, tag = 'scoped memory for tpu_custom_call.1']
    #allocation11 [shape = 'u8[16384]{0}', space=vmem, size = 0x4000, scoped, tag = 'input window, operand 12, single buffered']
    #allocation12 [shape = 'u8[16384]{0}', space=vmem, size = 0x4000, scoped, tag = 'input window, operand 13, single buffered']
    #allocation13 [shape = 's32[1]{0}', space=sflag, size = 0x4, scoped, tag = 'scoped memory for tpu_custom_call.1']
    #allocation14 [shape = 'u8[8192]{0}', space=vmem, size = 0x2000, scoped, tag = 'output window, operand 0']
    #allocation15 [shape = 'u8[8192]{0}', space=vmem, size = 0x2000, scoped, tag = 'output window, operand 1']
    #allocation16 [shape = 's32[2]{0}', space=sflag, size = 0x8, scoped, tag = 'scoped memory for tpu_custom_call.1']
    #allocation17 [shape = 'u8[8192]{0}', space=vmem, size = 0x2000, scoped, tag = 'output window, operand 2']
    #allocation18 [shape = 'u8[8192]{0}', space=vmem, size = 0x2000, scoped, tag = 'output window, operand 3']
    #allocation19 [shape = 's32[2]{0}', space=sflag, size = 0x8, scoped, tag = 'scoped memory for tpu_custom_call.1']
    %30 = vsyncpa [#allocation7], 0
    %31 = vsyncpa [#allocation5], 0
    %32 = vsyncpa [#allocation10], 0
    %33 = vsyncpa [#allocation13], 0
    %34 = vsyncpa [#allocation6], 0
    %s35 = scalar_lea.sflag [#allocation6], 1
    %36 = vsyncpa %s35, 0
    %37 = vsyncpa [#allocation16], 0
    %s38 = scalar_lea.sflag [#allocation16], 1
    %39 = vsyncpa %s38, 0
    %40 = vsyncpa [#allocation19], 0
    %s41 = scalar_lea.sflag [#allocation19], 1
    %42 = vsyncpa %s41, 0
    loop: start=0, step=1, limit=6
    $region2: #{tpu_custom_call.1} parent=1 // loop_pre_header
      _
    $region3: #{tpu_custom_call.1} parent=1 // loop_header
      %s44 = sphi 0, %s48
      %p45 = scmp.ge.s32.totalorder %s44, 6
      %s51 = sphi 0, %s63
      %s52 = sphi 0, %s59
      %s53 = sphi 0, %s51
      %s54 = sphi 0, %s52
      %s55 = sphi 0, %s53
      %s56 = sphi 0, %s54
      %s66 = sphi 0, %s68
      %s69 = sphi 0, %s66
      %s70 = sphi 0, %s69
      %s86 = sphi 0, %s70
      %s94 = sphi 0, %s96
      %s97 = sphi 0, %s94
      %s98 = sphi 0, %s97
      %s114 = sphi 0, %s98
      %s122 = sphi 0, %s124
      %s125 = sphi 0, %s122
      %s126 = sphi 0, %s125
      %s142 = sphi 0, %s126
      %s150 = sphi 0, %s152
      %s153 = sphi 0, %s150
      %s154 = sphi 0, %s153
      %s170 = sphi 0, %s154
      %s174 = sphi 0, %s174
      %s176 = sphi 0, %s174
      %s177 = sphi 0, %s176
      %s191 = sphi 0, %s177
      %s195 = sphi 0, %s195
      %s197 = sphi 0, %s195
      %s198 = sphi 0, %s197
      %s212 = sphi 0, %s198
      %s216 = sphi 0, %s216
      %s218 = sphi 0, %s216
      %s219 = sphi 0, %s218
      %s233 = sphi 0, %s219
      %s237 = sphi 0, %s237
      %s239 = sphi 0, %s237
      %s240 = sphi 0, %s239
      %s254 = sphi 0, %s240
      %s258 = sphi 0, %s258
      %s260 = sphi 0, %s258
      %s261 = sphi 0, %s260
      %s275 = sphi 0, %s261
      %s279 = sphi 0, %s279
      %s281 = sphi 0, %s279
      %s282 = sphi 0, %s281
      %s296 = sphi 0, %s282
      %s300 = sphi 0, %s300
      %s302 = sphi 0, %s300
      %s303 = sphi 0, %s302
      %s317 = sphi 0, %s303
      %s321 = sphi 0, %s321
      %s323 = sphi 0, %s321
      %s324 = sphi 0, %s323
      %s338 = sphi 0, %s324
      %s342 = sphi 0, %s342
      %s344 = sphi 0, %s342
      %s345 = sphi 0, %s344
      %s359 = sphi 0, %s345
      %s363 = sphi 0, %s363
      %s365 = sphi 0, %s363
      %s366 = sphi 0, %s365
      %s380 = sphi 0, %s366
      %s384 = sphi 0, %s384
      %s386 = sphi 0, %s384
      %s387 = sphi 0, %s386
      %s401 = sphi 0, %s387
      %s405 = sphi 0, %s405
      %s407 = sphi 0, %s405
      %s408 = sphi 0, %s407
      %s422 = sphi 0, %s408
      %s426 = sphi 0, %s426
      %s428 = sphi 0, %s426
      %s429 = sphi 0, %s428
      %s443 = sphi 0, %s429
      %s447 = sphi 0, %s447
      %s449 = sphi 0, %s447
      %s450 = sphi 0, %s449
      %s464 = sphi 0, %s450
      %s468 = sphi 0, %s468
      %s470 = sphi 0, %s468
      %s471 = sphi 0, %s470
      %s485 = sphi 0, %s471
      %s489 = sphi 0, %s489
      %s491 = sphi 0, %s489
      %s492 = sphi 0, %s491
      %s506 = sphi 0, %s492
      %s510 = sphi 0, %s510
      %s512 = sphi 0, %s510
      %s513 = sphi 0, %s512
      %s527 = sphi 0, %s513
      %s535 = sphi 0, %s537
      %s538 = sphi 0, %s535
      %s539 = sphi 0, %s538
      %s555 = sphi 0, %s539
      %s563 = sphi 0, %s565
      %s566 = sphi 0, %s563
      %s567 = sphi 0, %s566
      %s583 = sphi 0, %s567
      %s591 = sphi 0, %s593
      %s594 = sphi 0, %s591
      %s595 = sphi 0, %s594
      %s611 = sphi 0, %s595
      %s619 = sphi 0, %s621
      %s622 = sphi 0, %s619
      %s623 = sphi 0, %s622
      %s639 = sphi 0, %s623
    $region4: #{tpu_custom_call.1} parent=1 // loop_header_branch
      %47 = sbr.rel (%p45) target = $region8
    $region5: #{tpu_custom_call.1} parent=1 // loop_body
      %s49 = ssub.s32 %s44, 1
      %s50 = ssub.s32 %s44, 2
      %s57 = sadd.s32 1, %s52
      %p58 = scmp.ge.s32.totalorder %s57, 2
      %s59 = scalar_select %p58, 0, %s57
      %s60 = sadd.s32 1, %s51
      %s61 = scalar_select %p58, %s60, %s51
      %p62 = scmp.ge.s32.totalorder %s61, 2
      %s63 = scalar_select %p62, 0, %s61
      %s64 = ssub.s32 %s51, %s63
      %p65 = scmp.eq.s32.totalorder %s64, 0
      %s67 = sadd.s32 %s66, 1
      %s68 = scalar_select %p65, %s66, %s67
      %p71 = pneg %p65
      %p72 = scmp.eq.s32.totalorder %s44, 3
      %p73 = por %p71, %p72
      %p74 = scmp.ne.s32.totalorder %s66, %s69
      %p75 = scmp.eq.s32.totalorder %s44, 0
      %p76 = por %p74, %p75
      %p77 = scmp.ne.s32.totalorder %s66, %s69
      %p78 = scmp.eq.s32.totalorder %s49, 3
      %p79 = por %p77, %p78
      %p80 = scmp.ne.s32.totalorder %s69, %s70
      %p81 = scmp.eq.s32.totalorder %s49, 0
      %p82 = por %p80, %p81
      %p83 = scmp.ne.s32.totalorder %s69, %s70
      %p84 = scmp.eq.s32.totalorder %s50, 3
      %p85 = por %p83, %p84
      %p87 = scmp.ne.s32.totalorder %s70, %s86
      %p88 = scmp.eq.s32.totalorder %s50, 0
      %p89 = por %p87, %p88
      %s90 = ssub.s32 %s51, %s63
      %s91 = ssub.s32 %s52, %s59
      %s92 = sor.u32 %s90, %s91
      %p93 = scmp.eq.s32.totalorder %s92, 0
      %s95 = sadd.s32 %s94, 1
      %s96 = scalar_select %p93, %s94, %s95
      %p99 = pneg %p93
      %p100 = scmp.eq.s32.totalorder %s44, 3
      %p101 = por %p99, %p100
      %p102 = scmp.ne.s32.totalorder %s94, %s97
      %p103 = scmp.eq.s32.totalorder %s44, 0
      %p104 = por %p102, %p103
      %p105 = scmp.ne.s32.totalorder %s94, %s97
      %p106 = scmp.eq.s32.totalorder %s49, 3
      %p107 = por %p105, %p106
      %p108 = scmp.ne.s32.totalorder %s97, %s98
      %p109 = scmp.eq.s32.totalorder %s49, 0
      %p110 = por %p108, %p109
      %p111 = scmp.ne.s32.totalorder %s97, %s98
      %p112 = scmp.eq.s32.totalorder %s50, 3
      %p113 = por %p111, %p112
      %p115 = scmp.ne.s32.totalorder %s98, %s114
      %p116 = scmp.eq.s32.totalorder %s50, 0
      %p117 = por %p115, %p116
      %s118 = ssub.s32 %s51, %s63
      %s119 = ssub.s32 %s52, %s59
      %s120 = sor.u32 %s118, %s119
      %p121 = scmp.eq.s32.totalorder %s120, 0
      %s123 = sadd.s32 %s122, 1
      %s124 = scalar_select %p121, %s122, %s123
      %p127 = pneg %p121
      %p128 = scmp.eq.s32.totalorder %s44, 3
      %p129 = por %p127, %p128
      %p130 = scmp.ne.s32.totalorder %s122, %s125
      %p131 = scmp.eq.s32.totalorder %s44, 0
      %p132 = por %p130, %p131
      %p133 = scmp.ne.s32.totalorder %s122, %s125
      %p134 = scmp.eq.s32.totalorder %s49, 3
      %p135 = por %p133, %p134
      %p136 = scmp.ne.s32.totalorder %s125, %s126
      %p137 = scmp.eq.s32.totalorder %s49, 0
      %p138 = por %p136, %p137
      %p139 = scmp.ne.s32.totalorder %s125, %s126
      %p140 = scmp.eq.s32.totalorder %s50, 3
      %p141 = por %p139, %p140
      %p143 = scmp.ne.s32.totalorder %s126, %s142
      %p144 = scmp.eq.s32.totalorder %s50, 0
      %p145 = por %p143, %p144
      %s146 = ssub.s32 %s51, %s63
      %s147 = ssub.s32 %s52, %s59
      %s148 = sor.u32 %s146, %s147
      %p149 = scmp.eq.s32.totalorder %s148, 0
      %s151 = sadd.s32 %s150, 1
      %s152 = scalar_select %p149, %s150, %s151
      %p155 = pneg %p149
      %p156 = scmp.eq.s32.totalorder %s44, 3
      %p157 = por %p155, %p156
      %p158 = scmp.ne.s32.totalorder %s150, %s153
      %p159 = scmp.eq.s32.totalorder %s44, 0
      %p160 = por %p158, %p159
      %p161 = scmp.ne.s32.totalorder %s150, %s153
      %p162 = scmp.eq.s32.totalorder %s49, 3
      %p163 = por %p161, %p162
      %p164 = scmp.ne.s32.totalorder %s153, %s154
      %p165 = scmp.eq.s32.totalorder %s49, 0
      %p166 = por %p164, %p165
      %p167 = scmp.ne.s32.totalorder %s153, %s154
      %p168 = scmp.eq.s32.totalorder %s50, 3
      %p169 = por %p167, %p168
      %p171 = scmp.ne.s32.totalorder %s154, %s170
      %p172 = scmp.eq.s32.totalorder %s50, 0
      %p173 = por %p171, %p172
      %s175 = sadd.s32 %s174, 1
      %p178 = scmp.eq.s32.totalorder %s44, 3
      %p179 = scmp.ne.s32.totalorder %s174, %s176
      %p180 = scmp.eq.s32.totalorder %s44, 0
      %p181 = por %p179, %p180
      %p182 = scmp.ne.s32.totalorder %s174, %s176
      %p183 = scmp.eq.s32.totalorder %s49, 3
      %p184 = por %p182, %p183
      %p185 = scmp.ne.s32.totalorder %s176, %s177
      %p186 = scmp.eq.s32.totalorder %s49, 0
      %p187 = por %p185, %p186
      %p188 = scmp.ne.s32.totalorder %s176, %s177
      %p189 = scmp.eq.s32.totalorder %s50, 3
      %p190 = por %p188, %p189
      %p192 = scmp.ne.s32.totalorder %s177, %s191
      %p193 = scmp.eq.s32.totalorder %s50, 0
      %p194 = por %p192, %p193
      %s196 = sadd.s32 %s195, 1
      %p199 = scmp.eq.s32.totalorder %s44, 3
      %p200 = scmp.ne.s32.totalorder %s195, %s197
      %p201 = scmp.eq.s32.totalorder %s44, 0
      %p202 = por %p200, %p201
      %p203 = scmp.ne.s32.totalorder %s195, %s197
      %p204 = scmp.eq.s32.totalorder %s49, 3
      %p205 = por %p203, %p204
      %p206 = scmp.ne.s32.totalorder %s197, %s198
      %p207 = scmp.eq.s32.totalorder %s49, 0
      %p208 = por %p206, %p207
      %p209 = scmp.ne.s32.totalorder %s197, %s198
      %p210 = scmp.eq.s32.totalorder %s50, 3
      %p211 = por %p209, %p210
      %p213 = scmp.ne.s32.totalorder %s198, %s212
      %p214 = scmp.eq.s32.totalorder %s50, 0
      %p215 = por %p213, %p214
      %s217 = sadd.s32 %s216, 1
      %p220 = scmp.eq.s32.totalorder %s44, 3
      %p221 = scmp.ne.s32.totalorder %s216, %s218
      %p222 = scmp.eq.s32.totalorder %s44, 0
      %p223 = por %p221, %p222
      %p224 = scmp.ne.s32.totalorder %s216, %s218
      %p225 = scmp.eq.s32.totalorder %s49, 3
      %p226 = por %p224, %p225
      %p227 = scmp.ne.s32.totalorder %s218, %s219
      %p228 = scmp.eq.s32.totalorder %s49, 0
      %p229 = por %p227, %p228
      %p230 = scmp.ne.s32.totalorder %s218, %s219
      %p231 = scmp.eq.s32.totalorder %s50, 3
      %p232 = por %p230, %p231
      %p234 = scmp.ne.s32.totalorder %s219, %s233
      %p235 = scmp.eq.s32.totalorder %s50, 0
      %p236 = por %p234, %p235
      %s238 = sadd.s32 %s237, 1
      %p241 = scmp.eq.s32.totalorder %s44, 3
      %p242 = scmp.ne.s32.totalorder %s237, %s239
      %p243 = scmp.eq.s32.totalorder %s44, 0
      %p244 = por %p242, %p243
      %p245 = scmp.ne.s32.totalorder %s237, %s239
      %p246 = scmp.eq.s32.totalorder %s49, 3
      %p247 = por %p245, %p246
      %p248 = scmp.ne.s32.totalorder %s239, %s240
      %p249 = scmp.eq.s32.totalorder %s49, 0
      %p250 = por %p248, %p249
      %p251 = scmp.ne.s32.totalorder %s239, %s240
      %p252 = scmp.eq.s32.totalorder %s50, 3
      %p253 = por %p251, %p252
      %p255 = scmp.ne.s32.totalorder %s240, %s254
      %p256 = scmp.eq.s32.totalorder %s50, 0
      %p257 = por %p255, %p256
      %s259 = sadd.s32 %s258, 1
      %p262 = scmp.eq.s32.totalorder %s44, 3
      %p263 = scmp.ne.s32.totalorder %s258, %s260
      %p264 = scmp.eq.s32.totalorder %s44, 0
      %p265 = por %p263, %p264
      %p266 = scmp.ne.s32.totalorder %s258, %s260
      %p267 = scmp.eq.s32.totalorder %s49, 3
      %p268 = por %p266, %p267
      %p269 = scmp.ne.s32.totalorder %s260, %s261
      %p270 = scmp.eq.s32.totalorder %s49, 0
      %p271 = por %p269, %p270
      %p272 = scmp.ne.s32.totalorder %s260, %s261
      %p273 = scmp.eq.s32.totalorder %s50, 3
      %p274 = por %p272, %p273
      %p276 = scmp.ne.s32.totalorder %s261, %s275
      %p277 = scmp.eq.s32.totalorder %s50, 0
      %p278 = por %p276, %p277
      %s280 = sadd.s32 %s279, 1
      %p283 = scmp.eq.s32.totalorder %s44, 3
      %p284 = scmp.ne.s32.totalorder %s279, %s281
      %p285 = scmp.eq.s32.totalorder %s44, 0
      %p286 = por %p284, %p285
      %p287 = scmp.ne.s32.totalorder %s279, %s281
      %p288 = scmp.eq.s32.totalorder %s49, 3
      %p289 = por %p287, %p288
      %p290 = scmp.ne.s32.totalorder %s281, %s282
      %p291 = scmp.eq.s32.totalorder %s49, 0
      %p292 = por %p290, %p291
      %p293 = scmp.ne.s32.totalorder %s281, %s282
      %p294 = scmp.eq.s32.totalorder %s50, 3
      %p295 = por %p293, %p294
      %p297 = scmp.ne.s32.totalorder %s282, %s296
      %p298 = scmp.eq.s32.totalorder %s50, 0
      %p299 = por %p297, %p298
      %s301 = sadd.s32 %s300, 1
      %p304 = scmp.eq.s32.totalorder %s44, 3
      %p305 = scmp.ne.s32.totalorder %s300, %s302
      %p306 = scmp.eq.s32.totalorder %s44, 0
      %p307 = por %p305, %p306
      %p308 = scmp.ne.s32.totalorder %s300, %s302
      %p309 = scmp.eq.s32.totalorder %s49, 3
      %p310 = por %p308, %p309
      %p311 = scmp.ne.s32.totalorder %s302, %s303
      %p312 = scmp.eq.s32.totalorder %s49, 0
      %p313 = por %p311, %p312
      %p314 = scmp.ne.s32.totalorder %s302, %s303
      %p315 = scmp.eq.s32.totalorder %s50, 3
      %p316 = por %p314, %p315
      %p318 = scmp.ne.s32.totalorder %s303, %s317
      %p319 = scmp.eq.s32.totalorder %s50, 0
      %p320 = por %p318, %p319
      %s322 = sadd.s32 %s321, 1
      %p325 = scmp.eq.s32.totalorder %s44, 3
      %p326 = scmp.ne.s32.totalorder %s321, %s323
      %p327 = scmp.eq.s32.totalorder %s44, 0
      %p328 = por %p326, %p327
      %p329 = scmp.ne.s32.totalorder %s321, %s323
      %p330 = scmp.eq.s32.totalorder %s49, 3
      %p331 = por %p329, %p330
      %p332 = scmp.ne.s32.totalorder %s323, %s324
      %p333 = scmp.eq.s32.totalorder %s49, 0
      %p334 = por %p332, %p333
      %p335 = scmp.ne.s32.totalorder %s323, %s324
      %p336 = scmp.eq.s32.totalorder %s50, 3
      %p337 = por %p335, %p336
      %p339 = scmp.ne.s32.totalorder %s324, %s338
      %p340 = scmp.eq.s32.totalorder %s50, 0
      %p341 = por %p339, %p340
      %s343 = sadd.s32 %s342, 1
      %p346 = scmp.eq.s32.totalorder %s44, 3
      %p347 = scmp.ne.s32.totalorder %s342, %s344
      %p348 = scmp.eq.s32.totalorder %s44, 0
      %p349 = por %p347, %p348
      %p350 = scmp.ne.s32.totalorder %s342, %s344
      %p351 = scmp.eq.s32.totalorder %s49, 3
      %p352 = por %p350, %p351
      %p353 = scmp.ne.s32.totalorder %s344, %s345
      %p354 = scmp.eq.s32.totalorder %s49, 0
      %p355 = por %p353, %p354
      %p356 = scmp.ne.s32.totalorder %s344, %s345
      %p357 = scmp.eq.s32.totalorder %s50, 3
      %p358 = por %p356, %p357
      %p360 = scmp.ne.s32.totalorder %s345, %s359
      %p361 = scmp.eq.s32.totalorder %s50, 0
      %p362 = por %p360, %p361
      %s364 = sadd.s32 %s363, 1
      %p367 = scmp.eq.s32.totalorder %s44, 3
      %p368 = scmp.ne.s32.totalorder %s363, %s365
      %p369 = scmp.eq.s32.totalorder %s44, 0
      %p370 = por %p368, %p369
      %p371 = scmp.ne.s32.totalorder %s363, %s365
      %p372 = scmp.eq.s32.totalorder %s49, 3
      %p373 = por %p371, %p372
      %p374 = scmp.ne.s32.totalorder %s365, %s366
      %p375 = scmp.eq.s32.totalorder %s49, 0
      %p376 = por %p374, %p375
      %p377 = scmp.ne.s32.totalorder %s365, %s366
      %p378 = scmp.eq.s32.totalorder %s50, 3
      %p379 = por %p377, %p378
      %p381 = scmp.ne.s32.totalorder %s366, %s380
      %p382 = scmp.eq.s32.totalorder %s50, 0
      %p383 = por %p381, %p382
      %s385 = sadd.s32 %s384, 1
      %p388 = scmp.eq.s32.totalorder %s44, 3
      %p389 = scmp.ne.s32.totalorder %s384, %s386
      %p390 = scmp.eq.s32.totalorder %s44, 0
      %p391 = por %p389, %p390
      %p392 = scmp.ne.s32.totalorder %s384, %s386
      %p393 = scmp.eq.s32.totalorder %s49, 3
      %p394 = por %p392, %p393
      %p395 = scmp.ne.s32.totalorder %s386, %s387
      %p396 = scmp.eq.s32.totalorder %s49, 0
      %p397 = por %p395, %p396
      %p398 = scmp.ne.s32.totalorder %s386, %s387
      %p399 = scmp.eq.s32.totalorder %s50, 3
      %p400 = por %p398, %p399
      %p402 = scmp.ne.s32.totalorder %s387, %s401
      %p403 = scmp.eq.s32.totalorder %s50, 0
      %p404 = por %p402, %p403
      %s406 = sadd.s32 %s405, 1
      %p409 = scmp.eq.s32.totalorder %s44, 3
      %p410 = scmp.ne.s32.totalorder %s405, %s407
      %p411 = scmp.eq.s32.totalorder %s44, 0
      %p412 = por %p410, %p411
      %p413 = scmp.ne.s32.totalorder %s405, %s407
      %p414 = scmp.eq.s32.totalorder %s49, 3
      %p415 = por %p413, %p414
      %p416 = scmp.ne.s32.totalorder %s407, %s408
      %p417 = scmp.eq.s32.totalorder %s49, 0
      %p418 = por %p416, %p417
      %p419 = scmp.ne.s32.totalorder %s407, %s408
      %p420 = scmp.eq.s32.totalorder %s50, 3
      %p421 = por %p419, %p420
      %p423 = scmp.ne.s32.totalorder %s408, %s422
      %p424 = scmp.eq.s32.totalorder %s50, 0
      %p425 = por %p423, %p424
      %s427 = sadd.s32 %s426, 1
      %p430 = scmp.eq.s32.totalorder %s44, 3
      %p431 = scmp.ne.s32.totalorder %s426, %s428
      %p432 = scmp.eq.s32.totalorder %s44, 0
      %p433 = por %p431, %p432
      %p434 = scmp.ne.s32.totalorder %s426, %s428
      %p435 = scmp.eq.s32.totalorder %s49, 3
      %p436 = por %p434, %p435
      %p437 = scmp.ne.s32.totalorder %s428, %s429
      %p438 = scmp.eq.s32.totalorder %s49, 0
      %p439 = por %p437, %p438
      %p440 = scmp.ne.s32.totalorder %s428, %s429
      %p441 = scmp.eq.s32.totalorder %s50, 3
      %p442 = por %p440, %p441
      %p444 = scmp.ne.s32.totalorder %s429, %s443
      %p445 = scmp.eq.s32.totalorder %s50, 0
      %p446 = por %p444, %p445
      %s448 = sadd.s32 %s447, 1
      %p451 = scmp.eq.s32.totalorder %s44, 3
      %p452 = scmp.ne.s32.totalorder %s447, %s449
      %p453 = scmp.eq.s32.totalorder %s44, 0
      %p454 = por %p452, %p453
      %p455 = scmp.ne.s32.totalorder %s447, %s449
      %p456 = scmp.eq.s32.totalorder %s49, 3
      %p457 = por %p455, %p456
      %p458 = scmp.ne.s32.totalorder %s449, %s450
      %p459 = scmp.eq.s32.totalorder %s49, 0
      %p460 = por %p458, %p459
      %p461 = scmp.ne.s32.totalorder %s449, %s450
      %p462 = scmp.eq.s32.totalorder %s50, 3
      %p463 = por %p461, %p462
      %p465 = scmp.ne.s32.totalorder %s450, %s464
      %p466 = scmp.eq.s32.totalorder %s50, 0
      %p467 = por %p465, %p466
      %s469 = sadd.s32 %s468, 1
      %p472 = scmp.eq.s32.totalorder %s44, 3
      %p473 = scmp.ne.s32.totalorder %s468, %s470
      %p474 = scmp.eq.s32.totalorder %s44, 0
      %p475 = por %p473, %p474
      %p476 = scmp.ne.s32.totalorder %s468, %s470
      %p477 = scmp.eq.s32.totalorder %s49, 3
      %p478 = por %p476, %p477
      %p479 = scmp.ne.s32.totalorder %s470, %s471
      %p480 = scmp.eq.s32.totalorder %s49, 0
      %p481 = por %p479, %p480
      %p482 = scmp.ne.s32.totalorder %s470, %s471
      %p483 = scmp.eq.s32.totalorder %s50, 3
      %p484 = por %p482, %p483
      %p486 = scmp.ne.s32.totalorder %s471, %s485
      %p487 = scmp.eq.s32.totalorder %s50, 0
      %p488 = por %p486, %p487
      %s490 = sadd.s32 %s489, 1
      %p493 = scmp.eq.s32.totalorder %s44, 3
      %p494 = scmp.ne.s32.totalorder %s489, %s491
      %p495 = scmp.eq.s32.totalorder %s44, 0
      %p496 = por %p494, %p495
      %p497 = scmp.ne.s32.totalorder %s489, %s491
      %p498 = scmp.eq.s32.totalorder %s49, 3
      %p499 = por %p497, %p498
      %p500 = scmp.ne.s32.totalorder %s491, %s492
      %p501 = scmp.eq.s32.totalorder %s49, 0
      %p502 = por %p500, %p501
      %p503 = scmp.ne.s32.totalorder %s491, %s492
      %p504 = scmp.eq.s32.totalorder %s50, 3
      %p505 = por %p503, %p504
      %p507 = scmp.ne.s32.totalorder %s492, %s506
      %p508 = scmp.eq.s32.totalorder %s50, 0
      %p509 = por %p507, %p508
      %s511 = sadd.s32 %s510, 1
      %p514 = scmp.eq.s32.totalorder %s44, 3
      %p515 = scmp.ne.s32.totalorder %s510, %s512
      %p516 = scmp.eq.s32.totalorder %s44, 0
      %p517 = por %p515, %p516
      %p518 = scmp.ne.s32.totalorder %s510, %s512
      %p519 = scmp.eq.s32.totalorder %s49, 3
      %p520 = por %p518, %p519
      %p521 = scmp.ne.s32.totalorder %s512, %s513
      %p522 = scmp.eq.s32.totalorder %s49, 0
      %p523 = por %p521, %p522
      %p524 = scmp.ne.s32.totalorder %s512, %s513
      %p525 = scmp.eq.s32.totalorder %s50, 3
      %p526 = por %p524, %p525
      %p528 = scmp.ne.s32.totalorder %s513, %s527
      %p529 = scmp.eq.s32.totalorder %s50, 0
      %p530 = por %p528, %p529
      %s531 = ssub.s32 %s51, %s63
      %s532 = ssub.s32 %s52, %s59
      %s533 = sor.u32 %s531, %s532
      %p534 = scmp.eq.s32.totalorder %s533, 0
      %s536 = sadd.s32 %s535, 1
      %s537 = scalar_select %p534, %s535, %s536
      %p540 = pneg %p534
      %p541 = scmp.eq.s32.totalorder %s44, 3
      %p542 = por %p540, %p541
      %p543 = scmp.ne.s32.totalorder %s535, %s538
      %p544 = scmp.eq.s32.totalorder %s44, 0
      %p545 = por %p543, %p544
      %p546 = scmp.ne.s32.totalorder %s535, %s538
      %p547 = scmp.eq.s32.totalorder %s49, 3
      %p548 = por %p546, %p547
      %p549 = scmp.ne.s32.totalorder %s538, %s539
      %p550 = scmp.eq.s32.totalorder %s49, 0
      %p551 = por %p549, %p550
      %p552 = scmp.ne.s32.totalorder %s538, %s539
      %p553 = scmp.eq.s32.totalorder %s50, 3
      %p554 = por %p552, %p553
      %p556 = scmp.ne.s32.totalorder %s539, %s555
      %p557 = scmp.eq.s32.totalorder %s50, 0
      %p558 = por %p556, %p557
      %s559 = ssub.s32 %s51, %s63
      %s560 = ssub.s32 %s52, %s59
      %s561 = sor.u32 %s559, %s560
      %p562 = scmp.eq.s32.totalorder %s561, 0
      %s564 = sadd.s32 %s563, 1
      %s565 = scalar_select %p562, %s563, %s564
      %p568 = pneg %p562
      %p569 = scmp.eq.s32.totalorder %s44, 3
      %p570 = por %p568, %p569
      %p571 = scmp.ne.s32.totalorder %s563, %s566
      %p572 = scmp.eq.s32.totalorder %s44, 0
      %p573 = por %p571, %p572
      %p574 = scmp.ne.s32.totalorder %s563, %s566
      %p575 = scmp.eq.s32.totalorder %s49, 3
      %p576 = por %p574, %p575
      %p577 = scmp.ne.s32.totalorder %s566, %s567
      %p578 = scmp.eq.s32.totalorder %s49, 0
      %p579 = por %p577, %p578
      %p580 = scmp.ne.s32.totalorder %s566, %s567
      %p581 = scmp.eq.s32.totalorder %s50, 3
      %p582 = por %p580, %p581
      %p584 = scmp.ne.s32.totalorder %s567, %s583
      %p585 = scmp.eq.s32.totalorder %s50, 0
      %p586 = por %p584, %p585
      %s587 = ssub.s32 %s51, %s63
      %s588 = ssub.s32 %s52, %s59
      %s589 = sor.u32 %s587, %s588
      %p590 = scmp.eq.s32.totalorder %s589, 0
      %s592 = sadd.s32 %s591, 1
      %s593 = scalar_select %p590, %s591, %s592
      %p596 = pneg %p590
      %p597 = scmp.eq.s32.totalorder %s44, 3
      %p598 = por %p596, %p597
      %p599 = scmp.ne.s32.totalorder %s591, %s594
      %p600 = scmp.eq.s32.totalorder %s44, 0
      %p601 = por %p599, %p600
      %p602 = scmp.ne.s32.totalorder %s591, %s594
      %p603 = scmp.eq.s32.totalorder %s49, 3
      %p604 = por %p602, %p603
      %p605 = scmp.ne.s32.totalorder %s594, %s595
      %p606 = scmp.eq.s32.totalorder %s49, 0
      %p607 = por %p605, %p606
      %p608 = scmp.ne.s32.totalorder %s594, %s595
      %p609 = scmp.eq.s32.totalorder %s50, 3
      %p610 = por %p608, %p609
      %p612 = scmp.ne.s32.totalorder %s595, %s611
      %p613 = scmp.eq.s32.totalorder %s50, 0
      %p614 = por %p612, %p613
      %s615 = ssub.s32 %s51, %s63
      %s616 = ssub.s32 %s52, %s59
      %s617 = sor.u32 %s615, %s616
      %p618 = scmp.eq.s32.totalorder %s617, 0
      %s620 = sadd.s32 %s619, 1
      %s621 = scalar_select %p618, %s619, %s620
      %p624 = pneg %p618
      %p625 = scmp.eq.s32.totalorder %s44, 3
      %p626 = por %p624, %p625
      %p627 = scmp.ne.s32.totalorder %s619, %s622
      %p628 = scmp.eq.s32.totalorder %s44, 0
      %p629 = por %p627, %p628
      %p630 = scmp.ne.s32.totalorder %s619, %s622
      %p631 = scmp.eq.s32.totalorder %s49, 3
      %p632 = por %p630, %p631
      %p633 = scmp.ne.s32.totalorder %s622, %s623
      %p634 = scmp.eq.s32.totalorder %s49, 0
      %p635 = por %p633, %p634
      %p636 = scmp.ne.s32.totalorder %s622, %s623
      %p637 = scmp.eq.s32.totalorder %s50, 3
      %p638 = por %p636, %p637
      %p640 = scmp.ne.s32.totalorder %s623, %s639
      %p641 = scmp.eq.s32.totalorder %s50, 0
      %p642 = por %p640, %p641
      %p643 = scmp.le.s32.totalorder 1, %s44
      %p644 = scmp.lt.s32.totalorder %s44, 5
      %p645 = pnand %p643, %p644
      %p646 = pneg %p645
      // Predicated region
      $region9: #{tpu_custom_call.1} parent=5 // pred_check
        _
      $region10: #{tpu_custom_call.1} parent=5 // pred_check_branch
        %648 = sbr.rel (%p645) target = $region12
      $region11: #{tpu_custom_call.1} parent=5 // pred_region
        %s649 = ssub.s32 %s44, 1
        // Predicated region
        $region13: #{tpu_custom_call.1} parent=11 // pred_check
          %p650 = pneg %p187
        $region14: #{tpu_custom_call.1} parent=11 // pred_check_branch
          %652 = sbr.rel (%p650) target = $region16
        $region15: #{tpu_custom_call.1} parent=11 // pred_region
          %s654 = ssub.s32 16, 16
          %655 = vsyncadd [#allocation7], %s654
          %s657 = sshll.u32 %s4, 4
          %s658 = int_to_ptr.vmem [resolvable:$true] %s657
          %660 = dma.vmem_to_smem %s658, 16, [#allocation4], [#allocation7]
        $region16: #{tpu_custom_call.1} parent=11 // pred_fallthru
          _
        // Predicated region
        $region17: #{tpu_custom_call.1} parent=11 // pred_check
          %p661 = pneg %p208
        $region18: #{tpu_custom_call.1} parent=11 // pred_check_branch
          %663 = sbr.rel (%p661) target = $region20
        $region19: #{tpu_custom_call.1} parent=11 // pred_region
          _
        $region20: #{tpu_custom_call.1} parent=11 // pred_fallthru
          _
        // Predicated region
        $region21: #{tpu_custom_call.1} parent=11 // pred_check
          %p664 = pneg %p229
        $region22: #{tpu_custom_call.1} parent=11 // pred_check_branch
          %666 = sbr.rel (%p664) target = $region24
        $region23: #{tpu_custom_call.1} parent=11 // pred_region
          %s668 = ssub.s32 512, 512
          %669 = vsyncadd [#allocation5], %s668
          %s670 = sshll.u32 [#allocation8], 4
          %s671 = int_to_ptr.vmem [resolvable:$true] %s670
          %676 = dma.hbm_to_vmem [thread:$0]  %s6, 512, %s671, [#allocation5], 128, 128, 8
        $region24: #{tpu_custom_call.1} parent=11 // pred_fallthru
          _
        // Predicated region
        $region25: #{tpu_custom_call.1} parent=11 // pred_check
          %p677 = pneg %p250
        $region26: #{tpu_custom_call.1} parent=11 // pred_check_branch
          %679 = sbr.rel (%p677) target = $region28
        $region27: #{tpu_custom_call.1} parent=11 // pred_region
          %s681 = ssub.s32 512, 512
          %682 = vsyncadd [#allocation10], %s681
          %s683 = sshll.u32 [#allocation9], 4
          %s684 = int_to_ptr.vmem [resolvable:$true] %s683
          %689 = dma.hbm_to_vmem [thread:$0]  %s7, 512, %s684, [#allocation10], 128, 128, 8
        $region28: #{tpu_custom_call.1} parent=11 // pred_fallthru
          _
        // Predicated region
        $region29: #{tpu_custom_call.1} parent=11 // pred_check
          %p690 = pneg %p271
        $region30: #{tpu_custom_call.1} parent=11 // pred_check_branch
          %692 = sbr.rel (%p690) target = $region32
        $region31: #{tpu_custom_call.1} parent=11 // pred_region
          _
        $region32: #{tpu_custom_call.1} parent=11 // pred_fallthru
          _
        // Predicated region
        $region33: #{tpu_custom_call.1} parent=11 // pred_check
          %p693 = pneg %p292
        $region34: #{tpu_custom_call.1} parent=11 // pred_check_branch
          %695 = sbr.rel (%p693) target = $region36
        $region35: #{tpu_custom_call.1} parent=11 // pred_region
          _
        $region36: #{tpu_custom_call.1} parent=11 // pred_fallthru
          _
        // Predicated region
        $region37: #{tpu_custom_call.1} parent=11 // pred_check
          %p696 = pneg %p313
        $region38: #{tpu_custom_call.1} parent=11 // pred_check_branch
          %698 = sbr.rel (%p696) target = $region40
        $region39: #{tpu_custom_call.1} parent=11 // pred_region
          _
        $region40: #{tpu_custom_call.1} parent=11 // pred_fallthru
          _
        // Predicated region
        $region41: #{tpu_custom_call.1} parent=11 // pred_check
          %p699 = pneg %p334
        $region42: #{tpu_custom_call.1} parent=11 // pred_check_branch
          %701 = sbr.rel (%p699) target = $region44
        $region43: #{tpu_custom_call.1} parent=11 // pred_region
          _
        $region44: #{tpu_custom_call.1} parent=11 // pred_fallthru
          _
        // Predicated region
        $region45: #{tpu_custom_call.1} parent=11 // pred_check
          %p702 = pneg %p355
        $region46: #{tpu_custom_call.1} parent=11 // pred_check_branch
          %704 = sbr.rel (%p702) target = $region48
        $region47: #{tpu_custom_call.1} parent=11 // pred_region
          %s706 = ssub.s32 512, 512
          %707 = vsyncadd [#allocation10], %s706
          %s708 = sshll.u32 [#allocation11], 4
          %s709 = int_to_ptr.vmem [resolvable:$true] %s708
          %714 = dma.hbm_to_vmem [thread:$0]  %s12, 512, %s709, [#allocation10], 128, 128, 8
        $region48: #{tpu_custom_call.1} parent=11 // pred_fallthru
          _
        // Predicated region
        $region49: #{tpu_custom_call.1} parent=11 // pred_check
          %p715 = pneg %p376
        $region50: #{tpu_custom_call.1} parent=11 // pred_check_branch
          %717 = sbr.rel (%p715) target = $region52
        $region51: #{tpu_custom_call.1} parent=11 // pred_region
          %s719 = ssub.s32 512, 512
          %720 = vsyncadd [#allocation13], %s719
          %s721 = sshll.u32 [#allocation12], 4
          %s722 = int_to_ptr.vmem [resolvable:$true] %s721
          %727 = dma.hbm_to_vmem [thread:$0]  %s13, 512, %s722, [#allocation13], 128, 128, 8
        $region52: #{tpu_custom_call.1} parent=11 // pred_fallthru
          _
        // Predicated region
        $region53: #{tpu_custom_call.1} parent=11 // pred_check
          %p728 = pneg %p397
        $region54: #{tpu_custom_call.1} parent=11 // pred_check_branch
          %730 = sbr.rel (%p728) target = $region56
        $region55: #{tpu_custom_call.1} parent=11 // pred_region
          _
        $region56: #{tpu_custom_call.1} parent=11 // pred_fallthru
          _
        // Predicated region
        $region57: #{tpu_custom_call.1} parent=11 // pred_check
          %p731 = pneg %p418
        $region58: #{tpu_custom_call.1} parent=11 // pred_check_branch
          %733 = sbr.rel (%p731) target = $region60
        $region59: #{tpu_custom_call.1} parent=11 // pred_region
          _
        $region60: #{tpu_custom_call.1} parent=11 // pred_fallthru
          _
        // Predicated region
        $region61: #{tpu_custom_call.1} parent=11 // pred_check
          %p734 = pneg %p439
        $region62: #{tpu_custom_call.1} parent=11 // pred_check_branch
          %736 = sbr.rel (%p734) target = $region64
        $region63: #{tpu_custom_call.1} parent=11 // pred_region
          _
        $region64: #{tpu_custom_call.1} parent=11 // pred_fallthru
          _
        // Predicated region
        $region65: #{tpu_custom_call.1} parent=11 // pred_check
          %p737 = pneg %p460
        $region66: #{tpu_custom_call.1} parent=11 // pred_check_branch
          %739 = sbr.rel (%p737) target = $region68
        $region67: #{tpu_custom_call.1} parent=11 // pred_region
          _
        $region68: #{tpu_custom_call.1} parent=11 // pred_fallthru
          _
        // Predicated region
        $region69: #{tpu_custom_call.1} parent=11 // pred_check
          %p740 = pneg %p481
        $region70: #{tpu_custom_call.1} parent=11 // pred_check_branch
          %742 = sbr.rel (%p740) target = $region72
        $region71: #{tpu_custom_call.1} parent=11 // pred_region
          _
        $region72: #{tpu_custom_call.1} parent=11 // pred_fallthru
          _
        // Predicated region
        $region73: #{tpu_custom_call.1} parent=11 // pred_check
          %p743 = pneg %p502
        $region74: #{tpu_custom_call.1} parent=11 // pred_check_branch
          %745 = sbr.rel (%p743) target = $region76
        $region75: #{tpu_custom_call.1} parent=11 // pred_region
          _
        $region76: #{tpu_custom_call.1} parent=11 // pred_fallthru
          _
        // Predicated region
        $region77: #{tpu_custom_call.1} parent=11 // pred_check
          %p746 = pneg %p523
        $region78: #{tpu_custom_call.1} parent=11 // pred_check_branch
          %748 = sbr.rel (%p746) target = $region80
        $region79: #{tpu_custom_call.1} parent=11 // pred_region
          _
        $region80: #{tpu_custom_call.1} parent=11 // pred_fallthru
          _
      $region12: #{tpu_custom_call.1} parent=5 // pred_fallthru
        _
      %p749 = scmp.lt.s32.totalorder %s44, 4
      // Predicated region
      $region81: #{tpu_custom_call.1} parent=5 // pred_check
        %p750 = pneg %p749
      $region82: #{tpu_custom_call.1} parent=5 // pred_check_branch
        %752 = sbr.rel (%p750) target = $region84
      $region83: #{tpu_custom_call.1} parent=5 // pred_region
        // Predicated region
        $region85: #{tpu_custom_call.1} parent=83 // pred_check
          %p753 = pneg %p76
        $region86: #{tpu_custom_call.1} parent=83 // pred_check_branch
          %755 = sbr.rel (%p753) target = $region88
        $region87: #{tpu_custom_call.1} parent=83 // pred_region
          %p756 = scmp.lt.s32.totalorder %s51, 1
          %s757 = scalar_select %p756, %s51, 1
          %s758 = smul.addr %s757, 2
          %s759 = smul.addr %s758, 8
          %s760 = scalar_lea.vmem %s0, %s759
        $region88: #{tpu_custom_call.1} parent=83 // pred_fallthru
          _
        // Predicated region
        $region89: #{tpu_custom_call.1} parent=83 // pred_check
          %p761 = pneg %p104
        $region90: #{tpu_custom_call.1} parent=83 // pred_check_branch
          %763 = sbr.rel (%p761) target = $region92
        $region91: #{tpu_custom_call.1} parent=83 // pred_region
          %p764 = scmp.lt.s32.totalorder %s51, 1
          %s765 = scalar_select %p764, %s51, 1
          %p766 = scmp.lt.s32.totalorder %s52, 1
          %s767 = scalar_select %p766, %s52, 1
          %s768 = smul.addr %s765, 2
          %s769 = sadd.s32 %s767, %s768
          %s770 = smul.addr %s769, 8
          %s771 = scalar_lea.vmem %s1, %s770
        $region92: #{tpu_custom_call.1} parent=83 // pred_fallthru
          _
        // Predicated region
        $region93: #{tpu_custom_call.1} parent=83 // pred_check
          %p772 = pneg %p132
        $region94: #{tpu_custom_call.1} parent=83 // pred_check_branch
          %774 = sbr.rel (%p772) target = $region96
        $region95: #{tpu_custom_call.1} parent=83 // pred_region
          %p775 = scmp.lt.s32.totalorder %s51, 1
          %s776 = scalar_select %p775, %s51, 1
          %p777 = scmp.lt.s32.totalorder %s52, 1
          %s778 = scalar_select %p777, %s52, 1
          %s779 = smul.addr %s776, 2
          %s780 = sadd.s32 %s778, %s779
          %s781 = smul.addr %s780, 8
          %s782 = scalar_lea.vmem %s2, %s781
        $region96: #{tpu_custom_call.1} parent=83 // pred_fallthru
          _
        // Predicated region
        $region97: #{tpu_custom_call.1} parent=83 // pred_check
          %p783 = pneg %p160
        $region98: #{tpu_custom_call.1} parent=83 // pred_check_branch
          %785 = sbr.rel (%p783) target = $region100
        $region99: #{tpu_custom_call.1} parent=83 // pred_region
          %p786 = scmp.lt.s32.totalorder %s51, 1
          %s787 = scalar_select %p786, %s51, 1
          %p788 = scmp.lt.s32.totalorder %s52, 1
          %s789 = scalar_select %p788, %s52, 1
          %s790 = smul.addr %s787, 2
          %s791 = sadd.s32 %s789, %s790
          %s792 = smul.addr %s791, 8
          %s793 = scalar_lea.vmem %s3, %s792
        $region100: #{tpu_custom_call.1} parent=83 // pred_fallthru
          _
      $region84: #{tpu_custom_call.1} parent=5 // pred_fallthru
        _
      %p794 = scmp.le.s32.totalorder 1, %s44
      %p795 = scmp.lt.s32.totalorder %s44, 5
      %p796 = pnand %p794, %p795
      %p797 = pneg %p796
      // Predicated region
      $region101: #{tpu_custom_call.1} parent=5 // pred_check
        _
      $region102: #{tpu_custom_call.1} parent=5 // pred_check_branch
        %799 = sbr.rel (%p796) target = $region104
      $region103: #{tpu_custom_call.1} parent=5 // pred_region
        %s800 = ssub.s32 %s44, 1
        // Predicated region
        $region105: #{tpu_custom_call.1} parent=103 // pred_check
          %p801 = pneg %p187
        $region106: #{tpu_custom_call.1} parent=103 // pred_check_branch
          %803 = sbr.rel (%p801) target = $region108
        $region107: #{tpu_custom_call.1} parent=103 // pred_region
          %804 = dma.done [#allocation7], 16
        $region108: #{tpu_custom_call.1} parent=103 // pred_fallthru
          _
        // Predicated region
        $region109: #{tpu_custom_call.1} parent=103 // pred_check
          %p805 = pneg %p229
        $region110: #{tpu_custom_call.1} parent=103 // pred_check_branch
          %807 = sbr.rel (%p805) target = $region112
        $region111: #{tpu_custom_call.1} parent=103 // pred_region
          %808 = dma.done [#allocation5], 512
        $region112: #{tpu_custom_call.1} parent=103 // pred_fallthru
          _
        // Predicated region
        $region113: #{tpu_custom_call.1} parent=103 // pred_check
          %p809 = pneg %p250
        $region114: #{tpu_custom_call.1} parent=103 // pred_check_branch
          %811 = sbr.rel (%p809) target = $region116
        $region115: #{tpu_custom_call.1} parent=103 // pred_region
          %812 = dma.done [#allocation10], 512
        $region116: #{tpu_custom_call.1} parent=103 // pred_fallthru
          _
        // Predicated region
        $region117: #{tpu_custom_call.1} parent=103 // pred_check
          %p813 = pneg %p355
        $region118: #{tpu_custom_call.1} parent=103 // pred_check_branch
          %815 = sbr.rel (%p813) target = $region120
        $region119: #{tpu_custom_call.1} parent=103 // pred_region
          %816 = dma.done [#allocation10], 512
        $region120: #{tpu_custom_call.1} parent=103 // pred_fallthru
          _
        // Predicated region
        $region121: #{tpu_custom_call.1} parent=103 // pred_check
          %p817 = pneg %p376
        $region122: #{tpu_custom_call.1} parent=103 // pred_check_branch
          %819 = sbr.rel (%p817) target = $region124
        $region123: #{tpu_custom_call.1} parent=103 // pred_region
          %820 = dma.done [#allocation13], 512
        $region124: #{tpu_custom_call.1} parent=103 // pred_fallthru
          _
        %821 = sfence
        %p822 = scmp.lt.s32.totalorder %s53, 1
        %s823 = scalar_select %p822, %s53, 1
        %s824 = smul.addr %s823, 2
        %s825 = smul.addr %s824, 8
        %s826 = scalar_lea.vmem %s0, %s825
        %p827 = pneg %p82
        %p828 = pneg %p79
        %p829 = scmp.lt.s32.totalorder %s53, 1
        %s830 = scalar_select %p829, %s53, 1
        %p831 = scmp.lt.s32.totalorder %s54, 1
        %s832 = scalar_select %p831, %s54, 1
        %s833 = smul.addr %s830, 2
        %s834 = sadd.s32 %s832, %s833
        %s835 = smul.addr %s834, 8
        %s836 = scalar_lea.vmem %s1, %s835
        %p837 = pneg %p110
        %p838 = pneg %p107
        %p839 = scmp.lt.s32.totalorder %s53, 1
        %s840 = scalar_select %p839, %s53, 1
        %p841 = scmp.lt.s32.totalorder %s54, 1
        %s842 = scalar_select %p841, %s54, 1
        %s843 = smul.addr %s840, 2
        %s844 = sadd.s32 %s842, %s843
        %s845 = smul.addr %s844, 8
        %s846 = scalar_lea.vmem %s2, %s845
        %p847 = pneg %p138
        %p848 = pneg %p135
        %p849 = scmp.lt.s32.totalorder %s53, 1
        %s850 = scalar_select %p849, %s53, 1
        %p851 = scmp.lt.s32.totalorder %s54, 1
        %s852 = scalar_select %p851, %s54, 1
        %s853 = smul.addr %s850, 2
        %s854 = sadd.s32 %s852, %s853
        %s855 = smul.addr %s854, 8
        %s856 = scalar_lea.vmem %s3, %s855
        %p857 = pneg %p166
        %p858 = pneg %p163
        %p859 = pneg %p187
        %p860 = pneg %p184
        %p861 = pneg %p208
        %p862 = pneg %p205
        %p863 = pneg %p229
        %p864 = pneg %p226
        %p865 = pneg %p250
        %p866 = pneg %p247
        %p867 = pneg %p271
        %p868 = pneg %p268
        %p869 = pneg %p292
        %p870 = pneg %p289
        %p871 = pneg %p313
        %p872 = pneg %p310
        %p873 = pneg %p334
        %p874 = pneg %p331
        %p875 = pneg %p355
        %p876 = pneg %p352
        %p877 = pneg %p376
        %p878 = pneg %p373
        %p879 = pneg %p397
        %p880 = pneg %p394
        %p881 = pneg %p418
        %p882 = pneg %p415
        %p883 = pneg %p439
        %p884 = pneg %p436
        %p885 = pneg %p460
        %p886 = pneg %p457
        %p887 = pneg %p481
        %p888 = pneg %p478
        %p889 = pneg %p502
        %p890 = pneg %p499
        %p891 = pneg %p523
        %p892 = pneg %p520
        %p893 = pneg %p551
        %p894 = pneg %p548
        %s895 = sand.u32 %s538, 1
        %s896 = scalar_lea.sflag [#allocation6], %s895
        %s897 = sand.u32 %s538, 1
        %s898 = smul.addr %s897, 8
        %s899 = scalar_lea.vmem [#allocation14], %s898
        %p900 = pneg %p579
        %p901 = pneg %p576
        %s902 = sand.u32 %s49, 1
        %s903 = scalar_lea.sflag [#allocation16], %s902
        %s904 = sand.u32 %s566, 1
        %s905 = smul.addr %s904, 8
        %s906 = scalar_lea.vmem [#allocation15], %s905
        %p907 = pneg %p607
        %p908 = pneg %p604
        %s909 = sand.u32 %s49, 1
        %s910 = scalar_lea.sflag [#allocation16], %s909
        %s911 = sand.u32 %s594, 1
        %s912 = smul.addr %s911, 8
        %s913 = scalar_lea.vmem [#allocation17], %s912
        %p914 = pneg %p635
        %p915 = pneg %p632
        %s916 = sand.u32 %s622, 1
        %s917 = scalar_lea.sflag [#allocation19], %s916
        %s918 = sand.u32 %s622, 1
        %s919 = smul.addr %s918, 8
        %s920 = scalar_lea.vmem [#allocation18], %s919
        %p921 = scmp.lt.s32.totalorder %s53, 1
        %s922 = scalar_select %p921, %s53, 1
        %s923 = smul.addr %s922, 2
        %s924 = smul.addr %s923, 8
        %s925 = scalar_lea.vmem %s0, %s924
        %p926 = scmp.lt.s32.totalorder %s53, 1
        %s927 = scalar_select %p926, %s53, 1
        %p928 = scmp.lt.s32.totalorder %s54, 1
        %s929 = scalar_select %p928, %s54, 1
        %s930 = smul.addr %s927, 2
        %s931 = sadd.s32 %s929, %s930
        %s932 = smul.addr %s931, 8
        %s933 = scalar_lea.vmem %s1, %s932
        %p934 = scmp.lt.s32.totalorder %s53, 1
        %s935 = scalar_select %p934, %s53, 1
        %p936 = scmp.lt.s32.totalorder %s54, 1
        %s937 = scalar_select %p936, %s54, 1
        %s938 = smul.addr %s935, 2
        %s939 = sadd.s32 %s937, %s938
        %s940 = smul.addr %s939, 8
        %s941 = scalar_lea.vmem %s2, %s940
        %p942 = scmp.lt.s32.totalorder %s53, 1
        %s943 = scalar_select %p942, %s53, 1
        %p944 = scmp.lt.s32.totalorder %s54, 1
        %s945 = scalar_select %p944, %s54, 1
        %s946 = smul.addr %s943, 2
        %s947 = sadd.s32 %s945, %s946
        %s948 = smul.addr %s947, 8
        %s949 = scalar_lea.vmem %s3, %s948
        %v950 = vld [vmem:[%s8] sm:$0x1]
        %v951 = vld [vmem:[%s9] sm:$0x1]
        %p952 = scmp.eq.s32.totalorder %s54, 0
        // Predicated region
        $region125: #{tpu_custom_call.1} parent=103 // pred_check
          %p953 = pneg %p952
        $region126: #{tpu_custom_call.1} parent=103 // pred_check_branch
          %955 = sbr.rel (%p953) target = $region128
        $region127: #{tpu_custom_call.1} parent=103 // pred_region
          %v956 = vld [vmem:[%s925] sm:$0xff]
          %v957 = vld [vmem:[%s925 + $0x8] sm:$0xff]
          %vm958 = vcmask 261120
          %v959 = vsel %vm958, %v956, 0.0
          %960 = vadd.xlane.f32.xlu0 %v959
          %v961 = vpop.xlane.xlu0 %960
          %v962 = vsel %vm958, %v957, 0.0
          %963 = vadd.xlane.f32.xlu0 %v962
          %v964 = vpop.xlane.xlu0 %963
          %v965 = vrcp.pop 32.0
          %v966 = vmul.f32 %v961, %v965
          %v967 = vmul.f32 %v964, %v965
          %v968 = vsub.f32 %v956, %v966
          %v969 = vsub.f32 %v957, %v967
          %v970 = vmul.f32 %v968, %v968
          %v971 = vmul.f32 %v969, %v969
          %v972 = vsel %vm958, %v970, 0.0
          %973 = vadd.xlane.f32.xlu0 %v972
          %v974 = vpop.xlane.xlu0 %973
          %v975 = vsel %vm958, %v971, 0.0
          %976 = vadd.xlane.f32.xlu0 %v975
          %v977 = vpop.xlane.xlu0 %976
          %v978 = vmul.f32 %v974, %v965
          %v979 = vmul.f32 %v977, %v965
          %v980 = vadd.f32 %v978, 1e-05
          %v981 = vadd.f32 %v979, 1e-05
          %v982 = vrsqrt.pop %v980
          %v983 = vrsqrt.pop %v981
          %v984 = vmul.f32 %v968, %v982
          %v985 = vmul.f32 %v969, %v983
          %v986 = vsel %vm958, %v984, 0.0
          %987 = vadd.xlane.f32.xlu0 %v986
          %v988 = vpop.xlane.xlu0 %987
          %v989 = vsel %vm958, %v985, 0.0
          %990 = vadd.xlane.f32.xlu0 %v989
          %v991 = vpop.xlane.xlu0 %990
          %v992 = vmul.f32 %v988, %v965
          %v993 = vmul.f32 %v991, %v965
          %v994 = vsub.f32 %v984, %v992
          %v995 = vsub.f32 %v985, %v993
          %v996 = vmul.f32 %v994, %v994
          %v997 = vmul.f32 %v995, %v995
          %v998 = vsel %vm958, %v996, 0.0
          %999 = vadd.xlane.f32.xlu0 %v998
          %v1000 = vpop.xlane.xlu0 %999
          %v1001 = vsel %vm958, %v997, 0.0
          %1002 = vadd.xlane.f32.xlu0 %v1001
          %v1003 = vpop.xlane.xlu0 %1002
          %v1004 = vmul.f32 %v1000, %v965
          %v1005 = vmul.f32 %v1003, %v965
          %v1006 = vadd.f32 %v1004, 1e-05
          %v1007 = vadd.f32 %v1005, 1e-05
          %v1008 = vrsqrt.pop %v1006
          %v1009 = vrsqrt.pop %v1007
          %v1010 = vmul.f32 %v994, %v1008
          %v1011 = vmul.f32 %v995, %v1009
          %v1013 = vlaneseq
          %v1014 = vshrl.u32 %v1013, 7
          %v1015 = vsub.s32 0, %v1014
          %v1016 = vrot.slane %v950, %v1015
          %v1018 = vmul.f32 %v1010, %v1016
          %v1019 = vmul.f32 %v1011, %v1016
          %v1021 = vlaneseq
          %v1022 = vshrl.u32 %v1021, 7
          %v1023 = vsub.s32 0, %v1022
          %v1024 = vrot.slane %v951, %v1023
          %v1026 = vadd.f32 %v1018, %v1024
          %v1027 = vadd.f32 %v1019, %v1024
          %v1028 = vld [vmem:[#allocation8] sm:$0xff]
          %v1029 = vld [vmem:[#allocation8 + $0x8] sm:$0xff]
          %v1030 = vld [vmem:[#allocation8 + $0x10] sm:$0xff]
          %v1031 = vld [vmem:[#allocation8 + $0x18] sm:$0xff]
          %v1033 = vsel %vm958, %v1026, 0
          %v1036 = vsel %vm958, %v1027, 0
          %1038 = vmatprep.subr.mxu0 0.0
          %1039 = vmatpush1.msra.mxu0 %v1028
          %1040 = vmatprep.subr.mxu0 0.0
          %1041 = vmatpush1.msra.mxu0 %v1029
          %1042 = vmatprep.subr.mxu0 0.0
          %1043 = vmatpush1.msra.mxu0 %v1030
          %1044 = vmatprep.subr.mxu0 0.0
          %1045 = vmatpush1.msra.mxu0 %v1031
          %1046 = vmatprep.subr.mxu0 0.0
          %1047 = vmatpush1.msra.mxu0 0.0
          %1048 = vmatprep.subr.mxu0 0.0
          %1049 = vmatpush1.msra.mxu0 0.0
          %1050 = vmatprep.subr.mxu0 0.0
          %1051 = vmatpush1.msra.mxu0 0.0
          %1052 = vmatprep.subr.mxu0 0.0
          %1053 = vmatpush1.msra.mxu0 0.0
          %1054 = vmatprep.subr.mxu0 0.0
          %1055 = vmatpush1.msra.mxu0 0.0
          %1056 = vmatprep.subr.mxu0 0.0
          %1057 = vmatpush1.msra.mxu0 0.0
          %1058 = vmatprep.subr.mxu0 0.0
          %1059 = vmatpush1.msra.mxu0 0.0
          %1060 = vmatprep.subr.mxu0 0.0
          %1061 = vmatpush1.msra.mxu0 0.0
          %1062 = vmatprep.subr.mxu0 0.0
          %1063 = vmatpush1.msra.mxu0 0.0
          %1064 = vmatprep.subr.mxu0 0.0
          %1065 = vmatpush1.msra.mxu0 0.0
          %1066 = vmatprep.subr.mxu0 0.0
          %1067 = vmatpush1.msra.mxu0 0.0
          %1068 = vmatprep.subr.mxu0 0.0
          %1069 = vmatpush1.msra.mxu0 0.0
          %1070 = vmatprep.subr.mxu0 0.0
          %1071 = vmatpush1.msra.mxu0 0.0
          %1072 = vmatprep.subr.mxu0 0.0
          %1073 = vmatpush1.msra.mxu0 0.0
          %1074 = vmatprep.subr.mxu0 0.0
          %1075 = vmatpush1.msra.mxu0 0.0
          %1076 = vmatprep.subr.mxu0 0.0
          %1077 = vmatpush1.msra.mxu0 0.0
          %1078 = vmatprep.subr.mxu0 0.0
          %1079 = vmatpush1.msra.mxu0 0.0
          %1080 = vmatprep.subr.mxu0 0.0
          %1081 = vmatpush1.msra.mxu0 0.0
          %1082 = vmatprep.subr.mxu0 0.0
          %1083 = vmatpush1.msra.mxu0 0.0
          %1084 = vmatprep.subr.mxu0 0.0
          %1085 = vmatpush1.msra.mxu0 0.0
          %1086 = vmatprep.subr.mxu0 0.0
          %1087 = vmatpush1.msra.mxu0 0.0
          %1088 = vmatprep.subr.mxu0 0.0
          %1089 = vmatpush1.msra.mxu0 0.0
          %1090 = vmatprep.subr.mxu0 0.0
          %1091 = vmatpush1.msra.mxu0 0.0
          %1092 = vmatprep.subr.mxu0 0.0
          %1093 = vmatpush1.msra.mxu0 0.0
          %1094 = vmatprep.subr.mxu0 0.0
          %1095 = vmatpush1.msra.mxu0 0.0
          %1096 = vmatprep.subr.mxu0 0.0
          %1097 = vmatpush1.msra.mxu0 0.0
          %1098 = vmatprep.subr.mxu0 0.0
          %1099 = vmatpush1.msra.mxu0 0.0
          %1100 = vmatprep.subr.mxu0 0.0
          %1101 = vmatpush1.msra.mxu0 0.0
          %1102 = vmatprep.mubr.f32.mxu0 0.0
          %1103 = vmatmul.mubr.f32.gmra.mrb[0].mxu0 %v1033
          %v1104 = vpop.f32.mrb[0].mxu0
          %v1105 = vadd.f32 0.0, %v1104
          %v1106 = vpop.f32.mrb[0].mxu0
          %1107 = vmatprep.mubr.f32.mxu0 0.0
          %1108 = vmatmul.mubr.f32.gmra.mrb[0].mxu0 %v1036
          %v1109 = vpop.f32.mrb[0].mxu0
          %v1110 = vadd.f32 0.0, %v1109
          %v1111 = vpop.f32.mrb[0].mxu0
          %1112 = vdwg.mxu0
          %vm1113 = vcmask 523264
          %1114 = vst.msk [vmem:[#allocation2] sm:$0xff] %vm1113, %v1105
          %1115 = vst.msk [vmem:[#allocation2 + $0x8] sm:$0xff] %vm1113, %v1110
        $region128: #{tpu_custom_call.1} parent=103 // pred_fallthru
          _
        %v1116 = vld [vmem:[%s933] sm:$0xff]
        %vm1117 = vcmask 261120
        %v1118 = vsel %vm1117, %v1116, 0.0
        %1119 = vadd.xlane.f32.xlu0 %v1118
        %v1120 = vpop.xlane.xlu0 %1119
        %v1121 = vrcp.pop 32.0
        %v1122 = vmul.f32 %v1120, %v1121
        %v1123 = vsub.f32 %v1116, %v1122
        %v1124 = vmul.f32 %v1123, %v1123
        %v1125 = vsel %vm1117, %v1124, 0.0
        %1126 = vadd.xlane.f32.xlu0 %v1125
        %v1127 = vpop.xlane.xlu0 %1126
        %v1128 = vmul.f32 %v1127, %v1121
        %v1129 = vadd.f32 %v1128, 1e-05
        %v1130 = vrsqrt.pop %v1129
        %v1131 = vmul.f32 %v1123, %v1130
        %v1132 = vsel %vm1117, %v1131, 0.0
        %1133 = vadd.xlane.f32.xlu0 %v1132
        %v1134 = vpop.xlane.xlu0 %1133
        %v1135 = vmul.f32 %v1134, %v1121
        %v1136 = vsub.f32 %v1131, %v1135
        %v1137 = vmul.f32 %v1136, %v1136
        %v1138 = vsel %vm1117, %v1137, 0.0
        %1139 = vadd.xlane.f32.xlu0 %v1138
        %v1140 = vpop.xlane.xlu0 %1139
        %v1141 = vmul.f32 %v1140, %v1121
        %v1142 = vadd.f32 %v1141, 1e-05
        %v1143 = vrsqrt.pop %v1142
        %v1144 = vmul.f32 %v1136, %v1143
        %v1146 = vlaneseq
        %v1147 = vshrl.u32 %v1146, 7
        %v1148 = vsub.s32 0, %v1147
        %v1149 = vrot.slane %v950, %v1148
        %v1151 = vmul.f32 %v1144, %v1149
        %v1153 = vlaneseq
        %v1154 = vshrl.u32 %v1153, 7
        %v1155 = vsub.s32 0, %v1154
        %v1156 = vrot.slane %v951, %v1155
        %v1158 = vadd.f32 %v1151, %v1156
        %v1159 = vld [vmem:[%s5] sm:$0xff]
        %v1160 = vld [vmem:[%s5 + $0x8] sm:$0xff]
        %v1161 = vld [vmem:[%s5 + $0x10] sm:$0xff]
        %v1162 = vld [vmem:[%s5 + $0x18] sm:$0xff]
        %v1164 = vsel %vm1117, %v1158, 0
        %1166 = vmatprep.subr.mxu0 0.0
        %1167 = vmatpush1.msra.mxu0 %v1159
        %1168 = vmatprep.subr.mxu0 0.0
        %1169 = vmatpush1.msra.mxu0 %v1160
        %1170 = vmatprep.subr.mxu0 0.0
        %1171 = vmatpush1.msra.mxu0 %v1161
        %1172 = vmatprep.subr.mxu0 0.0
        %1173 = vmatpush1.msra.mxu0 %v1162
        %1174 = vmatprep.subr.mxu0 0.0
        %1175 = vmatpush1.msra.mxu0 0.0
        %1176 = vmatprep.subr.mxu0 0.0
        %1177 = vmatpush1.msra.mxu0 0.0
        %1178 = vmatprep.subr.mxu0 0.0
        %1179 = vmatpush1.msra.mxu0 0.0
        %1180 = vmatprep.subr.mxu0 0.0
        %1181 = vmatpush1.msra.mxu0 0.0
        %1182 = vmatprep.subr.mxu0 0.0
        %1183 = vmatpush1.msra.mxu0 0.0
        %1184 = vmatprep.subr.mxu0 0.0
        %1185 = vmatpush1.msra.mxu0 0.0
        %1186 = vmatprep.subr.mxu0 0.0
        %1187 = vmatpush1.msra.mxu0 0.0
        %1188 = vmatprep.subr.mxu0 0.0
        %1189 = vmatpush1.msra.mxu0 0.0
        %1190 = vmatprep.subr.mxu0 0.0
        %1191 = vmatpush1.msra.mxu0 0.0
        %1192 = vmatprep.subr.mxu0 0.0
        %1193 = vmatpush1.msra.mxu0 0.0
        %1194 = vmatprep.subr.mxu0 0.0
        %1195 = vmatpush1.msra.mxu0 0.0
        %1196 = vmatprep.subr.mxu0 0.0
        %1197 = vmatpush1.msra.mxu0 0.0
        %1198 = vmatprep.subr.mxu0 0.0
        %1199 = vmatpush1.msra.mxu0 0.0
        %1200 = vmatprep.subr.mxu0 0.0
        %1201 = vmatpush1.msra.mxu0 0.0
        %1202 = vmatprep.subr.mxu0 0.0
        %1203 = vmatpush1.msra.mxu0 0.0
        %1204 = vmatprep.subr.mxu0 0.0
        %1205 = vmatpush1.msra.mxu0 0.0
        %1206 = vmatprep.subr.mxu0 0.0
        %1207 = vmatpush1.msra.mxu0 0.0
        %1208 = vmatprep.subr.mxu0 0.0
        %1209 = vmatpush1.msra.mxu0 0.0
        %1210 = vmatprep.subr.mxu0 0.0
        %1211 = vmatpush1.msra.mxu0 0.0
        %1212 = vmatprep.subr.mxu0 0.0
        %1213 = vmatpush1.msra.mxu0 0.0
        %1214 = vmatprep.subr.mxu0 0.0
        %1215 = vmatpush1.msra.mxu0 0.0
        %1216 = vmatprep.subr.mxu0 0.0
        %1217 = vmatpush1.msra.mxu0 0.0
        %1218 = vmatprep.subr.mxu0 0.0
        %1219 = vmatpush1.msra.mxu0 0.0
        %1220 = vmatprep.subr.mxu0 0.0
        %1221 = vmatpush1.msra.mxu0 0.0
        %1222 = vmatprep.subr.mxu0 0.0
        %1223 = vmatpush1.msra.mxu0 0.0
        %1224 = vmatprep.subr.mxu0 0.0
        %1225 = vmatpush1.msra.mxu0 0.0
        %1226 = vmatprep.subr.mxu0 0.0
        %1227 = vmatpush1.msra.mxu0 0.0
        %1228 = vmatprep.subr.mxu0 0.0
        %1229 = vmatpush1.msra.mxu0 0.0
        %1230 = vmatprep.mubr.f32.mxu0 0.0
        %1231 = vmatmul.mubr.f32.gmra.mrb[0].mxu0 %v1164
        %v1232 = vpop.f32.mrb[0].mxu0
        %v1233 = vadd.f32 0.0, %v1232
        %v1234 = vpop.f32.mrb[0].mxu0
        %1235 = vdwg.mxu0
        %v1236 = vld [vmem:[%s941] sm:$0xff]
        %v1237 = vld [vmem:[%s949] sm:$0xff]
        %v1238 = vld [vmem:[#allocation2] sm:$0xff]
        %v1239 = vld [vmem:[#allocation2 + $0x8] sm:$0xff]
        %s1240 = sld [smem:[#allocation4]]
        %v1241 = vstv %s1240
        %v1242 = vmul.f32 %v1241, %v1236
        %v1243 = vadd.f32 %v1237, %v1242
        %vm1244 = vcmask 64512
        %v1246 = vsel %vm1244, %v1233, 0
        %v1249 = vsel %vm1244, %v1238, 0
        %v1252 = vsel %vm1244, %v1239, 0
        %1254 = vmatprep.subr.mxu0 0.0
        %1255 = vmatpush1.xpose.msra.mxu0 %v1249
        %1256 = vmatprep.subr.mxu0 0.0
        %1257 = vmatpush1.xpose.msra.mxu0 %v1252
        %1258 = vmatprep.subr.mxu0 0.0
        %1259 = vmatpush1.xpose.msra.mxu0 0.0
        %1260 = vmatprep.subr.mxu0 0.0
        %1261 = vmatpush1.xpose.msra.mxu0 0.0
        %1262 = vmatprep.subr.mxu0 0.0
        %1263 = vmatpush1.xpose.msra.mxu0 0.0
        %1264 = vmatprep.subr.mxu0 0.0
        %1265 = vmatpush1.xpose.msra.mxu0 0.0
        %1266 = vmatprep.subr.mxu0 0.0
        %1267 = vmatpush1.xpose.msra.mxu0 0.0
        %1268 = vmatprep.subr.mxu0 0.0
        %1269 = vmatpush1.xpose.msra.mxu0 0.0
        %1270 = vmatprep.subr.mxu0 0.0
        %1271 = vmatpush1.xpose.msra.mxu0 0.0
        %1272 = vmatprep.subr.mxu0 0.0
        %1273 = vmatpush1.xpose.msra.mxu0 0.0
        %1274 = vmatprep.subr.mxu0 0.0
        %1275 = vmatpush1.xpose.msra.mxu0 0.0
        %1276 = vmatprep.subr.mxu0 0.0
        %1277 = vmatpush1.xpose.msra.mxu0 0.0
        %1278 = vmatprep.subr.mxu0 0.0
        %1279 = vmatpush1.xpose.msra.mxu0 0.0
        %1280 = vmatprep.subr.mxu0 0.0
        %1281 = vmatpush1.xpose.msra.mxu0 0.0
        %1282 = vmatprep.subr.mxu0 0.0
        %1283 = vmatpush1.xpose.msra.mxu0 0.0
        %1284 = vmatprep.subr.mxu0 0.0
        %1285 = vmatpush1.xpose.msra.mxu0 0.0
        %1286 = vmatprep.subr.mxu0 0.0
        %1287 = vmatpush1.xpose.msra.mxu0 0.0
        %1288 = vmatprep.subr.mxu0 0.0
        %1289 = vmatpush1.xpose.msra.mxu0 0.0
        %1290 = vmatprep.subr.mxu0 0.0
        %1291 = vmatpush1.xpose.msra.mxu0 0.0
        %1292 = vmatprep.subr.mxu0 0.0
        %1293 = vmatpush1.xpose.msra.mxu0 0.0
        %1294 = vmatprep.subr.mxu0 0.0
        %1295 = vmatpush1.xpose.msra.mxu0 0.0
        %1296 = vmatprep.subr.mxu0 0.0
        %1297 = vmatpush1.xpose.msra.mxu0 0.0
        %1298 = vmatprep.subr.mxu0 0.0
        %1299 = vmatpush1.xpose.msra.mxu0 0.0
        %1300 = vmatprep.subr.mxu0 0.0
        %1301 = vmatpush1.xpose.msra.mxu0 0.0
        %1302 = vmatprep.subr.mxu0 0.0
        %1303 = vmatpush1.xpose.msra.mxu0 0.0
        %1304 = vmatprep.subr.mxu0 0.0
        %1305 = vmatpush1.xpose.msra.mxu0 0.0
        %1306 = vmatprep.subr.mxu0 0.0
        %1307 = vmatpush1.xpose.msra.mxu0 0.0
        %1308 = vmatprep.subr.mxu0 0.0
        %1309 = vmatpush1.xpose.msra.mxu0 0.0
        %1310 = vmatprep.subr.mxu0 0.0
        %1311 = vmatpush1.xpose.msra.mxu0 0.0
        %1312 = vmatprep.subr.mxu0 0.0
        %1313 = vmatpush1.xpose.msra.mxu0 0.0
        %1314 = vmatprep.subr.mxu0 0.0
        %1315 = vmatpush1.xpose.msra.mxu0 0.0
        %1316 = vmatprep.subr.mxu0 0.0
        %1317 = vmatpush1.xpose.msra.mxu0 0.0
        %1318 = vmatprep.mubr.f32.mxu0 0.0
        %1319 = vmatmul.mubr.f32.gmra.mrb[0].mxu0 %v1246
        %v1320 = vpop.f32.mrb[0].mxu0
        %v1321 = vadd.f32 %v1243, %v1320
        %v1322 = vpop.f32.mrb[0].mxu0
        %1323 = vdwg.mxu0
        %vm1324 = vcmask 130048
        %v1325 = vsel %vm1324, %v1321, -inf
        %1326 = vmax.xlane.f32.xlu0 %v1325
        %v1327 = vpop.xlane.xlu0 %1326
        %v1328 = vsub.f32 %v1321, %v1327
        %v1329 = vmul.f32 %v1328, 1.442695
        %v1330 = vpow.pop %v1329
        %v1331 = vsel %vm1324, %v1330, 0.0
        %1332 = vadd.xlane.f32.xlu0 %v1331
        %v1333 = vpop.xlane.xlu0 %1332
        %v1334 = vrcp.pop %v1333
        %v1335 = vmul.f32 %v1330, %v1334
        %1336 = vrot.lane.b32.xlu0 %v1238, 96
        %v1337 = vpop.permute.xlu0 %1336
        %1338 = vrot.lane.b32.xlu0 %v1239, 96
        %v1339 = vpop.permute.xlu0 %1338
        %v1343 = vsel %vm1324, %v1335, 0
        %1345 = vmatprep.subr.mxu0 0.0
        %1346 = vmatpush1.msra.mxu0 %v1337
        %1347 = vmatprep.subr.mxu0 0.0
        %1348 = vmatpush1.msra.mxu0 %v1339
        %1349 = vmatprep.subr.mxu0 0.0
        %1350 = vmatpush1.msra.mxu0 0.0
        %1351 = vmatprep.subr.mxu0 0.0
        %1352 = vmatpush1.msra.mxu0 0.0
        %1353 = vmatprep.subr.mxu0 0.0
        %1354 = vmatpush1.msra.mxu0 0.0
        %1355 = vmatprep.subr.mxu0 0.0
        %1356 = vmatpush1.msra.mxu0 0.0
        %1357 = vmatprep.subr.mxu0 0.0
        %1358 = vmatpush1.msra.mxu0 0.0
        %1359 = vmatprep.subr.mxu0 0.0
        %1360 = vmatpush1.msra.mxu0 0.0
        %1361 = vmatprep.subr.mxu0 0.0
        %1362 = vmatpush1.msra.mxu0 0.0
        %1363 = vmatprep.subr.mxu0 0.0
        %1364 = vmatpush1.msra.mxu0 0.0
        %1365 = vmatprep.subr.mxu0 0.0
        %1366 = vmatpush1.msra.mxu0 0.0
        %1367 = vmatprep.subr.mxu0 0.0
        %1368 = vmatpush1.msra.mxu0 0.0
        %1369 = vmatprep.subr.mxu0 0.0
        %1370 = vmatpush1.msra.mxu0 0.0
        %1371 = vmatprep.subr.mxu0 0.0
        %1372 = vmatpush1.msra.mxu0 0.0
        %1373 = vmatprep.subr.mxu0 0.0
        %1374 = vmatpush1.msra.mxu0 0.0
        %1375 = vmatprep.subr.mxu0 0.0
        %1376 = vmatpush1.msra.mxu0 0.0
        %1377 = vmatprep.subr.mxu0 0.0
        %1378 = vmatpush1.msra.mxu0 0.0
        %1379 = vmatprep.subr.mxu0 0.0
        %1380 = vmatpush1.msra.mxu0 0.0
        %1381 = vmatprep.subr.mxu0 0.0
        %1382 = vmatpush1.msra.mxu0 0.0
        %1383 = vmatprep.subr.mxu0 0.0
        %1384 = vmatpush1.msra.mxu0 0.0
        %1385 = vmatprep.subr.mxu0 0.0
        %1386 = vmatpush1.msra.mxu0 0.0
        %1387 = vmatprep.subr.mxu0 0.0
        %1388 = vmatpush1.msra.mxu0 0.0
        %1389 = vmatprep.subr.mxu0 0.0
        %1390 = vmatpush1.msra.mxu0 0.0
        %1391 = vmatprep.subr.mxu0 0.0
        %1392 = vmatpush1.msra.mxu0 0.0
        %1393 = vmatprep.subr.mxu0 0.0
        %1394 = vmatpush1.msra.mxu0 0.0
        %1395 = vmatprep.subr.mxu0 0.0
        %1396 = vmatpush1.msra.mxu0 0.0
        %1397 = vmatprep.subr.mxu0 0.0
        %1398 = vmatpush1.msra.mxu0 0.0
        %1399 = vmatprep.subr.mxu0 0.0
        %1400 = vmatpush1.msra.mxu0 0.0
        %1401 = vmatprep.subr.mxu0 0.0
        %1402 = vmatpush1.msra.mxu0 0.0
        %1403 = vmatprep.subr.mxu0 0.0
        %1404 = vmatpush1.msra.mxu0 0.0
        %1405 = vmatprep.subr.mxu0 0.0
        %1406 = vmatpush1.msra.mxu0 0.0
        %1407 = vmatprep.subr.mxu0 0.0
        %1408 = vmatpush1.msra.mxu0 0.0
        %1409 = vmatprep.mubr.f32.mxu0 0.0
        %1410 = vmatmul.mubr.f32.gmra.mrb[0].mxu0 %v1343
        %v1411 = vpop.f32.mrb[0].mxu0
        %v1412 = vadd.f32 0.0, %v1411
        %v1413 = vpop.f32.mrb[0].mxu0
        %1414 = vdwg.mxu0
        %1415 = vst.msk [vmem:[#allocation3] sm:$0xff] %vm1244, %v1412
        %v1416 = vld [vmem:[#allocation2] sm:$0xff]
        %v1417 = vld [vmem:[#allocation2 + $0x8] sm:$0xff]
        %s1418 = sld [smem:[#allocation4 + $0x1]]
        %v1419 = vstv %s1418
        %v1420 = vmul.f32 %v1419, %v1236
        %v1421 = vadd.f32 %v1237, %v1420
        %1422 = vrot.lane.b32.xlu0 %v1233, 120
        %v1423 = vpop.permute.xlu0 %1422
        %1426 = vrot.lane.b32.xlu0 %v1416, 120
        %v1427 = vpop.permute.xlu0 %1426
        %1428 = vrot.lane.b32.xlu0 %v1417, 120
        %v1429 = vpop.permute.xlu0 %1428
        %v1430 = vsel %vm1244, %v1423, 0
        %v1432 = vsel %vm1244, %v1427, 0
        %v1434 = vsel %vm1244, %v1429, 0
        %1436 = vmatprep.subr.mxu0 0.0
        %1437 = vmatpush1.xpose.msra.mxu0 %v1432
        %1438 = vmatprep.subr.mxu0 0.0
        %1439 = vmatpush1.xpose.msra.mxu0 %v1434
        %1440 = vmatprep.subr.mxu0 0.0
        %1441 = vmatpush1.xpose.msra.mxu0 0.0
        %1442 = vmatprep.subr.mxu0 0.0
        %1443 = vmatpush1.xpose.msra.mxu0 0.0
        %1444 = vmatprep.subr.mxu0 0.0
        %1445 = vmatpush1.xpose.msra.mxu0 0.0
        %1446 = vmatprep.subr.mxu0 0.0
        %1447 = vmatpush1.xpose.msra.mxu0 0.0
        %1448 = vmatprep.subr.mxu0 0.0
        %1449 = vmatpush1.xpose.msra.mxu0 0.0
        %1450 = vmatprep.subr.mxu0 0.0
        %1451 = vmatpush1.xpose.msra.mxu0 0.0
        %1452 = vmatprep.subr.mxu0 0.0
        %1453 = vmatpush1.xpose.msra.mxu0 0.0
        %1454 = vmatprep.subr.mxu0 0.0
        %1455 = vmatpush1.xpose.msra.mxu0 0.0
        %1456 = vmatprep.subr.mxu0 0.0
        %1457 = vmatpush1.xpose.msra.mxu0 0.0
        %1458 = vmatprep.subr.mxu0 0.0
        %1459 = vmatpush1.xpose.msra.mxu0 0.0
        %1460 = vmatprep.subr.mxu0 0.0
        %1461 = vmatpush1.xpose.msra.mxu0 0.0
        %1462 = vmatprep.subr.mxu0 0.0
        %1463 = vmatpush1.xpose.msra.mxu0 0.0
        %1464 = vmatprep.subr.mxu0 0.0
        %1465 = vmatpush1.xpose.msra.mxu0 0.0
        %1466 = vmatprep.subr.mxu0 0.0
        %1467 = vmatpush1.xpose.msra.mxu0 0.0
        %1468 = vmatprep.subr.mxu0 0.0
        %1469 = vmatpush1.xpose.msra.mxu0 0.0
        %1470 = vmatprep.subr.mxu0 0.0
        %1471 = vmatpush1.xpose.msra.mxu0 0.0
        %1472 = vmatprep.subr.mxu0 0.0
        %1473 = vmatpush1.xpose.msra.mxu0 0.0
        %1474 = vmatprep.subr.mxu0 0.0
        %1475 = vmatpush1.xpose.msra.mxu0 0.0
        %1476 = vmatprep.subr.mxu0 0.0
        %1477 = vmatpush1.xpose.msra.mxu0 0.0
        %1478 = vmatprep.subr.mxu0 0.0
        %1479 = vmatpush1.xpose.msra.mxu0 0.0
        %1480 = vmatprep.subr.mxu0 0.0
        %1481 = vmatpush1.xpose.msra.mxu0 0.0
        %1482 = vmatprep.subr.mxu0 0.0
        %1483 = vmatpush1.xpose.msra.mxu0 0.0
        %1484 = vmatprep.subr.mxu0 0.0
        %1485 = vmatpush1.xpose.msra.mxu0 0.0
        %1486 = vmatprep.subr.mxu0 0.0
        %1487 = vmatpush1.xpose.msra.mxu0 0.0
        %1488 = vmatprep.subr.mxu0 0.0
        %1489 = vmatpush1.xpose.msra.mxu0 0.0
        %1490 = vmatprep.subr.mxu0 0.0
        %1491 = vmatpush1.xpose.msra.mxu0 0.0
        %1492 = vmatprep.subr.mxu0 0.0
        %1493 = vmatpush1.xpose.msra.mxu0 0.0
        %1494 = vmatprep.subr.mxu0 0.0
        %1495 = vmatpush1.xpose.msra.mxu0 0.0
        %1496 = vmatprep.subr.mxu0 0.0
        %1497 = vmatpush1.xpose.msra.mxu0 0.0
        %1498 = vmatprep.subr.mxu0 0.0
        %1499 = vmatpush1.xpose.msra.mxu0 0.0
        %1500 = vmatprep.mubr.f32.mxu0 0.0
        %1501 = vmatmul.mubr.f32.gmra.mrb[0].mxu0 %v1430
        %v1502 = vpop.f32.mrb[0].mxu0
        %v1503 = vadd.f32 %v1421, %v1502
        %v1504 = vpop.f32.mrb[0].mxu0
        %1505 = vdwg.mxu0
        %v1506 = vsel %vm1324, %v1503, -inf
        %1507 = vmax.xlane.f32.xlu0 %v1506
        %v1508 = vpop.xlane.xlu0 %1507
        %v1509 = vsub.f32 %v1503, %v1508
        %v1510 = vmul.f32 %v1509, 1.442695
        %v1511 = vpow.pop %v1510
        %v1512 = vsel %vm1324, %v1511, 0.0
        %1513 = vadd.xlane.f32.xlu0 %v1512
        %v1514 = vpop.xlane.xlu0 %1513
        %v1515 = vrcp.pop %v1514
        %v1516 = vmul.f32 %v1511, %v1515
        %1517 = vrot.lane.b32.xlu0 %v1416, 88
        %v1518 = vpop.permute.xlu0 %1517
        %1519 = vrot.lane.b32.xlu0 %v1417, 88
        %v1520 = vpop.permute.xlu0 %1519
        %v1524 = vsel %vm1324, %v1516, 0
        %1526 = vmatprep.subr.mxu0 0.0
        %1527 = vmatpush1.msra.mxu0 %v1518
        %1528 = vmatprep.subr.mxu0 0.0
        %1529 = vmatpush1.msra.mxu0 %v1520
        %1530 = vmatprep.subr.mxu0 0.0
        %1531 = vmatpush1.msra.mxu0 0.0
        %1532 = vmatprep.subr.mxu0 0.0
        %1533 = vmatpush1.msra.mxu0 0.0
        %1534 = vmatprep.subr.mxu0 0.0
        %1535 = vmatpush1.msra.mxu0 0.0
        %1536 = vmatprep.subr.mxu0 0.0
        %1537 = vmatpush1.msra.mxu0 0.0
        %1538 = vmatprep.subr.mxu0 0.0
        %1539 = vmatpush1.msra.mxu0 0.0
        %1540 = vmatprep.subr.mxu0 0.0
        %1541 = vmatpush1.msra.mxu0 0.0
        %1542 = vmatprep.subr.mxu0 0.0
        %1543 = vmatpush1.msra.mxu0 0.0
        %1544 = vmatprep.subr.mxu0 0.0
        %1545 = vmatpush1.msra.mxu0 0.0
        %1546 = vmatprep.subr.mxu0 0.0
        %1547 = vmatpush1.msra.mxu0 0.0
        %1548 = vmatprep.subr.mxu0 0.0
        %1549 = vmatpush1.msra.mxu0 0.0
        %1550 = vmatprep.subr.mxu0 0.0
        %1551 = vmatpush1.msra.mxu0 0.0
        %1552 = vmatprep.subr.mxu0 0.0
        %1553 = vmatpush1.msra.mxu0 0.0
        %1554 = vmatprep.subr.mxu0 0.0
        %1555 = vmatpush1.msra.mxu0 0.0
        %1556 = vmatprep.subr.mxu0 0.0
        %1557 = vmatpush1.msra.mxu0 0.0
        %1558 = vmatprep.subr.mxu0 0.0
        %1559 = vmatpush1.msra.mxu0 0.0
        %1560 = vmatprep.subr.mxu0 0.0
        %1561 = vmatpush1.msra.mxu0 0.0
        %1562 = vmatprep.subr.mxu0 0.0
        %1563 = vmatpush1.msra.mxu0 0.0
        %1564 = vmatprep.subr.mxu0 0.0
        %1565 = vmatpush1.msra.mxu0 0.0
        %1566 = vmatprep.subr.mxu0 0.0
        %1567 = vmatpush1.msra.mxu0 0.0
        %1568 = vmatprep.subr.mxu0 0.0
        %1569 = vmatpush1.msra.mxu0 0.0
        %1570 = vmatprep.subr.mxu0 0.0
        %1571 = vmatpush1.msra.mxu0 0.0
        %1572 = vmatprep.subr.mxu0 0.0
        %1573 = vmatpush1.msra.mxu0 0.0
        %1574 = vmatprep.subr.mxu0 0.0
        %1575 = vmatpush1.msra.mxu0 0.0
        %1576 = vmatprep.subr.mxu0 0.0
        %1577 = vmatpush1.msra.mxu0 0.0
        %1578 = vmatprep.subr.mxu0 0.0
        %1579 = vmatpush1.msra.mxu0 0.0
        %1580 = vmatprep.subr.mxu0 0.0
        %1581 = vmatpush1.msra.mxu0 0.0
        %1582 = vmatprep.subr.mxu0 0.0
        %1583 = vmatpush1.msra.mxu0 0.0
        %1584 = vmatprep.subr.mxu0 0.0
        %1585 = vmatpush1.msra.mxu0 0.0
        %1586 = vmatprep.subr.mxu0 0.0
        %1587 = vmatpush1.msra.mxu0 0.0
        %1588 = vmatprep.subr.mxu0 0.0
        %1589 = vmatpush1.msra.mxu0 0.0
        %1590 = vmatprep.mubr.f32.mxu0 0.0
        %1591 = vmatmul.mubr.f32.gmra.mrb[0].mxu0 %v1524
        %v1592 = vpop.f32.mrb[0].mxu0
        %v1593 = vadd.f32 0.0, %v1592
        %v1594 = vpop.f32.mrb[0].mxu0
        %1595 = vdwg.mxu0
        %1597 = vrot.lane.b32.xlu0 %v1593, 8
        %v1598 = vpop.permute.xlu0 %1597
        %vm1600 = vcmask 130112
        %1601 = vst.msk [vmem:[#allocation3] sm:$0xff] %vm1600, %v1598
        %v1602 = vld [vmem:[#allocation2] sm:$0xff]
        %v1603 = vld [vmem:[#allocation2 + $0x8] sm:$0xff]
        %s1604 = sld [smem:[#allocation4 + $0x2]]
        %v1605 = vstv %s1604
        %v1606 = vmul.f32 %v1605, %v1236
        %v1607 = vadd.f32 %v1237, %v1606
        %1608 = vrot.lane.b32.xlu0 %v1233, 112
        %v1609 = vpop.permute.xlu0 %1608
        %1612 = vrot.lane.b32.xlu0 %v1602, 112
        %v1613 = vpop.permute.xlu0 %1612
        %1614 = vrot.lane.b32.xlu0 %v1603, 112
        %v1615 = vpop.permute.xlu0 %1614
        %v1616 = vsel %vm1244, %v1609, 0
        %v1618 = vsel %vm1244, %v1613, 0
        %v1620 = vsel %vm1244, %v1615, 0
        %1622 = vmatprep.subr.mxu0 0.0
        %1623 = vmatpush1.xpose.msra.mxu0 %v1618
        %1624 = vmatprep.subr.mxu0 0.0
        %1625 = vmatpush1.xpose.msra.mxu0 %v1620
        %1626 = vmatprep.subr.mxu0 0.0
        %1627 = vmatpush1.xpose.msra.mxu0 0.0
        %1628 = vmatprep.subr.mxu0 0.0
        %1629 = vmatpush1.xpose.msra.mxu0 0.0
        %1630 = vmatprep.subr.mxu0 0.0
        %1631 = vmatpush1.xpose.msra.mxu0 0.0
        %1632 = vmatprep.subr.mxu0 0.0
        %1633 = vmatpush1.xpose.msra.mxu0 0.0
        %1634 = vmatprep.subr.mxu0 0.0
        %1635 = vmatpush1.xpose.msra.mxu0 0.0
        %1636 = vmatprep.subr.mxu0 0.0
        %1637 = vmatpush1.xpose.msra.mxu0 0.0
        %1638 = vmatprep.subr.mxu0 0.0
        %1639 = vmatpush1.xpose.msra.mxu0 0.0
        %1640 = vmatprep.subr.mxu0 0.0
        %1641 = vmatpush1.xpose.msra.mxu0 0.0
        %1642 = vmatprep.subr.mxu0 0.0
        %1643 = vmatpush1.xpose.msra.mxu0 0.0
        %1644 = vmatprep.subr.mxu0 0.0
        %1645 = vmatpush1.xpose.msra.mxu0 0.0
        %1646 = vmatprep.subr.mxu0 0.0
        %1647 = vmatpush1.xpose.msra.mxu0 0.0
        %1648 = vmatprep.subr.mxu0 0.0
        %1649 = vmatpush1.xpose.msra.mxu0 0.0
        %1650 = vmatprep.subr.mxu0 0.0
        %1651 = vmatpush1.xpose.msra.mxu0 0.0
        %1652 = vmatprep.subr.mxu0 0.0
        %1653 = vmatpush1.xpose.msra.mxu0 0.0
        %1654 = vmatprep.subr.mxu0 0.0
        %1655 = vmatpush1.xpose.msra.mxu0 0.0
        %1656 = vmatprep.subr.mxu0 0.0
        %1657 = vmatpush1.xpose.msra.mxu0 0.0
        %1658 = vmatprep.subr.mxu0 0.0
        %1659 = vmatpush1.xpose.msra.mxu0 0.0
        %1660 = vmatprep.subr.mxu0 0.0
        %1661 = vmatpush1.xpose.msra.mxu0 0.0
        %1662 = vmatprep.subr.mxu0 0.0
        %1663 = vmatpush1.xpose.msra.mxu0 0.0
        %1664 = vmatprep.subr.mxu0 0.0
        %1665 = vmatpush1.xpose.msra.mxu0 0.0
        %1666 = vmatprep.subr.mxu0 0.0
        %1667 = vmatpush1.xpose.msra.mxu0 0.0
        %1668 = vmatprep.subr.mxu0 0.0
        %1669 = vmatpush1.xpose.msra.mxu0 0.0
        %1670 = vmatprep.subr.mxu0 0.0
        %1671 = vmatpush1.xpose.msra.mxu0 0.0
        %1672 = vmatprep.subr.mxu0 0.0
        %1673 = vmatpush1.xpose.msra.mxu0 0.0
        %1674 = vmatprep.subr.mxu0 0.0
        %1675 = vmatpush1.xpose.msra.mxu0 0.0
        %1676 = vmatprep.subr.mxu0 0.0
        %1677 = vmatpush1.xpose.msra.mxu0 0.0
        %1678 = vmatprep.subr.mxu0 0.0
        %1679 = vmatpush1.xpose.msra.mxu0 0.0
        %1680 = vmatprep.subr.mxu0 0.0
        %1681 = vmatpush1.xpose.msra.mxu0 0.0
        %1682 = vmatprep.subr.mxu0 0.0
        %1683 = vmatpush1.xpose.msra.mxu0 0.0
        %1684 = vmatprep.subr.mxu0 0.0
        %1685 = vmatpush1.xpose.msra.mxu0 0.0
        %1686 = vmatprep.mubr.f32.mxu0 0.0
        %1687 = vmatmul.mubr.f32.gmra.mrb[0].mxu0 %v1616
        %v1688 = vpop.f32.mrb[0].mxu0
        %v1689 = vadd.f32 %v1607, %v1688
        %v1690 = vpop.f32.mrb[0].mxu0
        %1691 = vdwg.mxu0
        %v1692 = vsel %vm1324, %v1689, -inf
        %1693 = vmax.xlane.f32.xlu0 %v1692
        %v1694 = vpop.xlane.xlu0 %1693
        %v1695 = vsub.f32 %v1689, %v1694
        %v1696 = vmul.f32 %v1695, 1.442695
        %v1697 = vpow.pop %v1696
        %v1698 = vsel %vm1324, %v1697, 0.0
        %1699 = vadd.xlane.f32.xlu0 %v1698
        %v1700 = vpop.xlane.xlu0 %1699
        %v1701 = vrcp.pop %v1700
        %v1702 = vmul.f32 %v1697, %v1701
        %1703 = vrot.lane.b32.xlu0 %v1602, 80
        %v1704 = vpop.permute.xlu0 %1703
        %1705 = vrot.lane.b32.xlu0 %v1603, 80
        %v1706 = vpop.permute.xlu0 %1705
        %v1710 = vsel %vm1324, %v1702, 0
        %1712 = vmatprep.subr.mxu0 0.0
        %1713 = vmatpush1.msra.mxu0 %v1704
        %1714 = vmatprep.subr.mxu0 0.0
        %1715 = vmatpush1.msra.mxu0 %v1706
        %1716 = vmatprep.subr.mxu0 0.0
        %1717 = vmatpush1.msra.mxu0 0.0
        %1718 = vmatprep.subr.mxu0 0.0
        %1719 = vmatpush1.msra.mxu0 0.0
        %1720 = vmatprep.subr.mxu0 0.0
        %1721 = vmatpush1.msra.mxu0 0.0
        %1722 = vmatprep.subr.mxu0 0.0
        %1723 = vmatpush1.msra.mxu0 0.0
        %1724 = vmatprep.subr.mxu0 0.0
        %1725 = vmatpush1.msra.mxu0 0.0
        %1726 = vmatprep.subr.mxu0 0.0
        %1727 = vmatpush1.msra.mxu0 0.0
        %1728 = vmatprep.subr.mxu0 0.0
        %1729 = vmatpush1.msra.mxu0 0.0
        %1730 = vmatprep.subr.mxu0 0.0
        %1731 = vmatpush1.msra.mxu0 0.0
        %1732 = vmatprep.subr.mxu0 0.0
        %1733 = vmatpush1.msra.mxu0 0.0
        %1734 = vmatprep.subr.mxu0 0.0
        %1735 = vmatpush1.msra.mxu0 0.0
        %1736 = vmatprep.subr.mxu0 0.0
        %1737 = vmatpush1.msra.mxu0 0.0
        %1738 = vmatprep.subr.mxu0 0.0
        %1739 = vmatpush1.msra.mxu0 0.0
        %1740 = vmatprep.subr.mxu0 0.0
        %1741 = vmatpush1.msra.mxu0 0.0
        %1742 = vmatprep.subr.mxu0 0.0
        %1743 = vmatpush1.msra.mxu0 0.0
        %1744 = vmatprep.subr.mxu0 0.0
        %1745 = vmatpush1.msra.mxu0 0.0
        %1746 = vmatprep.subr.mxu0 0.0
        %1747 = vmatpush1.msra.mxu0 0.0
        %1748 = vmatprep.subr.mxu0 0.0
        %1749 = vmatpush1.msra.mxu0 0.0
        %1750 = vmatprep.subr.mxu0 0.0
        %1751 = vmatpush1.msra.mxu0 0.0
        %1752 = vmatprep.subr.mxu0 0.0
        %1753 = vmatpush1.msra.mxu0 0.0
        %1754 = vmatprep.subr.mxu0 0.0
        %1755 = vmatpush1.msra.mxu0 0.0
        %1756 = vmatprep.subr.mxu0 0.0
        %1757 = vmatpush1.msra.mxu0 0.0
        %1758 = vmatprep.subr.mxu0 0.0
        %1759 = vmatpush1.msra.mxu0 0.0
        %1760 = vmatprep.subr.mxu0 0.0
        %1761 = vmatpush1.msra.mxu0 0.0
        %1762 = vmatprep.subr.mxu0 0.0
        %1763 = vmatpush1.msra.mxu0 0.0
        %1764 = vmatprep.subr.mxu0 0.0
        %1765 = vmatpush1.msra.mxu0 0.0
        %1766 = vmatprep.subr.mxu0 0.0
        %1767 = vmatpush1.msra.mxu0 0.0
        %1768 = vmatprep.subr.mxu0 0.0
        %1769 = vmatpush1.msra.mxu0 0.0
        %1770 = vmatprep.subr.mxu0 0.0
        %1771 = vmatpush1.msra.mxu0 0.0
        %1772 = vmatprep.subr.mxu0 0.0
        %1773 = vmatpush1.msra.mxu0 0.0
        %1774 = vmatprep.subr.mxu0 0.0
        %1775 = vmatpush1.msra.mxu0 0.0
        %1776 = vmatprep.mubr.f32.mxu0 0.0
        %1777 = vmatmul.mubr.f32.gmra.mrb[0].mxu0 %v1710
        %v1778 = vpop.f32.mrb[0].mxu0
        %v1779 = vadd.f32 0.0, %v1778
        %v1780 = vpop.f32.mrb[0].mxu0
        %1781 = vdwg.mxu0
        %1783 = vrot.lane.b32.xlu0 %v1779, 16
        %v1784 = vpop.permute.xlu0 %1783
        %vm1786 = vcmask 195712
        %1787 = vst.msk [vmem:[#allocation3] sm:$0xff] %vm1786, %v1784
        %v1788 = vld [vmem:[#allocation2] sm:$0xff]
        %v1789 = vld [vmem:[#allocation2 + $0x8] sm:$0xff]
        %s1790 = sld [smem:[#allocation4 + $0x3]]
        %v1791 = vstv %s1790
        %v1792 = vmul.f32 %v1791, %v1236
        %v1793 = vadd.f32 %v1237, %v1792
        %1794 = vrot.lane.b32.xlu0 %v1233, 104
        %v1795 = vpop.permute.xlu0 %1794
        %1798 = vrot.lane.b32.xlu0 %v1788, 104
        %v1799 = vpop.permute.xlu0 %1798
        %1800 = vrot.lane.b32.xlu0 %v1789, 104
        %v1801 = vpop.permute.xlu0 %1800
        %v1802 = vsel %vm1244, %v1795, 0
        %v1804 = vsel %vm1244, %v1799, 0
        %v1806 = vsel %vm1244, %v1801, 0
        %1808 = vmatprep.subr.mxu0 0.0
        %1809 = vmatpush1.xpose.msra.mxu0 %v1804
        %1810 = vmatprep.subr.mxu0 0.0
        %1811 = vmatpush1.xpose.msra.mxu0 %v1806
        %1812 = vmatprep.subr.mxu0 0.0
        %1813 = vmatpush1.xpose.msra.mxu0 0.0
        %1814 = vmatprep.subr.mxu0 0.0
        %1815 = vmatpush1.xpose.msra.mxu0 0.0
        %1816 = vmatprep.subr.mxu0 0.0
        %1817 = vmatpush1.xpose.msra.mxu0 0.0
        %1818 = vmatprep.subr.mxu0 0.0
        %1819 = vmatpush1.xpose.msra.mxu0 0.0
        %1820 = vmatprep.subr.mxu0 0.0
        %1821 = vmatpush1.xpose.msra.mxu0 0.0
        %1822 = vmatprep.subr.mxu0 0.0
        %1823 = vmatpush1.xpose.msra.mxu0 0.0
        %1824 = vmatprep.subr.mxu0 0.0
        %1825 = vmatpush1.xpose.msra.mxu0 0.0
        %1826 = vmatprep.subr.mxu0 0.0
        %1827 = vmatpush1.xpose.msra.mxu0 0.0
        %1828 = vmatprep.subr.mxu0 0.0
        %1829 = vmatpush1.xpose.msra.mxu0 0.0
        %1830 = vmatprep.subr.mxu0 0.0
        %1831 = vmatpush1.xpose.msra.mxu0 0.0
        %1832 = vmatprep.subr.mxu0 0.0
        %1833 = vmatpush1.xpose.msra.mxu0 0.0
        %1834 = vmatprep.subr.mxu0 0.0
        %1835 = vmatpush1.xpose.msra.mxu0 0.0
        %1836 = vmatprep.subr.mxu0 0.0
        %1837 = vmatpush1.xpose.msra.mxu0 0.0
        %1838 = vmatprep.subr.mxu0 0.0
        %1839 = vmatpush1.xpose.msra.mxu0 0.0
        %1840 = vmatprep.subr.mxu0 0.0
        %1841 = vmatpush1.xpose.msra.mxu0 0.0
        %1842 = vmatprep.subr.mxu0 0.0
        %1843 = vmatpush1.xpose.msra.mxu0 0.0
        %1844 = vmatprep.subr.mxu0 0.0
        %1845 = vmatpush1.xpose.msra.mxu0 0.0
        %1846 = vmatprep.subr.mxu0 0.0
        %1847 = vmatpush1.xpose.msra.mxu0 0.0
        %1848 = vmatprep.subr.mxu0 0.0
        %1849 = vmatpush1.xpose.msra.mxu0 0.0
        %1850 = vmatprep.subr.mxu0 0.0
        %1851 = vmatpush1.xpose.msra.mxu0 0.0
        %1852 = vmatprep.subr.mxu0 0.0
        %1853 = vmatpush1.xpose.msra.mxu0 0.0
        %1854 = vmatprep.subr.mxu0 0.0
        %1855 = vmatpush1.xpose.msra.mxu0 0.0
        %1856 = vmatprep.subr.mxu0 0.0
        %1857 = vmatpush1.xpose.msra.mxu0 0.0
        %1858 = vmatprep.subr.mxu0 0.0
        %1859 = vmatpush1.xpose.msra.mxu0 0.0
        %1860 = vmatprep.subr.mxu0 0.0
        %1861 = vmatpush1.xpose.msra.mxu0 0.0
        %1862 = vmatprep.subr.mxu0 0.0
        %1863 = vmatpush1.xpose.msra.mxu0 0.0
        %1864 = vmatprep.subr.mxu0 0.0
        %1865 = vmatpush1.xpose.msra.mxu0 0.0
        %1866 = vmatprep.subr.mxu0 0.0
        %1867 = vmatpush1.xpose.msra.mxu0 0.0
        %1868 = vmatprep.subr.mxu0 0.0
        %1869 = vmatpush1.xpose.msra.mxu0 0.0
        %1870 = vmatprep.subr.mxu0 0.0
        %1871 = vmatpush1.xpose.msra.mxu0 0.0
        %1872 = vmatprep.mubr.f32.mxu0 0.0
        %1873 = vmatmul.mubr.f32.gmra.mrb[0].mxu0 %v1802
        %v1874 = vpop.f32.mrb[0].mxu0
        %v1875 = vadd.f32 %v1793, %v1874
        %v1876 = vpop.f32.mrb[0].mxu0
        %1877 = vdwg.mxu0
        %v1878 = vsel %vm1324, %v1875, -inf
        %1879 = vmax.xlane.f32.xlu0 %v1878
        %v1880 = vpop.xlane.xlu0 %1879
        %v1881 = vsub.f32 %v1875, %v1880
        %v1882 = vmul.f32 %v1881, 1.442695
        %v1883 = vpow.pop %v1882
        %v1884 = vsel %vm1324, %v1883, 0.0
        %1885 = vadd.xlane.f32.xlu0 %v1884
        %v1886 = vpop.xlane.xlu0 %1885
        %v1887 = vrcp.pop %v1886
        %v1888 = vmul.f32 %v1883, %v1887
        %1889 = vrot.lane.b32.xlu0 %v1788, 72
        %v1890 = vpop.permute.xlu0 %1889
        %1891 = vrot.lane.b32.xlu0 %v1789, 72
        %v1892 = vpop.permute.xlu0 %1891
        %v1896 = vsel %vm1324, %v1888, 0
        %1898 = vmatprep.subr.mxu0 0.0
        %1899 = vmatpush1.msra.mxu0 %v1890
        %1900 = vmatprep.subr.mxu0 0.0
        %1901 = vmatpush1.msra.mxu0 %v1892
        %1902 = vmatprep.subr.mxu0 0.0
        %1903 = vmatpush1.msra.mxu0 0.0
        %1904 = vmatprep.subr.mxu0 0.0
        %1905 = vmatpush1.msra.mxu0 0.0
        %1906 = vmatprep.subr.mxu0 0.0
        %1907 = vmatpush1.msra.mxu0 0.0
        %1908 = vmatprep.subr.mxu0 0.0
        %1909 = vmatpush1.msra.mxu0 0.0
        %1910 = vmatprep.subr.mxu0 0.0
        %1911 = vmatpush1.msra.mxu0 0.0
        %1912 = vmatprep.subr.mxu0 0.0
        %1913 = vmatpush1.msra.mxu0 0.0
        %1914 = vmatprep.subr.mxu0 0.0
        %1915 = vmatpush1.msra.mxu0 0.0
        %1916 = vmatprep.subr.mxu0 0.0
        %1917 = vmatpush1.msra.mxu0 0.0
        %1918 = vmatprep.subr.mxu0 0.0
        %1919 = vmatpush1.msra.mxu0 0.0
        %1920 = vmatprep.subr.mxu0 0.0
        %1921 = vmatpush1.msra.mxu0 0.0
        %1922 = vmatprep.subr.mxu0 0.0
        %1923 = vmatpush1.msra.mxu0 0.0
        %1924 = vmatprep.subr.mxu0 0.0
        %1925 = vmatpush1.msra.mxu0 0.0
        %1926 = vmatprep.subr.mxu0 0.0
        %1927 = vmatpush1.msra.mxu0 0.0
        %1928 = vmatprep.subr.mxu0 0.0
        %1929 = vmatpush1.msra.mxu0 0.0
        %1930 = vmatprep.subr.mxu0 0.0
        %1931 = vmatpush1.msra.mxu0 0.0
        %1932 = vmatprep.subr.mxu0 0.0
        %1933 = vmatpush1.msra.mxu0 0.0
        %1934 = vmatprep.subr.mxu0 0.0
        %1935 = vmatpush1.msra.mxu0 0.0
        %1936 = vmatprep.subr.mxu0 0.0
        %1937 = vmatpush1.msra.mxu0 0.0
        %1938 = vmatprep.subr.mxu0 0.0
        %1939 = vmatpush1.msra.mxu0 0.0
        %1940 = vmatprep.subr.mxu0 0.0
        %1941 = vmatpush1.msra.mxu0 0.0
        %1942 = vmatprep.subr.mxu0 0.0
        %1943 = vmatpush1.msra.mxu0 0.0
        %1944 = vmatprep.subr.mxu0 0.0
        %1945 = vmatpush1.msra.mxu0 0.0
        %1946 = vmatprep.subr.mxu0 0.0
        %1947 = vmatpush1.msra.mxu0 0.0
        %1948 = vmatprep.subr.mxu0 0.0
        %1949 = vmatpush1.msra.mxu0 0.0
        %1950 = vmatprep.subr.mxu0 0.0
        %1951 = vmatpush1.msra.mxu0 0.0
        %1952 = vmatprep.subr.mxu0 0.0
        %1953 = vmatpush1.msra.mxu0 0.0
        %1954 = vmatprep.subr.mxu0 0.0
        %1955 = vmatpush1.msra.mxu0 0.0
        %1956 = vmatprep.subr.mxu0 0.0
        %1957 = vmatpush1.msra.mxu0 0.0
        %1958 = vmatprep.subr.mxu0 0.0
        %1959 = vmatpush1.msra.mxu0 0.0
        %1960 = vmatprep.subr.mxu0 0.0
        %1961 = vmatpush1.msra.mxu0 0.0
        %1962 = vmatprep.mubr.f32.mxu0 0.0
        %1963 = vmatmul.mubr.f32.gmra.mrb[0].mxu0 %v1896
        %v1964 = vpop.f32.mrb[0].mxu0
        %v1965 = vadd.f32 0.0, %v1964
        %v1966 = vpop.f32.mrb[0].mxu0
        %1967 = vdwg.mxu0
        %1969 = vrot.lane.b32.xlu0 %v1965, 24
        %v1970 = vpop.permute.xlu0 %1969
        %vm1972 = vcmask 261312
        %1973 = vst.msk [vmem:[#allocation3] sm:$0xff] %vm1972, %v1970
        %v1974 = vld [vmem:[#allocation3] sm:$0xff]
        %1975 = vst.msk [vmem:[%s913] sm:$0xff] %vm1117, %v1974
        %v1976 = vld [vmem:[#allocation9] sm:$0xff]
        %v1977 = vld [vmem:[#allocation9 + $0x8] sm:$0xff]
        %v1978 = vld [vmem:[#allocation9 + $0x10] sm:$0xff]
        %v1979 = vld [vmem:[#allocation9 + $0x18] sm:$0xff]
        %v1981 = vsel %vm1117, %v1974, 0
        %1983 = vmatprep.subr.mxu0 0.0
        %1984 = vmatpush1.msra.mxu0 %v1976
        %1985 = vmatprep.subr.mxu0 0.0
        %1986 = vmatpush1.msra.mxu0 %v1977
        %1987 = vmatprep.subr.mxu0 0.0
        %1988 = vmatpush1.msra.mxu0 %v1978
        %1989 = vmatprep.subr.mxu0 0.0
        %1990 = vmatpush1.msra.mxu0 %v1979
        %1991 = vmatprep.subr.mxu0 0.0
        %1992 = vmatpush1.msra.mxu0 0.0
        %1993 = vmatprep.subr.mxu0 0.0
        %1994 = vmatpush1.msra.mxu0 0.0
        %1995 = vmatprep.subr.mxu0 0.0
        %1996 = vmatpush1.msra.mxu0 0.0
        %1997 = vmatprep.subr.mxu0 0.0
        %1998 = vmatpush1.msra.mxu0 0.0
        %1999 = vmatprep.subr.mxu0 0.0
        %2000 = vmatpush1.msra.mxu0 0.0
        %2001 = vmatprep.subr.mxu0 0.0
        %2002 = vmatpush1.msra.mxu0 0.0
        %2003 = vmatprep.subr.mxu0 0.0
        %2004 = vmatpush1.msra.mxu0 0.0
        %2005 = vmatprep.subr.mxu0 0.0
        %2006 = vmatpush1.msra.mxu0 0.0
        %2007 = vmatprep.subr.mxu0 0.0
        %2008 = vmatpush1.msra.mxu0 0.0
        %2009 = vmatprep.subr.mxu0 0.0
        %2010 = vmatpush1.msra.mxu0 0.0
        %2011 = vmatprep.subr.mxu0 0.0
        %2012 = vmatpush1.msra.mxu0 0.0
        %2013 = vmatprep.subr.mxu0 0.0
        %2014 = vmatpush1.msra.mxu0 0.0
        %2015 = vmatprep.subr.mxu0 0.0
        %2016 = vmatpush1.msra.mxu0 0.0
        %2017 = vmatprep.subr.mxu0 0.0
        %2018 = vmatpush1.msra.mxu0 0.0
        %2019 = vmatprep.subr.mxu0 0.0
        %2020 = vmatpush1.msra.mxu0 0.0
        %2021 = vmatprep.subr.mxu0 0.0
        %2022 = vmatpush1.msra.mxu0 0.0
        %2023 = vmatprep.subr.mxu0 0.0
        %2024 = vmatpush1.msra.mxu0 0.0
        %2025 = vmatprep.subr.mxu0 0.0
        %2026 = vmatpush1.msra.mxu0 0.0
        %2027 = vmatprep.subr.mxu0 0.0
        %2028 = vmatpush1.msra.mxu0 0.0
        %2029 = vmatprep.subr.mxu0 0.0
        %2030 = vmatpush1.msra.mxu0 0.0
        %2031 = vmatprep.subr.mxu0 0.0
        %2032 = vmatpush1.msra.mxu0 0.0
        %2033 = vmatprep.subr.mxu0 0.0
        %2034 = vmatpush1.msra.mxu0 0.0
        %2035 = vmatprep.subr.mxu0 0.0
        %2036 = vmatpush1.msra.mxu0 0.0
        %2037 = vmatprep.subr.mxu0 0.0
        %2038 = vmatpush1.msra.mxu0 0.0
        %2039 = vmatprep.subr.mxu0 0.0
        %2040 = vmatpush1.msra.mxu0 0.0
        %2041 = vmatprep.subr.mxu0 0.0
        %2042 = vmatpush1.msra.mxu0 0.0
        %2043 = vmatprep.subr.mxu0 0.0
        %2044 = vmatpush1.msra.mxu0 0.0
        %2045 = vmatprep.subr.mxu0 0.0
        %2046 = vmatpush1.msra.mxu0 0.0
        %2047 = vmatprep.mubr.f32.mxu0 0.0
        %2048 = vmatmul.mubr.f32.gmra.mrb[0].mxu0 %v1981
        %v2049 = vpop.f32.mrb[0].mxu0
        %v2050 = vadd.f32 0.0, %v2049
        %v2051 = vpop.f32.mrb[0].mxu0
        %2052 = vdwg.mxu0
        %v2053 = vld [vmem:[%s10] sm:$0x1]
        %v2054 = vld [vmem:[%s11] sm:$0x1]
        %v2055 = vsel %vm1117, %v2050, 0.0
        %2056 = vadd.xlane.f32.xlu0 %v2055
        %v2057 = vpop.xlane.xlu0 %2056
        %v2058 = vmul.f32 %v2057, %v1121
        %v2059 = vsub.f32 %v2050, %v2058
        %v2060 = vmul.f32 %v2059, %v2059
        %v2061 = vsel %vm1117, %v2060, 0.0
        %2062 = vadd.xlane.f32.xlu0 %v2061
        %v2063 = vpop.xlane.xlu0 %2062
        %v2064 = vmul.f32 %v2063, %v1121
        %v2065 = vadd.f32 %v2064, 1e-05
        %v2066 = vrsqrt.pop %v2065
        %v2067 = vmul.f32 %v2059, %v2066
        %v2069 = vlaneseq
        %v2070 = vshrl.u32 %v2069, 7
        %v2071 = vsub.s32 0, %v2070
        %v2072 = vrot.slane %v2053, %v2071
        %v2074 = vmul.f32 %v2067, %v2072
        %v2076 = vlaneseq
        %v2077 = vshrl.u32 %v2076, 7
        %v2078 = vsub.s32 0, %v2077
        %v2079 = vrot.slane %v2054, %v2078
        %v2081 = vadd.f32 %v2074, %v2079
        %v2082 = vadd.f32 %v1131, %v2081
        %v2083 = vld [vmem:[%s15] sm:$0x1]
        %v2084 = vld [vmem:[%s16] sm:$0x1]
        %v2085 = vsel %vm1117, %v2082, 0.0
        %2086 = vadd.xlane.f32.xlu0 %v2085
        %v2087 = vpop.xlane.xlu0 %2086
        %v2088 = vmul.f32 %v2087, %v1121
        %v2089 = vsub.f32 %v2082, %v2088
        %v2090 = vmul.f32 %v2089, %v2089
        %v2091 = vsel %vm1117, %v2090, 0.0
        %2092 = vadd.xlane.f32.xlu0 %v2091
        %v2093 = vpop.xlane.xlu0 %2092
        %v2094 = vmul.f32 %v2093, %v1121
        %v2095 = vadd.f32 %v2094, 1e-05
        %v2096 = vrsqrt.pop %v2095
        %v2097 = vmul.f32 %v2089, %v2096
        %v2099 = vlaneseq
        %v2100 = vshrl.u32 %v2099, 7
        %v2101 = vsub.s32 0, %v2100
        %v2102 = vrot.slane %v2083, %v2101
        %v2104 = vmul.f32 %v2097, %v2102
        %v2106 = vlaneseq
        %v2107 = vshrl.u32 %v2106, 7
        %v2108 = vsub.s32 0, %v2107
        %v2109 = vrot.slane %v2084, %v2108
        %v2111 = vadd.f32 %v2104, %v2109
        %v2112 = vld [vmem:[#allocation11] sm:$0xff]
        %v2113 = vld [vmem:[#allocation11 + $0x8] sm:$0xff]
        %v2114 = vld [vmem:[#allocation11 + $0x10] sm:$0xff]
        %v2115 = vld [vmem:[#allocation11 + $0x18] sm:$0xff]
        %v2117 = vsel %vm1117, %v2111, 0
        %2119 = vmatprep.subr.mxu0 0.0
        %2120 = vmatpush1.msra.mxu0 %v2112
        %2121 = vmatprep.subr.mxu0 0.0
        %2122 = vmatpush1.msra.mxu0 %v2113
        %2123 = vmatprep.subr.mxu0 0.0
        %2124 = vmatpush1.msra.mxu0 %v2114
        %2125 = vmatprep.subr.mxu0 0.0
        %2126 = vmatpush1.msra.mxu0 %v2115
        %2127 = vmatprep.subr.mxu0 0.0
        %2128 = vmatpush1.msra.mxu0 0.0
        %2129 = vmatprep.subr.mxu0 0.0
        %2130 = vmatpush1.msra.mxu0 0.0
        %2131 = vmatprep.subr.mxu0 0.0
        %2132 = vmatpush1.msra.mxu0 0.0
        %2133 = vmatprep.subr.mxu0 0.0
        %2134 = vmatpush1.msra.mxu0 0.0
        %2135 = vmatprep.subr.mxu0 0.0
        %2136 = vmatpush1.msra.mxu0 0.0
        %2137 = vmatprep.subr.mxu0 0.0
        %2138 = vmatpush1.msra.mxu0 0.0
        %2139 = vmatprep.subr.mxu0 0.0
        %2140 = vmatpush1.msra.mxu0 0.0
        %2141 = vmatprep.subr.mxu0 0.0
        %2142 = vmatpush1.msra.mxu0 0.0
        %2143 = vmatprep.subr.mxu0 0.0
        %2144 = vmatpush1.msra.mxu0 0.0
        %2145 = vmatprep.subr.mxu0 0.0
        %2146 = vmatpush1.msra.mxu0 0.0
        %2147 = vmatprep.subr.mxu0 0.0
        %2148 = vmatpush1.msra.mxu0 0.0
        %2149 = vmatprep.subr.mxu0 0.0
        %2150 = vmatpush1.msra.mxu0 0.0
        %2151 = vmatprep.subr.mxu0 0.0
        %2152 = vmatpush1.msra.mxu0 0.0
        %2153 = vmatprep.subr.mxu0 0.0
        %2154 = vmatpush1.msra.mxu0 0.0
        %2155 = vmatprep.subr.mxu0 0.0
        %2156 = vmatpush1.msra.mxu0 0.0
        %2157 = vmatprep.subr.mxu0 0.0
        %2158 = vmatpush1.msra.mxu0 0.0
        %2159 = vmatprep.subr.mxu0 0.0
        %2160 = vmatpush1.msra.mxu0 0.0
        %2161 = vmatprep.subr.mxu0 0.0
        %2162 = vmatpush1.msra.mxu0 0.0
        %2163 = vmatprep.subr.mxu0 0.0
        %2164 = vmatpush1.msra.mxu0 0.0
        %2165 = vmatprep.subr.mxu0 0.0
        %2166 = vmatpush1.msra.mxu0 0.0
        %2167 = vmatprep.subr.mxu0 0.0
        %2168 = vmatpush1.msra.mxu0 0.0
        %2169 = vmatprep.subr.mxu0 0.0
        %2170 = vmatpush1.msra.mxu0 0.0
        %2171 = vmatprep.subr.mxu0 0.0
        %2172 = vmatpush1.msra.mxu0 0.0
        %2173 = vmatprep.subr.mxu0 0.0
        %2174 = vmatpush1.msra.mxu0 0.0
        %2175 = vmatprep.subr.mxu0 0.0
        %2176 = vmatpush1.msra.mxu0 0.0
        %2177 = vmatprep.subr.mxu0 0.0
        %2178 = vmatpush1.msra.mxu0 0.0
        %2179 = vmatprep.subr.mxu0 0.0
        %2180 = vmatpush1.msra.mxu0 0.0
        %2181 = vmatprep.subr.mxu0 0.0
        %2182 = vmatpush1.msra.mxu0 0.0
        %2183 = vmatprep.mubr.f32.mxu0 0.0
        %2184 = vmatmul.mubr.f32.gmra.mrb[0].mxu0 %v2117
        %v2185 = vpop.f32.mrb[0].mxu0
        %v2186 = vadd.f32 0.0, %v2185
        %v2187 = vpop.f32.mrb[0].mxu0
        %2188 = vdwg.mxu0
        %v2189 = vld [vmem:[#allocation12] sm:$0xff]
        %v2190 = vld [vmem:[#allocation12 + $0x8] sm:$0xff]
        %v2191 = vld [vmem:[#allocation12 + $0x10] sm:$0xff]
        %v2192 = vld [vmem:[#allocation12 + $0x18] sm:$0xff]
        %2193 = vmatprep.subr.mxu0 0.0
        %2194 = vmatpush1.msra.mxu0 %v2189
        %2195 = vmatprep.subr.mxu0 0.0
        %2196 = vmatpush1.msra.mxu0 %v2190
        %2197 = vmatprep.subr.mxu0 0.0
        %2198 = vmatpush1.msra.mxu0 %v2191
        %2199 = vmatprep.subr.mxu0 0.0
        %2200 = vmatpush1.msra.mxu0 %v2192
        %2201 = vmatprep.subr.mxu0 0.0
        %2202 = vmatpush1.msra.mxu0 0.0
        %2203 = vmatprep.subr.mxu0 0.0
        %2204 = vmatpush1.msra.mxu0 0.0
        %2205 = vmatprep.subr.mxu0 0.0
        %2206 = vmatpush1.msra.mxu0 0.0
        %2207 = vmatprep.subr.mxu0 0.0
        %2208 = vmatpush1.msra.mxu0 0.0
        %2209 = vmatprep.subr.mxu0 0.0
        %2210 = vmatpush1.msra.mxu0 0.0
        %2211 = vmatprep.subr.mxu0 0.0
        %2212 = vmatpush1.msra.mxu0 0.0
        %2213 = vmatprep.subr.mxu0 0.0
        %2214 = vmatpush1.msra.mxu0 0.0
        %2215 = vmatprep.subr.mxu0 0.0
        %2216 = vmatpush1.msra.mxu0 0.0
        %2217 = vmatprep.subr.mxu0 0.0
        %2218 = vmatpush1.msra.mxu0 0.0
        %2219 = vmatprep.subr.mxu0 0.0
        %2220 = vmatpush1.msra.mxu0 0.0
        %2221 = vmatprep.subr.mxu0 0.0
        %2222 = vmatpush1.msra.mxu0 0.0
        %2223 = vmatprep.subr.mxu0 0.0
        %2224 = vmatpush1.msra.mxu0 0.0
        %2225 = vmatprep.subr.mxu0 0.0
        %2226 = vmatpush1.msra.mxu0 0.0
        %2227 = vmatprep.subr.mxu0 0.0
        %2228 = vmatpush1.msra.mxu0 0.0
        %2229 = vmatprep.subr.mxu0 0.0
        %2230 = vmatpush1.msra.mxu0 0.0
        %2231 = vmatprep.subr.mxu0 0.0
        %2232 = vmatpush1.msra.mxu0 0.0
        %2233 = vmatprep.subr.mxu0 0.0
        %2234 = vmatpush1.msra.mxu0 0.0
        %2235 = vmatprep.subr.mxu0 0.0
        %2236 = vmatpush1.msra.mxu0 0.0
        %2237 = vmatprep.subr.mxu0 0.0
        %2238 = vmatpush1.msra.mxu0 0.0
        %2239 = vmatprep.subr.mxu0 0.0
        %2240 = vmatpush1.msra.mxu0 0.0
        %2241 = vmatprep.subr.mxu0 0.0
        %2242 = vmatpush1.msra.mxu0 0.0
        %2243 = vmatprep.subr.mxu0 0.0
        %2244 = vmatpush1.msra.mxu0 0.0
        %2245 = vmatprep.subr.mxu0 0.0
        %2246 = vmatpush1.msra.mxu0 0.0
        %2247 = vmatprep.subr.mxu0 0.0
        %2248 = vmatpush1.msra.mxu0 0.0
        %2249 = vmatprep.subr.mxu0 0.0
        %2250 = vmatpush1.msra.mxu0 0.0
        %2251 = vmatprep.subr.mxu0 0.0
        %2252 = vmatpush1.msra.mxu0 0.0
        %2253 = vmatprep.subr.mxu0 0.0
        %2254 = vmatpush1.msra.mxu0 0.0
        %2255 = vmatprep.subr.mxu0 0.0
        %2256 = vmatpush1.msra.mxu0 0.0
        %2257 = vmatprep.mubr.f32.mxu0 0.0
        %2258 = vmatmul.mubr.f32.gmra.mrb[0].mxu0 %v2117
        %v2259 = vpop.f32.mrb[0].mxu0
        %v2260 = vadd.f32 0.0, %v2259
        %v2261 = vpop.f32.mrb[0].mxu0
        %2262 = vdwg.mxu0
        %v2263 = vmul.f32 %v2186, %v2260
        %v2264 = vld [vmem:[%s14] sm:$0xff]
        %v2265 = vld [vmem:[%s14 + $0x8] sm:$0xff]
        %v2266 = vld [vmem:[%s14 + $0x10] sm:$0xff]
        %v2267 = vld [vmem:[%s14 + $0x18] sm:$0xff]
        %v2268 = vld [vmem:[%s14 + $0x20] sm:$0xff]
        %v2269 = vld [vmem:[%s14 + $0x28] sm:$0xff]
        %v2270 = vld [vmem:[%s14 + $0x30] sm:$0xff]
        %v2271 = vld [vmem:[%s14 + $0x38] sm:$0xff]
        %v2272 = vld [vmem:[%s14 + $0x40] sm:$0xff]
        %v2273 = vld [vmem:[%s14 + $0x48] sm:$0xff]
        %v2274 = vld [vmem:[%s14 + $0x50] sm:$0xff]
        %v2275 = vld [vmem:[%s14 + $0x58] sm:$0xff]
        %v2276 = vld [vmem:[%s14 + $0x60] sm:$0xff]
        %v2277 = vld [vmem:[%s14 + $0x68] sm:$0xff]
        %v2278 = vld [vmem:[%s14 + $0x70] sm:$0xff]
        %v2279 = vld [vmem:[%s14 + $0x78] sm:$0xff]
        %2280 = vmatprep.subr.mxu0 0.0
        %2281 = vmatpush1.msra.mxu0 %v2264
        %2282 = vmatprep.subr.mxu0 0.0
        %2283 = vmatpush1.msra.mxu0 %v2265
        %2284 = vmatprep.subr.mxu0 0.0
        %2285 = vmatpush1.msra.mxu0 %v2266
        %2286 = vmatprep.subr.mxu0 0.0
        %2287 = vmatpush1.msra.mxu0 %v2267
        %2288 = vmatprep.subr.mxu0 0.0
        %2289 = vmatpush1.msra.mxu0 %v2268
        %2290 = vmatprep.subr.mxu0 0.0
        %2291 = vmatpush1.msra.mxu0 %v2269
        %2292 = vmatprep.subr.mxu0 0.0
        %2293 = vmatpush1.msra.mxu0 %v2270
        %2294 = vmatprep.subr.mxu0 0.0
        %2295 = vmatpush1.msra.mxu0 %v2271
        %2296 = vmatprep.subr.mxu0 0.0
        %2297 = vmatpush1.msra.mxu0 %v2272
        %2298 = vmatprep.subr.mxu0 0.0
        %2299 = vmatpush1.msra.mxu0 %v2273
        %2300 = vmatprep.subr.mxu0 0.0
        %2301 = vmatpush1.msra.mxu0 %v2274
        %2302 = vmatprep.subr.mxu0 0.0
        %2303 = vmatpush1.msra.mxu0 %v2275
        %2304 = vmatprep.subr.mxu0 0.0
        %2305 = vmatpush1.msra.mxu0 %v2276
        %2306 = vmatprep.subr.mxu0 0.0
        %2307 = vmatpush1.msra.mxu0 %v2277
        %2308 = vmatprep.subr.mxu0 0.0
        %2309 = vmatpush1.msra.mxu0 %v2278
        %2310 = vmatprep.subr.mxu0 0.0
        %2311 = vmatpush1.msra.mxu0 %v2279
        %2312 = vmatprep.subr.mxu0 0.0
        %2313 = vmatpush1.msra.mxu0 0.0
        %2314 = vmatprep.subr.mxu0 0.0
        %2315 = vmatpush1.msra.mxu0 0.0
        %2316 = vmatprep.subr.mxu0 0.0
        %2317 = vmatpush1.msra.mxu0 0.0
        %2318 = vmatprep.subr.mxu0 0.0
        %2319 = vmatpush1.msra.mxu0 0.0
        %2320 = vmatprep.subr.mxu0 0.0
        %2321 = vmatpush1.msra.mxu0 0.0
        %2322 = vmatprep.subr.mxu0 0.0
        %2323 = vmatpush1.msra.mxu0 0.0
        %2324 = vmatprep.subr.mxu0 0.0
        %2325 = vmatpush1.msra.mxu0 0.0
        %2326 = vmatprep.subr.mxu0 0.0
        %2327 = vmatpush1.msra.mxu0 0.0
        %2328 = vmatprep.subr.mxu0 0.0
        %2329 = vmatpush1.msra.mxu0 0.0
        %2330 = vmatprep.subr.mxu0 0.0
        %2331 = vmatpush1.msra.mxu0 0.0
        %2332 = vmatprep.subr.mxu0 0.0
        %2333 = vmatpush1.msra.mxu0 0.0
        %2334 = vmatprep.subr.mxu0 0.0
        %2335 = vmatpush1.msra.mxu0 0.0
        %2336 = vmatprep.subr.mxu0 0.0
        %2337 = vmatpush1.msra.mxu0 0.0
        %2338 = vmatprep.subr.mxu0 0.0
        %2339 = vmatpush1.msra.mxu0 0.0
        %2340 = vmatprep.subr.mxu0 0.0
        %2341 = vmatpush1.msra.mxu0 0.0
        %2342 = vmatprep.subr.mxu0 0.0
        %2343 = vmatpush1.msra.mxu0 0.0
        %2344 = vmatprep.mubr.f32.mxu0 0.0
        %2345 = vmatmul.mubr.f32.gmra.mrb[0].mxu0 %v2263
        %v2346 = vpop.f32.mrb[0].mxu0
        %v2347 = vadd.f32 0.0, %v2346
        %v2348 = vpop.f32.mrb[0].mxu0
        %2349 = vdwg.mxu0
        %v2350 = vld [vmem:[%s17] sm:$0x1]
        %v2351 = vld [vmem:[%s18] sm:$0x1]
        %v2352 = vsel %vm1117, %v2347, 0.0
        %2353 = vadd.xlane.f32.xlu0 %v2352
        %v2354 = vpop.xlane.xlu0 %2353
        %v2355 = vmul.f32 %v2354, %v1121
        %v2356 = vsub.f32 %v2347, %v2355
        %v2357 = vmul.f32 %v2356, %v2356
        %v2358 = vsel %vm1117, %v2357, 0.0
        %2359 = vadd.xlane.f32.xlu0 %v2358
        %v2360 = vpop.xlane.xlu0 %2359
        %v2361 = vmul.f32 %v2360, %v1121
        %v2362 = vadd.f32 %v2361, 1e-05
        %v2363 = vrsqrt.pop %v2362
        %v2364 = vmul.f32 %v2356, %v2363
        %v2366 = vlaneseq
        %v2367 = vshrl.u32 %v2366, 7
        %v2368 = vsub.s32 0, %v2367
        %v2369 = vrot.slane %v2350, %v2368
        %v2371 = vmul.f32 %v2364, %v2369
        %v2373 = vlaneseq
        %v2374 = vshrl.u32 %v2373, 7
        %v2375 = vsub.s32 0, %v2374
        %v2376 = vrot.slane %v2351, %v2375
        %v2378 = vadd.f32 %v2371, %v2376
        %v2379 = vadd.f32 %v2082, %v2378
        %2380 = vst.msk [vmem:[%s899] sm:$0xff] %vm1117, %v2379
        %2381 = vst.msk [vmem:[%s906] sm:$0xff] %vm1117, %v2082
        %2382 = vst.msk [vmem:[%s920] sm:$0xff] %vm1117, %v2347
        %s2383 = sand.u32 %s538, 1
        %s2384 = scalar_lea.sflag [#allocation6], %s2383
        %s2385 = sand.u32 %s538, 1
        %s2386 = smul.addr %s2385, 8
        %s2387 = scalar_lea.vmem [#allocation14], %s2386
        %s2388 = sand.u32 %s49, 1
        %s2389 = scalar_lea.sflag [#allocation16], %s2388
        %s2390 = sand.u32 %s566, 1
        %s2391 = smul.addr %s2390, 8
        %s2392 = scalar_lea.vmem [#allocation15], %s2391
        %s2393 = sand.u32 %s49, 1
        %s2394 = scalar_lea.sflag [#allocation16], %s2393
        %s2395 = sand.u32 %s594, 1
        %s2396 = smul.addr %s2395, 8
        %s2397 = scalar_lea.vmem [#allocation17], %s2396
        %s2398 = sand.u32 %s622, 1
        %s2399 = scalar_lea.sflag [#allocation19], %s2398
        %s2400 = sand.u32 %s622, 1
        %s2401 = smul.addr %s2400, 8
        %s2402 = scalar_lea.vmem [#allocation18], %s2401
        // Predicated region
        $region129: #{tpu_custom_call.1} parent=103 // pred_check
          %p2403 = pneg %p548
        $region130: #{tpu_custom_call.1} parent=103 // pred_check_branch
          %2405 = sbr.rel (%p2403) target = $region132
        $region131: #{tpu_custom_call.1} parent=103 // pred_region
          %s2407 = ssub.s32 128, 128
          %2408 = vsyncadd %s2384, %s2407
          %s2409 = smul.addr %s53, 2
          %s2410 = sadd.s32 %s54, %s2409
          %s2411 = smul.addr %s2410, 128
          %s2412 = scalar_lea.hbm %s21, %s2411
          %s2414 = sshll.u32 %s2387, 4
          %s2415 = int_to_ptr.vmem [resolvable:$true] %s2414
          %2417 = dma.vmem_to_hbm [thread:$0]  %s2415, 128, %s2412, %s2384
        $region132: #{tpu_custom_call.1} parent=103 // pred_fallthru
          _
        // Predicated region
        $region133: #{tpu_custom_call.1} parent=103 // pred_check
          %p2418 = pneg %p576
        $region134: #{tpu_custom_call.1} parent=103 // pred_check_branch
          %2420 = sbr.rel (%p2418) target = $region136
        $region135: #{tpu_custom_call.1} parent=103 // pred_region
          %s2422 = ssub.s32 128, 128
          %2423 = vsyncadd %s2389, %s2422
          %s2424 = smul.addr %s53, 2
          %s2425 = sadd.s32 %s54, %s2424
          %s2426 = smul.addr %s2425, 128
          %s2427 = scalar_lea.hbm %s22, %s2426
          %s2429 = sshll.u32 %s2392, 4
          %s2430 = int_to_ptr.vmem [resolvable:$true] %s2429
          %2432 = dma.vmem_to_hbm [thread:$0]  %s2430, 128, %s2427, %s2389
        $region136: #{tpu_custom_call.1} parent=103 // pred_fallthru
          _
        // Predicated region
        $region137: #{tpu_custom_call.1} parent=103 // pred_check
          %p2433 = pneg %p604
        $region138: #{tpu_custom_call.1} parent=103 // pred_check_branch
          %2435 = sbr.rel (%p2433) target = $region140
        $region139: #{tpu_custom_call.1} parent=103 // pred_region
          %s2437 = ssub.s32 128, 128
          %2438 = vsyncadd %s2394, %s2437
          %s2439 = smul.addr %s53, 2
          %s2440 = sadd.s32 %s54, %s2439
          %s2441 = smul.addr %s2440, 128
          %s2442 = scalar_lea.hbm %s23, %s2441
          %s2444 = sshll.u32 %s2397, 4
          %s2445 = int_to_ptr.vmem [resolvable:$true] %s2444
          %2447 = dma.vmem_to_hbm [thread:$0]  %s2445, 128, %s2442, %s2394
        $region140: #{tpu_custom_call.1} parent=103 // pred_fallthru
          _
        // Predicated region
        $region141: #{tpu_custom_call.1} parent=103 // pred_check
          %p2448 = pneg %p632
        $region142: #{tpu_custom_call.1} parent=103 // pred_check_branch
          %2450 = sbr.rel (%p2448) target = $region144
        $region143: #{tpu_custom_call.1} parent=103 // pred_region
          %s2452 = ssub.s32 128, 128
          %2453 = vsyncadd %s2399, %s2452
          %s2454 = smul.addr %s53, 2
          %s2455 = sadd.s32 %s54, %s2454
          %s2456 = smul.addr %s2455, 128
          %s2457 = scalar_lea.hbm %s24, %s2456
          %s2459 = sshll.u32 %s2402, 4
          %s2460 = int_to_ptr.vmem [resolvable:$true] %s2459
          %2462 = dma.vmem_to_hbm [thread:$0]  %s2460, 128, %s2457, %s2399
        $region144: #{tpu_custom_call.1} parent=103 // pred_fallthru
          _
      $region104: #{tpu_custom_call.1} parent=5 // pred_fallthru
        _
      %p2463 = scmp.le.s32.totalorder 2, %s44
      // Predicated region
      $region145: #{tpu_custom_call.1} parent=5 // pred_check
        %p2464 = pneg %p2463
      $region146: #{tpu_custom_call.1} parent=5 // pred_check_branch
        %2466 = sbr.rel (%p2464) target = $region148
      $region147: #{tpu_custom_call.1} parent=5 // pred_region
        %s2467 = ssub.s32 %s44, 2
        // Predicated region
        $region149: #{tpu_custom_call.1} parent=147 // pred_check
          %p2468 = pneg %p554
        $region150: #{tpu_custom_call.1} parent=147 // pred_check_branch
          %2470 = sbr.rel (%p2468) target = $region152
        $region151: #{tpu_custom_call.1} parent=147 // pred_region
          %s2471 = sand.u32 %s539, 1
          %s2472 = scalar_lea.sflag [#allocation6], %s2471
          %s2473 = sand.u32 %s539, 1
          %s2474 = smul.addr %s2473, 8
          %s2475 = scalar_lea.vmem [#allocation14], %s2474
          %2476 = dma.done %s2472, 128
        $region152: #{tpu_custom_call.1} parent=147 // pred_fallthru
          _
        // Predicated region
        $region153: #{tpu_custom_call.1} parent=147 // pred_check
          %p2477 = pneg %p582
        $region154: #{tpu_custom_call.1} parent=147 // pred_check_branch
          %2479 = sbr.rel (%p2477) target = $region156
        $region155: #{tpu_custom_call.1} parent=147 // pred_region
          %s2480 = sand.u32 %s50, 1
          %s2481 = scalar_lea.sflag [#allocation16], %s2480
          %s2482 = sand.u32 %s567, 1
          %s2483 = smul.addr %s2482, 8
          %s2484 = scalar_lea.vmem [#allocation15], %s2483
          %2485 = dma.done %s2481, 128
        $region156: #{tpu_custom_call.1} parent=147 // pred_fallthru
          _
        // Predicated region
        $region157: #{tpu_custom_call.1} parent=147 // pred_check
          %p2486 = pneg %p610
        $region158: #{tpu_custom_call.1} parent=147 // pred_check_branch
          %2488 = sbr.rel (%p2486) target = $region160
        $region159: #{tpu_custom_call.1} parent=147 // pred_region
          %s2489 = sand.u32 %s50, 1
          %s2490 = scalar_lea.sflag [#allocation16], %s2489
          %s2491 = sand.u32 %s595, 1
          %s2492 = smul.addr %s2491, 8
          %s2493 = scalar_lea.vmem [#allocation17], %s2492
          %2494 = dma.done %s2490, 128
        $region160: #{tpu_custom_call.1} parent=147 // pred_fallthru
          _
        // Predicated region
        $region161: #{tpu_custom_call.1} parent=147 // pred_check
          %p2495 = pneg %p638
        $region162: #{tpu_custom_call.1} parent=147 // pred_check_branch
          %2497 = sbr.rel (%p2495) target = $region164
        $region163: #{tpu_custom_call.1} parent=147 // pred_region
          %s2498 = sand.u32 %s623, 1
          %s2499 = scalar_lea.sflag [#allocation19], %s2498
          %s2500 = sand.u32 %s623, 1
          %s2501 = smul.addr %s2500, 8
          %s2502 = scalar_lea.vmem [#allocation18], %s2501
          %2503 = dma.done %s2499, 128
        $region164: #{tpu_custom_call.1} parent=147 // pred_fallthru
          _
      $region148: #{tpu_custom_call.1} parent=5 // pred_fallthru
        _
    $region6: #{tpu_custom_call.1} parent=1 // loop_footer
      %s48 = sadd.s32 1, %s44
    $region7: #{tpu_custom_call.1} parent=1 // loop_footer_branch
      %43 = sbr.rel target = $region3
    $region8: #{tpu_custom_call.1} parent=1 // loop_exit
      _
    %2504 = vsyncpa [#allocation5], 1
    %s2505 = scalar_lea.sflag [#allocation5], 1
    %2506 = vsyncpa %s2505, 1
    %2507 = vsyncpa [#allocation10], 1
    %2508 = vsyncpa [#allocation13], 1
    %2509 = vsyncpa [#allocation6], 1
    %s2510 = scalar_lea.sflag [#allocation6], 1
    %2511 = vsyncpa %s2510, 1
    %2512 = vsyncpa [#allocation16], 1
    %s2513 = scalar_lea.sflag [#allocation16], 1
    %2514 = vsyncpa %s2513, 1
    %2515 = vsyncpa [#allocation19], 1
    %s2516 = scalar_lea.sflag [#allocation19], 1
    %2517 = vsyncpa %s2516, 1
    %2518 = vsyncpa [#allocation7], 1
    %s2519 = scalar_lea.sflag [#allocation7], 1
    %2520 = vsyncpa %s2519, 1

</llo_original>
